<compile_context>
chip_gen: v7x
topology: tpu7x:2x2x1
jax: 0.10.0
libtpu: 0.0.40
codegen_flags: <defaults>
</compile_context>

<pallas_src>
import functools

import jax
import jax.numpy as jnp
import numpy as np
from jax.experimental import pallas as pl
from jax.experimental.pallas import tpu as pltpu


def _round_up(x, m):
    return (x + m - 1) // m * m


def _pick_vmem_limit_bytes():
    # Generation-aware scoped-VMEM limit: ~75% of physical, capped at 100 MiB
    # (v5e/v6e 128 MiB parts -> 96 MiB; v7x 64 MiB -> 48 MiB).
    try:
        cap = int(pltpu.get_tpu_info().vmem_capacity_bytes)
    except Exception:  # conservative fallback
        cap = 64 * 1024 * 1024
    return min(cap * 3 // 4, 100 * 1024 * 1024)


_VMEM_LIMIT_BYTES = _pick_vmem_limit_bytes()


def _mspace_dims(Ho, Wo):
    """Flat 'M-space' geometry: rows of width Wo+2 (2 junk columns per row)."""
    Wp = Wo + 2                      # padded row width
    M2 = Ho * Wp                     # matmul M (real outputs + junk columns)
    D = Wp + 1 + ((Wp + 1) % 2)      # even (bf16-pair aligned) store offset
    rows = _round_up(D + (Ho + 1) * Wp + 1, 8)   # conv2 operand buffer rows
    return Wp, M2, D, rows


# ---------------------------------------------------------------------------
# Fused BasicBlock kernel
# ---------------------------------------------------------------------------
def _make_fused_kernel(Ho, Wo, Cout_p, stride, has_projection):
    """conv1(3x3,stride)+bn1+relu -> conv2(3x3,1)+bn2 -> shortcut add -> relu."""
    Wp, M2, D, rows = _mspace_dims(Ho, Wo)

    def kernel(*args):
        if has_projection:
            (x_ref, keep_ref, w1_ref, b1_ref, w2_ref, b2_ref, ws_ref, bs_ref,
             o_ref, y1p_ref) = args
        else:
            (x_ref, keep_ref, w1_ref, b1_ref, w2_ref, b2_ref,
             o_ref, y1p_ref) = args
            ws_ref = bs_ref = None

        # Conv taps are contiguous flat slices of the wrapper-prepared input
        # (no slice+reshape materialization: rows were flattened in XLA).
        if stride == 1:
            def tap(kh, kw):
                return x_ref[pl.ds(kh * Wp + kw, M2), :]
            xs = x_ref[pl.ds(Wp + 1, M2), :]          # x itself, output-aligned
        else:  # stride == 2: 2x2 polyphase slabs prepared by the wrapper
            def tap(kh, kw):
                p = (kh % 2) * 2 + (kw % 2)
                return x_ref[p, pl.ds((kh // 2) * Wp + (kw // 2), M2), :]
            xs = x_ref[3, pl.ds(0, M2), :]            # x[::2, ::2], output-aligned

        # ---- conv1 (3x3, stride) + BN1 (scale folded in w1, bias in init) ----
        acc1 = (jnp.dot(tap(0, 0), w1_ref[0, 0],
                        preferred_element_type=jnp.float32) + b1_ref[...])
        for kh in range(3):
            for kw in range(3):
                if kh == 0 and kw == 0:
                    continue
                acc1 = acc1 + jnp.dot(tap(kh, kw), w1_ref[kh, kw],
                                      preferred_element_type=jnp.float32)
        # ReLU, zero the 2 junk columns per row (keeps conv2's halo exactly
        # zero), single cast to bf16.
        y1 = (jnp.maximum(acc1, 0.0) * keep_ref[...]).astype(jnp.bfloat16)

        # ---- conv1 -> conv2 handoff: VMEM-only, zero just the thin halo ----
        y1p_ref[pl.ds(0, D), :] = jnp.zeros((D, Cout_p), jnp.bfloat16)
        suf = D + M2
        y1p_ref[pl.ds(suf, rows - suf), :] = jnp.zeros((rows - suf, Cout_p),
                                                       jnp.bfloat16)
        y1p_ref[pl.ds(D, M2), :] = y1

        # ---- shortcut (folded into the conv2 accumulator init) ----
        if has_projection:
            sc = (jnp.dot(xs, ws_ref[...], preferred_element_type=jnp.float32)
                  + bs_ref[...])
        else:
            sc = xs.astype(jnp.float32)               # identity: direct add

        # ---- conv2 (3x3, stride 1) + BN2 + residual add + ReLU ----
        acc2 = sc + b2_ref[...]
        base2 = D - Wp - 1
        for kh in range(3):
            for kw in range(3):
                acc2 = acc2 + jnp.dot(
                    y1p_ref[pl.ds(base2 + kh * Wp + kw, M2), :],
                    w2_ref[kh, kw],
                    preferred_element_type=jnp.float32)

        o_ref[...] = jnp.maximum(acc2, 0.0).astype(jnp.bfloat16)

    return kernel


# ---------------------------------------------------------------------------
# Wrapper: NCHW in/out, parameter folding / lane padding, pallas_call plumbing
# ---------------------------------------------------------------------------
@functools.partial(jax.jit, static_argnames=("stride",))
def basic_block_forward(x_nchw, params, *, stride):
    assert stride in (1, 2), "ResNet BasicBlock uses stride 1 or 2"
    N, Cin, H, W = x_nchw.shape
    Cout = params["w1"].shape[-1]
    has_projection = "ws" in params
    Cin_p = _round_up(Cin, 128)
    Cout_p = _round_up(Cout, 128)
    Ho = (H + 2 - 3) // stride + 1
    Wo = (W + 2 - 3) // stride + 1
    Wp, M2, _, rows = _mspace_dims(Ho, Wo)

    # NCHW -> NHWC (channels on lanes), bf16, channels zero-padded lane-dense.
    x = jnp.transpose(x_nchw, (0, 2, 3, 1)).astype(jnp.bfloat16)
    x = jnp.pad(x, ((0, 0), (0, 0), (0, 0), (0, Cin_p - Cin)))

    if stride == 1:
        # Pre-pad spatially (top1/left1/right1/bottom2 -> H+3 x W+2) and
        # flatten rows so every in-kernel tap is a contiguous flat slice.
        xp = jnp.pad(x, ((0, 0), (1, 2), (1, 1), (0, 0)))
        Mx = (H + 3) * (W + 2)
        x_in = xp.reshape(N, Mx, Cin_p)
        x_spec = pl.BlockSpec((None, Mx, Cin_p), lambda n: (n, 0, 0))
    else:
        # 2x2 polyphase decomposition of a (2*(Ho+2), 2*(Wo+2)) zero-padded
        # image; each phase is a flat (Ho+2)*(Wo+2) slab -> contiguous taps.
        Hp = Ho + 2
        Wq = Wo + 2
        pad_b = 2 * Hp - H - 1
        pad_r = 2 * Wq - W - 1
        xp = jnp.pad(x, ((0, 0), (1, pad_b), (1, pad_r), (0, 0)))
        xph = xp.reshape(N, Hp, 2, Wq, 2, Cin_p)
        xph = jnp.transpose(xph, (0, 2, 4, 1, 3, 5))
        x_in = xph.reshape(N, 4, Hp * Wq, Cin_p)
        x_spec = pl.BlockSpec((None, 4, Hp * Wq, Cin_p), lambda n: (n, 0, 0, 0))

    # 0/1 mask over the M-space rows (junk columns -> 0); resident across steps.
    keep = ((jnp.arange(M2, dtype=jnp.int32) % Wp) < Wo).astype(jnp.float32)
    keep = jnp.broadcast_to(keep[:, None], (M2, Cout_p))

    # Fold BN scale into the conv weights (exact algebra for eval-mode BN); the
    # shift stays as a per-channel add folded into the accumulator inits.
    w1 = jnp.pad((params["w1"] * params["s1"]).astype(jnp.bfloat16),
                 ((0, 0), (0, 0), (0, Cin_p - Cin), (0, Cout_p - Cout)))
    b1 = jnp.pad(params["b1"], (0, Cout_p - Cout)).reshape(1, Cout_p)
    w2 = jnp.pad((params["w2"] * params["s2"]).astype(jnp.bfloat16),
                 ((0, 0), (0, 0), (0, Cout_p - Cout), (0, Cout_p - Cout)))
    b2 = jnp.pad(params["b2"], (0, Cout_p - Cout)).reshape(1, Cout_p)

    inputs = [x_in, keep, w1, b1, w2, b2]
    in_specs = [
        x_spec,
        pl.BlockSpec((M2, Cout_p), lambda n: (0, 0)),
        pl.BlockSpec((3, 3, Cin_p, Cout_p), lambda n: (0, 0, 0, 0)),
        pl.BlockSpec((1, Cout_p), lambda n: (0, 0)),
        pl.BlockSpec((3, 3, Cout_p, Cout_p), lambda n: (0, 0, 0, 0)),
        pl.BlockSpec((1, Cout_p), lambda n: (0, 0)),
    ]
    if has_projection:
        ws = jnp.pad((params["ws"] * params["ss"]).astype(jnp.bfloat16),
                     ((0, Cin_p - Cin), (0, Cout_p - Cout)))
        bs = jnp.pad(params["bs"], (0, Cout_p - Cout)).reshape(1, Cout_p)
        inputs += [ws, bs]
        in_specs += [pl.BlockSpec((Cin_p, Cout_p), lambda n: (0, 0)),
                     pl.BlockSpec((1, Cout_p), lambda n: (0, 0))]

    kernel = _make_fused_kernel(Ho, Wo, Cout_p, stride, has_projection)
    out_flat = pl.pallas_call(
        kernel,
        out_shape=jax.ShapeDtypeStruct((N, M2, Cout_p), jnp.bfloat16),
        grid=(N,),
        in_specs=in_specs,
        out_specs=pl.BlockSpec((None, M2, Cout_p), lambda n: (n, 0, 0)),
        scratch_shapes=[pltpu.VMEM((rows, Cout_p), jnp.bfloat16)],
        compiler_params=pltpu.CompilerParams(
            dimension_semantics=("parallel",),
            vmem_limit_bytes=_VMEM_LIMIT_BYTES),
    )(*inputs)

    # Drop junk columns / padded channels, back to NCHW. (In a real network
    # the next block would consume the bf16 result directly; the f32 cast is
    # only to match the PyTorch module's output dtype.)
    out = out_flat.reshape(N, Ho, Wp, Cout_p)[:, :, :Wo, :Cout]
    return jnp.transpose(out, (0, 3, 1, 2)).astype(jnp.float32)


# ---------------------------------------------------------------------------
# Deterministic parameter construction (eval-mode BN running stats, folded)
# ---------------------------------------------------------------------------
def fold_bn(gamma, beta, running_mean, running_var, eps=1e-5):
    scale = gamma / jnp.sqrt(running_var + eps)
    bias = beta - running_mean * scale
    return scale, bias


def init_basic_block_params(key, in_channels, out_channels, stride):
    ks = jax.random.split(key, 12)
    p = {}
    # conv weights in HWIO layout (kh, kw, Cin, Cout)
    p["w1"] = jax.random.normal(ks[0], (3, 3, in_channels, out_channels),
                                jnp.float32) * 0.1
    p["w2"] = jax.random.normal(ks[1], (3, 3, out_channels, out_channels),
                                jnp.float32) * 0.1
    g1 = 1.0 + 0.1 * jax.random.normal(ks[2], (out_channels,), jnp.float32)
    b1 = 0.1 * jax.random.normal(ks[3], (out_channels,), jnp.float32)
    m1 = 0.1 * jax.random.normal(ks[4], (out_channels,), jnp.float32)
    v1 = jnp.abs(jax.random.normal(ks[5], (out_channels,), jnp.float32)) + 0.5
    g2 = 1.0 + 0.1 * jax.random.normal(ks[6], (out_channels,), jnp.float32)
    b2 = 0.1 * jax.random.normal(ks[7], (out_channels,), jnp.float32)
    m2 = 0.1 * jax.random.normal(ks[8], (out_channels,), jnp.float32)
    v2 = jnp.abs(jax.random.normal(ks[9], (out_channels,), jnp.float32)) + 0.5
    p["s1"], p["b1"] = fold_bn(g1, b1, m1, v1)
    p["s2"], p["b2"] = fold_bn(g2, b2, m2, v2)
    if stride != 1 or in_channels != out_channels:
        p["ws"] = jax.random.normal(ks[10], (in_channels, out_channels),
                                    jnp.float32) * 0.1
        gs = 1.0 + 0.1 * jax.random.normal(ks[11], (out_channels,), jnp.float32)
        bs = 0.1 * jnp.ones((out_channels,), jnp.float32)
        ms = jnp.zeros((out_channels,), jnp.float32)
        vs = jnp.ones((out_channels,), jnp.float32)
        p["ss"], p["bs"] = fold_bn(gs, bs, ms, vs)
    # identity shortcut: no "ws" key -> kernel adds x directly (no eye-matmul)
    return p


# ---------------------------------------------------------------------------
# Pure-XLA reference with identical precision choices (bf16 operands, f32 acc)
# ---------------------------------------------------------------------------
def _conv_ref(x, w, stride, pad):
    return jax.lax.conv_general_dilated(
        x, w, (stride, stride), [(pad, pad), (pad, pad)],
        dimension_numbers=("NHWC", "HWIO", "NHWC"),
        preferred_element_type=jnp.float32)


def basic_block_ref(x_nchw, p, stride):
    x = jnp.transpose(x_nchw, (0, 2, 3, 1)).astype(jnp.bfloat16)
    w1 = (p["w1"] * p["s1"]).astype(jnp.bfloat16)
    w2 = (p["w2"] * p["s2"]).astype(jnp.bfloat16)
    o = jnp.maximum(_conv_ref(x, w1, stride, 1) + p["b1"], 0.0)
    o = _conv_ref(o.astype(jnp.bfloat16), w2, 1, 1) + p["b2"]
    if "ws" in p:
        ws = (p["ws"] * p["ss"]).astype(jnp.bfloat16)
        sc = _conv_ref(x, ws[None, None], stride, 0) + p["bs"]
    else:
        sc = x.astype(jnp.float32)
    o = jnp.maximum(o + sc, 0.0)
    return jnp.transpose(o, (0, 3, 1, 2))


if __name__ == "__main__":
    key = jax.random.PRNGKey(0)

    cases = [
        # (N, Cin, Cout, H, W, stride)
        (2, 4, 8, 16, 16, 1),   # projection shortcut (channel change)
        (2, 4, 8, 16, 16, 2),   # projection shortcut + stride-2 downsample
        (2, 8, 8, 16, 16, 1),   # identity shortcut
    ]
    for idx, (N, Cin, Cout, H, W, stride) in enumerate(cases):
        k_x, k_p = jax.random.split(jax.random.fold_in(key, idx))
        x = jax.random.normal(k_x, (N, Cin, H, W), jnp.float32)
        params = init_basic_block_params(k_p, Cin, Cout, stride)

        out = jax.block_until_ready(basic_block_forward(x, params, stride=stride))
        ref = jax.block_until_ready(basic_block_ref(x, params, stride))

        Ho = (H + 2 - 3) // stride + 1
        Wo = (W + 2 - 3) // stride + 1
        assert out.shape == (N, Cout, Ho, Wo)
        # Kernel output passes through bf16 -> allow ~bf16-rounding tolerance.
        np.testing.assert_allclose(np.asarray(out), np.asarray(ref),
                                   rtol=2e-2, atol=2e-2)

    print("KERNEL_OK")
</pallas_src>

<mosaic_0001>
module attributes {stable_mosaic.version = 11 : i64} {
  func.func @kernel(%arg0: i32, %arg1: memref<1x342x128xbf16, #tpu.memory_space<vmem>>, %arg2: memref<288x128xf32, #tpu.memory_space<vmem>>, %arg3: memref<3x3x128x128xbf16, #tpu.memory_space<vmem>>, %arg4: memref<1x128xf32, #tpu.memory_space<vmem>>, %arg5: memref<3x3x128x128xbf16, #tpu.memory_space<vmem>>, %arg6: memref<1x128xf32, #tpu.memory_space<vmem>>, %arg7: memref<128x128xbf16, #tpu.memory_space<vmem>>, %arg8: memref<1x128xf32, #tpu.memory_space<vmem>>, %arg9: memref<1x288x128xbf16, #tpu.memory_space<vmem>>, %arg10: memref<328x128xbf16, #tpu.memory_space<vmem>>) attributes {dimension_semantics = [#tpu.dimension_semantics<parallel>], iteration_bounds = array<i64: 2>, scalar_prefetch = 0 : i64, scratch_operands = 1 : i64, tpu.core_type = #tpu.core_type<tc>, window_params = [{transform_indices = @transform_0, window_bounds = array<i64: 1, 342, 128>}, {pipeline_mode = #tpu.pipeline_mode<synchronous>, transform_indices = @transform_1, window_bounds = array<i64: 288, 128>}, {pipeline_mode = #tpu.pipeline_mode<synchronous>, transform_indices = @transform_2, window_bounds = array<i64: 3, 3, 128, 128>}, {pipeline_mode = #tpu.pipeline_mode<synchronous>, transform_indices = @transform_3, window_bounds = array<i64: 1, 128>}, {pipeline_mode = #tpu.pipeline_mode<synchronous>, transform_indices = @transform_4, window_bounds = array<i64: 3, 3, 128, 128>}, {pipeline_mode = #tpu.pipeline_mode<synchronous>, transform_indices = @transform_5, window_bounds = array<i64: 1, 128>}, {pipeline_mode = #tpu.pipeline_mode<synchronous>, transform_indices = @transform_6, window_bounds = array<i64: 128, 128>}, {pipeline_mode = #tpu.pipeline_mode<synchronous>, transform_indices = @transform_7, window_bounds = array<i64: 1, 128>}, {transform_indices = @transform_8, window_bounds = array<i64: 1, 288, 128>}]} {
    %c0 = arith.constant 0 : index
    %c19 = arith.constant 19 : index
    %c0_0 = arith.constant 0 : index
    %0 = vector.load %arg1[%c0, %c19, %c0_0] : memref<1x342x128xbf16, #tpu.memory_space<vmem>>, vector<1x288x128xbf16>
    %1 = vector.shape_cast %0 : vector<1x288x128xbf16> to vector<288x128xbf16>
    %c0_1 = arith.constant 0 : index
    %c0_2 = arith.constant 0 : index
    %c0_3 = arith.constant 0 : index
    %2 = vector.load %arg1[%c0_1, %c0_2, %c0_3] : memref<1x342x128xbf16, #tpu.memory_space<vmem>>, vector<1x288x128xbf16>
    %3 = vector.shape_cast %2 : vector<1x288x128xbf16> to vector<288x128xbf16>
    %c0_4 = arith.constant 0 : index
    %c0_5 = arith.constant 0 : index
    %c0_6 = arith.constant 0 : index
    %c0_7 = arith.constant 0 : index
    %4 = vector.load %arg3[%c0_4, %c0_5, %c0_6, %c0_7] : memref<3x3x128x128xbf16, #tpu.memory_space<vmem>>, vector<1x1x128x128xbf16>
    %5 = vector.shape_cast %4 : vector<1x1x128x128xbf16> to vector<128x128xbf16>
    %cst = arith.constant dense<0.000000e+00> : vector<288x128xf32>
    %6 = tpu.matmul %3, %5, %cst {dimension_numbers = #tpu.dot_dimension_numbers<[1], [0], [0], [1], [0, 0, 1, 1], [], []>} : vector<288x128xbf16>, vector<128x128xbf16>, vector<288x128xf32> -> vector<288x128xf32>
    %c0_8 = arith.constant 0 : index
    %c0_9 = arith.constant 0 : index
    %7 = vector.load %arg4[%c0_8, %c0_9] : memref<1x128xf32, #tpu.memory_space<vmem>>, vector<1x128xf32>
    %8 = vector.broadcast %7 : vector<1x128xf32> to vector<288x128xf32>
    %9 = arith.addf %6, %8 : vector<288x128xf32>
    %c0_10 = arith.constant 0 : index
    %c1 = arith.constant 1 : index
    %c0_11 = arith.constant 0 : index
    %10 = vector.load %arg1[%c0_10, %c1, %c0_11] : memref<1x342x128xbf16, #tpu.memory_space<vmem>>, vector<1x288x128xbf16>
    %11 = vector.shape_cast %10 : vector<1x288x128xbf16> to vector<288x128xbf16>
    %c0_12 = arith.constant 0 : index
    %c1_13 = arith.constant 1 : index
    %c0_14 = arith.constant 0 : index
    %c0_15 = arith.constant 0 : index
    %12 = vector.load %arg3[%c0_12, %c1_13, %c0_14, %c0_15] : memref<3x3x128x128xbf16, #tpu.memory_space<vmem>>, vector<1x1x128x128xbf16>
    %13 = vector.shape_cast %12 : vector<1x1x128x128xbf16> to vector<128x128xbf16>
    %cst_16 = arith.constant dense<0.000000e+00> : vector<288x128xf32>
    %14 = tpu.matmul %11, %13, %cst_16 {dimension_numbers = #tpu.dot_dimension_numbers<[1], [0], [0], [1], [0, 0, 1, 1], [], []>} : vector<288x128xbf16>, vector<128x128xbf16>, vector<288x128xf32> -> vector<288x128xf32>
    %15 = arith.addf %9, %14 : vector<288x128xf32>
    %c0_17 = arith.constant 0 : index
    %c2 = arith.constant 2 : index
    %c0_18 = arith.constant 0 : index
    %16 = vector.load %arg1[%c0_17, %c2, %c0_18] : memref<1x342x128xbf16, #tpu.memory_space<vmem>>, vector<1x288x128xbf16>
    %17 = vector.shape_cast %16 : vector<1x288x128xbf16> to vector<288x128xbf16>
    %c0_19 = arith.constant 0 : index
    %c2_20 = arith.constant 2 : index
    %c0_21 = arith.constant 0 : index
    %c0_22 = arith.constant 0 : index
    %18 = vector.load %arg3[%c0_19, %c2_20, %c0_21, %c0_22] : memref<3x3x128x128xbf16, #tpu.memory_space<vmem>>, vector<1x1x128x128xbf16>
    %19 = vector.shape_cast %18 : vector<1x1x128x128xbf16> to vector<128x128xbf16>
    %cst_23 = arith.constant dense<0.000000e+00> : vector<288x128xf32>
    %20 = tpu.matmul %17, %19, %cst_23 {dimension_numbers = #tpu.dot_dimension_numbers<[1], [0], [0], [1], [0, 0, 1, 1], [], []>} : vector<288x128xbf16>, vector<128x128xbf16>, vector<288x128xf32> -> vector<288x128xf32>
    %21 = arith.addf %15, %20 : vector<288x128xf32>
    %c0_24 = arith.constant 0 : index
    %c18 = arith.constant 18 : index
    %c0_25 = arith.constant 0 : index
    %22 = vector.load %arg1[%c0_24, %c18, %c0_25] : memref<1x342x128xbf16, #tpu.memory_space<vmem>>, vector<1x288x128xbf16>
    %23 = vector.shape_cast %22 : vector<1x288x128xbf16> to vector<288x128xbf16>
    %c1_26 = arith.constant 1 : index
    %c0_27 = arith.constant 0 : index
    %c0_28 = arith.constant 0 : index
    %c0_29 = arith.constant 0 : index
    %24 = vector.load %arg3[%c1_26, %c0_27, %c0_28, %c0_29] : memref<3x3x128x128xbf16, #tpu.memory_space<vmem>>, vector<1x1x128x128xbf16>
    %25 = vector.shape_cast %24 : vector<1x1x128x128xbf16> to vector<128x128xbf16>
    %cst_30 = arith.constant dense<0.000000e+00> : vector<288x128xf32>
    %26 = tpu.matmul %23, %25, %cst_30 {dimension_numbers = #tpu.dot_dimension_numbers<[1], [0], [0], [1], [0, 0, 1, 1], [], []>} : vector<288x128xbf16>, vector<128x128xbf16>, vector<288x128xf32> -> vector<288x128xf32>
    %27 = arith.addf %21, %26 : vector<288x128xf32>
    %c0_31 = arith.constant 0 : index
    %c19_32 = arith.constant 19 : index
    %c0_33 = arith.constant 0 : index
    %28 = vector.load %arg1[%c0_31, %c19_32, %c0_33] : memref<1x342x128xbf16, #tpu.memory_space<vmem>>, vector<1x288x128xbf16>
    %29 = vector.shape_cast %28 : vector<1x288x128xbf16> to vector<288x128xbf16>
    %c1_34 = arith.constant 1 : index
    %c1_35 = arith.constant 1 : index
    %c0_36 = arith.constant 0 : index
    %c0_37 = arith.constant 0 : index
    %30 = vector.load %arg3[%c1_34, %c1_35, %c0_36, %c0_37] : memref<3x3x128x128xbf16, #tpu.memory_space<vmem>>, vector<1x1x128x128xbf16>
    %31 = vector.shape_cast %30 : vector<1x1x128x128xbf16> to vector<128x128xbf16>
    %cst_38 = arith.constant dense<0.000000e+00> : vector<288x128xf32>
    %32 = tpu.matmul %29, %31, %cst_38 {dimension_numbers = #tpu.dot_dimension_numbers<[1], [0], [0], [1], [0, 0, 1, 1], [], []>} : vector<288x128xbf16>, vector<128x128xbf16>, vector<288x128xf32> -> vector<288x128xf32>
    %33 = arith.addf %27, %32 : vector<288x128xf32>
    %c0_39 = arith.constant 0 : index
    %c20 = arith.constant 20 : index
    %c0_40 = arith.constant 0 : index
    %34 = vector.load %arg1[%c0_39, %c20, %c0_40] : memref<1x342x128xbf16, #tpu.memory_space<vmem>>, vector<1x288x128xbf16>
    %35 = vector.shape_cast %34 : vector<1x288x128xbf16> to vector<288x128xbf16>
    %c1_41 = arith.constant 1 : index
    %c2_42 = arith.constant 2 : index
    %c0_43 = arith.constant 0 : index
    %c0_44 = arith.constant 0 : index
    %36 = vector.load %arg3[%c1_41, %c2_42, %c0_43, %c0_44] : memref<3x3x128x128xbf16, #tpu.memory_space<vmem>>, vector<1x1x128x128xbf16>
    %37 = vector.shape_cast %36 : vector<1x1x128x128xbf16> to vector<128x128xbf16>
    %cst_45 = arith.constant dense<0.000000e+00> : vector<288x128xf32>
    %38 = tpu.matmul %35, %37, %cst_45 {dimension_numbers = #tpu.dot_dimension_numbers<[1], [0], [0], [1], [0, 0, 1, 1], [], []>} : vector<288x128xbf16>, vector<128x128xbf16>, vector<288x128xf32> -> vector<288x128xf32>
    %39 = arith.addf %33, %38 : vector<288x128xf32>
    %c0_46 = arith.constant 0 : index
    %c36 = arith.constant 36 : index
    %c0_47 = arith.constant 0 : index
    %40 = vector.load %arg1[%c0_46, %c36, %c0_47] : memref<1x342x128xbf16, #tpu.memory_space<vmem>>, vector<1x288x128xbf16>
    %41 = vector.shape_cast %40 : vector<1x288x128xbf16> to vector<288x128xbf16>
    %c2_48 = arith.constant 2 : index
    %c0_49 = arith.constant 0 : index
    %c0_50 = arith.constant 0 : index
    %c0_51 = arith.constant 0 : index
    %42 = vector.load %arg3[%c2_48, %c0_49, %c0_50, %c0_51] : memref<3x3x128x128xbf16, #tpu.memory_space<vmem>>, vector<1x1x128x128xbf16>
    %43 = vector.shape_cast %42 : vector<1x1x128x128xbf16> to vector<128x128xbf16>
    %cst_52 = arith.constant dense<0.000000e+00> : vector<288x128xf32>
    %44 = tpu.matmul %41, %43, %cst_52 {dimension_numbers = #tpu.dot_dimension_numbers<[1], [0], [0], [1], [0, 0, 1, 1], [], []>} : vector<288x128xbf16>, vector<128x128xbf16>, vector<288x128xf32> -> vector<288x128xf32>
    %45 = arith.addf %39, %44 : vector<288x128xf32>
    %c0_53 = arith.constant 0 : index
    %c37 = arith.constant 37 : index
    %c0_54 = arith.constant 0 : index
    %46 = vector.load %arg1[%c0_53, %c37, %c0_54] : memref<1x342x128xbf16, #tpu.memory_space<vmem>>, vector<1x288x128xbf16>
    %47 = vector.shape_cast %46 : vector<1x288x128xbf16> to vector<288x128xbf16>
    %c2_55 = arith.constant 2 : index
    %c1_56 = arith.constant 1 : index
    %c0_57 = arith.constant 0 : index
    %c0_58 = arith.constant 0 : index
    %48 = vector.load %arg3[%c2_55, %c1_56, %c0_57, %c0_58] : memref<3x3x128x128xbf16, #tpu.memory_space<vmem>>, vector<1x1x128x128xbf16>
    %49 = vector.shape_cast %48 : vector<1x1x128x128xbf16> to vector<128x128xbf16>
    %cst_59 = arith.constant dense<0.000000e+00> : vector<288x128xf32>
    %50 = tpu.matmul %47, %49, %cst_59 {dimension_numbers = #tpu.dot_dimension_numbers<[1], [0], [0], [1], [0, 0, 1, 1], [], []>} : vector<288x128xbf16>, vector<128x128xbf16>, vector<288x128xf32> -> vector<288x128xf32>
    %51 = arith.addf %45, %50 : vector<288x128xf32>
    %c0_60 = arith.constant 0 : index
    %c38 = arith.constant 38 : index
    %c0_61 = arith.constant 0 : index
    %52 = vector.load %arg1[%c0_60, %c38, %c0_61] : memref<1x342x128xbf16, #tpu.memory_space<vmem>>, vector<1x288x128xbf16>
    %53 = vector.shape_cast %52 : vector<1x288x128xbf16> to vector<288x128xbf16>
    %c2_62 = arith.constant 2 : index
    %c2_63 = arith.constant 2 : index
    %c0_64 = arith.constant 0 : index
    %c0_65 = arith.constant 0 : index
    %54 = vector.load %arg3[%c2_62, %c2_63, %c0_64, %c0_65] : memref<3x3x128x128xbf16, #tpu.memory_space<vmem>>, vector<1x1x128x128xbf16>
    %55 = vector.shape_cast %54 : vector<1x1x128x128xbf16> to vector<128x128xbf16>
    %cst_66 = arith.constant dense<0.000000e+00> : vector<288x128xf32>
    %56 = tpu.matmul %53, %55, %cst_66 {dimension_numbers = #tpu.dot_dimension_numbers<[1], [0], [0], [1], [0, 0, 1, 1], [], []>} : vector<288x128xbf16>, vector<128x128xbf16>, vector<288x128xf32> -> vector<288x128xf32>
    %57 = arith.addf %51, %56 : vector<288x128xf32>
    %cst_67 = arith.constant 0.000000e+00 : f32
    %58 = vector.broadcast %cst_67 : f32 to vector<288x128xf32>
    %59 = arith.maximumf %57, %58 : vector<288x128xf32>
    %c0_68 = arith.constant 0 : index
    %c0_69 = arith.constant 0 : index
    %60 = vector.load %arg2[%c0_68, %c0_69] : memref<288x128xf32, #tpu.memory_space<vmem>>, vector<288x128xf32>
    %61 = arith.mulf %59, %60 : vector<288x128xf32>
    %62 = arith.truncf %61 : vector<288x128xf32> to vector<288x128xbf16>
    %cst_70 = arith.constant 0.000000e+00 : bf16
    %63 = vector.broadcast %cst_70 : bf16 to vector<20x128xbf16>
    %c0_71 = arith.constant 0 : index
    %c0_72 = arith.constant 0 : index
    %64 = vector.load %arg10[%c0_71, %c0_72] : memref<328x128xbf16, #tpu.memory_space<vmem>>, vector<20x128xbf16>
    tpu.vector_store %arg10[%c0_71, %c0_72], %63 {strides = array<i32>} : memref<328x128xbf16, #tpu.memory_space<vmem>>, vector<20x128xbf16>,
    %cst_73 = arith.constant 0.000000e+00 : bf16
    %65 = vector.broadcast %cst_73 : bf16 to vector<20x128xbf16>
    %c308 = arith.constant 308 : index
    %c0_74 = arith.constant 0 : index
    %66 = vector.load %arg10[%c308, %c0_74] : memref<328x128xbf16, #tpu.memory_space<vmem>>, vector<20x128xbf16>
    tpu.vector_store %arg10[%c308, %c0_74], %65 {strides = array<i32>} : memref<328x128xbf16, #tpu.memory_space<vmem>>, vector<20x128xbf16>,
    %c20_75 = arith.constant 20 : index
    %c0_76 = arith.constant 0 : index
    %67 = vector.load %arg10[%c20_75, %c0_76] : memref<328x128xbf16, #tpu.memory_space<vmem>>, vector<288x128xbf16>
    tpu.vector_store %arg10[%c20_75, %c0_76], %62 {strides = array<i32>} : memref<328x128xbf16, #tpu.memory_space<vmem>>, vector<288x128xbf16>,
    %c0_77 = arith.constant 0 : index
    %c0_78 = arith.constant 0 : index
    %68 = vector.load %arg7[%c0_77, %c0_78] : memref<128x128xbf16, #tpu.memory_space<vmem>>, vector<128x128xbf16>
    %cst_79 = arith.constant dense<0.000000e+00> : vector<288x128xf32>
    %69 = tpu.matmul %1, %68, %cst_79 {dimension_numbers = #tpu.dot_dimension_numbers<[1], [0], [0], [1], [0, 0, 1, 1], [], []>} : vector<288x128xbf16>, vector<128x128xbf16>, vector<288x128xf32> -> vector<288x128xf32>
    %c0_80 = arith.constant 0 : index
    %c0_81 = arith.constant 0 : index
    %70 = vector.load %arg8[%c0_80, %c0_81] : memref<1x128xf32, #tpu.memory_space<vmem>>, vector<1x128xf32>
    %71 = vector.broadcast %70 : vector<1x128xf32> to vector<288x128xf32>
    %72 = arith.addf %69, %71 : vector<288x128xf32>
    %c0_82 = arith.constant 0 : index
    %c0_83 = arith.constant 0 : index
    %73 = vector.load %arg6[%c0_82, %c0_83] : memref<1x128xf32, #tpu.memory_space<vmem>>, vector<1x128xf32>
    %74 = vector.broadcast %73 : vector<1x128xf32> to vector<288x128xf32>
    %75 = arith.addf %72, %74 : vector<288x128xf32>
    %c1_84 = arith.constant 1 : index
    %c0_85 = arith.constant 0 : index
    %76 = vector.load %arg10[%c1_84, %c0_85] : memref<328x128xbf16, #tpu.memory_space<vmem>>, vector<288x128xbf16>
    %c0_86 = arith.constant 0 : index
    %c0_87 = arith.constant 0 : index
    %c0_88 = arith.constant 0 : index
    %c0_89 = arith.constant 0 : index
    %77 = vector.load %arg5[%c0_86, %c0_87, %c0_88, %c0_89] : memref<3x3x128x128xbf16, #tpu.memory_space<vmem>>, vector<1x1x128x128xbf16>
    %78 = vector.shape_cast %77 : vector<1x1x128x128xbf16> to vector<128x128xbf16>
    %cst_90 = arith.constant dense<0.000000e+00> : vector<288x128xf32>
    %79 = tpu.matmul %76, %78, %cst_90 {dimension_numbers = #tpu.dot_dimension_numbers<[1], [0], [0], [1], [0, 0, 1, 1], [], []>} : vector<288x128xbf16>, vector<128x128xbf16>, vector<288x128xf32> -> vector<288x128xf32>
    %80 = arith.addf %75, %79 : vector<288x128xf32>
    %c2_91 = arith.constant 2 : index
    %c0_92 = arith.constant 0 : index
    %81 = vector.load %arg10[%c2_91, %c0_92] : memref<328x128xbf16, #tpu.memory_space<vmem>>, vector<288x128xbf16>
    %c0_93 = arith.constant 0 : index
    %c1_94 = arith.constant 1 : index
    %c0_95 = arith.constant 0 : index
    %c0_96 = arith.constant 0 : index
    %82 = vector.load %arg5[%c0_93, %c1_94, %c0_95, %c0_96] : memref<3x3x128x128xbf16, #tpu.memory_space<vmem>>, vector<1x1x128x128xbf16>
    %83 = vector.shape_cast %82 : vector<1x1x128x128xbf16> to vector<128x128xbf16>
    %cst_97 = arith.constant dense<0.000000e+00> : vector<288x128xf32>
    %84 = tpu.matmul %81, %83, %cst_97 {dimension_numbers = #tpu.dot_dimension_numbers<[1], [0], [0], [1], [0, 0, 1, 1], [], []>} : vector<288x128xbf16>, vector<128x128xbf16>, vector<288x128xf32> -> vector<288x128xf32>
    %85 = arith.addf %80, %84 : vector<288x128xf32>
    %c3 = arith.constant 3 : index
    %c0_98 = arith.constant 0 : index
    %86 = vector.load %arg10[%c3, %c0_98] : memref<328x128xbf16, #tpu.memory_space<vmem>>, vector<288x128xbf16>
    %c0_99 = arith.constant 0 : index
    %c2_100 = arith.constant 2 : index
    %c0_101 = arith.constant 0 : index
    %c0_102 = arith.constant 0 : index
    %87 = vector.load %arg5[%c0_99, %c2_100, %c0_101, %c0_102] : memref<3x3x128x128xbf16, #tpu.memory_space<vmem>>, vector<1x1x128x128xbf16>
    %88 = vector.shape_cast %87 : vector<1x1x128x128xbf16> to vector<128x128xbf16>
    %cst_103 = arith.constant dense<0.000000e+00> : vector<288x128xf32>
    %89 = tpu.matmul %86, %88, %cst_103 {dimension_numbers = #tpu.dot_dimension_numbers<[1], [0], [0], [1], [0, 0, 1, 1], [], []>} : vector<288x128xbf16>, vector<128x128xbf16>, vector<288x128xf32> -> vector<288x128xf32>
    %90 = arith.addf %85, %89 : vector<288x128xf32>
    %c19_104 = arith.constant 19 : index
    %c0_105 = arith.constant 0 : index
    %91 = vector.load %arg10[%c19_104, %c0_105] : memref<328x128xbf16, #tpu.memory_space<vmem>>, vector<288x128xbf16>
    %c1_106 = arith.constant 1 : index
    %c0_107 = arith.constant 0 : index
    %c0_108 = arith.constant 0 : index
    %c0_109 = arith.constant 0 : index
    %92 = vector.load %arg5[%c1_106, %c0_107, %c0_108, %c0_109] : memref<3x3x128x128xbf16, #tpu.memory_space<vmem>>, vector<1x1x128x128xbf16>
    %93 = vector.shape_cast %92 : vector<1x1x128x128xbf16> to vector<128x128xbf16>
    %cst_110 = arith.constant dense<0.000000e+00> : vector<288x128xf32>
    %94 = tpu.matmul %91, %93, %cst_110 {dimension_numbers = #tpu.dot_dimension_numbers<[1], [0], [0], [1], [0, 0, 1, 1], [], []>} : vector<288x128xbf16>, vector<128x128xbf16>, vector<288x128xf32> -> vector<288x128xf32>
    %95 = arith.addf %90, %94 : vector<288x128xf32>
    %c20_111 = arith.constant 20 : index
    %c0_112 = arith.constant 0 : index
    %96 = vector.load %arg10[%c20_111, %c0_112] : memref<328x128xbf16, #tpu.memory_space<vmem>>, vector<288x128xbf16>
    %c1_113 = arith.constant 1 : index
    %c1_114 = arith.constant 1 : index
    %c0_115 = arith.constant 0 : index
    %c0_116 = arith.constant 0 : index
    %97 = vector.load %arg5[%c1_113, %c1_114, %c0_115, %c0_116] : memref<3x3x128x128xbf16, #tpu.memory_space<vmem>>, vector<1x1x128x128xbf16>
    %98 = vector.shape_cast %97 : vector<1x1x128x128xbf16> to vector<128x128xbf16>
    %cst_117 = arith.constant dense<0.000000e+00> : vector<288x128xf32>
    %99 = tpu.matmul %96, %98, %cst_117 {dimension_numbers = #tpu.dot_dimension_numbers<[1], [0], [0], [1], [0, 0, 1, 1], [], []>} : vector<288x128xbf16>, vector<128x128xbf16>, vector<288x128xf32> -> vector<288x128xf32>
    %100 = arith.addf %95, %99 : vector<288x128xf32>
    %c21 = arith.constant 21 : index
    %c0_118 = arith.constant 0 : index
    %101 = vector.load %arg10[%c21, %c0_118] : memref<328x128xbf16, #tpu.memory_space<vmem>>, vector<288x128xbf16>
    %c1_119 = arith.constant 1 : index
    %c2_120 = arith.constant 2 : index
    %c0_121 = arith.constant 0 : index
    %c0_122 = arith.constant 0 : index
    %102 = vector.load %arg5[%c1_119, %c2_120, %c0_121, %c0_122] : memref<3x3x128x128xbf16, #tpu.memory_space<vmem>>, vector<1x1x128x128xbf16>
    %103 = vector.shape_cast %102 : vector<1x1x128x128xbf16> to vector<128x128xbf16>
    %cst_123 = arith.constant dense<0.000000e+00> : vector<288x128xf32>
    %104 = tpu.matmul %101, %103, %cst_123 {dimension_numbers = #tpu.dot_dimension_numbers<[1], [0], [0], [1], [0, 0, 1, 1], [], []>} : vector<288x128xbf16>, vector<128x128xbf16>, vector<288x128xf32> -> vector<288x128xf32>
    %105 = arith.addf %100, %104 : vector<288x128xf32>
    %c37_124 = arith.constant 37 : index
    %c0_125 = arith.constant 0 : index
    %106 = vector.load %arg10[%c37_124, %c0_125] : memref<328x128xbf16, #tpu.memory_space<vmem>>, vector<288x128xbf16>
    %c2_126 = arith.constant 2 : index
    %c0_127 = arith.constant 0 : index
    %c0_128 = arith.constant 0 : index
    %c0_129 = arith.constant 0 : index
    %107 = vector.load %arg5[%c2_126, %c0_127, %c0_128, %c0_129] : memref<3x3x128x128xbf16, #tpu.memory_space<vmem>>, vector<1x1x128x128xbf16>
    %108 = vector.shape_cast %107 : vector<1x1x128x128xbf16> to vector<128x128xbf16>
    %cst_130 = arith.constant dense<0.000000e+00> : vector<288x128xf32>
    %109 = tpu.matmul %106, %108, %cst_130 {dimension_numbers = #tpu.dot_dimension_numbers<[1], [0], [0], [1], [0, 0, 1, 1], [], []>} : vector<288x128xbf16>, vector<128x128xbf16>, vector<288x128xf32> -> vector<288x128xf32>
    %110 = arith.addf %105, %109 : vector<288x128xf32>
    %c38_131 = arith.constant 38 : index
    %c0_132 = arith.constant 0 : index
    %111 = vector.load %arg10[%c38_131, %c0_132] : memref<328x128xbf16, #tpu.memory_space<vmem>>, vector<288x128xbf16>
    %c2_133 = arith.constant 2 : index
    %c1_134 = arith.constant 1 : index
    %c0_135 = arith.constant 0 : index
    %c0_136 = arith.constant 0 : index
    %112 = vector.load %arg5[%c2_133, %c1_134, %c0_135, %c0_136] : memref<3x3x128x128xbf16, #tpu.memory_space<vmem>>, vector<1x1x128x128xbf16>
    %113 = vector.shape_cast %112 : vector<1x1x128x128xbf16> to vector<128x128xbf16>
    %cst_137 = arith.constant dense<0.000000e+00> : vector<288x128xf32>
    %114 = tpu.matmul %111, %113, %cst_137 {dimension_numbers = #tpu.dot_dimension_numbers<[1], [0], [0], [1], [0, 0, 1, 1], [], []>} : vector<288x128xbf16>, vector<128x128xbf16>, vector<288x128xf32> -> vector<288x128xf32>
    %115 = arith.addf %110, %114 : vector<288x128xf32>
    %c39 = arith.constant 39 : index
    %c0_138 = arith.constant 0 : index
    %116 = vector.load %arg10[%c39, %c0_138] : memref<328x128xbf16, #tpu.memory_space<vmem>>, vector<288x128xbf16>
    %c2_139 = arith.constant 2 : index
    %c2_140 = arith.constant 2 : index
    %c0_141 = arith.constant 0 : index
    %c0_142 = arith.constant 0 : index
    %117 = vector.load %arg5[%c2_139, %c2_140, %c0_141, %c0_142] : memref<3x3x128x128xbf16, #tpu.memory_space<vmem>>, vector<1x1x128x128xbf16>
    %118 = vector.shape_cast %117 : vector<1x1x128x128xbf16> to vector<128x128xbf16>
    %cst_143 = arith.constant dense<0.000000e+00> : vector<288x128xf32>
    %119 = tpu.matmul %116, %118, %cst_143 {dimension_numbers = #tpu.dot_dimension_numbers<[1], [0], [0], [1], [0, 0, 1, 1], [], []>} : vector<288x128xbf16>, vector<128x128xbf16>, vector<288x128xf32> -> vector<288x128xf32>
    %120 = arith.addf %115, %119 : vector<288x128xf32>
    %cst_144 = arith.constant 0.000000e+00 : f32
    %121 = vector.broadcast %cst_144 : f32 to vector<288x128xf32>
    %122 = arith.maximumf %120, %121 : vector<288x128xf32>
    %123 = arith.truncf %122 : vector<288x128xf32> to vector<288x128xbf16>
    %c0_145 = arith.constant 0 : index
    %c0_146 = arith.constant 0 : index
    %c0_147 = arith.constant 0 : index
    %124 = vector.load %arg9[%c0_145, %c0_146, %c0_147] : memref<1x288x128xbf16, #tpu.memory_space<vmem>>, vector<1x288x128xbf16>
    %125 = vector.shape_cast %124 : vector<1x288x128xbf16> to vector<288x128xbf16>
    %126 = vector.shape_cast %123 : vector<288x128xbf16> to vector<1x288x128xbf16>
    tpu.vector_store %arg9[%c0_145, %c0_146, %c0_147], %126 {strides = array<i32>} : memref<1x288x128xbf16, #tpu.memory_space<vmem>>, vector<1x288x128xbf16>,
    return
  }
  func.func @transform_0(%arg0: i32) -> (i32, i32, i32) {
    %c0_i32 = arith.constant 0 : i32
    %c0_i32_0 = arith.constant 0 : i32
    %c0_i32_1 = arith.constant 0 : i32
    return %arg0, %c0_i32, %c0_i32_0 : i32, i32, i32
  }
  func.func @transform_1(%arg0: i32) -> (i32, i32) {
    %c0_i32 = arith.constant 0 : i32
    %c0_i32_0 = arith.constant 0 : i32
    %c0_i32_1 = arith.constant 0 : i32
    return %c0_i32, %c0_i32_0 : i32, i32
  }
  func.func @transform_2(%arg0: i32) -> (i32, i32, i32, i32) {
    %c0_i32 = arith.constant 0 : i32
    %c0_i32_0 = arith.constant 0 : i32
    %c0_i32_1 = arith.constant 0 : i32
    %c0_i32_2 = arith.constant 0 : i32
    %c0_i32_3 = arith.constant 0 : i32
    return %c0_i32, %c0_i32_0, %c0_i32_1, %c0_i32_2 : i32, i32, i32, i32
  }
  func.func @transform_3(%arg0: i32) -> (i32, i32) {
    %c0_i32 = arith.constant 0 : i32
    %c0_i32_0 = arith.constant 0 : i32
    %c0_i32_1 = arith.constant 0 : i32
    return %c0_i32, %c0_i32_0 : i32, i32
  }
  func.func @transform_4(%arg0: i32) -> (i32, i32, i32, i32) {
    %c0_i32 = arith.constant 0 : i32
    %c0_i32_0 = arith.constant 0 : i32
    %c0_i32_1 = arith.constant 0 : i32
    %c0_i32_2 = arith.constant 0 : i32
    %c0_i32_3 = arith.constant 0 : i32
    return %c0_i32, %c0_i32_0, %c0_i32_1, %c0_i32_2 : i32, i32, i32, i32
  }
  func.func @transform_5(%arg0: i32) -> (i32, i32) {
    %c0_i32 = arith.constant 0 : i32
    %c0_i32_0 = arith.constant 0 : i32
    %c0_i32_1 = arith.constant 0 : i32
    return %c0_i32, %c0_i32_0 : i32, i32
  }
  func.func @transform_6(%arg0: i32) -> (i32, i32) {
    %c0_i32 = arith.constant 0 : i32
    %c0_i32_0 = arith.constant 0 : i32
    %c0_i32_1 = arith.constant 0 : i32
    return %c0_i32, %c0_i32_0 : i32, i32
  }
  func.func @transform_7(%arg0: i32) -> (i32, i32) {
    %c0_i32 = arith.constant 0 : i32
    %c0_i32_0 = arith.constant 0 : i32
    %c0_i32_1 = arith.constant 0 : i32
    return %c0_i32, %c0_i32_0 : i32, i32
  }
  func.func @transform_8(%arg0: i32) -> (i32, i32, i32) {
    %c0_i32 = arith.constant 0 : i32
    %c0_i32_0 = arith.constant 0 : i32
    %c0_i32_1 = arith.constant 0 : i32
    return %arg0, %c0_i32, %c0_i32_0 : i32, i32, i32
  }
}

</mosaic_0001>

<llo_original>
// kernel: basic_block_forward.1
$region0: #{basic_block_forward.1}
  #allocation0 [shape = 'u32[]', space=smem, size = 0x4, offset = 0x4, fixed_abs, tag = 'smem constant byte address 0x4 - core index']
  #allocation1 [shape = 'u32[144,128]{1,0:T(1,128)}', space=vmem, size = 0x12000, scoped, tag = 'internal scratch']
  #allocation2 [shape = 'bf16[328,128]{1,0:T(8,128)(2,1)}', space=vmem, size = 0x14800, scoped, tag = 'scratch operand']
  %s0 = inlined_call_operand.vmem [shape: bf16[2,342,128], index: 0, kind: input, shape index: {}]
  %s1 = inlined_call_operand.vmem [shape: f32[288,128], index: 1, kind: input, shape index: {}]
  %s2 = inlined_call_operand.vmem [shape: bf16[3,3,128,128], index: 2, kind: input, shape index: {}]
  %s3 = inlined_call_operand.vmem [shape: f32[1,128], index: 3, kind: input, shape index: {}]
  %s4 = inlined_call_operand.vmem [shape: bf16[3,3,128,128], index: 4, kind: input, shape index: {}]
  %s5 = inlined_call_operand.vmem [shape: f32[1,128], index: 5, kind: input, shape index: {}]
  %s6 = inlined_call_operand.vmem [shape: bf16[128,128], index: 6, kind: input, shape index: {}]
  %s7 = inlined_call_operand.vmem [shape: f32[1,128], index: 7, kind: input, shape index: {}]
  %s8 = inlined_call_operand.vmem [shape: bf16[2,288,128], index: 8, kind: output, shape index: {}]
  %s9 = sld [smem:[#allocation0]]
  $region65: #{basic_block_forward.1} parent=0
    _
  %s11 = ssub.s32 1, %s9
  %s12 = scalar_select 0, %s11, %s9
  loop: start=0, step=1, limit=4
  $region2: #{basic_block_forward.1} parent=0 // loop_pre_header
    _
  $region3: #{basic_block_forward.1} parent=0 // loop_header
    %s14 = sphi 0, %s18
    %p15 = scmp.ge.s32.totalorder %s14, 4
    %s24 = sphi 0, %s26
    %s27 = sphi 0, %s24
    %s28 = sphi 0, %s27
    %s44 = sphi 0, %s28
    %s48 = sphi 0, %s48
    %s50 = sphi 0, %s48
    %s51 = sphi 0, %s50
    %s65 = sphi 0, %s51
    %s69 = sphi 0, %s69
    %s71 = sphi 0, %s69
    %s72 = sphi 0, %s71
    %s86 = sphi 0, %s72
    %s90 = sphi 0, %s90
    %s92 = sphi 0, %s90
    %s93 = sphi 0, %s92
    %s107 = sphi 0, %s93
    %s111 = sphi 0, %s111
    %s113 = sphi 0, %s111
    %s114 = sphi 0, %s113
    %s128 = sphi 0, %s114
    %s132 = sphi 0, %s132
    %s134 = sphi 0, %s132
    %s135 = sphi 0, %s134
    %s149 = sphi 0, %s135
    %s153 = sphi 0, %s153
    %s155 = sphi 0, %s153
    %s156 = sphi 0, %s155
    %s170 = sphi 0, %s156
    %s174 = sphi 0, %s174
    %s176 = sphi 0, %s174
    %s177 = sphi 0, %s176
    %s191 = sphi 0, %s177
    %s197 = sphi 0, %s199
    %s200 = sphi 0, %s197
    %s201 = sphi 0, %s200
    %s217 = sphi 0, %s201
  $region4: #{basic_block_forward.1} parent=0 // loop_header_branch
    %17 = sbr.rel (%p15) target = $region8
  $region5: #{basic_block_forward.1} parent=0 // loop_body
    %s19 = ssub.s32 %s14, 1
    %s20 = ssub.s32 %s14, 2
    %s21 = sadd.s32 %s14, 1
    %s22 = ssub.s32 %s14, %s21
    %p23 = scmp.eq.s32.totalorder %s22, 0
    %s25 = sadd.s32 %s24, 1
    %s26 = scalar_select %p23, %s24, %s25
    %p29 = pneg %p23
    %p30 = scmp.eq.s32.totalorder %s14, 1
    %p31 = por %p29, %p30
    %p32 = scmp.ne.s32.totalorder %s24, %s27
    %p33 = scmp.eq.s32.totalorder %s14, 0
    %p34 = por %p32, %p33
    %p35 = scmp.ne.s32.totalorder %s24, %s27
    %p36 = scmp.eq.s32.totalorder %s19, 1
    %p37 = por %p35, %p36
    %p38 = scmp.ne.s32.totalorder %s27, %s28
    %p39 = scmp.eq.s32.totalorder %s19, 0
    %p40 = por %p38, %p39
    %p41 = scmp.ne.s32.totalorder %s27, %s28
    %p42 = scmp.eq.s32.totalorder %s20, 1
    %p43 = por %p41, %p42
    %p45 = scmp.ne.s32.totalorder %s28, %s44
    %p46 = scmp.eq.s32.totalorder %s20, 0
    %p47 = por %p45, %p46
    %s49 = sadd.s32 %s48, 1
    %p52 = scmp.eq.s32.totalorder %s14, 1
    %p53 = scmp.ne.s32.totalorder %s48, %s50
    %p54 = scmp.eq.s32.totalorder %s14, 0
    %p55 = por %p53, %p54
    %p56 = scmp.ne.s32.totalorder %s48, %s50
    %p57 = scmp.eq.s32.totalorder %s19, 1
    %p58 = por %p56, %p57
    %p59 = scmp.ne.s32.totalorder %s50, %s51
    %p60 = scmp.eq.s32.totalorder %s19, 0
    %p61 = por %p59, %p60
    %p62 = scmp.ne.s32.totalorder %s50, %s51
    %p63 = scmp.eq.s32.totalorder %s20, 1
    %p64 = por %p62, %p63
    %p66 = scmp.ne.s32.totalorder %s51, %s65
    %p67 = scmp.eq.s32.totalorder %s20, 0
    %p68 = por %p66, %p67
    %s70 = sadd.s32 %s69, 1
    %p73 = scmp.eq.s32.totalorder %s14, 1
    %p74 = scmp.ne.s32.totalorder %s69, %s71
    %p75 = scmp.eq.s32.totalorder %s14, 0
    %p76 = por %p74, %p75
    %p77 = scmp.ne.s32.totalorder %s69, %s71
    %p78 = scmp.eq.s32.totalorder %s19, 1
    %p79 = por %p77, %p78
    %p80 = scmp.ne.s32.totalorder %s71, %s72
    %p81 = scmp.eq.s32.totalorder %s19, 0
    %p82 = por %p80, %p81
    %p83 = scmp.ne.s32.totalorder %s71, %s72
    %p84 = scmp.eq.s32.totalorder %s20, 1
    %p85 = por %p83, %p84
    %p87 = scmp.ne.s32.totalorder %s72, %s86
    %p88 = scmp.eq.s32.totalorder %s20, 0
    %p89 = por %p87, %p88
    %s91 = sadd.s32 %s90, 1
    %p94 = scmp.eq.s32.totalorder %s14, 1
    %p95 = scmp.ne.s32.totalorder %s90, %s92
    %p96 = scmp.eq.s32.totalorder %s14, 0
    %p97 = por %p95, %p96
    %p98 = scmp.ne.s32.totalorder %s90, %s92
    %p99 = scmp.eq.s32.totalorder %s19, 1
    %p100 = por %p98, %p99
    %p101 = scmp.ne.s32.totalorder %s92, %s93
    %p102 = scmp.eq.s32.totalorder %s19, 0
    %p103 = por %p101, %p102
    %p104 = scmp.ne.s32.totalorder %s92, %s93
    %p105 = scmp.eq.s32.totalorder %s20, 1
    %p106 = por %p104, %p105
    %p108 = scmp.ne.s32.totalorder %s93, %s107
    %p109 = scmp.eq.s32.totalorder %s20, 0
    %p110 = por %p108, %p109
    %s112 = sadd.s32 %s111, 1
    %p115 = scmp.eq.s32.totalorder %s14, 1
    %p116 = scmp.ne.s32.totalorder %s111, %s113
    %p117 = scmp.eq.s32.totalorder %s14, 0
    %p118 = por %p116, %p117
    %p119 = scmp.ne.s32.totalorder %s111, %s113
    %p120 = scmp.eq.s32.totalorder %s19, 1
    %p121 = por %p119, %p120
    %p122 = scmp.ne.s32.totalorder %s113, %s114
    %p123 = scmp.eq.s32.totalorder %s19, 0
    %p124 = por %p122, %p123
    %p125 = scmp.ne.s32.totalorder %s113, %s114
    %p126 = scmp.eq.s32.totalorder %s20, 1
    %p127 = por %p125, %p126
    %p129 = scmp.ne.s32.totalorder %s114, %s128
    %p130 = scmp.eq.s32.totalorder %s20, 0
    %p131 = por %p129, %p130
    %s133 = sadd.s32 %s132, 1
    %p136 = scmp.eq.s32.totalorder %s14, 1
    %p137 = scmp.ne.s32.totalorder %s132, %s134
    %p138 = scmp.eq.s32.totalorder %s14, 0
    %p139 = por %p137, %p138
    %p140 = scmp.ne.s32.totalorder %s132, %s134
    %p141 = scmp.eq.s32.totalorder %s19, 1
    %p142 = por %p140, %p141
    %p143 = scmp.ne.s32.totalorder %s134, %s135
    %p144 = scmp.eq.s32.totalorder %s19, 0
    %p145 = por %p143, %p144
    %p146 = scmp.ne.s32.totalorder %s134, %s135
    %p147 = scmp.eq.s32.totalorder %s20, 1
    %p148 = por %p146, %p147
    %p150 = scmp.ne.s32.totalorder %s135, %s149
    %p151 = scmp.eq.s32.totalorder %s20, 0
    %p152 = por %p150, %p151
    %s154 = sadd.s32 %s153, 1
    %p157 = scmp.eq.s32.totalorder %s14, 1
    %p158 = scmp.ne.s32.totalorder %s153, %s155
    %p159 = scmp.eq.s32.totalorder %s14, 0
    %p160 = por %p158, %p159
    %p161 = scmp.ne.s32.totalorder %s153, %s155
    %p162 = scmp.eq.s32.totalorder %s19, 1
    %p163 = por %p161, %p162
    %p164 = scmp.ne.s32.totalorder %s155, %s156
    %p165 = scmp.eq.s32.totalorder %s19, 0
    %p166 = por %p164, %p165
    %p167 = scmp.ne.s32.totalorder %s155, %s156
    %p168 = scmp.eq.s32.totalorder %s20, 1
    %p169 = por %p167, %p168
    %p171 = scmp.ne.s32.totalorder %s156, %s170
    %p172 = scmp.eq.s32.totalorder %s20, 0
    %p173 = por %p171, %p172
    %s175 = sadd.s32 %s174, 1
    %p178 = scmp.eq.s32.totalorder %s14, 1
    %p179 = scmp.ne.s32.totalorder %s174, %s176
    %p180 = scmp.eq.s32.totalorder %s14, 0
    %p181 = por %p179, %p180
    %p182 = scmp.ne.s32.totalorder %s174, %s176
    %p183 = scmp.eq.s32.totalorder %s19, 1
    %p184 = por %p182, %p183
    %p185 = scmp.ne.s32.totalorder %s176, %s177
    %p186 = scmp.eq.s32.totalorder %s19, 0
    %p187 = por %p185, %p186
    %p188 = scmp.ne.s32.totalorder %s176, %s177
    %p189 = scmp.eq.s32.totalorder %s20, 1
    %p190 = por %p188, %p189
    %p192 = scmp.ne.s32.totalorder %s177, %s191
    %p193 = scmp.eq.s32.totalorder %s20, 0
    %p194 = por %p192, %p193
    %s195 = ssub.s32 %s14, %s21
    %p196 = scmp.eq.s32.totalorder %s195, 0
    %s198 = sadd.s32 %s197, 1
    %s199 = scalar_select %p196, %s197, %s198
    %p202 = pneg %p196
    %p203 = scmp.eq.s32.totalorder %s14, 1
    %p204 = por %p202, %p203
    %p205 = scmp.ne.s32.totalorder %s197, %s200
    %p206 = scmp.eq.s32.totalorder %s14, 0
    %p207 = por %p205, %p206
    %p208 = scmp.ne.s32.totalorder %s197, %s200
    %p209 = scmp.eq.s32.totalorder %s19, 1
    %p210 = por %p208, %p209
    %p211 = scmp.ne.s32.totalorder %s200, %s201
    %p212 = scmp.eq.s32.totalorder %s19, 0
    %p213 = por %p211, %p212
    %p214 = scmp.ne.s32.totalorder %s200, %s201
    %p215 = scmp.eq.s32.totalorder %s20, 1
    %p216 = por %p214, %p215
    %p218 = scmp.ne.s32.totalorder %s201, %s217
    %p219 = scmp.eq.s32.totalorder %s20, 0
    %p220 = por %p218, %p219
    %p221 = scmp.le.s32.totalorder 1, %s14
    %p222 = scmp.lt.s32.totalorder %s14, 3
    %p223 = pnand %p221, %p222
    %p224 = pneg %p223
    // Predicated region
    $region9: #{basic_block_forward.1} parent=5 // pred_check
      _
    $region10: #{basic_block_forward.1} parent=5 // pred_check_branch
      %226 = sbr.rel (%p223) target = $region12
    $region11: #{basic_block_forward.1} parent=5 // pred_region
      %s227 = ssub.s32 %s14, 1
      // Predicated region
      $region13: #{basic_block_forward.1} parent=11 // pred_check
        %p228 = pneg %p61
      $region14: #{basic_block_forward.1} parent=11 // pred_check_branch
        %230 = sbr.rel (%p228) target = $region16
      $region15: #{basic_block_forward.1} parent=11 // pred_region
        _
      $region16: #{basic_block_forward.1} parent=11 // pred_fallthru
        _
      // Predicated region
      $region17: #{basic_block_forward.1} parent=11 // pred_check
        %p231 = pneg %p82
      $region18: #{basic_block_forward.1} parent=11 // pred_check_branch
        %233 = sbr.rel (%p231) target = $region20
      $region19: #{basic_block_forward.1} parent=11 // pred_region
        _
      $region20: #{basic_block_forward.1} parent=11 // pred_fallthru
        _
      // Predicated region
      $region21: #{basic_block_forward.1} parent=11 // pred_check
        %p234 = pneg %p103
      $region22: #{basic_block_forward.1} parent=11 // pred_check_branch
        %236 = sbr.rel (%p234) target = $region24
      $region23: #{basic_block_forward.1} parent=11 // pred_region
        _
      $region24: #{basic_block_forward.1} parent=11 // pred_fallthru
        _
      // Predicated region
      $region25: #{basic_block_forward.1} parent=11 // pred_check
        %p237 = pneg %p124
      $region26: #{basic_block_forward.1} parent=11 // pred_check_branch
        %239 = sbr.rel (%p237) target = $region28
      $region27: #{basic_block_forward.1} parent=11 // pred_region
        _
      $region28: #{basic_block_forward.1} parent=11 // pred_fallthru
        _
      // Predicated region
      $region29: #{basic_block_forward.1} parent=11 // pred_check
        %p240 = pneg %p145
      $region30: #{basic_block_forward.1} parent=11 // pred_check_branch
        %242 = sbr.rel (%p240) target = $region32
      $region31: #{basic_block_forward.1} parent=11 // pred_region
        _
      $region32: #{basic_block_forward.1} parent=11 // pred_fallthru
        _
      // Predicated region
      $region33: #{basic_block_forward.1} parent=11 // pred_check
        %p243 = pneg %p166
      $region34: #{basic_block_forward.1} parent=11 // pred_check_branch
        %245 = sbr.rel (%p243) target = $region36
      $region35: #{basic_block_forward.1} parent=11 // pred_region
        _
      $region36: #{basic_block_forward.1} parent=11 // pred_fallthru
        _
      // Predicated region
      $region37: #{basic_block_forward.1} parent=11 // pred_check
        %p246 = pneg %p187
      $region38: #{basic_block_forward.1} parent=11 // pred_check_branch
        %248 = sbr.rel (%p246) target = $region40
      $region39: #{basic_block_forward.1} parent=11 // pred_region
        _
      $region40: #{basic_block_forward.1} parent=11 // pred_fallthru
        _
    $region12: #{basic_block_forward.1} parent=5 // pred_fallthru
      _
    %p249 = scmp.lt.s32.totalorder %s14, 2
    // Predicated region
    $region41: #{basic_block_forward.1} parent=5 // pred_check
      %p250 = pneg %p249
    $region42: #{basic_block_forward.1} parent=5 // pred_check_branch
      %252 = sbr.rel (%p250) target = $region44
    $region43: #{basic_block_forward.1} parent=5 // pred_region
      // Predicated region
      $region45: #{basic_block_forward.1} parent=43 // pred_check
        %p253 = pneg %p34
      $region46: #{basic_block_forward.1} parent=43 // pred_check_branch
        %255 = sbr.rel (%p253) target = $region48
      $region47: #{basic_block_forward.1} parent=43 // pred_region
        %p256 = scmp.lt.s32.totalorder %s14, 1
        %s257 = scalar_select %p256, %s14, 1
        %s258 = smul.addr %s257, 43
        %s259 = smul.addr %s258, 4
        %s260 = scalar_lea.vmem %s0, %s259
      $region48: #{basic_block_forward.1} parent=43 // pred_fallthru
        _
    $region44: #{basic_block_forward.1} parent=5 // pred_fallthru
      _
    %p261 = scmp.le.s32.totalorder 1, %s14
    %p262 = scmp.lt.s32.totalorder %s14, 3
    %p263 = pnand %p261, %p262
    %p264 = pneg %p263
    // Predicated region
    $region49: #{basic_block_forward.1} parent=5 // pred_check
      _
    $region50: #{basic_block_forward.1} parent=5 // pred_check_branch
      %266 = sbr.rel (%p263) target = $region52
    $region51: #{basic_block_forward.1} parent=5 // pred_region
      %s267 = ssub.s32 %s14, 1
      %p268 = scmp.lt.s32.totalorder %s19, 1
      %s269 = scalar_select %p268, %s19, 1
      %s270 = smul.addr %s269, 43
      %s271 = smul.addr %s270, 4
      %s272 = scalar_lea.vmem %s0, %s271
      %p273 = pneg %p40
      %p274 = pneg %p37
      %p275 = pneg %p61
      %p276 = pneg %p58
      %p277 = pneg %p82
      %p278 = pneg %p79
      %p279 = pneg %p103
      %p280 = pneg %p100
      %p281 = pneg %p124
      %p282 = pneg %p121
      %p283 = pneg %p145
      %p284 = pneg %p142
      %p285 = pneg %p166
      %p286 = pneg %p163
      %p287 = pneg %p187
      %p288 = pneg %p184
      %p289 = pneg %p213
      %p290 = pneg %p210
      %p291 = scmp.lt.s32.totalorder %s19, 1
      %s292 = scalar_select %p291, %s19, 1
      %s293 = smul.addr %s292, 36
      %s294 = smul.addr %s293, 4
      %s295 = scalar_lea.vmem %s8, %s294
      %p296 = scmp.lt.s32.totalorder %s19, 1
      %s297 = scalar_select %p296, %s19, 1
      %s298 = smul.addr %s297, 43
      %s299 = smul.addr %s298, 4
      %s300 = scalar_lea.vmem %s0, %s299
      %p301 = scmp.lt.s32.totalorder %s19, 1
      %s302 = scalar_select %p301, %s19, 1
      %s303 = smul.addr %s302, 36
      %s304 = smul.addr %s303, 4
      %s305 = scalar_lea.vmem %s8, %s304
      %v307 = vld [vmem:[%s300 + $0x8] sm:$0xe]
      %v308 = vld [vmem:[%s300 + $0xc] sm:$0xf]
      %v309 = vld [vmem:[%s300 + $0x10] sm:$0xf]
      %v310 = vld [vmem:[%s300 + $0x14] sm:$0xf]
      %v311 = vld [vmem:[%s300 + $0x18] sm:$0xf]
      %v312 = vld [vmem:[%s300 + $0x1c] sm:$0xf]
      %v313 = vld [vmem:[%s300 + $0x20] sm:$0xf]
      %v314 = vld [vmem:[%s300 + $0x24] sm:$0xf]
      %v315 = vld [vmem:[%s300 + $0x28] sm:$0xf]
      %v316 = vld [vmem:[%s300 + $0x2c] sm:$0xf]
      %v317 = vld [vmem:[%s300 + $0x30] sm:$0xf]
      %v318 = vld [vmem:[%s300 + $0x34] sm:$0xf]
      %v319 = vld [vmem:[%s300 + $0x38] sm:$0xf]
      %v320 = vld [vmem:[%s300 + $0x3c] sm:$0xf]
      %v321 = vld [vmem:[%s300 + $0x40] sm:$0xf]
      %v322 = vld [vmem:[%s300 + $0x44] sm:$0xf]
      %v323 = vld [vmem:[%s300 + $0x48] sm:$0xf]
      %v324 = vld [vmem:[%s300 + $0x4c] sm:$0xf]
      %v325 = vld [vmem:[%s300 + $0x50] sm:$0xf]
      %v326 = vld [vmem:[%s300 + $0x54] sm:$0xf]
      %v327 = vld [vmem:[%s300 + $0x58] sm:$0xf]
      %v328 = vld [vmem:[%s300 + $0x5c] sm:$0xf]
      %v329 = vld [vmem:[%s300 + $0x60] sm:$0xf]
      %v330 = vld [vmem:[%s300 + $0x64] sm:$0xf]
      %v331 = vld [vmem:[%s300 + $0x68] sm:$0xf]
      %v332 = vld [vmem:[%s300 + $0x6c] sm:$0xf]
      %v333 = vld [vmem:[%s300 + $0x70] sm:$0xf]
      %v334 = vld [vmem:[%s300 + $0x74] sm:$0xf]
      %v335 = vld [vmem:[%s300 + $0x78] sm:$0xf]
      %v336 = vld [vmem:[%s300 + $0x7c] sm:$0xf]
      %v337 = vld [vmem:[%s300 + $0x80] sm:$0xf]
      %v338 = vld [vmem:[%s300 + $0x84] sm:$0xf]
      %v339 = vld [vmem:[%s300 + $0x88] sm:$0xf]
      %v340 = vld [vmem:[%s300 + $0x8c] sm:$0xf]
      %v341 = vld [vmem:[%s300 + $0x90] sm:$0xf]
      %v342 = vld [vmem:[%s300 + $0x94] sm:$0xf]
      %v343 = vld [vmem:[%s300 + $0x98] sm:$0x3]
      %v344 = vld [vmem:[%s300] sm:$0xf]
      %v345 = vld [vmem:[%s300 + $0x4] sm:$0xf]
      %v346 = vld [vmem:[%s300 + $0x8] sm:$0xf]
      %v347 = vld [vmem:[%s2] sm:$0xf]
      %v348 = vld [vmem:[%s2 + $0x4] sm:$0xf]
      %v349 = vld [vmem:[%s2 + $0x8] sm:$0xf]
      %v350 = vld [vmem:[%s2 + $0xc] sm:$0xf]
      %v351 = vld [vmem:[%s2 + $0x10] sm:$0xf]
      %v352 = vld [vmem:[%s2 + $0x14] sm:$0xf]
      %v353 = vld [vmem:[%s2 + $0x18] sm:$0xf]
      %v354 = vld [vmem:[%s2 + $0x1c] sm:$0xf]
      %v355 = vld [vmem:[%s2 + $0x20] sm:$0xf]
      %v356 = vld [vmem:[%s2 + $0x24] sm:$0xf]
      %v357 = vld [vmem:[%s2 + $0x28] sm:$0xf]
      %v358 = vld [vmem:[%s2 + $0x2c] sm:$0xf]
      %v359 = vld [vmem:[%s2 + $0x30] sm:$0xf]
      %v360 = vld [vmem:[%s2 + $0x34] sm:$0xf]
      %v361 = vld [vmem:[%s2 + $0x38] sm:$0xf]
      %v362 = vld [vmem:[%s2 + $0x3c] sm:$0xf]
      %v363 = vld [vmem:[%s3] sm:$0x1]
      %v365 = vlaneseq
      %v366 = vshrl.u32 %v365, 7
      %v367 = vsub.s32 0, %v366
      %v368 = vrot.slane %v363, %v367
      %v406 = vunpack.c.l.b16 %v344
      %v407 = vunpack.c.l.b16 %v345
      %v408 = vunpack.c.l.b16 %v346
      %v409 = vunpack.c.l.b16 %v308
      %v410 = vunpack.c.l.b16 %v309
      %v411 = vunpack.c.l.b16 %v310
      %v412 = vunpack.c.l.b16 %v311
      %v413 = vunpack.c.l.b16 %v312
      %v414 = vunpack.c.l.b16 %v313
      %v415 = vunpack.c.l.b16 %v314
      %v416 = vunpack.c.l.b16 %v315
      %v417 = vunpack.c.l.b16 %v316
      %v418 = vunpack.c.l.b16 %v317
      %v419 = vunpack.c.l.b16 %v318
      %v420 = vunpack.c.l.b16 %v319
      %v421 = vunpack.c.l.b16 %v320
      %v422 = vunpack.c.l.b16 %v321
      %v423 = vunpack.c.l.b16 %v322
      %v424 = vunpack.c.l.b16 %v323
      %v425 = vunpack.c.l.b16 %v324
      %v426 = vunpack.c.l.b16 %v325
      %v427 = vunpack.c.l.b16 %v326
      %v428 = vunpack.c.l.b16 %v327
      %v429 = vunpack.c.l.b16 %v328
      %v430 = vunpack.c.l.b16 %v329
      %v431 = vunpack.c.l.b16 %v330
      %v432 = vunpack.c.l.b16 %v331
      %v433 = vunpack.c.l.b16 %v332
      %v434 = vunpack.c.l.b16 %v333
      %v435 = vunpack.c.l.b16 %v334
      %v436 = vunpack.c.l.b16 %v335
      %v437 = vunpack.c.l.b16 %v336
      %v438 = vunpack.c.l.b16 %v337
      %v439 = vunpack.c.l.b16 %v338
      %v440 = vunpack.c.l.b16 %v339
      %v441 = vunpack.c.l.b16 %v340
      %v442 = vpack.c.b16 %v407, %v406
      %v443 = vpack.c.b16 %v409, %v408
      %v444 = vpack.c.b16 %v411, %v410
      %v445 = vpack.c.b16 %v413, %v412
      %v446 = vpack.c.b16 %v415, %v414
      %v447 = vpack.c.b16 %v417, %v416
      %v448 = vpack.c.b16 %v419, %v418
      %v449 = vpack.c.b16 %v421, %v420
      %v450 = vpack.c.b16 %v423, %v422
      %v451 = vpack.c.b16 %v425, %v424
      %v452 = vpack.c.b16 %v427, %v426
      %v453 = vpack.c.b16 %v429, %v428
      %v454 = vpack.c.b16 %v431, %v430
      %v455 = vpack.c.b16 %v433, %v432
      %v456 = vpack.c.b16 %v435, %v434
      %v457 = vpack.c.b16 %v437, %v436
      %v458 = vpack.c.b16 %v439, %v438
      %v459 = vpack.c.b16 %v441, %v440
      %v494 = vunpack.c.l.b16 %v347
      %v495 = vunpack.c.l.b16 %v348
      %v496 = vunpack.c.l.b16 %v349
      %v497 = vunpack.c.l.b16 %v350
      %v498 = vunpack.c.l.b16 %v351
      %v499 = vunpack.c.l.b16 %v352
      %v500 = vunpack.c.l.b16 %v353
      %v501 = vunpack.c.l.b16 %v354
      %v502 = vunpack.c.l.b16 %v355
      %v503 = vunpack.c.l.b16 %v356
      %v504 = vunpack.c.l.b16 %v357
      %v505 = vunpack.c.l.b16 %v358
      %v506 = vunpack.c.l.b16 %v359
      %v507 = vunpack.c.l.b16 %v360
      %v508 = vunpack.c.l.b16 %v361
      %v509 = vunpack.c.l.b16 %v362
      %v510 = vpack.c.b16 %v495, %v494
      %v511 = vpack.c.b16 %v497, %v496
      %v512 = vpack.c.b16 %v499, %v498
      %v513 = vpack.c.b16 %v501, %v500
      %v514 = vpack.c.b16 %v503, %v502
      %v515 = vpack.c.b16 %v505, %v504
      %v516 = vpack.c.b16 %v507, %v506
      %v517 = vpack.c.b16 %v509, %v508
      %526 = vmatprep.subr.bf16.mxu0 0
      %527 = vmatpush1.bf16.msra.mxu0 %v510
      %528 = vmatprep.subr.bf16.mxu0 0
      %529 = vmatpush1.bf16.msra.mxu0 %v511
      %530 = vmatprep.subr.bf16.mxu0 0
      %531 = vmatpush1.bf16.msra.mxu0 %v512
      %532 = vmatprep.subr.bf16.mxu0 0
      %533 = vmatpush1.bf16.msra.mxu0 %v513
      %534 = vmatprep.subr.bf16.mxu0 0
      %535 = vmatpush1.bf16.msra.mxu0 %v514
      %536 = vmatprep.subr.bf16.mxu0 0
      %537 = vmatpush1.bf16.msra.mxu0 %v515
      %538 = vmatprep.subr.bf16.mxu0 0
      %539 = vmatpush1.bf16.msra.mxu0 %v516
      %540 = vmatprep.subr.bf16.mxu0 0
      %541 = vmatpush1.bf16.msra.mxu0 %v517
      %542 = vmatprep.subr.bf16.mxu0 0
      %543 = vmatpush1.bf16.msra.mxu0 0
      %544 = vmatprep.subr.bf16.mxu0 0
      %545 = vmatpush1.bf16.msra.mxu0 0
      %546 = vmatprep.subr.bf16.mxu0 0
      %547 = vmatpush1.bf16.msra.mxu0 0
      %548 = vmatprep.subr.bf16.mxu0 0
      %549 = vmatpush1.bf16.msra.mxu0 0
      %550 = vmatprep.subr.bf16.mxu0 0
      %551 = vmatpush1.bf16.msra.mxu0 0
      %552 = vmatprep.subr.bf16.mxu0 0
      %553 = vmatpush1.bf16.msra.mxu0 0
      %554 = vmatprep.subr.bf16.mxu0 0
      %555 = vmatpush1.bf16.msra.mxu0 0
      %556 = vmatprep.subr.bf16.mxu0 0
      %557 = vmatpush1.bf16.msra.mxu0 0
      %558 = vmatprep.mubr.bf16.mxu0 0
      %559 = vmatmul.mubr.bf16.gmra.mrb[0].mxu0 %v442
      %v560 = vpop.f32.mrb[0].mxu0
      %v561 = vadd.f32 %v368, %v560
      %v562 = vpop.f32.mrb[0].mxu0
      %v563 = vpop.f32.mrb[0].mxu0
      %v564 = vadd.f32 %v368, %v563
      %v565 = vpop.f32.mrb[0].mxu0
      %566 = vmatprep.mubr.bf16.mxu0 0
      %567 = vmatmul.mubr.bf16.gmra.mrb[0].mxu0 %v443
      %v568 = vpop.f32.mrb[0].mxu0
      %v569 = vadd.f32 %v368, %v568
      %v570 = vpop.f32.mrb[0].mxu0
      %v571 = vpop.f32.mrb[0].mxu0
      %v572 = vadd.f32 %v368, %v571
      %v573 = vpop.f32.mrb[0].mxu0
      %574 = vmatprep.mubr.bf16.mxu0 0
      %575 = vmatmul.mubr.bf16.gmra.mrb[0].mxu0 %v444
      %v576 = vpop.f32.mrb[0].mxu0
      %v577 = vadd.f32 %v368, %v576
      %v578 = vpop.f32.mrb[0].mxu0
      %v579 = vpop.f32.mrb[0].mxu0
      %v580 = vadd.f32 %v368, %v579
      %v581 = vpop.f32.mrb[0].mxu0
      %582 = vmatprep.mubr.bf16.mxu0 0
      %583 = vmatmul.mubr.bf16.gmra.mrb[0].mxu0 %v445
      %v584 = vpop.f32.mrb[0].mxu0
      %v585 = vadd.f32 %v368, %v584
      %v586 = vpop.f32.mrb[0].mxu0
      %v587 = vpop.f32.mrb[0].mxu0
      %v588 = vadd.f32 %v368, %v587
      %v589 = vpop.f32.mrb[0].mxu0
      %590 = vmatprep.mubr.bf16.mxu0 0
      %591 = vmatmul.mubr.bf16.gmra.mrb[0].mxu0 %v446
      %v592 = vpop.f32.mrb[0].mxu0
      %v593 = vadd.f32 %v368, %v592
      %v594 = vpop.f32.mrb[0].mxu0
      %v595 = vpop.f32.mrb[0].mxu0
      %v596 = vadd.f32 %v368, %v595
      %v597 = vpop.f32.mrb[0].mxu0
      %598 = vmatprep.mubr.bf16.mxu0 0
      %599 = vmatmul.mubr.bf16.gmra.mrb[0].mxu0 %v447
      %v600 = vpop.f32.mrb[0].mxu0
      %v601 = vadd.f32 %v368, %v600
      %v602 = vpop.f32.mrb[0].mxu0
      %v603 = vpop.f32.mrb[0].mxu0
      %v604 = vadd.f32 %v368, %v603
      %v605 = vpop.f32.mrb[0].mxu0
      %606 = vmatprep.mubr.bf16.mxu0 0
      %607 = vmatmul.mubr.bf16.gmra.mrb[0].mxu0 %v448
      %v608 = vpop.f32.mrb[0].mxu0
      %v609 = vadd.f32 %v368, %v608
      %v610 = vpop.f32.mrb[0].mxu0
      %v611 = vpop.f32.mrb[0].mxu0
      %v612 = vadd.f32 %v368, %v611
      %v613 = vpop.f32.mrb[0].mxu0
      %614 = vmatprep.mubr.bf16.mxu0 0
      %615 = vmatmul.mubr.bf16.gmra.mrb[0].mxu0 %v449
      %v616 = vpop.f32.mrb[0].mxu0
      %v617 = vadd.f32 %v368, %v616
      %v618 = vpop.f32.mrb[0].mxu0
      %v619 = vpop.f32.mrb[0].mxu0
      %v620 = vadd.f32 %v368, %v619
      %v621 = vpop.f32.mrb[0].mxu0
      %622 = vmatprep.mubr.bf16.mxu0 0
      %623 = vmatmul.mubr.bf16.gmra.mrb[0].mxu0 %v450
      %v624 = vpop.f32.mrb[0].mxu0
      %v625 = vadd.f32 %v368, %v624
      %v626 = vpop.f32.mrb[0].mxu0
      %v627 = vpop.f32.mrb[0].mxu0
      %v628 = vadd.f32 %v368, %v627
      %v629 = vpop.f32.mrb[0].mxu0
      %630 = vmatprep.mubr.bf16.mxu0 0
      %631 = vmatmul.mubr.bf16.gmra.mrb[0].mxu0 %v451
      %v632 = vpop.f32.mrb[0].mxu0
      %v633 = vadd.f32 %v368, %v632
      %v634 = vpop.f32.mrb[0].mxu0
      %v635 = vpop.f32.mrb[0].mxu0
      %v636 = vadd.f32 %v368, %v635
      %v637 = vpop.f32.mrb[0].mxu0
      %638 = vmatprep.mubr.bf16.mxu0 0
      %639 = vmatmul.mubr.bf16.gmra.mrb[0].mxu0 %v452
      %v640 = vpop.f32.mrb[0].mxu0
      %v641 = vadd.f32 %v368, %v640
      %v642 = vpop.f32.mrb[0].mxu0
      %v643 = vpop.f32.mrb[0].mxu0
      %v644 = vadd.f32 %v368, %v643
      %v645 = vpop.f32.mrb[0].mxu0
      %646 = vmatprep.mubr.bf16.mxu0 0
      %647 = vmatmul.mubr.bf16.gmra.mrb[0].mxu0 %v453
      %v648 = vpop.f32.mrb[0].mxu0
      %v649 = vadd.f32 %v368, %v648
      %v650 = vpop.f32.mrb[0].mxu0
      %v651 = vpop.f32.mrb[0].mxu0
      %v652 = vadd.f32 %v368, %v651
      %v653 = vpop.f32.mrb[0].mxu0
      %654 = vmatprep.mubr.bf16.mxu0 0
      %655 = vmatmul.mubr.bf16.gmra.mrb[0].mxu0 %v454
      %v656 = vpop.f32.mrb[0].mxu0
      %v657 = vadd.f32 %v368, %v656
      %v658 = vpop.f32.mrb[0].mxu0
      %v659 = vpop.f32.mrb[0].mxu0
      %v660 = vadd.f32 %v368, %v659
      %v661 = vpop.f32.mrb[0].mxu0
      %662 = vmatprep.mubr.bf16.mxu0 0
      %663 = vmatmul.mubr.bf16.gmra.mrb[0].mxu0 %v455
      %v664 = vpop.f32.mrb[0].mxu0
      %v665 = vadd.f32 %v368, %v664
      %v666 = vpop.f32.mrb[0].mxu0
      %v667 = vpop.f32.mrb[0].mxu0
      %v668 = vadd.f32 %v368, %v667
      %v669 = vpop.f32.mrb[0].mxu0
      %670 = vmatprep.mubr.bf16.mxu0 0
      %671 = vmatmul.mubr.bf16.gmra.mrb[0].mxu0 %v456
      %v672 = vpop.f32.mrb[0].mxu0
      %v673 = vadd.f32 %v368, %v672
      %v674 = vpop.f32.mrb[0].mxu0
      %v675 = vpop.f32.mrb[0].mxu0
      %v676 = vadd.f32 %v368, %v675
      %v677 = vpop.f32.mrb[0].mxu0
      %678 = vmatprep.mubr.bf16.mxu0 0
      %679 = vmatmul.mubr.bf16.gmra.mrb[0].mxu0 %v457
      %v680 = vpop.f32.mrb[0].mxu0
      %v681 = vadd.f32 %v368, %v680
      %v682 = vpop.f32.mrb[0].mxu0
      %v683 = vpop.f32.mrb[0].mxu0
      %v684 = vadd.f32 %v368, %v683
      %v685 = vpop.f32.mrb[0].mxu0
      %686 = vmatprep.mubr.bf16.mxu0 0
      %687 = vmatmul.mubr.bf16.gmra.mrb[0].mxu0 %v458
      %v688 = vpop.f32.mrb[0].mxu0
      %v689 = vadd.f32 %v368, %v688
      %v690 = vpop.f32.mrb[0].mxu0
      %v691 = vpop.f32.mrb[0].mxu0
      %v692 = vadd.f32 %v368, %v691
      %v693 = vpop.f32.mrb[0].mxu0
      %694 = vmatprep.mubr.bf16.mxu0 0
      %695 = vmatmul.mubr.bf16.gmra.mrb[0].mxu0 %v459
      %v696 = vpop.f32.mrb[0].mxu0
      %v697 = vadd.f32 %v368, %v696
      %v698 = vpop.f32.mrb[0].mxu0
      %v699 = vpop.f32.mrb[0].mxu0
      %v700 = vadd.f32 %v368, %v699
      %v701 = vpop.f32.mrb[0].mxu0
      %702 = vdwg.mxu0
      %v703 = vld [vmem:[%s300] sm:$0xf]
      %v704 = vld [vmem:[%s300 + $0x4] sm:$0xf]
      %v705 = vld [vmem:[%s300 + $0x8] sm:$0xf]
      %v706 = vld [vmem:[%s300 + $0xc] sm:$0xf]
      %v707 = vld [vmem:[%s300 + $0x10] sm:$0xf]
      %v708 = vld [vmem:[%s300 + $0x14] sm:$0xf]
      %v709 = vld [vmem:[%s300 + $0x18] sm:$0xf]
      %v710 = vld [vmem:[%s300 + $0x1c] sm:$0xf]
      %v711 = vld [vmem:[%s300 + $0x20] sm:$0xf]
      %v712 = vld [vmem:[%s300 + $0x24] sm:$0xf]
      %v713 = vld [vmem:[%s300 + $0x28] sm:$0xf]
      %v714 = vld [vmem:[%s300 + $0x2c] sm:$0xf]
      %v715 = vld [vmem:[%s300 + $0x30] sm:$0xf]
      %v716 = vld [vmem:[%s300 + $0x34] sm:$0xf]
      %v717 = vld [vmem:[%s300 + $0x38] sm:$0xf]
      %v718 = vld [vmem:[%s300 + $0x3c] sm:$0xf]
      %v719 = vld [vmem:[%s300 + $0x40] sm:$0xf]
      %v720 = vld [vmem:[%s300 + $0x44] sm:$0xf]
      %v721 = vld [vmem:[%s300 + $0x48] sm:$0xf]
      %v722 = vld [vmem:[%s300 + $0x4c] sm:$0xf]
      %v723 = vld [vmem:[%s300 + $0x50] sm:$0xf]
      %v724 = vld [vmem:[%s300 + $0x54] sm:$0xf]
      %v725 = vld [vmem:[%s300 + $0x58] sm:$0xf]
      %v726 = vld [vmem:[%s300 + $0x5c] sm:$0xf]
      %v727 = vld [vmem:[%s300 + $0x60] sm:$0xf]
      %v728 = vld [vmem:[%s300 + $0x64] sm:$0xf]
      %v729 = vld [vmem:[%s300 + $0x68] sm:$0xf]
      %v730 = vld [vmem:[%s300 + $0x6c] sm:$0xf]
      %v731 = vld [vmem:[%s300 + $0x70] sm:$0xf]
      %v732 = vld [vmem:[%s300 + $0x74] sm:$0xf]
      %v733 = vld [vmem:[%s300 + $0x78] sm:$0xf]
      %v734 = vld [vmem:[%s300 + $0x7c] sm:$0xf]
      %v735 = vld [vmem:[%s300 + $0x80] sm:$0xf]
      %v736 = vld [vmem:[%s300 + $0x84] sm:$0xf]
      %v737 = vld [vmem:[%s300 + $0x88] sm:$0xf]
      %v738 = vld [vmem:[%s300 + $0x8c] sm:$0xf]
      %v739 = vld [vmem:[%s300 + $0x90] sm:$0x1]
      %s740 = scalar_lea.vmem %s2, 64
      %v741 = vld [vmem:[%s740] sm:$0xf]
      %v742 = vld [vmem:[%s740 + $0x4] sm:$0xf]
      %v743 = vld [vmem:[%s740 + $0x8] sm:$0xf]
      %v744 = vld [vmem:[%s740 + $0xc] sm:$0xf]
      %v745 = vld [vmem:[%s740 + $0x10] sm:$0xf]
      %v746 = vld [vmem:[%s740 + $0x14] sm:$0xf]
      %v747 = vld [vmem:[%s740 + $0x18] sm:$0xf]
      %v748 = vld [vmem:[%s740 + $0x1c] sm:$0xf]
      %v749 = vld [vmem:[%s740 + $0x20] sm:$0xf]
      %v750 = vld [vmem:[%s740 + $0x24] sm:$0xf]
      %v751 = vld [vmem:[%s740 + $0x28] sm:$0xf]
      %v752 = vld [vmem:[%s740 + $0x2c] sm:$0xf]
      %v753 = vld [vmem:[%s740 + $0x30] sm:$0xf]
      %v754 = vld [vmem:[%s740 + $0x34] sm:$0xf]
      %v755 = vld [vmem:[%s740 + $0x38] sm:$0xf]
      %v756 = vld [vmem:[%s740 + $0x3c] sm:$0xf]
      %v794 = vunpack.c.l.b16 %v703
      %v795 = vunpack.c.l.b16 %v704
      %v796 = vunpack.c.l.b16 %v705
      %v797 = vunpack.c.l.b16 %v706
      %v798 = vunpack.c.l.b16 %v707
      %v799 = vunpack.c.l.b16 %v708
      %v800 = vunpack.c.l.b16 %v709
      %v801 = vunpack.c.l.b16 %v710
      %v802 = vunpack.c.l.b16 %v711
      %v803 = vunpack.c.l.b16 %v712
      %v804 = vunpack.c.l.b16 %v713
      %v805 = vunpack.c.l.b16 %v714
      %v806 = vunpack.c.l.b16 %v715
      %v807 = vunpack.c.l.b16 %v716
      %v808 = vunpack.c.l.b16 %v717
      %v809 = vunpack.c.l.b16 %v718
      %v810 = vunpack.c.l.b16 %v719
      %v811 = vunpack.c.l.b16 %v720
      %v812 = vunpack.c.l.b16 %v721
      %v813 = vunpack.c.l.b16 %v722
      %v814 = vunpack.c.l.b16 %v723
      %v815 = vunpack.c.l.b16 %v724
      %v816 = vunpack.c.l.b16 %v725
      %v817 = vunpack.c.l.b16 %v726
      %v818 = vunpack.c.l.b16 %v727
      %v819 = vunpack.c.l.b16 %v728
      %v820 = vunpack.c.l.b16 %v729
      %v821 = vunpack.c.l.b16 %v730
      %v822 = vunpack.c.l.b16 %v731
      %v823 = vunpack.c.l.b16 %v732
      %v824 = vunpack.c.l.b16 %v733
      %v825 = vunpack.c.l.b16 %v734
      %v826 = vunpack.c.l.b16 %v735
      %v827 = vunpack.c.l.b16 %v736
      %v828 = vunpack.c.l.b16 %v737
      %v829 = vunpack.c.l.b16 %v738
      %v830 = vunpack.c.l.b16 %v739
      %v831 = vpack.c.b16 %v795, %v794
      %v832 = vpack.c.b16 %v797, %v796
      %v833 = vpack.c.b16 %v799, %v798
      %v834 = vpack.c.b16 %v801, %v800
      %v835 = vpack.c.b16 %v803, %v802
      %v836 = vpack.c.b16 %v805, %v804
      %v837 = vpack.c.b16 %v807, %v806
      %v838 = vpack.c.b16 %v809, %v808
      %v839 = vpack.c.b16 %v811, %v810
      %v840 = vpack.c.b16 %v813, %v812
      %v841 = vpack.c.b16 %v815, %v814
      %v842 = vpack.c.b16 %v817, %v816
      %v843 = vpack.c.b16 %v819, %v818
      %v844 = vpack.c.b16 %v821, %v820
      %v845 = vpack.c.b16 %v823, %v822
      %v846 = vpack.c.b16 %v825, %v824
      %v847 = vpack.c.b16 %v827, %v826
      %v848 = vpack.c.b16 %v829, %v828
      %v849 = vpack.c.b16 %v830, %v830
      %vm850 = vsmask.f32 7424
      %v852 = vshrl.u32 %v831, 16
      %v854 = vshll.u32 %v831, 16
      %v856 = vrot.slane %v854, 1
      %v857 = vor.u32 %v852, %v856
      %v859 = vshll.u32 %v832, 16
      %v861 = vrot.slane %v859, 1
      %v862 = vsel %vm850, %v857, %v861
      %v863 = vshrl.u32 %v832, 16
      %v865 = vor.u32 %v863, %v861
      %v867 = vshll.u32 %v833, 16
      %v869 = vrot.slane %v867, 1
      %v870 = vsel %vm850, %v865, %v869
      %v871 = vshrl.u32 %v833, 16
      %v873 = vor.u32 %v871, %v869
      %v875 = vshll.u32 %v834, 16
      %v877 = vrot.slane %v875, 1
      %v878 = vsel %vm850, %v873, %v877
      %v879 = vshrl.u32 %v834, 16
      %v881 = vor.u32 %v879, %v877
      %v883 = vshll.u32 %v835, 16
      %v885 = vrot.slane %v883, 1
      %v886 = vsel %vm850, %v881, %v885
      %v887 = vshrl.u32 %v835, 16
      %v889 = vor.u32 %v887, %v885
      %v891 = vshll.u32 %v836, 16
      %v893 = vrot.slane %v891, 1
      %v894 = vsel %vm850, %v889, %v893
      %v895 = vshrl.u32 %v836, 16
      %v897 = vor.u32 %v895, %v893
      %v899 = vshll.u32 %v837, 16
      %v901 = vrot.slane %v899, 1
      %v902 = vsel %vm850, %v897, %v901
      %v903 = vshrl.u32 %v837, 16
      %v905 = vor.u32 %v903, %v901
      %v907 = vshll.u32 %v838, 16
      %v909 = vrot.slane %v907, 1
      %v910 = vsel %vm850, %v905, %v909
      %v911 = vshrl.u32 %v838, 16
      %v913 = vor.u32 %v911, %v909
      %v915 = vshll.u32 %v839, 16
      %v917 = vrot.slane %v915, 1
      %v918 = vsel %vm850, %v913, %v917
      %v919 = vshrl.u32 %v839, 16
      %v921 = vor.u32 %v919, %v917
      %v923 = vshll.u32 %v840, 16
      %v925 = vrot.slane %v923, 1
      %v926 = vsel %vm850, %v921, %v925
      %v927 = vshrl.u32 %v840, 16
      %v929 = vor.u32 %v927, %v925
      %v931 = vshll.u32 %v841, 16
      %v933 = vrot.slane %v931, 1
      %v934 = vsel %vm850, %v929, %v933
      %v935 = vshrl.u32 %v841, 16
      %v937 = vor.u32 %v935, %v933
      %v939 = vshll.u32 %v842, 16
      %v941 = vrot.slane %v939, 1
      %v942 = vsel %vm850, %v937, %v941
      %v943 = vshrl.u32 %v842, 16
      %v945 = vor.u32 %v943, %v941
      %v947 = vshll.u32 %v843, 16
      %v949 = vrot.slane %v947, 1
      %v950 = vsel %vm850, %v945, %v949
      %v951 = vshrl.u32 %v843, 16
      %v953 = vor.u32 %v951, %v949
      %v955 = vshll.u32 %v844, 16
      %v957 = vrot.slane %v955, 1
      %v958 = vsel %vm850, %v953, %v957
      %v959 = vshrl.u32 %v844, 16
      %v961 = vor.u32 %v959, %v957
      %v963 = vshll.u32 %v845, 16
      %v965 = vrot.slane %v963, 1
      %v966 = vsel %vm850, %v961, %v965
      %v967 = vshrl.u32 %v845, 16
      %v969 = vor.u32 %v967, %v965
      %v971 = vshll.u32 %v846, 16
      %v973 = vrot.slane %v971, 1
      %v974 = vsel %vm850, %v969, %v973
      %v975 = vshrl.u32 %v846, 16
      %v977 = vor.u32 %v975, %v973
      %v979 = vshll.u32 %v847, 16
      %v981 = vrot.slane %v979, 1
      %v982 = vsel %vm850, %v977, %v981
      %v983 = vshrl.u32 %v847, 16
      %v985 = vor.u32 %v983, %v981
      %v987 = vshll.u32 %v848, 16
      %v989 = vrot.slane %v987, 1
      %v990 = vsel %vm850, %v985, %v989
      %v991 = vshrl.u32 %v848, 16
      %v993 = vor.u32 %v991, %v989
      %v995 = vshll.u32 %v849, 16
      %v997 = vrot.slane %v995, 1
      %v998 = vsel %vm850, %v993, %v997
      %v1033 = vunpack.c.l.b16 %v741
      %v1034 = vunpack.c.l.b16 %v742
      %v1035 = vunpack.c.l.b16 %v743
      %v1036 = vunpack.c.l.b16 %v744
      %v1037 = vunpack.c.l.b16 %v745
      %v1038 = vunpack.c.l.b16 %v746
      %v1039 = vunpack.c.l.b16 %v747
      %v1040 = vunpack.c.l.b16 %v748
      %v1041 = vunpack.c.l.b16 %v749
      %v1042 = vunpack.c.l.b16 %v750
      %v1043 = vunpack.c.l.b16 %v751
      %v1044 = vunpack.c.l.b16 %v752
      %v1045 = vunpack.c.l.b16 %v753
      %v1046 = vunpack.c.l.b16 %v754
      %v1047 = vunpack.c.l.b16 %v755
      %v1048 = vunpack.c.l.b16 %v756
      %v1049 = vpack.c.b16 %v1034, %v1033
      %v1050 = vpack.c.b16 %v1036, %v1035
      %v1051 = vpack.c.b16 %v1038, %v1037
      %v1052 = vpack.c.b16 %v1040, %v1039
      %v1053 = vpack.c.b16 %v1042, %v1041
      %v1054 = vpack.c.b16 %v1044, %v1043
      %v1055 = vpack.c.b16 %v1046, %v1045
      %v1056 = vpack.c.b16 %v1048, %v1047
      %1065 = vmatprep.subr.bf16.mxu0 0
      %1066 = vmatpush1.bf16.msra.mxu0 %v1049
      %1067 = vmatprep.subr.bf16.mxu0 0
      %1068 = vmatpush1.bf16.msra.mxu0 %v1050
      %1069 = vmatprep.subr.bf16.mxu0 0
      %1070 = vmatpush1.bf16.msra.mxu0 %v1051
      %1071 = vmatprep.subr.bf16.mxu0 0
      %1072 = vmatpush1.bf16.msra.mxu0 %v1052
      %1073 = vmatprep.subr.bf16.mxu0 0
      %1074 = vmatpush1.bf16.msra.mxu0 %v1053
      %1075 = vmatprep.subr.bf16.mxu0 0
      %1076 = vmatpush1.bf16.msra.mxu0 %v1054
      %1077 = vmatprep.subr.bf16.mxu0 0
      %1078 = vmatpush1.bf16.msra.mxu0 %v1055
      %1079 = vmatprep.subr.bf16.mxu0 0
      %1080 = vmatpush1.bf16.msra.mxu0 %v1056
      %1081 = vmatprep.subr.bf16.mxu0 0
      %1082 = vmatpush1.bf16.msra.mxu0 0
      %1083 = vmatprep.subr.bf16.mxu0 0
      %1084 = vmatpush1.bf16.msra.mxu0 0
      %1085 = vmatprep.subr.bf16.mxu0 0
      %1086 = vmatpush1.bf16.msra.mxu0 0
      %1087 = vmatprep.subr.bf16.mxu0 0
      %1088 = vmatpush1.bf16.msra.mxu0 0
      %1089 = vmatprep.subr.bf16.mxu0 0
      %1090 = vmatpush1.bf16.msra.mxu0 0
      %1091 = vmatprep.subr.bf16.mxu0 0
      %1092 = vmatpush1.bf16.msra.mxu0 0
      %1093 = vmatprep.subr.bf16.mxu0 0
      %1094 = vmatpush1.bf16.msra.mxu0 0
      %1095 = vmatprep.subr.bf16.mxu0 0
      %1096 = vmatpush1.bf16.msra.mxu0 0
      %1097 = vmatprep.mubr.bf16.mxu0 0
      %1098 = vmatmul.mubr.bf16.gmra.mrb[0].mxu0 %v862
      %v1099 = vpop.f32.mrb[0].mxu0
      %v1100 = vadd.f32 0.0, %v1099
      %v1101 = vpop.f32.mrb[0].mxu0
      %v1102 = vpop.f32.mrb[0].mxu0
      %v1103 = vadd.f32 0.0, %v1102
      %v1104 = vpop.f32.mrb[0].mxu0
      %1105 = vmatprep.mubr.bf16.mxu0 0
      %1106 = vmatmul.mubr.bf16.gmra.mrb[0].mxu0 %v870
      %v1107 = vpop.f32.mrb[0].mxu0
      %v1108 = vadd.f32 0.0, %v1107
      %v1109 = vpop.f32.mrb[0].mxu0
      %v1110 = vpop.f32.mrb[0].mxu0
      %v1111 = vadd.f32 0.0, %v1110
      %v1112 = vpop.f32.mrb[0].mxu0
      %1113 = vmatprep.mubr.bf16.mxu0 0
      %1114 = vmatmul.mubr.bf16.gmra.mrb[0].mxu0 %v878
      %v1115 = vpop.f32.mrb[0].mxu0
      %v1116 = vadd.f32 0.0, %v1115
      %v1117 = vpop.f32.mrb[0].mxu0
      %v1118 = vpop.f32.mrb[0].mxu0
      %v1119 = vadd.f32 0.0, %v1118
      %v1120 = vpop.f32.mrb[0].mxu0
      %1121 = vmatprep.mubr.bf16.mxu0 0
      %1122 = vmatmul.mubr.bf16.gmra.mrb[0].mxu0 %v886
      %v1123 = vpop.f32.mrb[0].mxu0
      %v1124 = vadd.f32 0.0, %v1123
      %v1125 = vpop.f32.mrb[0].mxu0
      %v1126 = vpop.f32.mrb[0].mxu0
      %v1127 = vadd.f32 0.0, %v1126
      %v1128 = vpop.f32.mrb[0].mxu0
      %1129 = vmatprep.mubr.bf16.mxu0 0
      %1130 = vmatmul.mubr.bf16.gmra.mrb[0].mxu0 %v894
      %v1131 = vpop.f32.mrb[0].mxu0
      %v1132 = vadd.f32 0.0, %v1131
      %v1133 = vpop.f32.mrb[0].mxu0
      %v1134 = vpop.f32.mrb[0].mxu0
      %v1135 = vadd.f32 0.0, %v1134
      %v1136 = vpop.f32.mrb[0].mxu0
      %1137 = vmatprep.mubr.bf16.mxu0 0
      %1138 = vmatmul.mubr.bf16.gmra.mrb[0].mxu0 %v902
      %v1139 = vpop.f32.mrb[0].mxu0
      %v1140 = vadd.f32 0.0, %v1139
      %v1141 = vpop.f32.mrb[0].mxu0
      %v1142 = vpop.f32.mrb[0].mxu0
      %v1143 = vadd.f32 0.0, %v1142
      %v1144 = vpop.f32.mrb[0].mxu0
      %1145 = vmatprep.mubr.bf16.mxu0 0
      %1146 = vmatmul.mubr.bf16.gmra.mrb[0].mxu0 %v910
      %v1147 = vpop.f32.mrb[0].mxu0
      %v1148 = vadd.f32 0.0, %v1147
      %v1149 = vpop.f32.mrb[0].mxu0
      %v1150 = vpop.f32.mrb[0].mxu0
      %v1151 = vadd.f32 0.0, %v1150
      %v1152 = vpop.f32.mrb[0].mxu0
      %1153 = vmatprep.mubr.bf16.mxu0 0
      %1154 = vmatmul.mubr.bf16.gmra.mrb[0].mxu0 %v918
      %v1155 = vpop.f32.mrb[0].mxu0
      %v1156 = vadd.f32 0.0, %v1155
      %v1157 = vpop.f32.mrb[0].mxu0
      %v1158 = vpop.f32.mrb[0].mxu0
      %v1159 = vadd.f32 0.0, %v1158
      %v1160 = vpop.f32.mrb[0].mxu0
      %1161 = vmatprep.mubr.bf16.mxu0 0
      %1162 = vmatmul.mubr.bf16.gmra.mrb[0].mxu0 %v926
      %v1163 = vpop.f32.mrb[0].mxu0
      %v1164 = vadd.f32 0.0, %v1163
      %v1165 = vpop.f32.mrb[0].mxu0
      %v1166 = vpop.f32.mrb[0].mxu0
      %v1167 = vadd.f32 0.0, %v1166
      %v1168 = vpop.f32.mrb[0].mxu0
      %1169 = vmatprep.mubr.bf16.mxu0 0
      %1170 = vmatmul.mubr.bf16.gmra.mrb[0].mxu0 %v934
      %v1171 = vpop.f32.mrb[0].mxu0
      %v1172 = vadd.f32 0.0, %v1171
      %v1173 = vpop.f32.mrb[0].mxu0
      %v1174 = vpop.f32.mrb[0].mxu0
      %v1175 = vadd.f32 0.0, %v1174
      %v1176 = vpop.f32.mrb[0].mxu0
      %1177 = vmatprep.mubr.bf16.mxu0 0
      %1178 = vmatmul.mubr.bf16.gmra.mrb[0].mxu0 %v942
      %v1179 = vpop.f32.mrb[0].mxu0
      %v1180 = vadd.f32 0.0, %v1179
      %v1181 = vpop.f32.mrb[0].mxu0
      %v1182 = vpop.f32.mrb[0].mxu0
      %v1183 = vadd.f32 0.0, %v1182
      %v1184 = vpop.f32.mrb[0].mxu0
      %1185 = vmatprep.mubr.bf16.mxu0 0
      %1186 = vmatmul.mubr.bf16.gmra.mrb[0].mxu0 %v950
      %v1187 = vpop.f32.mrb[0].mxu0
      %v1188 = vadd.f32 0.0, %v1187
      %v1189 = vpop.f32.mrb[0].mxu0
      %v1190 = vpop.f32.mrb[0].mxu0
      %v1191 = vadd.f32 0.0, %v1190
      %v1192 = vpop.f32.mrb[0].mxu0
      %1193 = vmatprep.mubr.bf16.mxu0 0
      %1194 = vmatmul.mubr.bf16.gmra.mrb[0].mxu0 %v958
      %v1195 = vpop.f32.mrb[0].mxu0
      %v1196 = vadd.f32 0.0, %v1195
      %v1197 = vpop.f32.mrb[0].mxu0
      %v1198 = vpop.f32.mrb[0].mxu0
      %v1199 = vadd.f32 0.0, %v1198
      %v1200 = vpop.f32.mrb[0].mxu0
      %1201 = vmatprep.mubr.bf16.mxu0 0
      %1202 = vmatmul.mubr.bf16.gmra.mrb[0].mxu0 %v966
      %v1203 = vpop.f32.mrb[0].mxu0
      %v1204 = vadd.f32 0.0, %v1203
      %v1205 = vpop.f32.mrb[0].mxu0
      %v1206 = vpop.f32.mrb[0].mxu0
      %v1207 = vadd.f32 0.0, %v1206
      %v1208 = vpop.f32.mrb[0].mxu0
      %1209 = vmatprep.mubr.bf16.mxu0 0
      %1210 = vmatmul.mubr.bf16.gmra.mrb[0].mxu0 %v974
      %v1211 = vpop.f32.mrb[0].mxu0
      %v1212 = vadd.f32 0.0, %v1211
      %v1213 = vpop.f32.mrb[0].mxu0
      %v1214 = vpop.f32.mrb[0].mxu0
      %v1215 = vadd.f32 0.0, %v1214
      %v1216 = vpop.f32.mrb[0].mxu0
      %1217 = vmatprep.mubr.bf16.mxu0 0
      %1218 = vmatmul.mubr.bf16.gmra.mrb[0].mxu0 %v982
      %v1219 = vpop.f32.mrb[0].mxu0
      %v1220 = vadd.f32 0.0, %v1219
      %v1221 = vpop.f32.mrb[0].mxu0
      %v1222 = vpop.f32.mrb[0].mxu0
      %v1223 = vadd.f32 0.0, %v1222
      %v1224 = vpop.f32.mrb[0].mxu0
      %1225 = vmatprep.mubr.bf16.mxu0 0
      %1226 = vmatmul.mubr.bf16.gmra.mrb[0].mxu0 %v990
      %v1227 = vpop.f32.mrb[0].mxu0
      %v1228 = vadd.f32 0.0, %v1227
      %v1229 = vpop.f32.mrb[0].mxu0
      %v1230 = vpop.f32.mrb[0].mxu0
      %v1231 = vadd.f32 0.0, %v1230
      %v1232 = vpop.f32.mrb[0].mxu0
      %1233 = vmatprep.mubr.bf16.mxu0 0
      %1234 = vmatmul.mubr.bf16.gmra.mrb[0].mxu0 %v998
      %v1235 = vpop.f32.mrb[0].mxu0
      %v1236 = vadd.f32 0.0, %v1235
      %v1237 = vpop.f32.mrb[0].mxu0
      %v1238 = vpop.f32.mrb[0].mxu0
      %v1239 = vadd.f32 0.0, %v1238
      %v1240 = vpop.f32.mrb[0].mxu0
      %1241 = vdwg.mxu0
      %v1242 = vadd.f32 %v561, %v1100
      %v1243 = vadd.f32 %v564, %v1103
      %v1244 = vadd.f32 %v569, %v1108
      %v1245 = vadd.f32 %v572, %v1111
      %v1246 = vadd.f32 %v577, %v1116
      %v1247 = vadd.f32 %v580, %v1119
      %v1248 = vadd.f32 %v585, %v1124
      %v1249 = vadd.f32 %v588, %v1127
      %v1250 = vadd.f32 %v593, %v1132
      %v1251 = vadd.f32 %v596, %v1135
      %v1252 = vadd.f32 %v601, %v1140
      %v1253 = vadd.f32 %v604, %v1143
      %v1254 = vadd.f32 %v609, %v1148
      %v1255 = vadd.f32 %v612, %v1151
      %v1256 = vadd.f32 %v617, %v1156
      %v1257 = vadd.f32 %v620, %v1159
      %v1258 = vadd.f32 %v625, %v1164
      %v1259 = vadd.f32 %v628, %v1167
      %v1260 = vadd.f32 %v633, %v1172
      %v1261 = vadd.f32 %v636, %v1175
      %v1262 = vadd.f32 %v641, %v1180
      %v1263 = vadd.f32 %v644, %v1183
      %v1264 = vadd.f32 %v649, %v1188
      %v1265 = vadd.f32 %v652, %v1191
      %v1266 = vadd.f32 %v657, %v1196
      %v1267 = vadd.f32 %v660, %v1199
      %v1268 = vadd.f32 %v665, %v1204
      %v1269 = vadd.f32 %v668, %v1207
      %v1270 = vadd.f32 %v673, %v1212
      %v1271 = vadd.f32 %v676, %v1215
      %v1272 = vadd.f32 %v681, %v1220
      %v1273 = vadd.f32 %v684, %v1223
      %v1274 = vadd.f32 %v689, %v1228
      %v1275 = vadd.f32 %v692, %v1231
      %v1276 = vadd.f32 %v697, %v1236
      %v1277 = vadd.f32 %v700, %v1239
      %v1278 = vld [vmem:[%s300] sm:$0xe]
      %s1279 = scalar_lea.vmem %s2, 128
      %v1280 = vld [vmem:[%s1279] sm:$0xf]
      %v1281 = vld [vmem:[%s1279 + $0x4] sm:$0xf]
      %v1282 = vld [vmem:[%s1279 + $0x8] sm:$0xf]
      %v1283 = vld [vmem:[%s1279 + $0xc] sm:$0xf]
      %v1284 = vld [vmem:[%s1279 + $0x10] sm:$0xf]
      %v1285 = vld [vmem:[%s1279 + $0x14] sm:$0xf]
      %v1286 = vld [vmem:[%s1279 + $0x18] sm:$0xf]
      %v1287 = vld [vmem:[%s1279 + $0x1c] sm:$0xf]
      %v1288 = vld [vmem:[%s1279 + $0x20] sm:$0xf]
      %v1289 = vld [vmem:[%s1279 + $0x24] sm:$0xf]
      %v1290 = vld [vmem:[%s1279 + $0x28] sm:$0xf]
      %v1291 = vld [vmem:[%s1279 + $0x2c] sm:$0xf]
      %v1292 = vld [vmem:[%s1279 + $0x30] sm:$0xf]
      %v1293 = vld [vmem:[%s1279 + $0x34] sm:$0xf]
      %v1294 = vld [vmem:[%s1279 + $0x38] sm:$0xf]
      %v1295 = vld [vmem:[%s1279 + $0x3c] sm:$0xf]
      %v1297 = vunpack.c.l.b16 %v1278
      %v1298 = vpack.c.b16 %v795, %v1297
      %vm1299 = vcmask 1046528
      %v1300 = vrot.slane %v1298, 1
      %v1301 = vrot.slane %v832, 1
      %v1302 = vsel %vm1299, %v1300, %v1301
      %v1303 = vrot.slane %v833, 1
      %v1304 = vsel %vm1299, %v1301, %v1303
      %v1305 = vrot.slane %v834, 1
      %v1306 = vsel %vm1299, %v1303, %v1305
      %v1307 = vrot.slane %v835, 1
      %v1308 = vsel %vm1299, %v1305, %v1307
      %v1309 = vrot.slane %v836, 1
      %v1310 = vsel %vm1299, %v1307, %v1309
      %v1311 = vrot.slane %v837, 1
      %v1312 = vsel %vm1299, %v1309, %v1311
      %v1313 = vrot.slane %v838, 1
      %v1314 = vsel %vm1299, %v1311, %v1313
      %v1315 = vrot.slane %v839, 1
      %v1316 = vsel %vm1299, %v1313, %v1315
      %v1317 = vrot.slane %v840, 1
      %v1318 = vsel %vm1299, %v1315, %v1317
      %v1319 = vrot.slane %v841, 1
      %v1320 = vsel %vm1299, %v1317, %v1319
      %v1321 = vrot.slane %v842, 1
      %v1322 = vsel %vm1299, %v1319, %v1321
      %v1323 = vrot.slane %v843, 1
      %v1324 = vsel %vm1299, %v1321, %v1323
      %v1325 = vrot.slane %v844, 1
      %v1326 = vsel %vm1299, %v1323, %v1325
      %v1327 = vrot.slane %v845, 1
      %v1328 = vsel %vm1299, %v1325, %v1327
      %v1329 = vrot.slane %v846, 1
      %v1330 = vsel %vm1299, %v1327, %v1329
      %v1331 = vrot.slane %v847, 1
      %v1332 = vsel %vm1299, %v1329, %v1331
      %v1333 = vrot.slane %v848, 1
      %v1334 = vsel %vm1299, %v1331, %v1333
      %v1335 = vrot.slane %v849, 1
      %v1336 = vsel %vm1299, %v1333, %v1335
      %v1371 = vunpack.c.l.b16 %v1280
      %v1372 = vunpack.c.l.b16 %v1281
      %v1373 = vunpack.c.l.b16 %v1282
      %v1374 = vunpack.c.l.b16 %v1283
      %v1375 = vunpack.c.l.b16 %v1284
      %v1376 = vunpack.c.l.b16 %v1285
      %v1377 = vunpack.c.l.b16 %v1286
      %v1378 = vunpack.c.l.b16 %v1287
      %v1379 = vunpack.c.l.b16 %v1288
      %v1380 = vunpack.c.l.b16 %v1289
      %v1381 = vunpack.c.l.b16 %v1290
      %v1382 = vunpack.c.l.b16 %v1291
      %v1383 = vunpack.c.l.b16 %v1292
      %v1384 = vunpack.c.l.b16 %v1293
      %v1385 = vunpack.c.l.b16 %v1294
      %v1386 = vunpack.c.l.b16 %v1295
      %v1387 = vpack.c.b16 %v1372, %v1371
      %v1388 = vpack.c.b16 %v1374, %v1373
      %v1389 = vpack.c.b16 %v1376, %v1375
      %v1390 = vpack.c.b16 %v1378, %v1377
      %v1391 = vpack.c.b16 %v1380, %v1379
      %v1392 = vpack.c.b16 %v1382, %v1381
      %v1393 = vpack.c.b16 %v1384, %v1383
      %v1394 = vpack.c.b16 %v1386, %v1385
      %1403 = vmatprep.subr.bf16.mxu0 0
      %1404 = vmatpush1.bf16.msra.mxu0 %v1387
      %1405 = vmatprep.subr.bf16.mxu0 0
      %1406 = vmatpush1.bf16.msra.mxu0 %v1388
      %1407 = vmatprep.subr.bf16.mxu0 0
      %1408 = vmatpush1.bf16.msra.mxu0 %v1389
      %1409 = vmatprep.subr.bf16.mxu0 0
      %1410 = vmatpush1.bf16.msra.mxu0 %v1390
      %1411 = vmatprep.subr.bf16.mxu0 0
      %1412 = vmatpush1.bf16.msra.mxu0 %v1391
      %1413 = vmatprep.subr.bf16.mxu0 0
      %1414 = vmatpush1.bf16.msra.mxu0 %v1392
      %1415 = vmatprep.subr.bf16.mxu0 0
      %1416 = vmatpush1.bf16.msra.mxu0 %v1393
      %1417 = vmatprep.subr.bf16.mxu0 0
      %1418 = vmatpush1.bf16.msra.mxu0 %v1394
      %1419 = vmatprep.subr.bf16.mxu0 0
      %1420 = vmatpush1.bf16.msra.mxu0 0
      %1421 = vmatprep.subr.bf16.mxu0 0
      %1422 = vmatpush1.bf16.msra.mxu0 0
      %1423 = vmatprep.subr.bf16.mxu0 0
      %1424 = vmatpush1.bf16.msra.mxu0 0
      %1425 = vmatprep.subr.bf16.mxu0 0
      %1426 = vmatpush1.bf16.msra.mxu0 0
      %1427 = vmatprep.subr.bf16.mxu0 0
      %1428 = vmatpush1.bf16.msra.mxu0 0
      %1429 = vmatprep.subr.bf16.mxu0 0
      %1430 = vmatpush1.bf16.msra.mxu0 0
      %1431 = vmatprep.subr.bf16.mxu0 0
      %1432 = vmatpush1.bf16.msra.mxu0 0
      %1433 = vmatprep.subr.bf16.mxu0 0
      %1434 = vmatpush1.bf16.msra.mxu0 0
      %1435 = vmatprep.mubr.bf16.mxu0 0
      %1436 = vmatmul.mubr.bf16.gmra.mrb[0].mxu0 %v1302
      %v1437 = vpop.f32.mrb[0].mxu0
      %v1438 = vadd.f32 0.0, %v1437
      %v1439 = vpop.f32.mrb[0].mxu0
      %v1440 = vpop.f32.mrb[0].mxu0
      %v1441 = vadd.f32 0.0, %v1440
      %v1442 = vpop.f32.mrb[0].mxu0
      %1443 = vmatprep.mubr.bf16.mxu0 0
      %1444 = vmatmul.mubr.bf16.gmra.mrb[0].mxu0 %v1304
      %v1445 = vpop.f32.mrb[0].mxu0
      %v1446 = vadd.f32 0.0, %v1445
      %v1447 = vpop.f32.mrb[0].mxu0
      %v1448 = vpop.f32.mrb[0].mxu0
      %v1449 = vadd.f32 0.0, %v1448
      %v1450 = vpop.f32.mrb[0].mxu0
      %1451 = vmatprep.mubr.bf16.mxu0 0
      %1452 = vmatmul.mubr.bf16.gmra.mrb[0].mxu0 %v1306
      %v1453 = vpop.f32.mrb[0].mxu0
      %v1454 = vadd.f32 0.0, %v1453
      %v1455 = vpop.f32.mrb[0].mxu0
      %v1456 = vpop.f32.mrb[0].mxu0
      %v1457 = vadd.f32 0.0, %v1456
      %v1458 = vpop.f32.mrb[0].mxu0
      %1459 = vmatprep.mubr.bf16.mxu0 0
      %1460 = vmatmul.mubr.bf16.gmra.mrb[0].mxu0 %v1308
      %v1461 = vpop.f32.mrb[0].mxu0
      %v1462 = vadd.f32 0.0, %v1461
      %v1463 = vpop.f32.mrb[0].mxu0
      %v1464 = vpop.f32.mrb[0].mxu0
      %v1465 = vadd.f32 0.0, %v1464
      %v1466 = vpop.f32.mrb[0].mxu0
      %1467 = vmatprep.mubr.bf16.mxu0 0
      %1468 = vmatmul.mubr.bf16.gmra.mrb[0].mxu0 %v1310
      %v1469 = vpop.f32.mrb[0].mxu0
      %v1470 = vadd.f32 0.0, %v1469
      %v1471 = vpop.f32.mrb[0].mxu0
      %v1472 = vpop.f32.mrb[0].mxu0
      %v1473 = vadd.f32 0.0, %v1472
      %v1474 = vpop.f32.mrb[0].mxu0
      %1475 = vmatprep.mubr.bf16.mxu0 0
      %1476 = vmatmul.mubr.bf16.gmra.mrb[0].mxu0 %v1312
      %v1477 = vpop.f32.mrb[0].mxu0
      %v1478 = vadd.f32 0.0, %v1477
      %v1479 = vpop.f32.mrb[0].mxu0
      %v1480 = vpop.f32.mrb[0].mxu0
      %v1481 = vadd.f32 0.0, %v1480
      %v1482 = vpop.f32.mrb[0].mxu0
      %1483 = vmatprep.mubr.bf16.mxu0 0
      %1484 = vmatmul.mubr.bf16.gmra.mrb[0].mxu0 %v1314
      %v1485 = vpop.f32.mrb[0].mxu0
      %v1486 = vadd.f32 0.0, %v1485
      %v1487 = vpop.f32.mrb[0].mxu0
      %v1488 = vpop.f32.mrb[0].mxu0
      %v1489 = vadd.f32 0.0, %v1488
      %v1490 = vpop.f32.mrb[0].mxu0
      %1491 = vmatprep.mubr.bf16.mxu0 0
      %1492 = vmatmul.mubr.bf16.gmra.mrb[0].mxu0 %v1316
      %v1493 = vpop.f32.mrb[0].mxu0
      %v1494 = vadd.f32 0.0, %v1493
      %v1495 = vpop.f32.mrb[0].mxu0
      %v1496 = vpop.f32.mrb[0].mxu0
      %v1497 = vadd.f32 0.0, %v1496
      %v1498 = vpop.f32.mrb[0].mxu0
      %1499 = vmatprep.mubr.bf16.mxu0 0
      %1500 = vmatmul.mubr.bf16.gmra.mrb[0].mxu0 %v1318
      %v1501 = vpop.f32.mrb[0].mxu0
      %v1502 = vadd.f32 0.0, %v1501
      %v1503 = vpop.f32.mrb[0].mxu0
      %v1504 = vpop.f32.mrb[0].mxu0
      %v1505 = vadd.f32 0.0, %v1504
      %v1506 = vpop.f32.mrb[0].mxu0
      %1507 = vmatprep.mubr.bf16.mxu0 0
      %1508 = vmatmul.mubr.bf16.gmra.mrb[0].mxu0 %v1320
      %v1509 = vpop.f32.mrb[0].mxu0
      %v1510 = vadd.f32 0.0, %v1509
      %v1511 = vpop.f32.mrb[0].mxu0
      %v1512 = vpop.f32.mrb[0].mxu0
      %v1513 = vadd.f32 0.0, %v1512
      %v1514 = vpop.f32.mrb[0].mxu0
      %1515 = vmatprep.mubr.bf16.mxu0 0
      %1516 = vmatmul.mubr.bf16.gmra.mrb[0].mxu0 %v1322
      %v1517 = vpop.f32.mrb[0].mxu0
      %v1518 = vadd.f32 0.0, %v1517
      %v1519 = vpop.f32.mrb[0].mxu0
      %v1520 = vpop.f32.mrb[0].mxu0
      %v1521 = vadd.f32 0.0, %v1520
      %v1522 = vpop.f32.mrb[0].mxu0
      %1523 = vmatprep.mubr.bf16.mxu0 0
      %1524 = vmatmul.mubr.bf16.gmra.mrb[0].mxu0 %v1324
      %v1525 = vpop.f32.mrb[0].mxu0
      %v1526 = vadd.f32 0.0, %v1525
      %v1527 = vpop.f32.mrb[0].mxu0
      %v1528 = vpop.f32.mrb[0].mxu0
      %v1529 = vadd.f32 0.0, %v1528
      %v1530 = vpop.f32.mrb[0].mxu0
      %1531 = vmatprep.mubr.bf16.mxu0 0
      %1532 = vmatmul.mubr.bf16.gmra.mrb[0].mxu0 %v1326
      %v1533 = vpop.f32.mrb[0].mxu0
      %v1534 = vadd.f32 0.0, %v1533
      %v1535 = vpop.f32.mrb[0].mxu0
      %v1536 = vpop.f32.mrb[0].mxu0
      %v1537 = vadd.f32 0.0, %v1536
      %v1538 = vpop.f32.mrb[0].mxu0
      %1539 = vmatprep.mubr.bf16.mxu0 0
      %1540 = vmatmul.mubr.bf16.gmra.mrb[0].mxu0 %v1328
      %v1541 = vpop.f32.mrb[0].mxu0
      %v1542 = vadd.f32 0.0, %v1541
      %v1543 = vpop.f32.mrb[0].mxu0
      %v1544 = vpop.f32.mrb[0].mxu0
      %v1545 = vadd.f32 0.0, %v1544
      %v1546 = vpop.f32.mrb[0].mxu0
      %1547 = vmatprep.mubr.bf16.mxu0 0
      %1548 = vmatmul.mubr.bf16.gmra.mrb[0].mxu0 %v1330
      %v1549 = vpop.f32.mrb[0].mxu0
      %v1550 = vadd.f32 0.0, %v1549
      %v1551 = vpop.f32.mrb[0].mxu0
      %v1552 = vpop.f32.mrb[0].mxu0
      %v1553 = vadd.f32 0.0, %v1552
      %v1554 = vpop.f32.mrb[0].mxu0
      %1555 = vmatprep.mubr.bf16.mxu0 0
      %1556 = vmatmul.mubr.bf16.gmra.mrb[0].mxu0 %v1332
      %v1557 = vpop.f32.mrb[0].mxu0
      %v1558 = vadd.f32 0.0, %v1557
      %v1559 = vpop.f32.mrb[0].mxu0
      %v1560 = vpop.f32.mrb[0].mxu0
      %v1561 = vadd.f32 0.0, %v1560
      %v1562 = vpop.f32.mrb[0].mxu0
      %1563 = vmatprep.mubr.bf16.mxu0 0
      %1564 = vmatmul.mubr.bf16.gmra.mrb[0].mxu0 %v1334
      %v1565 = vpop.f32.mrb[0].mxu0
      %v1566 = vadd.f32 0.0, %v1565
      %v1567 = vpop.f32.mrb[0].mxu0
      %v1568 = vpop.f32.mrb[0].mxu0
      %v1569 = vadd.f32 0.0, %v1568
      %v1570 = vpop.f32.mrb[0].mxu0
      %1571 = vmatprep.mubr.bf16.mxu0 0
      %1572 = vmatmul.mubr.bf16.gmra.mrb[0].mxu0 %v1336
      %v1573 = vpop.f32.mrb[0].mxu0
      %v1574 = vadd.f32 0.0, %v1573
      %v1575 = vpop.f32.mrb[0].mxu0
      %v1576 = vpop.f32.mrb[0].mxu0
      %v1577 = vadd.f32 0.0, %v1576
      %v1578 = vpop.f32.mrb[0].mxu0
      %1579 = vdwg.mxu0
      %v1580 = vadd.f32 %v1242, %v1438
      %v1581 = vadd.f32 %v1243, %v1441
      %v1582 = vadd.f32 %v1244, %v1446
      %v1583 = vadd.f32 %v1245, %v1449
      %v1584 = vadd.f32 %v1246, %v1454
      %v1585 = vadd.f32 %v1247, %v1457
      %v1586 = vadd.f32 %v1248, %v1462
      %v1587 = vadd.f32 %v1249, %v1465
      %v1588 = vadd.f32 %v1250, %v1470
      %v1589 = vadd.f32 %v1251, %v1473
      %v1590 = vadd.f32 %v1252, %v1478
      %v1591 = vadd.f32 %v1253, %v1481
      %v1592 = vadd.f32 %v1254, %v1486
      %v1593 = vadd.f32 %v1255, %v1489
      %v1594 = vadd.f32 %v1256, %v1494
      %v1595 = vadd.f32 %v1257, %v1497
      %v1596 = vadd.f32 %v1258, %v1502
      %v1597 = vadd.f32 %v1259, %v1505
      %v1598 = vadd.f32 %v1260, %v1510
      %v1599 = vadd.f32 %v1261, %v1513
      %v1600 = vadd.f32 %v1262, %v1518
      %v1601 = vadd.f32 %v1263, %v1521
      %v1602 = vadd.f32 %v1264, %v1526
      %v1603 = vadd.f32 %v1265, %v1529
      %v1604 = vadd.f32 %v1266, %v1534
      %v1605 = vadd.f32 %v1267, %v1537
      %v1606 = vadd.f32 %v1268, %v1542
      %v1607 = vadd.f32 %v1269, %v1545
      %v1608 = vadd.f32 %v1270, %v1550
      %v1609 = vadd.f32 %v1271, %v1553
      %v1610 = vadd.f32 %v1272, %v1558
      %v1611 = vadd.f32 %v1273, %v1561
      %v1612 = vadd.f32 %v1274, %v1566
      %v1613 = vadd.f32 %v1275, %v1569
      %v1614 = vadd.f32 %v1276, %v1574
      %v1615 = vadd.f32 %v1277, %v1577
      %v1616 = vld [vmem:[%s300 + $0x98] sm:$0x1]
      %s1617 = scalar_lea.vmem %s2, 192
      %v1618 = vld [vmem:[%s1617] sm:$0xf]
      %v1619 = vld [vmem:[%s1617 + $0x4] sm:$0xf]
      %v1620 = vld [vmem:[%s1617 + $0x8] sm:$0xf]
      %v1621 = vld [vmem:[%s1617 + $0xc] sm:$0xf]
      %v1622 = vld [vmem:[%s1617 + $0x10] sm:$0xf]
      %v1623 = vld [vmem:[%s1617 + $0x14] sm:$0xf]
      %v1624 = vld [vmem:[%s1617 + $0x18] sm:$0xf]
      %v1625 = vld [vmem:[%s1617 + $0x1c] sm:$0xf]
      %v1626 = vld [vmem:[%s1617 + $0x20] sm:$0xf]
      %v1627 = vld [vmem:[%s1617 + $0x24] sm:$0xf]
      %v1628 = vld [vmem:[%s1617 + $0x28] sm:$0xf]
      %v1629 = vld [vmem:[%s1617 + $0x2c] sm:$0xf]
      %v1630 = vld [vmem:[%s1617 + $0x30] sm:$0xf]
      %v1631 = vld [vmem:[%s1617 + $0x34] sm:$0xf]
      %v1632 = vld [vmem:[%s1617 + $0x38] sm:$0xf]
      %v1633 = vld [vmem:[%s1617 + $0x3c] sm:$0xf]
      %v1638 = vunpack.c.l.b16 %v307
      %v1639 = vunpack.c.l.b16 %v341
      %v1640 = vunpack.c.l.b16 %v342
      %v1641 = vunpack.c.l.b16 %v1616
      %v1642 = vpack.c.b16 %v409, %v1638
      %v1643 = vpack.c.b16 %v1640, %v1639
      %v1644 = vpack.c.b16 %v1641, %v1641
      %v1645 = vrot.slane %v1642, 1
      %v1646 = vrot.slane %v444, 1
      %v1647 = vsel %vm1299, %v1645, %v1646
      %v1648 = vrot.slane %v445, 1
      %v1649 = vsel %vm1299, %v1646, %v1648
      %v1650 = vrot.slane %v446, 1
      %v1651 = vsel %vm1299, %v1648, %v1650
      %v1652 = vrot.slane %v447, 1
      %v1653 = vsel %vm1299, %v1650, %v1652
      %v1654 = vrot.slane %v448, 1
      %v1655 = vsel %vm1299, %v1652, %v1654
      %v1656 = vrot.slane %v449, 1
      %v1657 = vsel %vm1299, %v1654, %v1656
      %v1658 = vrot.slane %v450, 1
      %v1659 = vsel %vm1299, %v1656, %v1658
      %v1660 = vrot.slane %v451, 1
      %v1661 = vsel %vm1299, %v1658, %v1660
      %v1662 = vrot.slane %v452, 1
      %v1663 = vsel %vm1299, %v1660, %v1662
      %v1664 = vrot.slane %v453, 1
      %v1665 = vsel %vm1299, %v1662, %v1664
      %v1666 = vrot.slane %v454, 1
      %v1667 = vsel %vm1299, %v1664, %v1666
      %v1668 = vrot.slane %v455, 1
      %v1669 = vsel %vm1299, %v1666, %v1668
      %v1670 = vrot.slane %v456, 1
      %v1671 = vsel %vm1299, %v1668, %v1670
      %v1672 = vrot.slane %v457, 1
      %v1673 = vsel %vm1299, %v1670, %v1672
      %v1674 = vrot.slane %v458, 1
      %v1675 = vsel %vm1299, %v1672, %v1674
      %v1676 = vrot.slane %v459, 1
      %v1677 = vsel %vm1299, %v1674, %v1676
      %v1678 = vrot.slane %v1643, 1
      %v1679 = vsel %vm1299, %v1676, %v1678
      %v1680 = vrot.slane %v1644, 1
      %v1681 = vsel %vm1299, %v1678, %v1680
      %v1716 = vunpack.c.l.b16 %v1618
      %v1717 = vunpack.c.l.b16 %v1619
      %v1718 = vunpack.c.l.b16 %v1620
      %v1719 = vunpack.c.l.b16 %v1621
      %v1720 = vunpack.c.l.b16 %v1622
      %v1721 = vunpack.c.l.b16 %v1623
      %v1722 = vunpack.c.l.b16 %v1624
      %v1723 = vunpack.c.l.b16 %v1625
      %v1724 = vunpack.c.l.b16 %v1626
      %v1725 = vunpack.c.l.b16 %v1627
      %v1726 = vunpack.c.l.b16 %v1628
      %v1727 = vunpack.c.l.b16 %v1629
      %v1728 = vunpack.c.l.b16 %v1630
      %v1729 = vunpack.c.l.b16 %v1631
      %v1730 = vunpack.c.l.b16 %v1632
      %v1731 = vunpack.c.l.b16 %v1633
      %v1732 = vpack.c.b16 %v1717, %v1716
      %v1733 = vpack.c.b16 %v1719, %v1718
      %v1734 = vpack.c.b16 %v1721, %v1720
      %v1735 = vpack.c.b16 %v1723, %v1722
      %v1736 = vpack.c.b16 %v1725, %v1724
      %v1737 = vpack.c.b16 %v1727, %v1726
      %v1738 = vpack.c.b16 %v1729, %v1728
      %v1739 = vpack.c.b16 %v1731, %v1730
      %1748 = vmatprep.subr.bf16.mxu0 0
      %1749 = vmatpush1.bf16.msra.mxu0 %v1732
      %1750 = vmatprep.subr.bf16.mxu0 0
      %1751 = vmatpush1.bf16.msra.mxu0 %v1733
      %1752 = vmatprep.subr.bf16.mxu0 0
      %1753 = vmatpush1.bf16.msra.mxu0 %v1734
      %1754 = vmatprep.subr.bf16.mxu0 0
      %1755 = vmatpush1.bf16.msra.mxu0 %v1735
      %1756 = vmatprep.subr.bf16.mxu0 0
      %1757 = vmatpush1.bf16.msra.mxu0 %v1736
      %1758 = vmatprep.subr.bf16.mxu0 0
      %1759 = vmatpush1.bf16.msra.mxu0 %v1737
      %1760 = vmatprep.subr.bf16.mxu0 0
      %1761 = vmatpush1.bf16.msra.mxu0 %v1738
      %1762 = vmatprep.subr.bf16.mxu0 0
      %1763 = vmatpush1.bf16.msra.mxu0 %v1739
      %1764 = vmatprep.subr.bf16.mxu0 0
      %1765 = vmatpush1.bf16.msra.mxu0 0
      %1766 = vmatprep.subr.bf16.mxu0 0
      %1767 = vmatpush1.bf16.msra.mxu0 0
      %1768 = vmatprep.subr.bf16.mxu0 0
      %1769 = vmatpush1.bf16.msra.mxu0 0
      %1770 = vmatprep.subr.bf16.mxu0 0
      %1771 = vmatpush1.bf16.msra.mxu0 0
      %1772 = vmatprep.subr.bf16.mxu0 0
      %1773 = vmatpush1.bf16.msra.mxu0 0
      %1774 = vmatprep.subr.bf16.mxu0 0
      %1775 = vmatpush1.bf16.msra.mxu0 0
      %1776 = vmatprep.subr.bf16.mxu0 0
      %1777 = vmatpush1.bf16.msra.mxu0 0
      %1778 = vmatprep.subr.bf16.mxu0 0
      %1779 = vmatpush1.bf16.msra.mxu0 0
      %1780 = vmatprep.mubr.bf16.mxu0 0
      %1781 = vmatmul.mubr.bf16.gmra.mrb[0].mxu0 %v1647
      %v1782 = vpop.f32.mrb[0].mxu0
      %v1783 = vadd.f32 0.0, %v1782
      %v1784 = vpop.f32.mrb[0].mxu0
      %v1785 = vpop.f32.mrb[0].mxu0
      %v1786 = vadd.f32 0.0, %v1785
      %v1787 = vpop.f32.mrb[0].mxu0
      %1788 = vmatprep.mubr.bf16.mxu0 0
      %1789 = vmatmul.mubr.bf16.gmra.mrb[0].mxu0 %v1649
      %v1790 = vpop.f32.mrb[0].mxu0
      %v1791 = vadd.f32 0.0, %v1790
      %v1792 = vpop.f32.mrb[0].mxu0
      %v1793 = vpop.f32.mrb[0].mxu0
      %v1794 = vadd.f32 0.0, %v1793
      %v1795 = vpop.f32.mrb[0].mxu0
      %1796 = vmatprep.mubr.bf16.mxu0 0
      %1797 = vmatmul.mubr.bf16.gmra.mrb[0].mxu0 %v1651
      %v1798 = vpop.f32.mrb[0].mxu0
      %v1799 = vadd.f32 0.0, %v1798
      %v1800 = vpop.f32.mrb[0].mxu0
      %v1801 = vpop.f32.mrb[0].mxu0
      %v1802 = vadd.f32 0.0, %v1801
      %v1803 = vpop.f32.mrb[0].mxu0
      %1804 = vmatprep.mubr.bf16.mxu0 0
      %1805 = vmatmul.mubr.bf16.gmra.mrb[0].mxu0 %v1653
      %v1806 = vpop.f32.mrb[0].mxu0
      %v1807 = vadd.f32 0.0, %v1806
      %v1808 = vpop.f32.mrb[0].mxu0
      %v1809 = vpop.f32.mrb[0].mxu0
      %v1810 = vadd.f32 0.0, %v1809
      %v1811 = vpop.f32.mrb[0].mxu0
      %1812 = vmatprep.mubr.bf16.mxu0 0
      %1813 = vmatmul.mubr.bf16.gmra.mrb[0].mxu0 %v1655
      %v1814 = vpop.f32.mrb[0].mxu0
      %v1815 = vadd.f32 0.0, %v1814
      %v1816 = vpop.f32.mrb[0].mxu0
      %v1817 = vpop.f32.mrb[0].mxu0
      %v1818 = vadd.f32 0.0, %v1817
      %v1819 = vpop.f32.mrb[0].mxu0
      %1820 = vmatprep.mubr.bf16.mxu0 0
      %1821 = vmatmul.mubr.bf16.gmra.mrb[0].mxu0 %v1657
      %v1822 = vpop.f32.mrb[0].mxu0
      %v1823 = vadd.f32 0.0, %v1822
      %v1824 = vpop.f32.mrb[0].mxu0
      %v1825 = vpop.f32.mrb[0].mxu0
      %v1826 = vadd.f32 0.0, %v1825
      %v1827 = vpop.f32.mrb[0].mxu0
      %1828 = vmatprep.mubr.bf16.mxu0 0
      %1829 = vmatmul.mubr.bf16.gmra.mrb[0].mxu0 %v1659
      %v1830 = vpop.f32.mrb[0].mxu0
      %v1831 = vadd.f32 0.0, %v1830
      %v1832 = vpop.f32.mrb[0].mxu0
      %v1833 = vpop.f32.mrb[0].mxu0
      %v1834 = vadd.f32 0.0, %v1833
      %v1835 = vpop.f32.mrb[0].mxu0
      %1836 = vmatprep.mubr.bf16.mxu0 0
      %1837 = vmatmul.mubr.bf16.gmra.mrb[0].mxu0 %v1661
      %v1838 = vpop.f32.mrb[0].mxu0
      %v1839 = vadd.f32 0.0, %v1838
      %v1840 = vpop.f32.mrb[0].mxu0
      %v1841 = vpop.f32.mrb[0].mxu0
      %v1842 = vadd.f32 0.0, %v1841
      %v1843 = vpop.f32.mrb[0].mxu0
      %1844 = vmatprep.mubr.bf16.mxu0 0
      %1845 = vmatmul.mubr.bf16.gmra.mrb[0].mxu0 %v1663
      %v1846 = vpop.f32.mrb[0].mxu0
      %v1847 = vadd.f32 0.0, %v1846
      %v1848 = vpop.f32.mrb[0].mxu0
      %v1849 = vpop.f32.mrb[0].mxu0
      %v1850 = vadd.f32 0.0, %v1849
      %v1851 = vpop.f32.mrb[0].mxu0
      %1852 = vmatprep.mubr.bf16.mxu0 0
      %1853 = vmatmul.mubr.bf16.gmra.mrb[0].mxu0 %v1665
      %v1854 = vpop.f32.mrb[0].mxu0
      %v1855 = vadd.f32 0.0, %v1854
      %v1856 = vpop.f32.mrb[0].mxu0
      %v1857 = vpop.f32.mrb[0].mxu0
      %v1858 = vadd.f32 0.0, %v1857
      %v1859 = vpop.f32.mrb[0].mxu0
      %1860 = vmatprep.mubr.bf16.mxu0 0
      %1861 = vmatmul.mubr.bf16.gmra.mrb[0].mxu0 %v1667
      %v1862 = vpop.f32.mrb[0].mxu0
      %v1863 = vadd.f32 0.0, %v1862
      %v1864 = vpop.f32.mrb[0].mxu0
      %v1865 = vpop.f32.mrb[0].mxu0
      %v1866 = vadd.f32 0.0, %v1865
      %v1867 = vpop.f32.mrb[0].mxu0
      %1868 = vmatprep.mubr.bf16.mxu0 0
      %1869 = vmatmul.mubr.bf16.gmra.mrb[0].mxu0 %v1669
      %v1870 = vpop.f32.mrb[0].mxu0
      %v1871 = vadd.f32 0.0, %v1870
      %v1872 = vpop.f32.mrb[0].mxu0
      %v1873 = vpop.f32.mrb[0].mxu0
      %v1874 = vadd.f32 0.0, %v1873
      %v1875 = vpop.f32.mrb[0].mxu0
      %1876 = vmatprep.mubr.bf16.mxu0 0
      %1877 = vmatmul.mubr.bf16.gmra.mrb[0].mxu0 %v1671
      %v1878 = vpop.f32.mrb[0].mxu0
      %v1879 = vadd.f32 0.0, %v1878
      %v1880 = vpop.f32.mrb[0].mxu0
      %v1881 = vpop.f32.mrb[0].mxu0
      %v1882 = vadd.f32 0.0, %v1881
      %v1883 = vpop.f32.mrb[0].mxu0
      %1884 = vmatprep.mubr.bf16.mxu0 0
      %1885 = vmatmul.mubr.bf16.gmra.mrb[0].mxu0 %v1673
      %v1886 = vpop.f32.mrb[0].mxu0
      %v1887 = vadd.f32 0.0, %v1886
      %v1888 = vpop.f32.mrb[0].mxu0
      %v1889 = vpop.f32.mrb[0].mxu0
      %v1890 = vadd.f32 0.0, %v1889
      %v1891 = vpop.f32.mrb[0].mxu0
      %1892 = vmatprep.mubr.bf16.mxu0 0
      %1893 = vmatmul.mubr.bf16.gmra.mrb[0].mxu0 %v1675
      %v1894 = vpop.f32.mrb[0].mxu0
      %v1895 = vadd.f32 0.0, %v1894
      %v1896 = vpop.f32.mrb[0].mxu0
      %v1897 = vpop.f32.mrb[0].mxu0
      %v1898 = vadd.f32 0.0, %v1897
      %v1899 = vpop.f32.mrb[0].mxu0
      %1900 = vmatprep.mubr.bf16.mxu0 0
      %1901 = vmatmul.mubr.bf16.gmra.mrb[0].mxu0 %v1677
      %v1902 = vpop.f32.mrb[0].mxu0
      %v1903 = vadd.f32 0.0, %v1902
      %v1904 = vpop.f32.mrb[0].mxu0
      %v1905 = vpop.f32.mrb[0].mxu0
      %v1906 = vadd.f32 0.0, %v1905
      %v1907 = vpop.f32.mrb[0].mxu0
      %1908 = vmatprep.mubr.bf16.mxu0 0
      %1909 = vmatmul.mubr.bf16.gmra.mrb[0].mxu0 %v1679
      %v1910 = vpop.f32.mrb[0].mxu0
      %v1911 = vadd.f32 0.0, %v1910
      %v1912 = vpop.f32.mrb[0].mxu0
      %v1913 = vpop.f32.mrb[0].mxu0
      %v1914 = vadd.f32 0.0, %v1913
      %v1915 = vpop.f32.mrb[0].mxu0
      %1916 = vmatprep.mubr.bf16.mxu0 0
      %1917 = vmatmul.mubr.bf16.gmra.mrb[0].mxu0 %v1681
      %v1918 = vpop.f32.mrb[0].mxu0
      %v1919 = vadd.f32 0.0, %v1918
      %v1920 = vpop.f32.mrb[0].mxu0
      %v1921 = vpop.f32.mrb[0].mxu0
      %v1922 = vadd.f32 0.0, %v1921
      %v1923 = vpop.f32.mrb[0].mxu0
      %1924 = vdwg.mxu0
      %v1925 = vadd.f32 %v1580, %v1783
      %v1926 = vadd.f32 %v1581, %v1786
      %v1927 = vadd.f32 %v1582, %v1791
      %v1928 = vadd.f32 %v1583, %v1794
      %v1929 = vadd.f32 %v1584, %v1799
      %v1930 = vadd.f32 %v1585, %v1802
      %v1931 = vadd.f32 %v1586, %v1807
      %v1932 = vadd.f32 %v1587, %v1810
      %v1933 = vadd.f32 %v1588, %v1815
      %v1934 = vadd.f32 %v1589, %v1818
      %v1935 = vadd.f32 %v1590, %v1823
      %v1936 = vadd.f32 %v1591, %v1826
      %v1937 = vadd.f32 %v1592, %v1831
      %v1938 = vadd.f32 %v1593, %v1834
      %v1939 = vadd.f32 %v1594, %v1839
      %v1940 = vadd.f32 %v1595, %v1842
      %v1941 = vadd.f32 %v1596, %v1847
      %v1942 = vadd.f32 %v1597, %v1850
      %v1943 = vadd.f32 %v1598, %v1855
      %v1944 = vadd.f32 %v1599, %v1858
      %v1945 = vadd.f32 %v1600, %v1863
      %v1946 = vadd.f32 %v1601, %v1866
      %v1947 = vadd.f32 %v1602, %v1871
      %v1948 = vadd.f32 %v1603, %v1874
      %v1949 = vadd.f32 %v1604, %v1879
      %v1950 = vadd.f32 %v1605, %v1882
      %v1951 = vadd.f32 %v1606, %v1887
      %v1952 = vadd.f32 %v1607, %v1890
      %v1953 = vadd.f32 %v1608, %v1895
      %v1954 = vadd.f32 %v1609, %v1898
      %v1955 = vadd.f32 %v1610, %v1903
      %v1956 = vadd.f32 %v1611, %v1906
      %v1957 = vadd.f32 %v1612, %v1911
      %v1958 = vadd.f32 %v1613, %v1914
      %v1959 = vadd.f32 %v1614, %v1919
      %v1960 = vadd.f32 %v1615, %v1922
      %s1961 = scalar_lea.vmem %s2, 256
      %v1962 = vld [vmem:[%s1961] sm:$0xf]
      %v1963 = vld [vmem:[%s1961 + $0x4] sm:$0xf]
      %v1964 = vld [vmem:[%s1961 + $0x8] sm:$0xf]
      %v1965 = vld [vmem:[%s1961 + $0xc] sm:$0xf]
      %v1966 = vld [vmem:[%s1961 + $0x10] sm:$0xf]
      %v1967 = vld [vmem:[%s1961 + $0x14] sm:$0xf]
      %v1968 = vld [vmem:[%s1961 + $0x18] sm:$0xf]
      %v1969 = vld [vmem:[%s1961 + $0x1c] sm:$0xf]
      %v1970 = vld [vmem:[%s1961 + $0x20] sm:$0xf]
      %v1971 = vld [vmem:[%s1961 + $0x24] sm:$0xf]
      %v1972 = vld [vmem:[%s1961 + $0x28] sm:$0xf]
      %v1973 = vld [vmem:[%s1961 + $0x2c] sm:$0xf]
      %v1974 = vld [vmem:[%s1961 + $0x30] sm:$0xf]
      %v1975 = vld [vmem:[%s1961 + $0x34] sm:$0xf]
      %v1976 = vld [vmem:[%s1961 + $0x38] sm:$0xf]
      %v1977 = vld [vmem:[%s1961 + $0x3c] sm:$0xf]
      %v1979 = vunpack.c.l.b16 %v343
      %v1980 = vpack.c.b16 %v1979, %v1979
      %vm1981 = vsmask.f32 6400
      %v1983 = vshrl.u32 %v1642, 16
      %v1985 = vrot.slane %v1983, 1
      %v1986 = vshll.u32 %v1642, 16
      %v1988 = vrot.slane %v1986, 2
      %v1989 = vor.u32 %v1985, %v1988
      %v1991 = vshrl.u32 %v444, 16
      %v1993 = vrot.slane %v1991, 1
      %v1994 = vshll.u32 %v444, 16
      %v1996 = vrot.slane %v1994, 2
      %v1997 = vor.u32 %v1993, %v1996
      %v1998 = vsel %vm1981, %v1989, %v1997
      %v2000 = vshrl.u32 %v445, 16
      %v2002 = vrot.slane %v2000, 1
      %v2003 = vshll.u32 %v445, 16
      %v2005 = vrot.slane %v2003, 2
      %v2006 = vor.u32 %v2002, %v2005
      %v2007 = vsel %vm1981, %v1997, %v2006
      %v2009 = vshrl.u32 %v446, 16
      %v2011 = vrot.slane %v2009, 1
      %v2012 = vshll.u32 %v446, 16
      %v2014 = vrot.slane %v2012, 2
      %v2015 = vor.u32 %v2011, %v2014
      %v2016 = vsel %vm1981, %v2006, %v2015
      %v2018 = vshrl.u32 %v447, 16
      %v2020 = vrot.slane %v2018, 1
      %v2021 = vshll.u32 %v447, 16
      %v2023 = vrot.slane %v2021, 2
      %v2024 = vor.u32 %v2020, %v2023
      %v2025 = vsel %vm1981, %v2015, %v2024
      %v2027 = vshrl.u32 %v448, 16
      %v2029 = vrot.slane %v2027, 1
      %v2030 = vshll.u32 %v448, 16
      %v2032 = vrot.slane %v2030, 2
      %v2033 = vor.u32 %v2029, %v2032
      %v2034 = vsel %vm1981, %v2024, %v2033
      %v2036 = vshrl.u32 %v449, 16
      %v2038 = vrot.slane %v2036, 1
      %v2039 = vshll.u32 %v449, 16
      %v2041 = vrot.slane %v2039, 2
      %v2042 = vor.u32 %v2038, %v2041
      %v2043 = vsel %vm1981, %v2033, %v2042
      %v2045 = vshrl.u32 %v450, 16
      %v2047 = vrot.slane %v2045, 1
      %v2048 = vshll.u32 %v450, 16
      %v2050 = vrot.slane %v2048, 2
      %v2051 = vor.u32 %v2047, %v2050
      %v2052 = vsel %vm1981, %v2042, %v2051
      %v2054 = vshrl.u32 %v451, 16
      %v2056 = vrot.slane %v2054, 1
      %v2057 = vshll.u32 %v451, 16
      %v2059 = vrot.slane %v2057, 2
      %v2060 = vor.u32 %v2056, %v2059
      %v2061 = vsel %vm1981, %v2051, %v2060
      %v2063 = vshrl.u32 %v452, 16
      %v2065 = vrot.slane %v2063, 1
      %v2066 = vshll.u32 %v452, 16
      %v2068 = vrot.slane %v2066, 2
      %v2069 = vor.u32 %v2065, %v2068
      %v2070 = vsel %vm1981, %v2060, %v2069
      %v2072 = vshrl.u32 %v453, 16
      %v2074 = vrot.slane %v2072, 1
      %v2075 = vshll.u32 %v453, 16
      %v2077 = vrot.slane %v2075, 2
      %v2078 = vor.u32 %v2074, %v2077
      %v2079 = vsel %vm1981, %v2069, %v2078
      %v2081 = vshrl.u32 %v454, 16
      %v2083 = vrot.slane %v2081, 1
      %v2084 = vshll.u32 %v454, 16
      %v2086 = vrot.slane %v2084, 2
      %v2087 = vor.u32 %v2083, %v2086
      %v2088 = vsel %vm1981, %v2078, %v2087
      %v2090 = vshrl.u32 %v455, 16
      %v2092 = vrot.slane %v2090, 1
      %v2093 = vshll.u32 %v455, 16
      %v2095 = vrot.slane %v2093, 2
      %v2096 = vor.u32 %v2092, %v2095
      %v2097 = vsel %vm1981, %v2087, %v2096
      %v2099 = vshrl.u32 %v456, 16
      %v2101 = vrot.slane %v2099, 1
      %v2102 = vshll.u32 %v456, 16
      %v2104 = vrot.slane %v2102, 2
      %v2105 = vor.u32 %v2101, %v2104
      %v2106 = vsel %vm1981, %v2096, %v2105
      %v2108 = vshrl.u32 %v457, 16
      %v2110 = vrot.slane %v2108, 1
      %v2111 = vshll.u32 %v457, 16
      %v2113 = vrot.slane %v2111, 2
      %v2114 = vor.u32 %v2110, %v2113
      %v2115 = vsel %vm1981, %v2105, %v2114
      %v2117 = vshrl.u32 %v458, 16
      %v2119 = vrot.slane %v2117, 1
      %v2120 = vshll.u32 %v458, 16
      %v2122 = vrot.slane %v2120, 2
      %v2123 = vor.u32 %v2119, %v2122
      %v2124 = vsel %vm1981, %v2114, %v2123
      %v2126 = vshrl.u32 %v459, 16
      %v2128 = vrot.slane %v2126, 1
      %v2129 = vshll.u32 %v459, 16
      %v2131 = vrot.slane %v2129, 2
      %v2132 = vor.u32 %v2128, %v2131
      %v2133 = vsel %vm1981, %v2123, %v2132
      %v2135 = vshrl.u32 %v1643, 16
      %v2137 = vrot.slane %v2135, 1
      %v2138 = vshll.u32 %v1643, 16
      %v2140 = vrot.slane %v2138, 2
      %v2141 = vor.u32 %v2137, %v2140
      %v2142 = vsel %vm1981, %v2132, %v2141
      %v2144 = vshrl.u32 %v1980, 16
      %v2146 = vrot.slane %v2144, 1
      %v2147 = vshll.u32 %v1980, 16
      %v2149 = vrot.slane %v2147, 2
      %v2150 = vor.u32 %v2146, %v2149
      %v2151 = vsel %vm1981, %v2141, %v2150
      %v2186 = vunpack.c.l.b16 %v1962
      %v2187 = vunpack.c.l.b16 %v1963
      %v2188 = vunpack.c.l.b16 %v1964
      %v2189 = vunpack.c.l.b16 %v1965
      %v2190 = vunpack.c.l.b16 %v1966
      %v2191 = vunpack.c.l.b16 %v1967
      %v2192 = vunpack.c.l.b16 %v1968
      %v2193 = vunpack.c.l.b16 %v1969
      %v2194 = vunpack.c.l.b16 %v1970
      %v2195 = vunpack.c.l.b16 %v1971
      %v2196 = vunpack.c.l.b16 %v1972
      %v2197 = vunpack.c.l.b16 %v1973
      %v2198 = vunpack.c.l.b16 %v1974
      %v2199 = vunpack.c.l.b16 %v1975
      %v2200 = vunpack.c.l.b16 %v1976
      %v2201 = vunpack.c.l.b16 %v1977
      %v2202 = vpack.c.b16 %v2187, %v2186
      %v2203 = vpack.c.b16 %v2189, %v2188
      %v2204 = vpack.c.b16 %v2191, %v2190
      %v2205 = vpack.c.b16 %v2193, %v2192
      %v2206 = vpack.c.b16 %v2195, %v2194
      %v2207 = vpack.c.b16 %v2197, %v2196
      %v2208 = vpack.c.b16 %v2199, %v2198
      %v2209 = vpack.c.b16 %v2201, %v2200
      %2218 = vmatprep.subr.bf16.mxu0 0
      %2219 = vmatpush1.bf16.msra.mxu0 %v2202
      %2220 = vmatprep.subr.bf16.mxu0 0
      %2221 = vmatpush1.bf16.msra.mxu0 %v2203
      %2222 = vmatprep.subr.bf16.mxu0 0
      %2223 = vmatpush1.bf16.msra.mxu0 %v2204
      %2224 = vmatprep.subr.bf16.mxu0 0
      %2225 = vmatpush1.bf16.msra.mxu0 %v2205
      %2226 = vmatprep.subr.bf16.mxu0 0
      %2227 = vmatpush1.bf16.msra.mxu0 %v2206
      %2228 = vmatprep.subr.bf16.mxu0 0
      %2229 = vmatpush1.bf16.msra.mxu0 %v2207
      %2230 = vmatprep.subr.bf16.mxu0 0
      %2231 = vmatpush1.bf16.msra.mxu0 %v2208
      %2232 = vmatprep.subr.bf16.mxu0 0
      %2233 = vmatpush1.bf16.msra.mxu0 %v2209
      %2234 = vmatprep.subr.bf16.mxu0 0
      %2235 = vmatpush1.bf16.msra.mxu0 0
      %2236 = vmatprep.subr.bf16.mxu0 0
      %2237 = vmatpush1.bf16.msra.mxu0 0
      %2238 = vmatprep.subr.bf16.mxu0 0
      %2239 = vmatpush1.bf16.msra.mxu0 0
      %2240 = vmatprep.subr.bf16.mxu0 0
      %2241 = vmatpush1.bf16.msra.mxu0 0
      %2242 = vmatprep.subr.bf16.mxu0 0
      %2243 = vmatpush1.bf16.msra.mxu0 0
      %2244 = vmatprep.subr.bf16.mxu0 0
      %2245 = vmatpush1.bf16.msra.mxu0 0
      %2246 = vmatprep.subr.bf16.mxu0 0
      %2247 = vmatpush1.bf16.msra.mxu0 0
      %2248 = vmatprep.subr.bf16.mxu0 0
      %2249 = vmatpush1.bf16.msra.mxu0 0
      %2250 = vmatprep.mubr.bf16.mxu0 0
      %2251 = vmatmul.mubr.bf16.gmra.mrb[0].mxu0 %v1998
      %v2252 = vpop.f32.mrb[0].mxu0
      %v2253 = vadd.f32 0.0, %v2252
      %v2254 = vpop.f32.mrb[0].mxu0
      %v2255 = vpop.f32.mrb[0].mxu0
      %v2256 = vadd.f32 0.0, %v2255
      %v2257 = vpop.f32.mrb[0].mxu0
      %2258 = vmatprep.mubr.bf16.mxu0 0
      %2259 = vmatmul.mubr.bf16.gmra.mrb[0].mxu0 %v2007
      %v2260 = vpop.f32.mrb[0].mxu0
      %v2261 = vadd.f32 0.0, %v2260
      %v2262 = vpop.f32.mrb[0].mxu0
      %v2263 = vpop.f32.mrb[0].mxu0
      %v2264 = vadd.f32 0.0, %v2263
      %v2265 = vpop.f32.mrb[0].mxu0
      %2266 = vmatprep.mubr.bf16.mxu0 0
      %2267 = vmatmul.mubr.bf16.gmra.mrb[0].mxu0 %v2016
      %v2268 = vpop.f32.mrb[0].mxu0
      %v2269 = vadd.f32 0.0, %v2268
      %v2270 = vpop.f32.mrb[0].mxu0
      %v2271 = vpop.f32.mrb[0].mxu0
      %v2272 = vadd.f32 0.0, %v2271
      %v2273 = vpop.f32.mrb[0].mxu0
      %2274 = vmatprep.mubr.bf16.mxu0 0
      %2275 = vmatmul.mubr.bf16.gmra.mrb[0].mxu0 %v2025
      %v2276 = vpop.f32.mrb[0].mxu0
      %v2277 = vadd.f32 0.0, %v2276
      %v2278 = vpop.f32.mrb[0].mxu0
      %v2279 = vpop.f32.mrb[0].mxu0
      %v2280 = vadd.f32 0.0, %v2279
      %v2281 = vpop.f32.mrb[0].mxu0
      %2282 = vmatprep.mubr.bf16.mxu0 0
      %2283 = vmatmul.mubr.bf16.gmra.mrb[0].mxu0 %v2034
      %v2284 = vpop.f32.mrb[0].mxu0
      %v2285 = vadd.f32 0.0, %v2284
      %v2286 = vpop.f32.mrb[0].mxu0
      %v2287 = vpop.f32.mrb[0].mxu0
      %v2288 = vadd.f32 0.0, %v2287
      %v2289 = vpop.f32.mrb[0].mxu0
      %2290 = vmatprep.mubr.bf16.mxu0 0
      %2291 = vmatmul.mubr.bf16.gmra.mrb[0].mxu0 %v2043
      %v2292 = vpop.f32.mrb[0].mxu0
      %v2293 = vadd.f32 0.0, %v2292
      %v2294 = vpop.f32.mrb[0].mxu0
      %v2295 = vpop.f32.mrb[0].mxu0
      %v2296 = vadd.f32 0.0, %v2295
      %v2297 = vpop.f32.mrb[0].mxu0
      %2298 = vmatprep.mubr.bf16.mxu0 0
      %2299 = vmatmul.mubr.bf16.gmra.mrb[0].mxu0 %v2052
      %v2300 = vpop.f32.mrb[0].mxu0
      %v2301 = vadd.f32 0.0, %v2300
      %v2302 = vpop.f32.mrb[0].mxu0
      %v2303 = vpop.f32.mrb[0].mxu0
      %v2304 = vadd.f32 0.0, %v2303
      %v2305 = vpop.f32.mrb[0].mxu0
      %2306 = vmatprep.mubr.bf16.mxu0 0
      %2307 = vmatmul.mubr.bf16.gmra.mrb[0].mxu0 %v2061
      %v2308 = vpop.f32.mrb[0].mxu0
      %v2309 = vadd.f32 0.0, %v2308
      %v2310 = vpop.f32.mrb[0].mxu0
      %v2311 = vpop.f32.mrb[0].mxu0
      %v2312 = vadd.f32 0.0, %v2311
      %v2313 = vpop.f32.mrb[0].mxu0
      %2314 = vmatprep.mubr.bf16.mxu0 0
      %2315 = vmatmul.mubr.bf16.gmra.mrb[0].mxu0 %v2070
      %v2316 = vpop.f32.mrb[0].mxu0
      %v2317 = vadd.f32 0.0, %v2316
      %v2318 = vpop.f32.mrb[0].mxu0
      %v2319 = vpop.f32.mrb[0].mxu0
      %v2320 = vadd.f32 0.0, %v2319
      %v2321 = vpop.f32.mrb[0].mxu0
      %2322 = vmatprep.mubr.bf16.mxu0 0
      %2323 = vmatmul.mubr.bf16.gmra.mrb[0].mxu0 %v2079
      %v2324 = vpop.f32.mrb[0].mxu0
      %v2325 = vadd.f32 0.0, %v2324
      %v2326 = vpop.f32.mrb[0].mxu0
      %v2327 = vpop.f32.mrb[0].mxu0
      %v2328 = vadd.f32 0.0, %v2327
      %v2329 = vpop.f32.mrb[0].mxu0
      %2330 = vmatprep.mubr.bf16.mxu0 0
      %2331 = vmatmul.mubr.bf16.gmra.mrb[0].mxu0 %v2088
      %v2332 = vpop.f32.mrb[0].mxu0
      %v2333 = vadd.f32 0.0, %v2332
      %v2334 = vpop.f32.mrb[0].mxu0
      %v2335 = vpop.f32.mrb[0].mxu0
      %v2336 = vadd.f32 0.0, %v2335
      %v2337 = vpop.f32.mrb[0].mxu0
      %2338 = vmatprep.mubr.bf16.mxu0 0
      %2339 = vmatmul.mubr.bf16.gmra.mrb[0].mxu0 %v2097
      %v2340 = vpop.f32.mrb[0].mxu0
      %v2341 = vadd.f32 0.0, %v2340
      %v2342 = vpop.f32.mrb[0].mxu0
      %v2343 = vpop.f32.mrb[0].mxu0
      %v2344 = vadd.f32 0.0, %v2343
      %v2345 = vpop.f32.mrb[0].mxu0
      %2346 = vmatprep.mubr.bf16.mxu0 0
      %2347 = vmatmul.mubr.bf16.gmra.mrb[0].mxu0 %v2106
      %v2348 = vpop.f32.mrb[0].mxu0
      %v2349 = vadd.f32 0.0, %v2348
      %v2350 = vpop.f32.mrb[0].mxu0
      %v2351 = vpop.f32.mrb[0].mxu0
      %v2352 = vadd.f32 0.0, %v2351
      %v2353 = vpop.f32.mrb[0].mxu0
      %2354 = vmatprep.mubr.bf16.mxu0 0
      %2355 = vmatmul.mubr.bf16.gmra.mrb[0].mxu0 %v2115
      %v2356 = vpop.f32.mrb[0].mxu0
      %v2357 = vadd.f32 0.0, %v2356
      %v2358 = vpop.f32.mrb[0].mxu0
      %v2359 = vpop.f32.mrb[0].mxu0
      %v2360 = vadd.f32 0.0, %v2359
      %v2361 = vpop.f32.mrb[0].mxu0
      %2362 = vmatprep.mubr.bf16.mxu0 0
      %2363 = vmatmul.mubr.bf16.gmra.mrb[0].mxu0 %v2124
      %v2364 = vpop.f32.mrb[0].mxu0
      %v2365 = vadd.f32 0.0, %v2364
      %v2366 = vpop.f32.mrb[0].mxu0
      %v2367 = vpop.f32.mrb[0].mxu0
      %v2368 = vadd.f32 0.0, %v2367
      %v2369 = vpop.f32.mrb[0].mxu0
      %2370 = vmatprep.mubr.bf16.mxu0 0
      %2371 = vmatmul.mubr.bf16.gmra.mrb[0].mxu0 %v2133
      %v2372 = vpop.f32.mrb[0].mxu0
      %v2373 = vadd.f32 0.0, %v2372
      %v2374 = vpop.f32.mrb[0].mxu0
      %v2375 = vpop.f32.mrb[0].mxu0
      %v2376 = vadd.f32 0.0, %v2375
      %v2377 = vpop.f32.mrb[0].mxu0
      %2378 = vmatprep.mubr.bf16.mxu0 0
      %2379 = vmatmul.mubr.bf16.gmra.mrb[0].mxu0 %v2142
      %v2380 = vpop.f32.mrb[0].mxu0
      %v2381 = vadd.f32 0.0, %v2380
      %v2382 = vpop.f32.mrb[0].mxu0
      %v2383 = vpop.f32.mrb[0].mxu0
      %v2384 = vadd.f32 0.0, %v2383
      %v2385 = vpop.f32.mrb[0].mxu0
      %2386 = vmatprep.mubr.bf16.mxu0 0
      %2387 = vmatmul.mubr.bf16.gmra.mrb[0].mxu0 %v2151
      %v2388 = vpop.f32.mrb[0].mxu0
      %v2389 = vadd.f32 0.0, %v2388
      %v2390 = vpop.f32.mrb[0].mxu0
      %v2391 = vpop.f32.mrb[0].mxu0
      %v2392 = vadd.f32 0.0, %v2391
      %v2393 = vpop.f32.mrb[0].mxu0
      %2394 = vdwg.mxu0
      %v2395 = vadd.f32 %v1925, %v2253
      %v2396 = vadd.f32 %v1926, %v2256
      %v2397 = vadd.f32 %v1927, %v2261
      %v2398 = vadd.f32 %v1928, %v2264
      %v2399 = vadd.f32 %v1929, %v2269
      %v2400 = vadd.f32 %v1930, %v2272
      %v2401 = vadd.f32 %v1931, %v2277
      %v2402 = vadd.f32 %v1932, %v2280
      %v2403 = vadd.f32 %v1933, %v2285
      %v2404 = vadd.f32 %v1934, %v2288
      %v2405 = vadd.f32 %v1935, %v2293
      %v2406 = vadd.f32 %v1936, %v2296
      %v2407 = vadd.f32 %v1937, %v2301
      %v2408 = vadd.f32 %v1938, %v2304
      %v2409 = vadd.f32 %v1939, %v2309
      %v2410 = vadd.f32 %v1940, %v2312
      %v2411 = vadd.f32 %v1941, %v2317
      %v2412 = vadd.f32 %v1942, %v2320
      %v2413 = vadd.f32 %v1943, %v2325
      %v2414 = vadd.f32 %v1944, %v2328
      %v2415 = vadd.f32 %v1945, %v2333
      %v2416 = vadd.f32 %v1946, %v2336
      %v2417 = vadd.f32 %v1947, %v2341
      %v2418 = vadd.f32 %v1948, %v2344
      %v2419 = vadd.f32 %v1949, %v2349
      %v2420 = vadd.f32 %v1950, %v2352
      %v2421 = vadd.f32 %v1951, %v2357
      %v2422 = vadd.f32 %v1952, %v2360
      %v2423 = vadd.f32 %v1953, %v2365
      %v2424 = vadd.f32 %v1954, %v2368
      %v2425 = vadd.f32 %v1955, %v2373
      %v2426 = vadd.f32 %v1956, %v2376
      %v2427 = vadd.f32 %v1957, %v2381
      %v2428 = vadd.f32 %v1958, %v2384
      %v2429 = vadd.f32 %v1959, %v2389
      %v2430 = vadd.f32 %v1960, %v2392
      %v2431 = vld [vmem:[%s300 + $0x8] sm:$0xc]
      %s2432 = scalar_lea.vmem %s2, 320
      %v2433 = vld [vmem:[%s2432] sm:$0xf]
      %v2434 = vld [vmem:[%s2432 + $0x4] sm:$0xf]
      %v2435 = vld [vmem:[%s2432 + $0x8] sm:$0xf]
      %v2436 = vld [vmem:[%s2432 + $0xc] sm:$0xf]
      %v2437 = vld [vmem:[%s2432 + $0x10] sm:$0xf]
      %v2438 = vld [vmem:[%s2432 + $0x14] sm:$0xf]
      %v2439 = vld [vmem:[%s2432 + $0x18] sm:$0xf]
      %v2440 = vld [vmem:[%s2432 + $0x1c] sm:$0xf]
      %v2441 = vld [vmem:[%s2432 + $0x20] sm:$0xf]
      %v2442 = vld [vmem:[%s2432 + $0x24] sm:$0xf]
      %v2443 = vld [vmem:[%s2432 + $0x28] sm:$0xf]
      %v2444 = vld [vmem:[%s2432 + $0x2c] sm:$0xf]
      %v2445 = vld [vmem:[%s2432 + $0x30] sm:$0xf]
      %v2446 = vld [vmem:[%s2432 + $0x34] sm:$0xf]
      %v2447 = vld [vmem:[%s2432 + $0x38] sm:$0xf]
      %v2448 = vld [vmem:[%s2432 + $0x3c] sm:$0xf]
      %v2450 = vunpack.c.l.b16 %v2431
      %v2451 = vpack.c.b16 %v409, %v2450
      %vm2452 = vcmask 1045504
      %v2453 = vrot.slane %v2451, 2
      %v2454 = vrot.slane %v444, 2
      %v2455 = vsel %vm2452, %v2453, %v2454
      %v2456 = vrot.slane %v445, 2
      %v2457 = vsel %vm2452, %v2454, %v2456
      %v2458 = vrot.slane %v446, 2
      %v2459 = vsel %vm2452, %v2456, %v2458
      %v2460 = vrot.slane %v447, 2
      %v2461 = vsel %vm2452, %v2458, %v2460
      %v2462 = vrot.slane %v448, 2
      %v2463 = vsel %vm2452, %v2460, %v2462
      %v2464 = vrot.slane %v449, 2
      %v2465 = vsel %vm2452, %v2462, %v2464
      %v2466 = vrot.slane %v450, 2
      %v2467 = vsel %vm2452, %v2464, %v2466
      %v2468 = vrot.slane %v451, 2
      %v2469 = vsel %vm2452, %v2466, %v2468
      %v2470 = vrot.slane %v452, 2
      %v2471 = vsel %vm2452, %v2468, %v2470
      %v2472 = vrot.slane %v453, 2
      %v2473 = vsel %vm2452, %v2470, %v2472
      %v2474 = vrot.slane %v454, 2
      %v2475 = vsel %vm2452, %v2472, %v2474
      %v2476 = vrot.slane %v455, 2
      %v2477 = vsel %vm2452, %v2474, %v2476
      %v2478 = vrot.slane %v456, 2
      %v2479 = vsel %vm2452, %v2476, %v2478
      %v2480 = vrot.slane %v457, 2
      %v2481 = vsel %vm2452, %v2478, %v2480
      %v2482 = vrot.slane %v458, 2
      %v2483 = vsel %vm2452, %v2480, %v2482
      %v2484 = vrot.slane %v459, 2
      %v2485 = vsel %vm2452, %v2482, %v2484
      %v2486 = vrot.slane %v1643, 2
      %v2487 = vsel %vm2452, %v2484, %v2486
      %v2488 = vrot.slane %v1980, 2
      %v2489 = vsel %vm2452, %v2486, %v2488
      %v2524 = vunpack.c.l.b16 %v2433
      %v2525 = vunpack.c.l.b16 %v2434
      %v2526 = vunpack.c.l.b16 %v2435
      %v2527 = vunpack.c.l.b16 %v2436
      %v2528 = vunpack.c.l.b16 %v2437
      %v2529 = vunpack.c.l.b16 %v2438
      %v2530 = vunpack.c.l.b16 %v2439
      %v2531 = vunpack.c.l.b16 %v2440
      %v2532 = vunpack.c.l.b16 %v2441
      %v2533 = vunpack.c.l.b16 %v2442
      %v2534 = vunpack.c.l.b16 %v2443
      %v2535 = vunpack.c.l.b16 %v2444
      %v2536 = vunpack.c.l.b16 %v2445
      %v2537 = vunpack.c.l.b16 %v2446
      %v2538 = vunpack.c.l.b16 %v2447
      %v2539 = vunpack.c.l.b16 %v2448
      %v2540 = vpack.c.b16 %v2525, %v2524
      %v2541 = vpack.c.b16 %v2527, %v2526
      %v2542 = vpack.c.b16 %v2529, %v2528
      %v2543 = vpack.c.b16 %v2531, %v2530
      %v2544 = vpack.c.b16 %v2533, %v2532
      %v2545 = vpack.c.b16 %v2535, %v2534
      %v2546 = vpack.c.b16 %v2537, %v2536
      %v2547 = vpack.c.b16 %v2539, %v2538
      %2556 = vmatprep.subr.bf16.mxu0 0
      %2557 = vmatpush1.bf16.msra.mxu0 %v2540
      %2558 = vmatprep.subr.bf16.mxu0 0
      %2559 = vmatpush1.bf16.msra.mxu0 %v2541
      %2560 = vmatprep.subr.bf16.mxu0 0
      %2561 = vmatpush1.bf16.msra.mxu0 %v2542
      %2562 = vmatprep.subr.bf16.mxu0 0
      %2563 = vmatpush1.bf16.msra.mxu0 %v2543
      %2564 = vmatprep.subr.bf16.mxu0 0
      %2565 = vmatpush1.bf16.msra.mxu0 %v2544
      %2566 = vmatprep.subr.bf16.mxu0 0
      %2567 = vmatpush1.bf16.msra.mxu0 %v2545
      %2568 = vmatprep.subr.bf16.mxu0 0
      %2569 = vmatpush1.bf16.msra.mxu0 %v2546
      %2570 = vmatprep.subr.bf16.mxu0 0
      %2571 = vmatpush1.bf16.msra.mxu0 %v2547
      %2572 = vmatprep.subr.bf16.mxu0 0
      %2573 = vmatpush1.bf16.msra.mxu0 0
      %2574 = vmatprep.subr.bf16.mxu0 0
      %2575 = vmatpush1.bf16.msra.mxu0 0
      %2576 = vmatprep.subr.bf16.mxu0 0
      %2577 = vmatpush1.bf16.msra.mxu0 0
      %2578 = vmatprep.subr.bf16.mxu0 0
      %2579 = vmatpush1.bf16.msra.mxu0 0
      %2580 = vmatprep.subr.bf16.mxu0 0
      %2581 = vmatpush1.bf16.msra.mxu0 0
      %2582 = vmatprep.subr.bf16.mxu0 0
      %2583 = vmatpush1.bf16.msra.mxu0 0
      %2584 = vmatprep.subr.bf16.mxu0 0
      %2585 = vmatpush1.bf16.msra.mxu0 0
      %2586 = vmatprep.subr.bf16.mxu0 0
      %2587 = vmatpush1.bf16.msra.mxu0 0
      %2588 = vmatprep.mubr.bf16.mxu0 0
      %2589 = vmatmul.mubr.bf16.gmra.mrb[0].mxu0 %v2455
      %v2590 = vpop.f32.mrb[0].mxu0
      %v2591 = vadd.f32 0.0, %v2590
      %v2592 = vpop.f32.mrb[0].mxu0
      %v2593 = vpop.f32.mrb[0].mxu0
      %v2594 = vadd.f32 0.0, %v2593
      %v2595 = vpop.f32.mrb[0].mxu0
      %2596 = vmatprep.mubr.bf16.mxu0 0
      %2597 = vmatmul.mubr.bf16.gmra.mrb[0].mxu0 %v2457
      %v2598 = vpop.f32.mrb[0].mxu0
      %v2599 = vadd.f32 0.0, %v2598
      %v2600 = vpop.f32.mrb[0].mxu0
      %v2601 = vpop.f32.mrb[0].mxu0
      %v2602 = vadd.f32 0.0, %v2601
      %v2603 = vpop.f32.mrb[0].mxu0
      %2604 = vmatprep.mubr.bf16.mxu0 0
      %2605 = vmatmul.mubr.bf16.gmra.mrb[0].mxu0 %v2459
      %v2606 = vpop.f32.mrb[0].mxu0
      %v2607 = vadd.f32 0.0, %v2606
      %v2608 = vpop.f32.mrb[0].mxu0
      %v2609 = vpop.f32.mrb[0].mxu0
      %v2610 = vadd.f32 0.0, %v2609
      %v2611 = vpop.f32.mrb[0].mxu0
      %2612 = vmatprep.mubr.bf16.mxu0 0
      %2613 = vmatmul.mubr.bf16.gmra.mrb[0].mxu0 %v2461
      %v2614 = vpop.f32.mrb[0].mxu0
      %v2615 = vadd.f32 0.0, %v2614
      %v2616 = vpop.f32.mrb[0].mxu0
      %v2617 = vpop.f32.mrb[0].mxu0
      %v2618 = vadd.f32 0.0, %v2617
      %v2619 = vpop.f32.mrb[0].mxu0
      %2620 = vmatprep.mubr.bf16.mxu0 0
      %2621 = vmatmul.mubr.bf16.gmra.mrb[0].mxu0 %v2463
      %v2622 = vpop.f32.mrb[0].mxu0
      %v2623 = vadd.f32 0.0, %v2622
      %v2624 = vpop.f32.mrb[0].mxu0
      %v2625 = vpop.f32.mrb[0].mxu0
      %v2626 = vadd.f32 0.0, %v2625
      %v2627 = vpop.f32.mrb[0].mxu0
      %2628 = vmatprep.mubr.bf16.mxu0 0
      %2629 = vmatmul.mubr.bf16.gmra.mrb[0].mxu0 %v2465
      %v2630 = vpop.f32.mrb[0].mxu0
      %v2631 = vadd.f32 0.0, %v2630
      %v2632 = vpop.f32.mrb[0].mxu0
      %v2633 = vpop.f32.mrb[0].mxu0
      %v2634 = vadd.f32 0.0, %v2633
      %v2635 = vpop.f32.mrb[0].mxu0
      %2636 = vmatprep.mubr.bf16.mxu0 0
      %2637 = vmatmul.mubr.bf16.gmra.mrb[0].mxu0 %v2467
      %v2638 = vpop.f32.mrb[0].mxu0
      %v2639 = vadd.f32 0.0, %v2638
      %v2640 = vpop.f32.mrb[0].mxu0
      %v2641 = vpop.f32.mrb[0].mxu0
      %v2642 = vadd.f32 0.0, %v2641
      %v2643 = vpop.f32.mrb[0].mxu0
      %2644 = vmatprep.mubr.bf16.mxu0 0
      %2645 = vmatmul.mubr.bf16.gmra.mrb[0].mxu0 %v2469
      %v2646 = vpop.f32.mrb[0].mxu0
      %v2647 = vadd.f32 0.0, %v2646
      %v2648 = vpop.f32.mrb[0].mxu0
      %v2649 = vpop.f32.mrb[0].mxu0
      %v2650 = vadd.f32 0.0, %v2649
      %v2651 = vpop.f32.mrb[0].mxu0
      %2652 = vmatprep.mubr.bf16.mxu0 0
      %2653 = vmatmul.mubr.bf16.gmra.mrb[0].mxu0 %v2471
      %v2654 = vpop.f32.mrb[0].mxu0
      %v2655 = vadd.f32 0.0, %v2654
      %v2656 = vpop.f32.mrb[0].mxu0
      %v2657 = vpop.f32.mrb[0].mxu0
      %v2658 = vadd.f32 0.0, %v2657
      %v2659 = vpop.f32.mrb[0].mxu0
      %2660 = vmatprep.mubr.bf16.mxu0 0
      %2661 = vmatmul.mubr.bf16.gmra.mrb[0].mxu0 %v2473
      %v2662 = vpop.f32.mrb[0].mxu0
      %v2663 = vadd.f32 0.0, %v2662
      %v2664 = vpop.f32.mrb[0].mxu0
      %v2665 = vpop.f32.mrb[0].mxu0
      %v2666 = vadd.f32 0.0, %v2665
      %v2667 = vpop.f32.mrb[0].mxu0
      %2668 = vmatprep.mubr.bf16.mxu0 0
      %2669 = vmatmul.mubr.bf16.gmra.mrb[0].mxu0 %v2475
      %v2670 = vpop.f32.mrb[0].mxu0
      %v2671 = vadd.f32 0.0, %v2670
      %v2672 = vpop.f32.mrb[0].mxu0
      %v2673 = vpop.f32.mrb[0].mxu0
      %v2674 = vadd.f32 0.0, %v2673
      %v2675 = vpop.f32.mrb[0].mxu0
      %2676 = vmatprep.mubr.bf16.mxu0 0
      %2677 = vmatmul.mubr.bf16.gmra.mrb[0].mxu0 %v2477
      %v2678 = vpop.f32.mrb[0].mxu0
      %v2679 = vadd.f32 0.0, %v2678
      %v2680 = vpop.f32.mrb[0].mxu0
      %v2681 = vpop.f32.mrb[0].mxu0
      %v2682 = vadd.f32 0.0, %v2681
      %v2683 = vpop.f32.mrb[0].mxu0
      %2684 = vmatprep.mubr.bf16.mxu0 0
      %2685 = vmatmul.mubr.bf16.gmra.mrb[0].mxu0 %v2479
      %v2686 = vpop.f32.mrb[0].mxu0
      %v2687 = vadd.f32 0.0, %v2686
      %v2688 = vpop.f32.mrb[0].mxu0
      %v2689 = vpop.f32.mrb[0].mxu0
      %v2690 = vadd.f32 0.0, %v2689
      %v2691 = vpop.f32.mrb[0].mxu0
      %2692 = vmatprep.mubr.bf16.mxu0 0
      %2693 = vmatmul.mubr.bf16.gmra.mrb[0].mxu0 %v2481
      %v2694 = vpop.f32.mrb[0].mxu0
      %v2695 = vadd.f32 0.0, %v2694
      %v2696 = vpop.f32.mrb[0].mxu0
      %v2697 = vpop.f32.mrb[0].mxu0
      %v2698 = vadd.f32 0.0, %v2697
      %v2699 = vpop.f32.mrb[0].mxu0
      %2700 = vmatprep.mubr.bf16.mxu0 0
      %2701 = vmatmul.mubr.bf16.gmra.mrb[0].mxu0 %v2483
      %v2702 = vpop.f32.mrb[0].mxu0
      %v2703 = vadd.f32 0.0, %v2702
      %v2704 = vpop.f32.mrb[0].mxu0
      %v2705 = vpop.f32.mrb[0].mxu0
      %v2706 = vadd.f32 0.0, %v2705
      %v2707 = vpop.f32.mrb[0].mxu0
      %2708 = vmatprep.mubr.bf16.mxu0 0
      %2709 = vmatmul.mubr.bf16.gmra.mrb[0].mxu0 %v2485
      %v2710 = vpop.f32.mrb[0].mxu0
      %v2711 = vadd.f32 0.0, %v2710
      %v2712 = vpop.f32.mrb[0].mxu0
      %v2713 = vpop.f32.mrb[0].mxu0
      %v2714 = vadd.f32 0.0, %v2713
      %v2715 = vpop.f32.mrb[0].mxu0
      %2716 = vmatprep.mubr.bf16.mxu0 0
      %2717 = vmatmul.mubr.bf16.gmra.mrb[0].mxu0 %v2487
      %v2718 = vpop.f32.mrb[0].mxu0
      %v2719 = vadd.f32 0.0, %v2718
      %v2720 = vpop.f32.mrb[0].mxu0
      %v2721 = vpop.f32.mrb[0].mxu0
      %v2722 = vadd.f32 0.0, %v2721
      %v2723 = vpop.f32.mrb[0].mxu0
      %2724 = vmatprep.mubr.bf16.mxu0 0
      %2725 = vmatmul.mubr.bf16.gmra.mrb[0].mxu0 %v2489
      %v2726 = vpop.f32.mrb[0].mxu0
      %v2727 = vadd.f32 0.0, %v2726
      %v2728 = vpop.f32.mrb[0].mxu0
      %v2729 = vpop.f32.mrb[0].mxu0
      %v2730 = vadd.f32 0.0, %v2729
      %v2731 = vpop.f32.mrb[0].mxu0
      %2732 = vdwg.mxu0
      %v2733 = vadd.f32 %v2395, %v2591
      %v2734 = vadd.f32 %v2396, %v2594
      %v2735 = vadd.f32 %v2397, %v2599
      %v2736 = vadd.f32 %v2398, %v2602
      %v2737 = vadd.f32 %v2399, %v2607
      %v2738 = vadd.f32 %v2400, %v2610
      %v2739 = vadd.f32 %v2401, %v2615
      %v2740 = vadd.f32 %v2402, %v2618
      %v2741 = vadd.f32 %v2403, %v2623
      %v2742 = vadd.f32 %v2404, %v2626
      %v2743 = vadd.f32 %v2405, %v2631
      %v2744 = vadd.f32 %v2406, %v2634
      %v2745 = vadd.f32 %v2407, %v2639
      %v2746 = vadd.f32 %v2408, %v2642
      %v2747 = vadd.f32 %v2409, %v2647
      %v2748 = vadd.f32 %v2410, %v2650
      %v2749 = vadd.f32 %v2411, %v2655
      %v2750 = vadd.f32 %v2412, %v2658
      %v2751 = vadd.f32 %v2413, %v2663
      %v2752 = vadd.f32 %v2414, %v2666
      %v2753 = vadd.f32 %v2415, %v2671
      %v2754 = vadd.f32 %v2416, %v2674
      %v2755 = vadd.f32 %v2417, %v2679
      %v2756 = vadd.f32 %v2418, %v2682
      %v2757 = vadd.f32 %v2419, %v2687
      %v2758 = vadd.f32 %v2420, %v2690
      %v2759 = vadd.f32 %v2421, %v2695
      %v2760 = vadd.f32 %v2422, %v2698
      %v2761 = vadd.f32 %v2423, %v2703
      %v2762 = vadd.f32 %v2424, %v2706
      %v2763 = vadd.f32 %v2425, %v2711
      %v2764 = vadd.f32 %v2426, %v2714
      %v2765 = vadd.f32 %v2427, %v2719
      %v2766 = vadd.f32 %v2428, %v2722
      %v2767 = vadd.f32 %v2429, %v2727
      %v2768 = vadd.f32 %v2430, %v2730
      %v2769 = vld [vmem:[%s300 + $0x10] sm:$0xc]
      %v2770 = vld [vmem:[%s300 + $0x14] sm:$0xf]
      %v2771 = vld [vmem:[%s300 + $0x18] sm:$0xf]
      %v2772 = vld [vmem:[%s300 + $0x1c] sm:$0xf]
      %v2773 = vld [vmem:[%s300 + $0x20] sm:$0xf]
      %v2774 = vld [vmem:[%s300 + $0x24] sm:$0xf]
      %v2775 = vld [vmem:[%s300 + $0x28] sm:$0xf]
      %v2776 = vld [vmem:[%s300 + $0x2c] sm:$0xf]
      %v2777 = vld [vmem:[%s300 + $0x30] sm:$0xf]
      %v2778 = vld [vmem:[%s300 + $0x34] sm:$0xf]
      %v2779 = vld [vmem:[%s300 + $0x38] sm:$0xf]
      %v2780 = vld [vmem:[%s300 + $0x3c] sm:$0xf]
      %v2781 = vld [vmem:[%s300 + $0x40] sm:$0xf]
      %v2782 = vld [vmem:[%s300 + $0x44] sm:$0xf]
      %v2783 = vld [vmem:[%s300 + $0x48] sm:$0xf]
      %v2784 = vld [vmem:[%s300 + $0x4c] sm:$0xf]
      %v2785 = vld [vmem:[%s300 + $0x50] sm:$0xf]
      %v2786 = vld [vmem:[%s300 + $0x54] sm:$0xf]
      %v2787 = vld [vmem:[%s300 + $0x58] sm:$0xf]
      %v2788 = vld [vmem:[%s300 + $0x5c] sm:$0xf]
      %v2789 = vld [vmem:[%s300 + $0x60] sm:$0xf]
      %v2790 = vld [vmem:[%s300 + $0x64] sm:$0xf]
      %v2791 = vld [vmem:[%s300 + $0x68] sm:$0xf]
      %v2792 = vld [vmem:[%s300 + $0x6c] sm:$0xf]
      %v2793 = vld [vmem:[%s300 + $0x70] sm:$0xf]
      %v2794 = vld [vmem:[%s300 + $0x74] sm:$0xf]
      %v2795 = vld [vmem:[%s300 + $0x78] sm:$0xf]
      %v2796 = vld [vmem:[%s300 + $0x7c] sm:$0xf]
      %v2797 = vld [vmem:[%s300 + $0x80] sm:$0xf]
      %v2798 = vld [vmem:[%s300 + $0x84] sm:$0xf]
      %v2799 = vld [vmem:[%s300 + $0x88] sm:$0xf]
      %v2800 = vld [vmem:[%s300 + $0x8c] sm:$0xf]
      %v2801 = vld [vmem:[%s300 + $0x90] sm:$0xf]
      %v2802 = vld [vmem:[%s300 + $0x94] sm:$0xf]
      %v2803 = vld [vmem:[%s300 + $0x98] sm:$0xf]
      %v2804 = vld [vmem:[%s300 + $0x9c] sm:$0xf]
      %v2805 = vld [vmem:[%s300 + $0xa0] sm:$0x3]
      %s2806 = scalar_lea.vmem %s2, 384
      %v2807 = vld [vmem:[%s2806] sm:$0xf]
      %v2808 = vld [vmem:[%s2806 + $0x4] sm:$0xf]
      %v2809 = vld [vmem:[%s2806 + $0x8] sm:$0xf]
      %v2810 = vld [vmem:[%s2806 + $0xc] sm:$0xf]
      %v2811 = vld [vmem:[%s2806 + $0x10] sm:$0xf]
      %v2812 = vld [vmem:[%s2806 + $0x14] sm:$0xf]
      %v2813 = vld [vmem:[%s2806 + $0x18] sm:$0xf]
      %v2814 = vld [vmem:[%s2806 + $0x1c] sm:$0xf]
      %v2815 = vld [vmem:[%s2806 + $0x20] sm:$0xf]
      %v2816 = vld [vmem:[%s2806 + $0x24] sm:$0xf]
      %v2817 = vld [vmem:[%s2806 + $0x28] sm:$0xf]
      %v2818 = vld [vmem:[%s2806 + $0x2c] sm:$0xf]
      %v2819 = vld [vmem:[%s2806 + $0x30] sm:$0xf]
      %v2820 = vld [vmem:[%s2806 + $0x34] sm:$0xf]
      %v2821 = vld [vmem:[%s2806 + $0x38] sm:$0xf]
      %v2822 = vld [vmem:[%s2806 + $0x3c] sm:$0xf]
      %v2860 = vunpack.c.l.b16 %v2769
      %v2861 = vunpack.c.l.b16 %v2770
      %v2862 = vunpack.c.l.b16 %v2771
      %v2863 = vunpack.c.l.b16 %v2772
      %v2864 = vunpack.c.l.b16 %v2773
      %v2865 = vunpack.c.l.b16 %v2774
      %v2866 = vunpack.c.l.b16 %v2775
      %v2867 = vunpack.c.l.b16 %v2776
      %v2868 = vunpack.c.l.b16 %v2777
      %v2869 = vunpack.c.l.b16 %v2778
      %v2870 = vunpack.c.l.b16 %v2779
      %v2871 = vunpack.c.l.b16 %v2780
      %v2872 = vunpack.c.l.b16 %v2781
      %v2873 = vunpack.c.l.b16 %v2782
      %v2874 = vunpack.c.l.b16 %v2783
      %v2875 = vunpack.c.l.b16 %v2784
      %v2876 = vunpack.c.l.b16 %v2785
      %v2877 = vunpack.c.l.b16 %v2786
      %v2878 = vunpack.c.l.b16 %v2787
      %v2879 = vunpack.c.l.b16 %v2788
      %v2880 = vunpack.c.l.b16 %v2789
      %v2881 = vunpack.c.l.b16 %v2790
      %v2882 = vunpack.c.l.b16 %v2791
      %v2883 = vunpack.c.l.b16 %v2792
      %v2884 = vunpack.c.l.b16 %v2793
      %v2885 = vunpack.c.l.b16 %v2794
      %v2886 = vunpack.c.l.b16 %v2795
      %v2887 = vunpack.c.l.b16 %v2796
      %v2888 = vunpack.c.l.b16 %v2797
      %v2889 = vunpack.c.l.b16 %v2798
      %v2890 = vunpack.c.l.b16 %v2799
      %v2891 = vunpack.c.l.b16 %v2800
      %v2892 = vunpack.c.l.b16 %v2801
      %v2893 = vunpack.c.l.b16 %v2802
      %v2894 = vunpack.c.l.b16 %v2803
      %v2895 = vunpack.c.l.b16 %v2804
      %v2896 = vunpack.c.l.b16 %v2805
      %v2897 = vpack.c.b16 %v2861, %v2860
      %v2898 = vpack.c.b16 %v2863, %v2862
      %v2899 = vpack.c.b16 %v2865, %v2864
      %v2900 = vpack.c.b16 %v2867, %v2866
      %v2901 = vpack.c.b16 %v2869, %v2868
      %v2902 = vpack.c.b16 %v2871, %v2870
      %v2903 = vpack.c.b16 %v2873, %v2872
      %v2904 = vpack.c.b16 %v2875, %v2874
      %v2905 = vpack.c.b16 %v2877, %v2876
      %v2906 = vpack.c.b16 %v2879, %v2878
      %v2907 = vpack.c.b16 %v2881, %v2880
      %v2908 = vpack.c.b16 %v2883, %v2882
      %v2909 = vpack.c.b16 %v2885, %v2884
      %v2910 = vpack.c.b16 %v2887, %v2886
      %v2911 = vpack.c.b16 %v2889, %v2888
      %v2912 = vpack.c.b16 %v2891, %v2890
      %v2913 = vpack.c.b16 %v2893, %v2892
      %v2914 = vpack.c.b16 %v2895, %v2894
      %v2915 = vpack.c.b16 %v2896, %v2896
      %v2916 = vrot.slane %v2897, 2
      %v2917 = vrot.slane %v2898, 2
      %v2918 = vsel %vm2452, %v2916, %v2917
      %v2919 = vrot.slane %v2899, 2
      %v2920 = vsel %vm2452, %v2917, %v2919
      %v2921 = vrot.slane %v2900, 2
      %v2922 = vsel %vm2452, %v2919, %v2921
      %v2923 = vrot.slane %v2901, 2
      %v2924 = vsel %vm2452, %v2921, %v2923
      %v2925 = vrot.slane %v2902, 2
      %v2926 = vsel %vm2452, %v2923, %v2925
      %v2927 = vrot.slane %v2903, 2
      %v2928 = vsel %vm2452, %v2925, %v2927
      %v2929 = vrot.slane %v2904, 2
      %v2930 = vsel %vm2452, %v2927, %v2929
      %v2931 = vrot.slane %v2905, 2
      %v2932 = vsel %vm2452, %v2929, %v2931
      %v2933 = vrot.slane %v2906, 2
      %v2934 = vsel %vm2452, %v2931, %v2933
      %v2935 = vrot.slane %v2907, 2
      %v2936 = vsel %vm2452, %v2933, %v2935
      %v2937 = vrot.slane %v2908, 2
      %v2938 = vsel %vm2452, %v2935, %v2937
      %v2939 = vrot.slane %v2909, 2
      %v2940 = vsel %vm2452, %v2937, %v2939
      %v2941 = vrot.slane %v2910, 2
      %v2942 = vsel %vm2452, %v2939, %v2941
      %v2943 = vrot.slane %v2911, 2
      %v2944 = vsel %vm2452, %v2941, %v2943
      %v2945 = vrot.slane %v2912, 2
      %v2946 = vsel %vm2452, %v2943, %v2945
      %v2947 = vrot.slane %v2913, 2
      %v2948 = vsel %vm2452, %v2945, %v2947
      %v2949 = vrot.slane %v2914, 2
      %v2950 = vsel %vm2452, %v2947, %v2949
      %v2951 = vrot.slane %v2915, 2
      %v2952 = vsel %vm2452, %v2949, %v2951
      %v2987 = vunpack.c.l.b16 %v2807
      %v2988 = vunpack.c.l.b16 %v2808
      %v2989 = vunpack.c.l.b16 %v2809
      %v2990 = vunpack.c.l.b16 %v2810
      %v2991 = vunpack.c.l.b16 %v2811
      %v2992 = vunpack.c.l.b16 %v2812
      %v2993 = vunpack.c.l.b16 %v2813
      %v2994 = vunpack.c.l.b16 %v2814
      %v2995 = vunpack.c.l.b16 %v2815
      %v2996 = vunpack.c.l.b16 %v2816
      %v2997 = vunpack.c.l.b16 %v2817
      %v2998 = vunpack.c.l.b16 %v2818
      %v2999 = vunpack.c.l.b16 %v2819
      %v3000 = vunpack.c.l.b16 %v2820
      %v3001 = vunpack.c.l.b16 %v2821
      %v3002 = vunpack.c.l.b16 %v2822
      %v3003 = vpack.c.b16 %v2988, %v2987
      %v3004 = vpack.c.b16 %v2990, %v2989
      %v3005 = vpack.c.b16 %v2992, %v2991
      %v3006 = vpack.c.b16 %v2994, %v2993
      %v3007 = vpack.c.b16 %v2996, %v2995
      %v3008 = vpack.c.b16 %v2998, %v2997
      %v3009 = vpack.c.b16 %v3000, %v2999
      %v3010 = vpack.c.b16 %v3002, %v3001
      %3019 = vmatprep.subr.bf16.mxu0 0
      %3020 = vmatpush1.bf16.msra.mxu0 %v3003
      %3021 = vmatprep.subr.bf16.mxu0 0
      %3022 = vmatpush1.bf16.msra.mxu0 %v3004
      %3023 = vmatprep.subr.bf16.mxu0 0
      %3024 = vmatpush1.bf16.msra.mxu0 %v3005
      %3025 = vmatprep.subr.bf16.mxu0 0
      %3026 = vmatpush1.bf16.msra.mxu0 %v3006
      %3027 = vmatprep.subr.bf16.mxu0 0
      %3028 = vmatpush1.bf16.msra.mxu0 %v3007
      %3029 = vmatprep.subr.bf16.mxu0 0
      %3030 = vmatpush1.bf16.msra.mxu0 %v3008
      %3031 = vmatprep.subr.bf16.mxu0 0
      %3032 = vmatpush1.bf16.msra.mxu0 %v3009
      %3033 = vmatprep.subr.bf16.mxu0 0
      %3034 = vmatpush1.bf16.msra.mxu0 %v3010
      %3035 = vmatprep.subr.bf16.mxu0 0
      %3036 = vmatpush1.bf16.msra.mxu0 0
      %3037 = vmatprep.subr.bf16.mxu0 0
      %3038 = vmatpush1.bf16.msra.mxu0 0
      %3039 = vmatprep.subr.bf16.mxu0 0
      %3040 = vmatpush1.bf16.msra.mxu0 0
      %3041 = vmatprep.subr.bf16.mxu0 0
      %3042 = vmatpush1.bf16.msra.mxu0 0
      %3043 = vmatprep.subr.bf16.mxu0 0
      %3044 = vmatpush1.bf16.msra.mxu0 0
      %3045 = vmatprep.subr.bf16.mxu0 0
      %3046 = vmatpush1.bf16.msra.mxu0 0
      %3047 = vmatprep.subr.bf16.mxu0 0
      %3048 = vmatpush1.bf16.msra.mxu0 0
      %3049 = vmatprep.subr.bf16.mxu0 0
      %3050 = vmatpush1.bf16.msra.mxu0 0
      %3051 = vmatprep.mubr.bf16.mxu0 0
      %3052 = vmatmul.mubr.bf16.gmra.mrb[0].mxu0 %v2918
      %v3053 = vpop.f32.mrb[0].mxu0
      %v3054 = vadd.f32 0.0, %v3053
      %v3055 = vpop.f32.mrb[0].mxu0
      %v3056 = vpop.f32.mrb[0].mxu0
      %v3057 = vadd.f32 0.0, %v3056
      %v3058 = vpop.f32.mrb[0].mxu0
      %3059 = vmatprep.mubr.bf16.mxu0 0
      %3060 = vmatmul.mubr.bf16.gmra.mrb[0].mxu0 %v2920
      %v3061 = vpop.f32.mrb[0].mxu0
      %v3062 = vadd.f32 0.0, %v3061
      %v3063 = vpop.f32.mrb[0].mxu0
      %v3064 = vpop.f32.mrb[0].mxu0
      %v3065 = vadd.f32 0.0, %v3064
      %v3066 = vpop.f32.mrb[0].mxu0
      %3067 = vmatprep.mubr.bf16.mxu0 0
      %3068 = vmatmul.mubr.bf16.gmra.mrb[0].mxu0 %v2922
      %v3069 = vpop.f32.mrb[0].mxu0
      %v3070 = vadd.f32 0.0, %v3069
      %v3071 = vpop.f32.mrb[0].mxu0
      %v3072 = vpop.f32.mrb[0].mxu0
      %v3073 = vadd.f32 0.0, %v3072
      %v3074 = vpop.f32.mrb[0].mxu0
      %3075 = vmatprep.mubr.bf16.mxu0 0
      %3076 = vmatmul.mubr.bf16.gmra.mrb[0].mxu0 %v2924
      %v3077 = vpop.f32.mrb[0].mxu0
      %v3078 = vadd.f32 0.0, %v3077
      %v3079 = vpop.f32.mrb[0].mxu0
      %v3080 = vpop.f32.mrb[0].mxu0
      %v3081 = vadd.f32 0.0, %v3080
      %v3082 = vpop.f32.mrb[0].mxu0
      %3083 = vmatprep.mubr.bf16.mxu0 0
      %3084 = vmatmul.mubr.bf16.gmra.mrb[0].mxu0 %v2926
      %v3085 = vpop.f32.mrb[0].mxu0
      %v3086 = vadd.f32 0.0, %v3085
      %v3087 = vpop.f32.mrb[0].mxu0
      %v3088 = vpop.f32.mrb[0].mxu0
      %v3089 = vadd.f32 0.0, %v3088
      %v3090 = vpop.f32.mrb[0].mxu0
      %3091 = vmatprep.mubr.bf16.mxu0 0
      %3092 = vmatmul.mubr.bf16.gmra.mrb[0].mxu0 %v2928
      %v3093 = vpop.f32.mrb[0].mxu0
      %v3094 = vadd.f32 0.0, %v3093
      %v3095 = vpop.f32.mrb[0].mxu0
      %v3096 = vpop.f32.mrb[0].mxu0
      %v3097 = vadd.f32 0.0, %v3096
      %v3098 = vpop.f32.mrb[0].mxu0
      %3099 = vmatprep.mubr.bf16.mxu0 0
      %3100 = vmatmul.mubr.bf16.gmra.mrb[0].mxu0 %v2930
      %v3101 = vpop.f32.mrb[0].mxu0
      %v3102 = vadd.f32 0.0, %v3101
      %v3103 = vpop.f32.mrb[0].mxu0
      %v3104 = vpop.f32.mrb[0].mxu0
      %v3105 = vadd.f32 0.0, %v3104
      %v3106 = vpop.f32.mrb[0].mxu0
      %3107 = vmatprep.mubr.bf16.mxu0 0
      %3108 = vmatmul.mubr.bf16.gmra.mrb[0].mxu0 %v2932
      %v3109 = vpop.f32.mrb[0].mxu0
      %v3110 = vadd.f32 0.0, %v3109
      %v3111 = vpop.f32.mrb[0].mxu0
      %v3112 = vpop.f32.mrb[0].mxu0
      %v3113 = vadd.f32 0.0, %v3112
      %v3114 = vpop.f32.mrb[0].mxu0
      %3115 = vmatprep.mubr.bf16.mxu0 0
      %3116 = vmatmul.mubr.bf16.gmra.mrb[0].mxu0 %v2934
      %v3117 = vpop.f32.mrb[0].mxu0
      %v3118 = vadd.f32 0.0, %v3117
      %v3119 = vpop.f32.mrb[0].mxu0
      %v3120 = vpop.f32.mrb[0].mxu0
      %v3121 = vadd.f32 0.0, %v3120
      %v3122 = vpop.f32.mrb[0].mxu0
      %3123 = vmatprep.mubr.bf16.mxu0 0
      %3124 = vmatmul.mubr.bf16.gmra.mrb[0].mxu0 %v2936
      %v3125 = vpop.f32.mrb[0].mxu0
      %v3126 = vadd.f32 0.0, %v3125
      %v3127 = vpop.f32.mrb[0].mxu0
      %v3128 = vpop.f32.mrb[0].mxu0
      %v3129 = vadd.f32 0.0, %v3128
      %v3130 = vpop.f32.mrb[0].mxu0
      %3131 = vmatprep.mubr.bf16.mxu0 0
      %3132 = vmatmul.mubr.bf16.gmra.mrb[0].mxu0 %v2938
      %v3133 = vpop.f32.mrb[0].mxu0
      %v3134 = vadd.f32 0.0, %v3133
      %v3135 = vpop.f32.mrb[0].mxu0
      %v3136 = vpop.f32.mrb[0].mxu0
      %v3137 = vadd.f32 0.0, %v3136
      %v3138 = vpop.f32.mrb[0].mxu0
      %3139 = vmatprep.mubr.bf16.mxu0 0
      %3140 = vmatmul.mubr.bf16.gmra.mrb[0].mxu0 %v2940
      %v3141 = vpop.f32.mrb[0].mxu0
      %v3142 = vadd.f32 0.0, %v3141
      %v3143 = vpop.f32.mrb[0].mxu0
      %v3144 = vpop.f32.mrb[0].mxu0
      %v3145 = vadd.f32 0.0, %v3144
      %v3146 = vpop.f32.mrb[0].mxu0
      %3147 = vmatprep.mubr.bf16.mxu0 0
      %3148 = vmatmul.mubr.bf16.gmra.mrb[0].mxu0 %v2942
      %v3149 = vpop.f32.mrb[0].mxu0
      %v3150 = vadd.f32 0.0, %v3149
      %v3151 = vpop.f32.mrb[0].mxu0
      %v3152 = vpop.f32.mrb[0].mxu0
      %v3153 = vadd.f32 0.0, %v3152
      %v3154 = vpop.f32.mrb[0].mxu0
      %3155 = vmatprep.mubr.bf16.mxu0 0
      %3156 = vmatmul.mubr.bf16.gmra.mrb[0].mxu0 %v2944
      %v3157 = vpop.f32.mrb[0].mxu0
      %v3158 = vadd.f32 0.0, %v3157
      %v3159 = vpop.f32.mrb[0].mxu0
      %v3160 = vpop.f32.mrb[0].mxu0
      %v3161 = vadd.f32 0.0, %v3160
      %v3162 = vpop.f32.mrb[0].mxu0
      %3163 = vmatprep.mubr.bf16.mxu0 0
      %3164 = vmatmul.mubr.bf16.gmra.mrb[0].mxu0 %v2946
      %v3165 = vpop.f32.mrb[0].mxu0
      %v3166 = vadd.f32 0.0, %v3165
      %v3167 = vpop.f32.mrb[0].mxu0
      %v3168 = vpop.f32.mrb[0].mxu0
      %v3169 = vadd.f32 0.0, %v3168
      %v3170 = vpop.f32.mrb[0].mxu0
      %3171 = vmatprep.mubr.bf16.mxu0 0
      %3172 = vmatmul.mubr.bf16.gmra.mrb[0].mxu0 %v2948
      %v3173 = vpop.f32.mrb[0].mxu0
      %v3174 = vadd.f32 0.0, %v3173
      %v3175 = vpop.f32.mrb[0].mxu0
      %v3176 = vpop.f32.mrb[0].mxu0
      %v3177 = vadd.f32 0.0, %v3176
      %v3178 = vpop.f32.mrb[0].mxu0
      %3179 = vmatprep.mubr.bf16.mxu0 0
      %3180 = vmatmul.mubr.bf16.gmra.mrb[0].mxu0 %v2950
      %v3181 = vpop.f32.mrb[0].mxu0
      %v3182 = vadd.f32 0.0, %v3181
      %v3183 = vpop.f32.mrb[0].mxu0
      %v3184 = vpop.f32.mrb[0].mxu0
      %v3185 = vadd.f32 0.0, %v3184
      %v3186 = vpop.f32.mrb[0].mxu0
      %3187 = vmatprep.mubr.bf16.mxu0 0
      %3188 = vmatmul.mubr.bf16.gmra.mrb[0].mxu0 %v2952
      %v3189 = vpop.f32.mrb[0].mxu0
      %v3190 = vadd.f32 0.0, %v3189
      %v3191 = vpop.f32.mrb[0].mxu0
      %v3192 = vpop.f32.mrb[0].mxu0
      %v3193 = vadd.f32 0.0, %v3192
      %v3194 = vpop.f32.mrb[0].mxu0
      %3195 = vdwg.mxu0
      %v3196 = vadd.f32 %v2733, %v3054
      %v3197 = vadd.f32 %v2734, %v3057
      %v3198 = vadd.f32 %v2735, %v3062
      %v3199 = vadd.f32 %v2736, %v3065
      %v3200 = vadd.f32 %v2737, %v3070
      %v3201 = vadd.f32 %v2738, %v3073
      %v3202 = vadd.f32 %v2739, %v3078
      %v3203 = vadd.f32 %v2740, %v3081
      %v3204 = vadd.f32 %v2741, %v3086
      %v3205 = vadd.f32 %v2742, %v3089
      %v3206 = vadd.f32 %v2743, %v3094
      %v3207 = vadd.f32 %v2744, %v3097
      %v3208 = vadd.f32 %v2745, %v3102
      %v3209 = vadd.f32 %v2746, %v3105
      %v3210 = vadd.f32 %v2747, %v3110
      %v3211 = vadd.f32 %v2748, %v3113
      %v3212 = vadd.f32 %v2749, %v3118
      %v3213 = vadd.f32 %v2750, %v3121
      %v3214 = vadd.f32 %v2751, %v3126
      %v3215 = vadd.f32 %v2752, %v3129
      %v3216 = vadd.f32 %v2753, %v3134
      %v3217 = vadd.f32 %v2754, %v3137
      %v3218 = vadd.f32 %v2755, %v3142
      %v3219 = vadd.f32 %v2756, %v3145
      %v3220 = vadd.f32 %v2757, %v3150
      %v3221 = vadd.f32 %v2758, %v3153
      %v3222 = vadd.f32 %v2759, %v3158
      %v3223 = vadd.f32 %v2760, %v3161
      %v3224 = vadd.f32 %v2761, %v3166
      %v3225 = vadd.f32 %v2762, %v3169
      %v3226 = vadd.f32 %v2763, %v3174
      %v3227 = vadd.f32 %v2764, %v3177
      %v3228 = vadd.f32 %v2765, %v3182
      %v3229 = vadd.f32 %v2766, %v3185
      %v3230 = vadd.f32 %v2767, %v3190
      %v3231 = vadd.f32 %v2768, %v3193
      %v3232 = vld [vmem:[%s300 + $0xa0] sm:$0x7]
      %s3233 = scalar_lea.vmem %s2, 448
      %v3234 = vld [vmem:[%s3233] sm:$0xf]
      %v3235 = vld [vmem:[%s3233 + $0x4] sm:$0xf]
      %v3236 = vld [vmem:[%s3233 + $0x8] sm:$0xf]
      %v3237 = vld [vmem:[%s3233 + $0xc] sm:$0xf]
      %v3238 = vld [vmem:[%s3233 + $0x10] sm:$0xf]
      %v3239 = vld [vmem:[%s3233 + $0x14] sm:$0xf]
      %v3240 = vld [vmem:[%s3233 + $0x18] sm:$0xf]
      %v3241 = vld [vmem:[%s3233 + $0x1c] sm:$0xf]
      %v3242 = vld [vmem:[%s3233 + $0x20] sm:$0xf]
      %v3243 = vld [vmem:[%s3233 + $0x24] sm:$0xf]
      %v3244 = vld [vmem:[%s3233 + $0x28] sm:$0xf]
      %v3245 = vld [vmem:[%s3233 + $0x2c] sm:$0xf]
      %v3246 = vld [vmem:[%s3233 + $0x30] sm:$0xf]
      %v3247 = vld [vmem:[%s3233 + $0x34] sm:$0xf]
      %v3248 = vld [vmem:[%s3233 + $0x38] sm:$0xf]
      %v3249 = vld [vmem:[%s3233 + $0x3c] sm:$0xf]
      %v3251 = vunpack.c.l.b16 %v3232
      %v3252 = vpack.c.b16 %v3251, %v3251
      %vm3253 = vsmask.f32 5376
      %v3255 = vshrl.u32 %v2897, 16
      %v3257 = vrot.slane %v3255, 2
      %v3258 = vshll.u32 %v2897, 16
      %v3260 = vrot.slane %v3258, 3
      %v3261 = vor.u32 %v3257, %v3260
      %v3263 = vshrl.u32 %v2898, 16
      %v3265 = vrot.slane %v3263, 2
      %v3266 = vshll.u32 %v2898, 16
      %v3268 = vrot.slane %v3266, 3
      %v3269 = vor.u32 %v3265, %v3268
      %v3270 = vsel %vm3253, %v3261, %v3269
      %v3272 = vshrl.u32 %v2899, 16
      %v3274 = vrot.slane %v3272, 2
      %v3275 = vshll.u32 %v2899, 16
      %v3277 = vrot.slane %v3275, 3
      %v3278 = vor.u32 %v3274, %v3277
      %v3279 = vsel %vm3253, %v3269, %v3278
      %v3281 = vshrl.u32 %v2900, 16
      %v3283 = vrot.slane %v3281, 2
      %v3284 = vshll.u32 %v2900, 16
      %v3286 = vrot.slane %v3284, 3
      %v3287 = vor.u32 %v3283, %v3286
      %v3288 = vsel %vm3253, %v3278, %v3287
      %v3290 = vshrl.u32 %v2901, 16
      %v3292 = vrot.slane %v3290, 2
      %v3293 = vshll.u32 %v2901, 16
      %v3295 = vrot.slane %v3293, 3
      %v3296 = vor.u32 %v3292, %v3295
      %v3297 = vsel %vm3253, %v3287, %v3296
      %v3299 = vshrl.u32 %v2902, 16
      %v3301 = vrot.slane %v3299, 2
      %v3302 = vshll.u32 %v2902, 16
      %v3304 = vrot.slane %v3302, 3
      %v3305 = vor.u32 %v3301, %v3304
      %v3306 = vsel %vm3253, %v3296, %v3305
      %v3308 = vshrl.u32 %v2903, 16
      %v3310 = vrot.slane %v3308, 2
      %v3311 = vshll.u32 %v2903, 16
      %v3313 = vrot.slane %v3311, 3
      %v3314 = vor.u32 %v3310, %v3313
      %v3315 = vsel %vm3253, %v3305, %v3314
      %v3317 = vshrl.u32 %v2904, 16
      %v3319 = vrot.slane %v3317, 2
      %v3320 = vshll.u32 %v2904, 16
      %v3322 = vrot.slane %v3320, 3
      %v3323 = vor.u32 %v3319, %v3322
      %v3324 = vsel %vm3253, %v3314, %v3323
      %v3326 = vshrl.u32 %v2905, 16
      %v3328 = vrot.slane %v3326, 2
      %v3329 = vshll.u32 %v2905, 16
      %v3331 = vrot.slane %v3329, 3
      %v3332 = vor.u32 %v3328, %v3331
      %v3333 = vsel %vm3253, %v3323, %v3332
      %v3335 = vshrl.u32 %v2906, 16
      %v3337 = vrot.slane %v3335, 2
      %v3338 = vshll.u32 %v2906, 16
      %v3340 = vrot.slane %v3338, 3
      %v3341 = vor.u32 %v3337, %v3340
      %v3342 = vsel %vm3253, %v3332, %v3341
      %v3344 = vshrl.u32 %v2907, 16
      %v3346 = vrot.slane %v3344, 2
      %v3347 = vshll.u32 %v2907, 16
      %v3349 = vrot.slane %v3347, 3
      %v3350 = vor.u32 %v3346, %v3349
      %v3351 = vsel %vm3253, %v3341, %v3350
      %v3353 = vshrl.u32 %v2908, 16
      %v3355 = vrot.slane %v3353, 2
      %v3356 = vshll.u32 %v2908, 16
      %v3358 = vrot.slane %v3356, 3
      %v3359 = vor.u32 %v3355, %v3358
      %v3360 = vsel %vm3253, %v3350, %v3359
      %v3362 = vshrl.u32 %v2909, 16
      %v3364 = vrot.slane %v3362, 2
      %v3365 = vshll.u32 %v2909, 16
      %v3367 = vrot.slane %v3365, 3
      %v3368 = vor.u32 %v3364, %v3367
      %v3369 = vsel %vm3253, %v3359, %v3368
      %v3371 = vshrl.u32 %v2910, 16
      %v3373 = vrot.slane %v3371, 2
      %v3374 = vshll.u32 %v2910, 16
      %v3376 = vrot.slane %v3374, 3
      %v3377 = vor.u32 %v3373, %v3376
      %v3378 = vsel %vm3253, %v3368, %v3377
      %v3380 = vshrl.u32 %v2911, 16
      %v3382 = vrot.slane %v3380, 2
      %v3383 = vshll.u32 %v2911, 16
      %v3385 = vrot.slane %v3383, 3
      %v3386 = vor.u32 %v3382, %v3385
      %v3387 = vsel %vm3253, %v3377, %v3386
      %v3389 = vshrl.u32 %v2912, 16
      %v3391 = vrot.slane %v3389, 2
      %v3392 = vshll.u32 %v2912, 16
      %v3394 = vrot.slane %v3392, 3
      %v3395 = vor.u32 %v3391, %v3394
      %v3396 = vsel %vm3253, %v3386, %v3395
      %v3398 = vshrl.u32 %v2913, 16
      %v3400 = vrot.slane %v3398, 2
      %v3401 = vshll.u32 %v2913, 16
      %v3403 = vrot.slane %v3401, 3
      %v3404 = vor.u32 %v3400, %v3403
      %v3405 = vsel %vm3253, %v3395, %v3404
      %v3407 = vshrl.u32 %v2914, 16
      %v3409 = vrot.slane %v3407, 2
      %v3410 = vshll.u32 %v2914, 16
      %v3412 = vrot.slane %v3410, 3
      %v3413 = vor.u32 %v3409, %v3412
      %v3414 = vsel %vm3253, %v3404, %v3413
      %v3416 = vshrl.u32 %v3252, 16
      %v3418 = vrot.slane %v3416, 2
      %v3419 = vshll.u32 %v3252, 16
      %v3421 = vrot.slane %v3419, 3
      %v3422 = vor.u32 %v3418, %v3421
      %v3423 = vsel %vm3253, %v3413, %v3422
      %v3458 = vunpack.c.l.b16 %v3234
      %v3459 = vunpack.c.l.b16 %v3235
      %v3460 = vunpack.c.l.b16 %v3236
      %v3461 = vunpack.c.l.b16 %v3237
      %v3462 = vunpack.c.l.b16 %v3238
      %v3463 = vunpack.c.l.b16 %v3239
      %v3464 = vunpack.c.l.b16 %v3240
      %v3465 = vunpack.c.l.b16 %v3241
      %v3466 = vunpack.c.l.b16 %v3242
      %v3467 = vunpack.c.l.b16 %v3243
      %v3468 = vunpack.c.l.b16 %v3244
      %v3469 = vunpack.c.l.b16 %v3245
      %v3470 = vunpack.c.l.b16 %v3246
      %v3471 = vunpack.c.l.b16 %v3247
      %v3472 = vunpack.c.l.b16 %v3248
      %v3473 = vunpack.c.l.b16 %v3249
      %v3474 = vpack.c.b16 %v3459, %v3458
      %v3475 = vpack.c.b16 %v3461, %v3460
      %v3476 = vpack.c.b16 %v3463, %v3462
      %v3477 = vpack.c.b16 %v3465, %v3464
      %v3478 = vpack.c.b16 %v3467, %v3466
      %v3479 = vpack.c.b16 %v3469, %v3468
      %v3480 = vpack.c.b16 %v3471, %v3470
      %v3481 = vpack.c.b16 %v3473, %v3472
      %3490 = vmatprep.subr.bf16.mxu0 0
      %3491 = vmatpush1.bf16.msra.mxu0 %v3474
      %3492 = vmatprep.subr.bf16.mxu0 0
      %3493 = vmatpush1.bf16.msra.mxu0 %v3475
      %3494 = vmatprep.subr.bf16.mxu0 0
      %3495 = vmatpush1.bf16.msra.mxu0 %v3476
      %3496 = vmatprep.subr.bf16.mxu0 0
      %3497 = vmatpush1.bf16.msra.mxu0 %v3477
      %3498 = vmatprep.subr.bf16.mxu0 0
      %3499 = vmatpush1.bf16.msra.mxu0 %v3478
      %3500 = vmatprep.subr.bf16.mxu0 0
      %3501 = vmatpush1.bf16.msra.mxu0 %v3479
      %3502 = vmatprep.subr.bf16.mxu0 0
      %3503 = vmatpush1.bf16.msra.mxu0 %v3480
      %3504 = vmatprep.subr.bf16.mxu0 0
      %3505 = vmatpush1.bf16.msra.mxu0 %v3481
      %3506 = vmatprep.subr.bf16.mxu0 0
      %3507 = vmatpush1.bf16.msra.mxu0 0
      %3508 = vmatprep.subr.bf16.mxu0 0
      %3509 = vmatpush1.bf16.msra.mxu0 0
      %3510 = vmatprep.subr.bf16.mxu0 0
      %3511 = vmatpush1.bf16.msra.mxu0 0
      %3512 = vmatprep.subr.bf16.mxu0 0
      %3513 = vmatpush1.bf16.msra.mxu0 0
      %3514 = vmatprep.subr.bf16.mxu0 0
      %3515 = vmatpush1.bf16.msra.mxu0 0
      %3516 = vmatprep.subr.bf16.mxu0 0
      %3517 = vmatpush1.bf16.msra.mxu0 0
      %3518 = vmatprep.subr.bf16.mxu0 0
      %3519 = vmatpush1.bf16.msra.mxu0 0
      %3520 = vmatprep.subr.bf16.mxu0 0
      %3521 = vmatpush1.bf16.msra.mxu0 0
      %3522 = vmatprep.mubr.bf16.mxu0 0
      %3523 = vmatmul.mubr.bf16.gmra.mrb[0].mxu0 %v3270
      %v3524 = vpop.f32.mrb[0].mxu0
      %v3525 = vadd.f32 0.0, %v3524
      %v3526 = vpop.f32.mrb[0].mxu0
      %v3527 = vpop.f32.mrb[0].mxu0
      %v3528 = vadd.f32 0.0, %v3527
      %v3529 = vpop.f32.mrb[0].mxu0
      %3530 = vmatprep.mubr.bf16.mxu0 0
      %3531 = vmatmul.mubr.bf16.gmra.mrb[0].mxu0 %v3279
      %v3532 = vpop.f32.mrb[0].mxu0
      %v3533 = vadd.f32 0.0, %v3532
      %v3534 = vpop.f32.mrb[0].mxu0
      %v3535 = vpop.f32.mrb[0].mxu0
      %v3536 = vadd.f32 0.0, %v3535
      %v3537 = vpop.f32.mrb[0].mxu0
      %3538 = vmatprep.mubr.bf16.mxu0 0
      %3539 = vmatmul.mubr.bf16.gmra.mrb[0].mxu0 %v3288
      %v3540 = vpop.f32.mrb[0].mxu0
      %v3541 = vadd.f32 0.0, %v3540
      %v3542 = vpop.f32.mrb[0].mxu0
      %v3543 = vpop.f32.mrb[0].mxu0
      %v3544 = vadd.f32 0.0, %v3543
      %v3545 = vpop.f32.mrb[0].mxu0
      %3546 = vmatprep.mubr.bf16.mxu0 0
      %3547 = vmatmul.mubr.bf16.gmra.mrb[0].mxu0 %v3297
      %v3548 = vpop.f32.mrb[0].mxu0
      %v3549 = vadd.f32 0.0, %v3548
      %v3550 = vpop.f32.mrb[0].mxu0
      %v3551 = vpop.f32.mrb[0].mxu0
      %v3552 = vadd.f32 0.0, %v3551
      %v3553 = vpop.f32.mrb[0].mxu0
      %3554 = vmatprep.mubr.bf16.mxu0 0
      %3555 = vmatmul.mubr.bf16.gmra.mrb[0].mxu0 %v3306
      %v3556 = vpop.f32.mrb[0].mxu0
      %v3557 = vadd.f32 0.0, %v3556
      %v3558 = vpop.f32.mrb[0].mxu0
      %v3559 = vpop.f32.mrb[0].mxu0
      %v3560 = vadd.f32 0.0, %v3559
      %v3561 = vpop.f32.mrb[0].mxu0
      %3562 = vmatprep.mubr.bf16.mxu0 0
      %3563 = vmatmul.mubr.bf16.gmra.mrb[0].mxu0 %v3315
      %v3564 = vpop.f32.mrb[0].mxu0
      %v3565 = vadd.f32 0.0, %v3564
      %v3566 = vpop.f32.mrb[0].mxu0
      %v3567 = vpop.f32.mrb[0].mxu0
      %v3568 = vadd.f32 0.0, %v3567
      %v3569 = vpop.f32.mrb[0].mxu0
      %3570 = vmatprep.mubr.bf16.mxu0 0
      %3571 = vmatmul.mubr.bf16.gmra.mrb[0].mxu0 %v3324
      %v3572 = vpop.f32.mrb[0].mxu0
      %v3573 = vadd.f32 0.0, %v3572
      %v3574 = vpop.f32.mrb[0].mxu0
      %v3575 = vpop.f32.mrb[0].mxu0
      %v3576 = vadd.f32 0.0, %v3575
      %v3577 = vpop.f32.mrb[0].mxu0
      %3578 = vmatprep.mubr.bf16.mxu0 0
      %3579 = vmatmul.mubr.bf16.gmra.mrb[0].mxu0 %v3333
      %v3580 = vpop.f32.mrb[0].mxu0
      %v3581 = vadd.f32 0.0, %v3580
      %v3582 = vpop.f32.mrb[0].mxu0
      %v3583 = vpop.f32.mrb[0].mxu0
      %v3584 = vadd.f32 0.0, %v3583
      %v3585 = vpop.f32.mrb[0].mxu0
      %3586 = vmatprep.mubr.bf16.mxu0 0
      %3587 = vmatmul.mubr.bf16.gmra.mrb[0].mxu0 %v3342
      %v3588 = vpop.f32.mrb[0].mxu0
      %v3589 = vadd.f32 0.0, %v3588
      %v3590 = vpop.f32.mrb[0].mxu0
      %v3591 = vpop.f32.mrb[0].mxu0
      %v3592 = vadd.f32 0.0, %v3591
      %v3593 = vpop.f32.mrb[0].mxu0
      %3594 = vmatprep.mubr.bf16.mxu0 0
      %3595 = vmatmul.mubr.bf16.gmra.mrb[0].mxu0 %v3351
      %v3596 = vpop.f32.mrb[0].mxu0
      %v3597 = vadd.f32 0.0, %v3596
      %v3598 = vpop.f32.mrb[0].mxu0
      %v3599 = vpop.f32.mrb[0].mxu0
      %v3600 = vadd.f32 0.0, %v3599
      %v3601 = vpop.f32.mrb[0].mxu0
      %3602 = vmatprep.mubr.bf16.mxu0 0
      %3603 = vmatmul.mubr.bf16.gmra.mrb[0].mxu0 %v3360
      %v3604 = vpop.f32.mrb[0].mxu0
      %v3605 = vadd.f32 0.0, %v3604
      %v3606 = vpop.f32.mrb[0].mxu0
      %v3607 = vpop.f32.mrb[0].mxu0
      %v3608 = vadd.f32 0.0, %v3607
      %v3609 = vpop.f32.mrb[0].mxu0
      %3610 = vmatprep.mubr.bf16.mxu0 0
      %3611 = vmatmul.mubr.bf16.gmra.mrb[0].mxu0 %v3369
      %v3612 = vpop.f32.mrb[0].mxu0
      %v3613 = vadd.f32 0.0, %v3612
      %v3614 = vpop.f32.mrb[0].mxu0
      %v3615 = vpop.f32.mrb[0].mxu0
      %v3616 = vadd.f32 0.0, %v3615
      %v3617 = vpop.f32.mrb[0].mxu0
      %3618 = vmatprep.mubr.bf16.mxu0 0
      %3619 = vmatmul.mubr.bf16.gmra.mrb[0].mxu0 %v3378
      %v3620 = vpop.f32.mrb[0].mxu0
      %v3621 = vadd.f32 0.0, %v3620
      %v3622 = vpop.f32.mrb[0].mxu0
      %v3623 = vpop.f32.mrb[0].mxu0
      %v3624 = vadd.f32 0.0, %v3623
      %v3625 = vpop.f32.mrb[0].mxu0
      %3626 = vmatprep.mubr.bf16.mxu0 0
      %3627 = vmatmul.mubr.bf16.gmra.mrb[0].mxu0 %v3387
      %v3628 = vpop.f32.mrb[0].mxu0
      %v3629 = vadd.f32 0.0, %v3628
      %v3630 = vpop.f32.mrb[0].mxu0
      %v3631 = vpop.f32.mrb[0].mxu0
      %v3632 = vadd.f32 0.0, %v3631
      %v3633 = vpop.f32.mrb[0].mxu0
      %3634 = vmatprep.mubr.bf16.mxu0 0
      %3635 = vmatmul.mubr.bf16.gmra.mrb[0].mxu0 %v3396
      %v3636 = vpop.f32.mrb[0].mxu0
      %v3637 = vadd.f32 0.0, %v3636
      %v3638 = vpop.f32.mrb[0].mxu0
      %v3639 = vpop.f32.mrb[0].mxu0
      %v3640 = vadd.f32 0.0, %v3639
      %v3641 = vpop.f32.mrb[0].mxu0
      %3642 = vmatprep.mubr.bf16.mxu0 0
      %3643 = vmatmul.mubr.bf16.gmra.mrb[0].mxu0 %v3405
      %v3644 = vpop.f32.mrb[0].mxu0
      %v3645 = vadd.f32 0.0, %v3644
      %v3646 = vpop.f32.mrb[0].mxu0
      %v3647 = vpop.f32.mrb[0].mxu0
      %v3648 = vadd.f32 0.0, %v3647
      %v3649 = vpop.f32.mrb[0].mxu0
      %3650 = vmatprep.mubr.bf16.mxu0 0
      %3651 = vmatmul.mubr.bf16.gmra.mrb[0].mxu0 %v3414
      %v3652 = vpop.f32.mrb[0].mxu0
      %v3653 = vadd.f32 0.0, %v3652
      %v3654 = vpop.f32.mrb[0].mxu0
      %v3655 = vpop.f32.mrb[0].mxu0
      %v3656 = vadd.f32 0.0, %v3655
      %v3657 = vpop.f32.mrb[0].mxu0
      %3658 = vmatprep.mubr.bf16.mxu0 0
      %3659 = vmatmul.mubr.bf16.gmra.mrb[0].mxu0 %v3423
      %v3660 = vpop.f32.mrb[0].mxu0
      %v3661 = vadd.f32 0.0, %v3660
      %v3662 = vpop.f32.mrb[0].mxu0
      %v3663 = vpop.f32.mrb[0].mxu0
      %v3664 = vadd.f32 0.0, %v3663
      %v3665 = vpop.f32.mrb[0].mxu0
      %3666 = vdwg.mxu0
      %v3667 = vadd.f32 %v3196, %v3525
      %v3668 = vadd.f32 %v3197, %v3528
      %v3669 = vadd.f32 %v3198, %v3533
      %v3670 = vadd.f32 %v3199, %v3536
      %v3671 = vadd.f32 %v3200, %v3541
      %v3672 = vadd.f32 %v3201, %v3544
      %v3673 = vadd.f32 %v3202, %v3549
      %v3674 = vadd.f32 %v3203, %v3552
      %v3675 = vadd.f32 %v3204, %v3557
      %v3676 = vadd.f32 %v3205, %v3560
      %v3677 = vadd.f32 %v3206, %v3565
      %v3678 = vadd.f32 %v3207, %v3568
      %v3679 = vadd.f32 %v3208, %v3573
      %v3680 = vadd.f32 %v3209, %v3576
      %v3681 = vadd.f32 %v3210, %v3581
      %v3682 = vadd.f32 %v3211, %v3584
      %v3683 = vadd.f32 %v3212, %v3589
      %v3684 = vadd.f32 %v3213, %v3592
      %v3685 = vadd.f32 %v3214, %v3597
      %v3686 = vadd.f32 %v3215, %v3600
      %v3687 = vadd.f32 %v3216, %v3605
      %v3688 = vadd.f32 %v3217, %v3608
      %v3689 = vadd.f32 %v3218, %v3613
      %v3690 = vadd.f32 %v3219, %v3616
      %v3691 = vadd.f32 %v3220, %v3621
      %v3692 = vadd.f32 %v3221, %v3624
      %v3693 = vadd.f32 %v3222, %v3629
      %v3694 = vadd.f32 %v3223, %v3632
      %v3695 = vadd.f32 %v3224, %v3637
      %v3696 = vadd.f32 %v3225, %v3640
      %v3697 = vadd.f32 %v3226, %v3645
      %v3698 = vadd.f32 %v3227, %v3648
      %v3699 = vadd.f32 %v3228, %v3653
      %v3700 = vadd.f32 %v3229, %v3656
      %v3701 = vadd.f32 %v3230, %v3661
      %v3702 = vadd.f32 %v3231, %v3664
      %v3703 = vld [vmem:[%s300 + $0x10] sm:$0x8]
      %s3704 = scalar_lea.vmem %s2, 512
      %v3705 = vld [vmem:[%s3704] sm:$0xf]
      %v3706 = vld [vmem:[%s3704 + $0x4] sm:$0xf]
      %v3707 = vld [vmem:[%s3704 + $0x8] sm:$0xf]
      %v3708 = vld [vmem:[%s3704 + $0xc] sm:$0xf]
      %v3709 = vld [vmem:[%s3704 + $0x10] sm:$0xf]
      %v3710 = vld [vmem:[%s3704 + $0x14] sm:$0xf]
      %v3711 = vld [vmem:[%s3704 + $0x18] sm:$0xf]
      %v3712 = vld [vmem:[%s3704 + $0x1c] sm:$0xf]
      %v3713 = vld [vmem:[%s3704 + $0x20] sm:$0xf]
      %v3714 = vld [vmem:[%s3704 + $0x24] sm:$0xf]
      %v3715 = vld [vmem:[%s3704 + $0x28] sm:$0xf]
      %v3716 = vld [vmem:[%s3704 + $0x2c] sm:$0xf]
      %v3717 = vld [vmem:[%s3704 + $0x30] sm:$0xf]
      %v3718 = vld [vmem:[%s3704 + $0x34] sm:$0xf]
      %v3719 = vld [vmem:[%s3704 + $0x38] sm:$0xf]
      %v3720 = vld [vmem:[%s3704 + $0x3c] sm:$0xf]
      %v3722 = vunpack.c.l.b16 %v3703
      %v3723 = vpack.c.b16 %v2861, %v3722
      %vm3724 = vcmask 1044480
      %v3725 = vrot.slane %v3723, 3
      %v3726 = vrot.slane %v2898, 3
      %v3727 = vsel %vm3724, %v3725, %v3726
      %v3728 = vrot.slane %v2899, 3
      %v3729 = vsel %vm3724, %v3726, %v3728
      %v3730 = vrot.slane %v2900, 3
      %v3731 = vsel %vm3724, %v3728, %v3730
      %v3732 = vrot.slane %v2901, 3
      %v3733 = vsel %vm3724, %v3730, %v3732
      %v3734 = vrot.slane %v2902, 3
      %v3735 = vsel %vm3724, %v3732, %v3734
      %v3736 = vrot.slane %v2903, 3
      %v3737 = vsel %vm3724, %v3734, %v3736
      %v3738 = vrot.slane %v2904, 3
      %v3739 = vsel %vm3724, %v3736, %v3738
      %v3740 = vrot.slane %v2905, 3
      %v3741 = vsel %vm3724, %v3738, %v3740
      %v3742 = vrot.slane %v2906, 3
      %v3743 = vsel %vm3724, %v3740, %v3742
      %v3744 = vrot.slane %v2907, 3
      %v3745 = vsel %vm3724, %v3742, %v3744
      %v3746 = vrot.slane %v2908, 3
      %v3747 = vsel %vm3724, %v3744, %v3746
      %v3748 = vrot.slane %v2909, 3
      %v3749 = vsel %vm3724, %v3746, %v3748
      %v3750 = vrot.slane %v2910, 3
      %v3751 = vsel %vm3724, %v3748, %v3750
      %v3752 = vrot.slane %v2911, 3
      %v3753 = vsel %vm3724, %v3750, %v3752
      %v3754 = vrot.slane %v2912, 3
      %v3755 = vsel %vm3724, %v3752, %v3754
      %v3756 = vrot.slane %v2913, 3
      %v3757 = vsel %vm3724, %v3754, %v3756
      %v3758 = vrot.slane %v2914, 3
      %v3759 = vsel %vm3724, %v3756, %v3758
      %v3760 = vrot.slane %v3252, 3
      %v3761 = vsel %vm3724, %v3758, %v3760
      %v3796 = vunpack.c.l.b16 %v3705
      %v3797 = vunpack.c.l.b16 %v3706
      %v3798 = vunpack.c.l.b16 %v3707
      %v3799 = vunpack.c.l.b16 %v3708
      %v3800 = vunpack.c.l.b16 %v3709
      %v3801 = vunpack.c.l.b16 %v3710
      %v3802 = vunpack.c.l.b16 %v3711
      %v3803 = vunpack.c.l.b16 %v3712
      %v3804 = vunpack.c.l.b16 %v3713
      %v3805 = vunpack.c.l.b16 %v3714
      %v3806 = vunpack.c.l.b16 %v3715
      %v3807 = vunpack.c.l.b16 %v3716
      %v3808 = vunpack.c.l.b16 %v3717
      %v3809 = vunpack.c.l.b16 %v3718
      %v3810 = vunpack.c.l.b16 %v3719
      %v3811 = vunpack.c.l.b16 %v3720
      %v3812 = vpack.c.b16 %v3797, %v3796
      %v3813 = vpack.c.b16 %v3799, %v3798
      %v3814 = vpack.c.b16 %v3801, %v3800
      %v3815 = vpack.c.b16 %v3803, %v3802
      %v3816 = vpack.c.b16 %v3805, %v3804
      %v3817 = vpack.c.b16 %v3807, %v3806
      %v3818 = vpack.c.b16 %v3809, %v3808
      %v3819 = vpack.c.b16 %v3811, %v3810
      %3828 = vmatprep.subr.bf16.mxu0 0
      %3829 = vmatpush1.bf16.msra.mxu0 %v3812
      %3830 = vmatprep.subr.bf16.mxu0 0
      %3831 = vmatpush1.bf16.msra.mxu0 %v3813
      %3832 = vmatprep.subr.bf16.mxu0 0
      %3833 = vmatpush1.bf16.msra.mxu0 %v3814
      %3834 = vmatprep.subr.bf16.mxu0 0
      %3835 = vmatpush1.bf16.msra.mxu0 %v3815
      %3836 = vmatprep.subr.bf16.mxu0 0
      %3837 = vmatpush1.bf16.msra.mxu0 %v3816
      %3838 = vmatprep.subr.bf16.mxu0 0
      %3839 = vmatpush1.bf16.msra.mxu0 %v3817
      %3840 = vmatprep.subr.bf16.mxu0 0
      %3841 = vmatpush1.bf16.msra.mxu0 %v3818
      %3842 = vmatprep.subr.bf16.mxu0 0
      %3843 = vmatpush1.bf16.msra.mxu0 %v3819
      %3844 = vmatprep.subr.bf16.mxu0 0
      %3845 = vmatpush1.bf16.msra.mxu0 0
      %3846 = vmatprep.subr.bf16.mxu0 0
      %3847 = vmatpush1.bf16.msra.mxu0 0
      %3848 = vmatprep.subr.bf16.mxu0 0
      %3849 = vmatpush1.bf16.msra.mxu0 0
      %3850 = vmatprep.subr.bf16.mxu0 0
      %3851 = vmatpush1.bf16.msra.mxu0 0
      %3852 = vmatprep.subr.bf16.mxu0 0
      %3853 = vmatpush1.bf16.msra.mxu0 0
      %3854 = vmatprep.subr.bf16.mxu0 0
      %3855 = vmatpush1.bf16.msra.mxu0 0
      %3856 = vmatprep.subr.bf16.mxu0 0
      %3857 = vmatpush1.bf16.msra.mxu0 0
      %3858 = vmatprep.subr.bf16.mxu0 0
      %3859 = vmatpush1.bf16.msra.mxu0 0
      %3860 = vmatprep.mubr.bf16.mxu0 0
      %3861 = vmatmul.mubr.bf16.gmra.mrb[0].mxu0 %v3727
      %v3862 = vpop.f32.mrb[0].mxu0
      %v3863 = vadd.f32 0.0, %v3862
      %v3864 = vpop.f32.mrb[0].mxu0
      %v3865 = vpop.f32.mrb[0].mxu0
      %v3866 = vadd.f32 0.0, %v3865
      %v3867 = vpop.f32.mrb[0].mxu0
      %3868 = vmatprep.mubr.bf16.mxu0 0
      %3869 = vmatmul.mubr.bf16.gmra.mrb[0].mxu0 %v3729
      %v3870 = vpop.f32.mrb[0].mxu0
      %v3871 = vadd.f32 0.0, %v3870
      %v3872 = vpop.f32.mrb[0].mxu0
      %v3873 = vpop.f32.mrb[0].mxu0
      %v3874 = vadd.f32 0.0, %v3873
      %v3875 = vpop.f32.mrb[0].mxu0
      %3876 = vmatprep.mubr.bf16.mxu0 0
      %3877 = vmatmul.mubr.bf16.gmra.mrb[0].mxu0 %v3731
      %v3878 = vpop.f32.mrb[0].mxu0
      %v3879 = vadd.f32 0.0, %v3878
      %v3880 = vpop.f32.mrb[0].mxu0
      %v3881 = vpop.f32.mrb[0].mxu0
      %v3882 = vadd.f32 0.0, %v3881
      %v3883 = vpop.f32.mrb[0].mxu0
      %3884 = vmatprep.mubr.bf16.mxu0 0
      %3885 = vmatmul.mubr.bf16.gmra.mrb[0].mxu0 %v3733
      %v3886 = vpop.f32.mrb[0].mxu0
      %v3887 = vadd.f32 0.0, %v3886
      %v3888 = vpop.f32.mrb[0].mxu0
      %v3889 = vpop.f32.mrb[0].mxu0
      %v3890 = vadd.f32 0.0, %v3889
      %v3891 = vpop.f32.mrb[0].mxu0
      %3892 = vmatprep.mubr.bf16.mxu0 0
      %3893 = vmatmul.mubr.bf16.gmra.mrb[0].mxu0 %v3735
      %v3894 = vpop.f32.mrb[0].mxu0
      %v3895 = vadd.f32 0.0, %v3894
      %v3896 = vpop.f32.mrb[0].mxu0
      %v3897 = vpop.f32.mrb[0].mxu0
      %v3898 = vadd.f32 0.0, %v3897
      %v3899 = vpop.f32.mrb[0].mxu0
      %3900 = vmatprep.mubr.bf16.mxu0 0
      %3901 = vmatmul.mubr.bf16.gmra.mrb[0].mxu0 %v3737
      %v3902 = vpop.f32.mrb[0].mxu0
      %v3903 = vadd.f32 0.0, %v3902
      %v3904 = vpop.f32.mrb[0].mxu0
      %v3905 = vpop.f32.mrb[0].mxu0
      %v3906 = vadd.f32 0.0, %v3905
      %v3907 = vpop.f32.mrb[0].mxu0
      %3908 = vmatprep.mubr.bf16.mxu0 0
      %3909 = vmatmul.mubr.bf16.gmra.mrb[0].mxu0 %v3739
      %v3910 = vpop.f32.mrb[0].mxu0
      %v3911 = vadd.f32 0.0, %v3910
      %v3912 = vpop.f32.mrb[0].mxu0
      %v3913 = vpop.f32.mrb[0].mxu0
      %v3914 = vadd.f32 0.0, %v3913
      %v3915 = vpop.f32.mrb[0].mxu0
      %3916 = vmatprep.mubr.bf16.mxu0 0
      %3917 = vmatmul.mubr.bf16.gmra.mrb[0].mxu0 %v3741
      %v3918 = vpop.f32.mrb[0].mxu0
      %v3919 = vadd.f32 0.0, %v3918
      %v3920 = vpop.f32.mrb[0].mxu0
      %v3921 = vpop.f32.mrb[0].mxu0
      %v3922 = vadd.f32 0.0, %v3921
      %v3923 = vpop.f32.mrb[0].mxu0
      %3924 = vmatprep.mubr.bf16.mxu0 0
      %3925 = vmatmul.mubr.bf16.gmra.mrb[0].mxu0 %v3743
      %v3926 = vpop.f32.mrb[0].mxu0
      %v3927 = vadd.f32 0.0, %v3926
      %v3928 = vpop.f32.mrb[0].mxu0
      %v3929 = vpop.f32.mrb[0].mxu0
      %v3930 = vadd.f32 0.0, %v3929
      %v3931 = vpop.f32.mrb[0].mxu0
      %3932 = vmatprep.mubr.bf16.mxu0 0
      %3933 = vmatmul.mubr.bf16.gmra.mrb[0].mxu0 %v3745
      %v3934 = vpop.f32.mrb[0].mxu0
      %v3935 = vadd.f32 0.0, %v3934
      %v3936 = vpop.f32.mrb[0].mxu0
      %v3937 = vpop.f32.mrb[0].mxu0
      %v3938 = vadd.f32 0.0, %v3937
      %v3939 = vpop.f32.mrb[0].mxu0
      %3940 = vmatprep.mubr.bf16.mxu0 0
      %3941 = vmatmul.mubr.bf16.gmra.mrb[0].mxu0 %v3747
      %v3942 = vpop.f32.mrb[0].mxu0
      %v3943 = vadd.f32 0.0, %v3942
      %v3944 = vpop.f32.mrb[0].mxu0
      %v3945 = vpop.f32.mrb[0].mxu0
      %v3946 = vadd.f32 0.0, %v3945
      %v3947 = vpop.f32.mrb[0].mxu0
      %3948 = vmatprep.mubr.bf16.mxu0 0
      %3949 = vmatmul.mubr.bf16.gmra.mrb[0].mxu0 %v3749
      %v3950 = vpop.f32.mrb[0].mxu0
      %v3951 = vadd.f32 0.0, %v3950
      %v3952 = vpop.f32.mrb[0].mxu0
      %v3953 = vpop.f32.mrb[0].mxu0
      %v3954 = vadd.f32 0.0, %v3953
      %v3955 = vpop.f32.mrb[0].mxu0
      %3956 = vmatprep.mubr.bf16.mxu0 0
      %3957 = vmatmul.mubr.bf16.gmra.mrb[0].mxu0 %v3751
      %v3958 = vpop.f32.mrb[0].mxu0
      %v3959 = vadd.f32 0.0, %v3958
      %v3960 = vpop.f32.mrb[0].mxu0
      %v3961 = vpop.f32.mrb[0].mxu0
      %v3962 = vadd.f32 0.0, %v3961
      %v3963 = vpop.f32.mrb[0].mxu0
      %3964 = vmatprep.mubr.bf16.mxu0 0
      %3965 = vmatmul.mubr.bf16.gmra.mrb[0].mxu0 %v3753
      %v3966 = vpop.f32.mrb[0].mxu0
      %v3967 = vadd.f32 0.0, %v3966
      %v3968 = vpop.f32.mrb[0].mxu0
      %v3969 = vpop.f32.mrb[0].mxu0
      %v3970 = vadd.f32 0.0, %v3969
      %v3971 = vpop.f32.mrb[0].mxu0
      %3972 = vmatprep.mubr.bf16.mxu0 0
      %3973 = vmatmul.mubr.bf16.gmra.mrb[0].mxu0 %v3755
      %v3974 = vpop.f32.mrb[0].mxu0
      %v3975 = vadd.f32 0.0, %v3974
      %v3976 = vpop.f32.mrb[0].mxu0
      %v3977 = vpop.f32.mrb[0].mxu0
      %v3978 = vadd.f32 0.0, %v3977
      %v3979 = vpop.f32.mrb[0].mxu0
      %3980 = vmatprep.mubr.bf16.mxu0 0
      %3981 = vmatmul.mubr.bf16.gmra.mrb[0].mxu0 %v3757
      %v3982 = vpop.f32.mrb[0].mxu0
      %v3983 = vadd.f32 0.0, %v3982
      %v3984 = vpop.f32.mrb[0].mxu0
      %v3985 = vpop.f32.mrb[0].mxu0
      %v3986 = vadd.f32 0.0, %v3985
      %v3987 = vpop.f32.mrb[0].mxu0
      %3988 = vmatprep.mubr.bf16.mxu0 0
      %3989 = vmatmul.mubr.bf16.gmra.mrb[0].mxu0 %v3759
      %v3990 = vpop.f32.mrb[0].mxu0
      %v3991 = vadd.f32 0.0, %v3990
      %v3992 = vpop.f32.mrb[0].mxu0
      %v3993 = vpop.f32.mrb[0].mxu0
      %v3994 = vadd.f32 0.0, %v3993
      %v3995 = vpop.f32.mrb[0].mxu0
      %3996 = vmatprep.mubr.bf16.mxu0 0
      %3997 = vmatmul.mubr.bf16.gmra.mrb[0].mxu0 %v3761
      %v3998 = vpop.f32.mrb[0].mxu0
      %v3999 = vadd.f32 0.0, %v3998
      %v4000 = vpop.f32.mrb[0].mxu0
      %v4001 = vpop.f32.mrb[0].mxu0
      %v4002 = vadd.f32 0.0, %v4001
      %v4003 = vpop.f32.mrb[0].mxu0
      %4004 = vdwg.mxu0
      %v4005 = vadd.f32 %v3667, %v3863
      %v4006 = vadd.f32 %v3668, %v3866
      %v4007 = vadd.f32 %v3669, %v3871
      %v4008 = vadd.f32 %v3670, %v3874
      %v4009 = vadd.f32 %v3671, %v3879
      %v4010 = vadd.f32 %v3672, %v3882
      %v4011 = vadd.f32 %v3673, %v3887
      %v4012 = vadd.f32 %v3674, %v3890
      %v4013 = vadd.f32 %v3675, %v3895
      %v4014 = vadd.f32 %v3676, %v3898
      %v4015 = vadd.f32 %v3677, %v3903
      %v4016 = vadd.f32 %v3678, %v3906
      %v4017 = vadd.f32 %v3679, %v3911
      %v4018 = vadd.f32 %v3680, %v3914
      %v4019 = vadd.f32 %v3681, %v3919
      %v4020 = vadd.f32 %v3682, %v3922
      %v4021 = vadd.f32 %v3683, %v3927
      %v4022 = vadd.f32 %v3684, %v3930
      %v4023 = vadd.f32 %v3685, %v3935
      %v4024 = vadd.f32 %v3686, %v3938
      %v4025 = vadd.f32 %v3687, %v3943
      %v4026 = vadd.f32 %v3688, %v3946
      %v4027 = vadd.f32 %v3689, %v3951
      %v4028 = vadd.f32 %v3690, %v3954
      %v4029 = vadd.f32 %v3691, %v3959
      %v4030 = vadd.f32 %v3692, %v3962
      %v4031 = vadd.f32 %v3693, %v3967
      %v4032 = vadd.f32 %v3694, %v3970
      %v4033 = vadd.f32 %v3695, %v3975
      %v4034 = vadd.f32 %v3696, %v3978
      %v4035 = vadd.f32 %v3697, %v3983
      %v4036 = vadd.f32 %v3698, %v3986
      %v4037 = vadd.f32 %v3699, %v3991
      %v4038 = vadd.f32 %v3700, %v3994
      %v4039 = vadd.f32 %v3701, %v3999
      %v4040 = vadd.f32 %v3702, %v4002
      %v4041 = vmax.f32 %v4005, 0.0
      %v4042 = vmax.f32 %v4006, 0.0
      %v4043 = vmax.f32 %v4007, 0.0
      %v4044 = vmax.f32 %v4008, 0.0
      %v4045 = vmax.f32 %v4009, 0.0
      %v4046 = vmax.f32 %v4010, 0.0
      %v4047 = vmax.f32 %v4011, 0.0
      %v4048 = vmax.f32 %v4012, 0.0
      %v4049 = vmax.f32 %v4013, 0.0
      %v4050 = vmax.f32 %v4014, 0.0
      %v4051 = vmax.f32 %v4015, 0.0
      %v4052 = vmax.f32 %v4016, 0.0
      %v4053 = vmax.f32 %v4017, 0.0
      %v4054 = vmax.f32 %v4018, 0.0
      %v4055 = vmax.f32 %v4019, 0.0
      %v4056 = vmax.f32 %v4020, 0.0
      %v4057 = vmax.f32 %v4021, 0.0
      %v4058 = vmax.f32 %v4022, 0.0
      %v4059 = vmax.f32 %v4023, 0.0
      %v4060 = vmax.f32 %v4024, 0.0
      %v4061 = vmax.f32 %v4025, 0.0
      %v4062 = vmax.f32 %v4026, 0.0
      %v4063 = vmax.f32 %v4027, 0.0
      %v4064 = vmax.f32 %v4028, 0.0
      %v4065 = vmax.f32 %v4029, 0.0
      %v4066 = vmax.f32 %v4030, 0.0
      %v4067 = vmax.f32 %v4031, 0.0
      %v4068 = vmax.f32 %v4032, 0.0
      %v4069 = vmax.f32 %v4033, 0.0
      %v4070 = vmax.f32 %v4034, 0.0
      %v4071 = vmax.f32 %v4035, 0.0
      %v4072 = vmax.f32 %v4036, 0.0
      %v4073 = vmax.f32 %v4037, 0.0
      %v4074 = vmax.f32 %v4038, 0.0
      %v4075 = vmax.f32 %v4039, 0.0
      %v4076 = vmax.f32 %v4040, 0.0
      %v4077 = vld [vmem:[%s1] sm:$0xff]
      %v4078 = vld [vmem:[%s1 + $0x8] sm:$0xff]
      %v4079 = vld [vmem:[%s1 + $0x10] sm:$0xff]
      %v4080 = vld [vmem:[%s1 + $0x18] sm:$0xff]
      %v4081 = vld [vmem:[%s1 + $0x20] sm:$0xff]
      %v4082 = vld [vmem:[%s1 + $0x28] sm:$0xff]
      %v4083 = vld [vmem:[%s1 + $0x30] sm:$0xff]
      %v4084 = vld [vmem:[%s1 + $0x38] sm:$0xff]
      %v4085 = vld [vmem:[%s1 + $0x40] sm:$0xff]
      %v4086 = vld [vmem:[%s1 + $0x48] sm:$0xff]
      %v4087 = vld [vmem:[%s1 + $0x50] sm:$0xff]
      %v4088 = vld [vmem:[%s1 + $0x58] sm:$0xff]
      %v4089 = vld [vmem:[%s1 + $0x60] sm:$0xff]
      %v4090 = vld [vmem:[%s1 + $0x68] sm:$0xff]
      %v4091 = vld [vmem:[%s1 + $0x70] sm:$0xff]
      %v4092 = vld [vmem:[%s1 + $0x78] sm:$0xff]
      %v4093 = vld [vmem:[%s1 + $0x80] sm:$0xff]
      %v4094 = vld [vmem:[%s1 + $0x88] sm:$0xff]
      %v4095 = vld [vmem:[%s1 + $0x90] sm:$0xff]
      %v4096 = vld [vmem:[%s1 + $0x98] sm:$0xff]
      %v4097 = vld [vmem:[%s1 + $0xa0] sm:$0xff]
      %v4098 = vld [vmem:[%s1 + $0xa8] sm:$0xff]
      %v4099 = vld [vmem:[%s1 + $0xb0] sm:$0xff]
      %v4100 = vld [vmem:[%s1 + $0xb8] sm:$0xff]
      %v4101 = vld [vmem:[%s1 + $0xc0] sm:$0xff]
      %v4102 = vld [vmem:[%s1 + $0xc8] sm:$0xff]
      %v4103 = vld [vmem:[%s1 + $0xd0] sm:$0xff]
      %v4104 = vld [vmem:[%s1 + $0xd8] sm:$0xff]
      %v4105 = vld [vmem:[%s1 + $0xe0] sm:$0xff]
      %v4106 = vld [vmem:[%s1 + $0xe8] sm:$0xff]
      %v4107 = vld [vmem:[%s1 + $0xf0] sm:$0xff]
      %v4108 = vld [vmem:[%s1 + $0xf8] sm:$0xff]
      %v4109 = vld [vmem:[%s1 + $0x100] sm:$0xff]
      %v4110 = vld [vmem:[%s1 + $0x108] sm:$0xff]
      %v4111 = vld [vmem:[%s1 + $0x110] sm:$0xff]
      %v4112 = vld [vmem:[%s1 + $0x118] sm:$0xff]
      %v4113 = vmul.f32 %v4041, %v4077
      %v4114 = vmul.f32 %v4042, %v4078
      %v4115 = vmul.f32 %v4043, %v4079
      %v4116 = vmul.f32 %v4044, %v4080
      %v4117 = vmul.f32 %v4045, %v4081
      %v4118 = vmul.f32 %v4046, %v4082
      %v4119 = vmul.f32 %v4047, %v4083
      %v4120 = vmul.f32 %v4048, %v4084
      %v4121 = vmul.f32 %v4049, %v4085
      %v4122 = vmul.f32 %v4050, %v4086
      %v4123 = vmul.f32 %v4051, %v4087
      %v4124 = vmul.f32 %v4052, %v4088
      %v4125 = vmul.f32 %v4053, %v4089
      %v4126 = vmul.f32 %v4054, %v4090
      %v4127 = vmul.f32 %v4055, %v4091
      %v4128 = vmul.f32 %v4056, %v4092
      %v4129 = vmul.f32 %v4057, %v4093
      %v4130 = vmul.f32 %v4058, %v4094
      %v4131 = vmul.f32 %v4059, %v4095
      %v4132 = vmul.f32 %v4060, %v4096
      %v4133 = vmul.f32 %v4061, %v4097
      %v4134 = vmul.f32 %v4062, %v4098
      %v4135 = vmul.f32 %v4063, %v4099
      %v4136 = vmul.f32 %v4064, %v4100
      %v4137 = vmul.f32 %v4065, %v4101
      %v4138 = vmul.f32 %v4066, %v4102
      %v4139 = vmul.f32 %v4067, %v4103
      %v4140 = vmul.f32 %v4068, %v4104
      %v4141 = vmul.f32 %v4069, %v4105
      %v4142 = vmul.f32 %v4070, %v4106
      %v4143 = vmul.f32 %v4071, %v4107
      %v4144 = vmul.f32 %v4072, %v4108
      %v4145 = vmul.f32 %v4073, %v4109
      %v4146 = vmul.f32 %v4074, %v4110
      %v4147 = vmul.f32 %v4075, %v4111
      %v4148 = vmul.f32 %v4076, %v4112
      %v4149 = vpack.c.bf16 %v4114, %v4113
      %v4150 = vpack.c.bf16 %v4116, %v4115
      %v4151 = vpack.c.bf16 %v4118, %v4117
      %v4152 = vpack.c.bf16 %v4120, %v4119
      %v4153 = vpack.c.bf16 %v4122, %v4121
      %v4154 = vpack.c.bf16 %v4124, %v4123
      %v4155 = vpack.c.bf16 %v4126, %v4125
      %v4156 = vpack.c.bf16 %v4128, %v4127
      %v4157 = vpack.c.bf16 %v4130, %v4129
      %v4158 = vpack.c.bf16 %v4132, %v4131
      %v4159 = vpack.c.bf16 %v4134, %v4133
      %v4160 = vpack.c.bf16 %v4136, %v4135
      %v4161 = vpack.c.bf16 %v4138, %v4137
      %v4162 = vpack.c.bf16 %v4140, %v4139
      %v4163 = vpack.c.bf16 %v4142, %v4141
      %v4164 = vpack.c.bf16 %v4144, %v4143
      %v4165 = vpack.c.bf16 %v4146, %v4145
      %v4166 = vpack.c.bf16 %v4148, %v4147
      %4167 = vst [vmem:[#allocation2] sm:$0xf] 0
      %4168 = vst [vmem:[#allocation2 + $0x4] sm:$0xf] 0
      %4169 = vst [vmem:[#allocation2 + $0x8] sm:$0x3] 0
      %4170 = vst [vmem:[#allocation2 + $0x98] sm:$0xc] 0
      %4171 = vst [vmem:[#allocation2 + $0x9c] sm:$0xf] 0
      %4172 = vst [vmem:[#allocation2 + $0xa0] sm:$0xf] 0
      %v4191 = vunpack.c.l.b16 %v4149
      %v4192 = vunpack.c.h.b16 %v4149
      %v4193 = vunpack.c.l.b16 %v4150
      %v4194 = vunpack.c.h.b16 %v4150
      %v4195 = vunpack.c.l.b16 %v4151
      %v4196 = vunpack.c.h.b16 %v4151
      %v4197 = vunpack.c.l.b16 %v4152
      %v4198 = vunpack.c.h.b16 %v4152
      %v4199 = vunpack.c.l.b16 %v4153
      %v4200 = vunpack.c.h.b16 %v4153
      %v4201 = vunpack.c.l.b16 %v4154
      %v4202 = vunpack.c.h.b16 %v4154
      %v4203 = vunpack.c.l.b16 %v4155
      %v4204 = vunpack.c.h.b16 %v4155
      %v4205 = vunpack.c.l.b16 %v4156
      %v4206 = vunpack.c.h.b16 %v4156
      %v4207 = vunpack.c.l.b16 %v4157
      %v4208 = vunpack.c.h.b16 %v4157
      %v4209 = vunpack.c.l.b16 %v4158
      %v4210 = vunpack.c.h.b16 %v4158
      %v4211 = vunpack.c.l.b16 %v4159
      %v4212 = vunpack.c.h.b16 %v4159
      %v4213 = vunpack.c.l.b16 %v4160
      %v4214 = vunpack.c.h.b16 %v4160
      %v4215 = vunpack.c.l.b16 %v4161
      %v4216 = vunpack.c.h.b16 %v4161
      %v4217 = vunpack.c.l.b16 %v4162
      %v4218 = vunpack.c.h.b16 %v4162
      %v4219 = vunpack.c.l.b16 %v4163
      %v4220 = vunpack.c.h.b16 %v4163
      %v4221 = vunpack.c.l.b16 %v4164
      %v4222 = vunpack.c.h.b16 %v4164
      %v4223 = vunpack.c.l.b16 %v4165
      %v4224 = vunpack.c.h.b16 %v4165
      %v4225 = vunpack.c.l.b16 %v4166
      %v4226 = vunpack.c.h.b16 %v4166
      %v4227 = vpack.c.b16 %v4191, %v4191
      %v4228 = vpack.c.b16 %v4192, %v4192
      %v4229 = vpack.c.b16 %v4193, %v4193
      %v4230 = vpack.c.b16 %v4194, %v4194
      %v4231 = vpack.c.b16 %v4195, %v4195
      %v4232 = vpack.c.b16 %v4196, %v4196
      %v4233 = vpack.c.b16 %v4197, %v4197
      %v4234 = vpack.c.b16 %v4198, %v4198
      %v4235 = vpack.c.b16 %v4199, %v4199
      %v4236 = vpack.c.b16 %v4200, %v4200
      %v4237 = vpack.c.b16 %v4201, %v4201
      %v4238 = vpack.c.b16 %v4202, %v4202
      %v4239 = vpack.c.b16 %v4203, %v4203
      %v4240 = vpack.c.b16 %v4204, %v4204
      %v4241 = vpack.c.b16 %v4205, %v4205
      %v4242 = vpack.c.b16 %v4206, %v4206
      %v4243 = vpack.c.b16 %v4207, %v4207
      %v4244 = vpack.c.b16 %v4208, %v4208
      %v4245 = vpack.c.b16 %v4209, %v4209
      %v4246 = vpack.c.b16 %v4210, %v4210
      %v4247 = vpack.c.b16 %v4211, %v4211
      %v4248 = vpack.c.b16 %v4212, %v4212
      %v4249 = vpack.c.b16 %v4213, %v4213
      %v4250 = vpack.c.b16 %v4214, %v4214
      %v4251 = vpack.c.b16 %v4215, %v4215
      %v4252 = vpack.c.b16 %v4216, %v4216
      %v4253 = vpack.c.b16 %v4217, %v4217
      %v4254 = vpack.c.b16 %v4218, %v4218
      %v4255 = vpack.c.b16 %v4219, %v4219
      %v4256 = vpack.c.b16 %v4220, %v4220
      %v4257 = vpack.c.b16 %v4221, %v4221
      %v4258 = vpack.c.b16 %v4222, %v4222
      %v4259 = vpack.c.b16 %v4223, %v4223
      %v4260 = vpack.c.b16 %v4224, %v4224
      %v4261 = vpack.c.b16 %v4225, %v4225
      %v4262 = vpack.c.b16 %v4226, %v4226
      %vm4263 = vcmask 1041408
      %vm4264 = vcmask 1045508
      %vm4265 = vmor %vm4263, %vm4264
      %v4266 = vrot.slane %v4227, 6
      %v4267 = vrot.slane %v4266, 4
      %v4268 = vrot.slane %v4228, 6
      %v4269 = vsel %vm4265, %v4267, %v4268
      %v4270 = vrot.slane %v4268, 4
      %v4271 = vrot.slane %v4229, 6
      %v4272 = vsel %vm4265, %v4270, %v4271
      %v4273 = vrot.slane %v4271, 4
      %v4274 = vrot.slane %v4230, 6
      %v4275 = vsel %vm4265, %v4273, %v4274
      %v4276 = vrot.slane %v4274, 4
      %v4277 = vrot.slane %v4231, 6
      %v4278 = vsel %vm4265, %v4276, %v4277
      %v4279 = vrot.slane %v4277, 4
      %v4280 = vrot.slane %v4232, 6
      %v4281 = vsel %vm4265, %v4279, %v4280
      %v4282 = vrot.slane %v4280, 4
      %v4283 = vrot.slane %v4233, 6
      %v4284 = vsel %vm4265, %v4282, %v4283
      %v4285 = vrot.slane %v4283, 4
      %v4286 = vrot.slane %v4234, 6
      %v4287 = vsel %vm4265, %v4285, %v4286
      %v4288 = vrot.slane %v4286, 4
      %v4289 = vrot.slane %v4235, 6
      %v4290 = vsel %vm4265, %v4288, %v4289
      %v4291 = vrot.slane %v4289, 4
      %v4292 = vrot.slane %v4236, 6
      %v4293 = vsel %vm4265, %v4291, %v4292
      %v4294 = vrot.slane %v4292, 4
      %v4295 = vrot.slane %v4237, 6
      %v4296 = vsel %vm4265, %v4294, %v4295
      %v4297 = vrot.slane %v4295, 4
      %v4298 = vrot.slane %v4238, 6
      %v4299 = vsel %vm4265, %v4297, %v4298
      %v4300 = vrot.slane %v4298, 4
      %v4301 = vrot.slane %v4239, 6
      %v4302 = vsel %vm4265, %v4300, %v4301
      %v4303 = vrot.slane %v4301, 4
      %v4304 = vrot.slane %v4240, 6
      %v4305 = vsel %vm4265, %v4303, %v4304
      %v4306 = vrot.slane %v4304, 4
      %v4307 = vrot.slane %v4241, 6
      %v4308 = vsel %vm4265, %v4306, %v4307
      %v4309 = vrot.slane %v4307, 4
      %v4310 = vrot.slane %v4242, 6
      %v4311 = vsel %vm4265, %v4309, %v4310
      %v4312 = vrot.slane %v4310, 4
      %v4313 = vrot.slane %v4243, 6
      %v4314 = vsel %vm4265, %v4312, %v4313
      %v4315 = vrot.slane %v4313, 4
      %v4316 = vrot.slane %v4244, 6
      %v4317 = vsel %vm4265, %v4315, %v4316
      %v4318 = vrot.slane %v4316, 4
      %v4319 = vrot.slane %v4245, 6
      %v4320 = vsel %vm4265, %v4318, %v4319
      %v4321 = vrot.slane %v4319, 4
      %v4322 = vrot.slane %v4246, 6
      %v4323 = vsel %vm4265, %v4321, %v4322
      %v4324 = vrot.slane %v4322, 4
      %v4325 = vrot.slane %v4247, 6
      %v4326 = vsel %vm4265, %v4324, %v4325
      %v4327 = vrot.slane %v4325, 4
      %v4328 = vrot.slane %v4248, 6
      %v4329 = vsel %vm4265, %v4327, %v4328
      %v4330 = vrot.slane %v4328, 4
      %v4331 = vrot.slane %v4249, 6
      %v4332 = vsel %vm4265, %v4330, %v4331
      %v4333 = vrot.slane %v4331, 4
      %v4334 = vrot.slane %v4250, 6
      %v4335 = vsel %vm4265, %v4333, %v4334
      %v4336 = vrot.slane %v4334, 4
      %v4337 = vrot.slane %v4251, 6
      %v4338 = vsel %vm4265, %v4336, %v4337
      %v4339 = vrot.slane %v4337, 4
      %v4340 = vrot.slane %v4252, 6
      %v4341 = vsel %vm4265, %v4339, %v4340
      %v4342 = vrot.slane %v4340, 4
      %v4343 = vrot.slane %v4253, 6
      %v4344 = vsel %vm4265, %v4342, %v4343
      %v4345 = vrot.slane %v4343, 4
      %v4346 = vrot.slane %v4254, 6
      %v4347 = vsel %vm4265, %v4345, %v4346
      %v4348 = vrot.slane %v4346, 4
      %v4349 = vrot.slane %v4255, 6
      %v4350 = vsel %vm4265, %v4348, %v4349
      %v4351 = vrot.slane %v4349, 4
      %v4352 = vrot.slane %v4256, 6
      %v4353 = vsel %vm4265, %v4351, %v4352
      %v4354 = vrot.slane %v4352, 4
      %v4355 = vrot.slane %v4257, 6
      %v4356 = vsel %vm4265, %v4354, %v4355
      %v4357 = vrot.slane %v4355, 4
      %v4358 = vrot.slane %v4258, 6
      %v4359 = vsel %vm4265, %v4357, %v4358
      %v4360 = vrot.slane %v4358, 4
      %v4361 = vrot.slane %v4259, 6
      %v4362 = vsel %vm4265, %v4360, %v4361
      %v4363 = vrot.slane %v4361, 4
      %v4364 = vrot.slane %v4260, 6
      %v4365 = vsel %vm4265, %v4363, %v4364
      %v4366 = vrot.slane %v4364, 4
      %v4367 = vrot.slane %v4261, 6
      %v4368 = vsel %vm4265, %v4366, %v4367
      %v4369 = vrot.slane %v4367, 4
      %v4370 = vrot.slane %v4262, 6
      %v4371 = vsel %vm4265, %v4369, %v4370
      %v4372 = vrot.slane %v4370, 4
      %4410 = vst [vmem:[#allocation2 + $0x8] sm:$0xc] %v4266
      %4411 = vst [vmem:[#allocation2 + $0xc] sm:$0xf] %v4269
      %4412 = vst [vmem:[#allocation2 + $0x10] sm:$0xf] %v4272
      %4413 = vst [vmem:[#allocation2 + $0x14] sm:$0xf] %v4275
      %4414 = vst [vmem:[#allocation2 + $0x18] sm:$0xf] %v4278
      %4415 = vst [vmem:[#allocation2 + $0x1c] sm:$0xf] %v4281
      %4416 = vst [vmem:[#allocation2 + $0x20] sm:$0xf] %v4284
      %4417 = vst [vmem:[#allocation2 + $0x24] sm:$0xf] %v4287
      %4418 = vst [vmem:[#allocation2 + $0x28] sm:$0xf] %v4290
      %4419 = vst [vmem:[#allocation2 + $0x2c] sm:$0xf] %v4293
      %4420 = vst [vmem:[#allocation2 + $0x30] sm:$0xf] %v4296
      %4421 = vst [vmem:[#allocation2 + $0x34] sm:$0xf] %v4299
      %4422 = vst [vmem:[#allocation2 + $0x38] sm:$0xf] %v4302
      %4423 = vst [vmem:[#allocation2 + $0x3c] sm:$0xf] %v4305
      %4424 = vst [vmem:[#allocation2 + $0x40] sm:$0xf] %v4308
      %4425 = vst [vmem:[#allocation2 + $0x44] sm:$0xf] %v4311
      %4426 = vst [vmem:[#allocation2 + $0x48] sm:$0xf] %v4314
      %4427 = vst [vmem:[#allocation2 + $0x4c] sm:$0xf] %v4317
      %4428 = vst [vmem:[#allocation2 + $0x50] sm:$0xf] %v4320
      %4429 = vst [vmem:[#allocation2 + $0x54] sm:$0xf] %v4323
      %4430 = vst [vmem:[#allocation2 + $0x58] sm:$0xf] %v4326
      %4431 = vst [vmem:[#allocation2 + $0x5c] sm:$0xf] %v4329
      %4432 = vst [vmem:[#allocation2 + $0x60] sm:$0xf] %v4332
      %4433 = vst [vmem:[#allocation2 + $0x64] sm:$0xf] %v4335
      %4434 = vst [vmem:[#allocation2 + $0x68] sm:$0xf] %v4338
      %4435 = vst [vmem:[#allocation2 + $0x6c] sm:$0xf] %v4341
      %4436 = vst [vmem:[#allocation2 + $0x70] sm:$0xf] %v4344
      %4437 = vst [vmem:[#allocation2 + $0x74] sm:$0xf] %v4347
      %4438 = vst [vmem:[#allocation2 + $0x78] sm:$0xf] %v4350
      %4439 = vst [vmem:[#allocation2 + $0x7c] sm:$0xf] %v4353
      %4440 = vst [vmem:[#allocation2 + $0x80] sm:$0xf] %v4356
      %4441 = vst [vmem:[#allocation2 + $0x84] sm:$0xf] %v4359
      %4442 = vst [vmem:[#allocation2 + $0x88] sm:$0xf] %v4362
      %4443 = vst [vmem:[#allocation2 + $0x8c] sm:$0xf] %v4365
      %4444 = vst [vmem:[#allocation2 + $0x90] sm:$0xf] %v4368
      %4445 = vst [vmem:[#allocation2 + $0x94] sm:$0xf] %v4371
      %4446 = vst [vmem:[#allocation2 + $0x98] sm:$0x3] %v4372
      %v4447 = vld [vmem:[%s6] sm:$0xf]
      %v4448 = vld [vmem:[%s6 + $0x4] sm:$0xf]
      %v4449 = vld [vmem:[%s6 + $0x8] sm:$0xf]
      %v4450 = vld [vmem:[%s6 + $0xc] sm:$0xf]
      %v4451 = vld [vmem:[%s6 + $0x10] sm:$0xf]
      %v4452 = vld [vmem:[%s6 + $0x14] sm:$0xf]
      %v4453 = vld [vmem:[%s6 + $0x18] sm:$0xf]
      %v4454 = vld [vmem:[%s6 + $0x1c] sm:$0xf]
      %v4455 = vld [vmem:[%s6 + $0x20] sm:$0xf]
      %v4456 = vld [vmem:[%s6 + $0x24] sm:$0xf]
      %v4457 = vld [vmem:[%s6 + $0x28] sm:$0xf]
      %v4458 = vld [vmem:[%s6 + $0x2c] sm:$0xf]
      %v4459 = vld [vmem:[%s6 + $0x30] sm:$0xf]
      %v4460 = vld [vmem:[%s6 + $0x34] sm:$0xf]
      %v4461 = vld [vmem:[%s6 + $0x38] sm:$0xf]
      %v4462 = vld [vmem:[%s6 + $0x3c] sm:$0xf]
      %v4463 = vld [vmem:[%s7] sm:$0x1]
      %v4465 = vlaneseq
      %v4466 = vshrl.u32 %v4465, 7
      %v4467 = vsub.s32 0, %v4466
      %v4468 = vrot.slane %v4463, %v4467
      %v4486 = vunpack.c.l.b16 %v4447
      %v4487 = vunpack.c.l.b16 %v4448
      %v4488 = vunpack.c.l.b16 %v4449
      %v4489 = vunpack.c.l.b16 %v4450
      %v4490 = vunpack.c.l.b16 %v4451
      %v4491 = vunpack.c.l.b16 %v4452
      %v4492 = vunpack.c.l.b16 %v4453
      %v4493 = vunpack.c.l.b16 %v4454
      %v4494 = vunpack.c.l.b16 %v4455
      %v4495 = vunpack.c.l.b16 %v4456
      %v4496 = vunpack.c.l.b16 %v4457
      %v4497 = vunpack.c.l.b16 %v4458
      %v4498 = vunpack.c.l.b16 %v4459
      %v4499 = vunpack.c.l.b16 %v4460
      %v4500 = vunpack.c.l.b16 %v4461
      %v4501 = vunpack.c.l.b16 %v4462
      %v4502 = vpack.c.b16 %v4487, %v4486
      %v4503 = vpack.c.b16 %v4489, %v4488
      %v4504 = vpack.c.b16 %v4491, %v4490
      %v4505 = vpack.c.b16 %v4493, %v4492
      %v4506 = vpack.c.b16 %v4495, %v4494
      %v4507 = vpack.c.b16 %v4497, %v4496
      %v4508 = vpack.c.b16 %v4499, %v4498
      %v4509 = vpack.c.b16 %v4501, %v4500
      %4518 = vmatprep.subr.bf16.mxu0 0
      %4519 = vmatpush1.bf16.msra.mxu0 %v4502
      %4520 = vmatprep.subr.bf16.mxu0 0
      %4521 = vmatpush1.bf16.msra.mxu0 %v4503
      %4522 = vmatprep.subr.bf16.mxu0 0
      %4523 = vmatpush1.bf16.msra.mxu0 %v4504
      %4524 = vmatprep.subr.bf16.mxu0 0
      %4525 = vmatpush1.bf16.msra.mxu0 %v4505
      %4526 = vmatprep.subr.bf16.mxu0 0
      %4527 = vmatpush1.bf16.msra.mxu0 %v4506
      %4528 = vmatprep.subr.bf16.mxu0 0
      %4529 = vmatpush1.bf16.msra.mxu0 %v4507
      %4530 = vmatprep.subr.bf16.mxu0 0
      %4531 = vmatpush1.bf16.msra.mxu0 %v4508
      %4532 = vmatprep.subr.bf16.mxu0 0
      %4533 = vmatpush1.bf16.msra.mxu0 %v4509
      %4534 = vmatprep.subr.bf16.mxu0 0
      %4535 = vmatpush1.bf16.msra.mxu0 0
      %4536 = vmatprep.subr.bf16.mxu0 0
      %4537 = vmatpush1.bf16.msra.mxu0 0
      %4538 = vmatprep.subr.bf16.mxu0 0
      %4539 = vmatpush1.bf16.msra.mxu0 0
      %4540 = vmatprep.subr.bf16.mxu0 0
      %4541 = vmatpush1.bf16.msra.mxu0 0
      %4542 = vmatprep.subr.bf16.mxu0 0
      %4543 = vmatpush1.bf16.msra.mxu0 0
      %4544 = vmatprep.subr.bf16.mxu0 0
      %4545 = vmatpush1.bf16.msra.mxu0 0
      %4546 = vmatprep.subr.bf16.mxu0 0
      %4547 = vmatpush1.bf16.msra.mxu0 0
      %4548 = vmatprep.subr.bf16.mxu0 0
      %4549 = vmatpush1.bf16.msra.mxu0 0
      %4550 = vmatprep.mubr.bf16.mxu0 0
      %4551 = vmatmul.mubr.bf16.gmra.mrb[0].mxu0 %v1998
      %v4552 = vpop.f32.mrb[0].mxu0
      %v4553 = vadd.f32 %v4468, %v4552
      %v4554 = vpop.f32.mrb[0].mxu0
      %v4555 = vpop.f32.mrb[0].mxu0
      %v4556 = vadd.f32 %v4468, %v4555
      %v4557 = vpop.f32.mrb[0].mxu0
      %4558 = vmatprep.mubr.bf16.mxu0 0
      %4559 = vmatmul.mubr.bf16.gmra.mrb[0].mxu0 %v2007
      %v4560 = vpop.f32.mrb[0].mxu0
      %v4561 = vadd.f32 %v4468, %v4560
      %v4562 = vpop.f32.mrb[0].mxu0
      %v4563 = vpop.f32.mrb[0].mxu0
      %v4564 = vadd.f32 %v4468, %v4563
      %v4565 = vpop.f32.mrb[0].mxu0
      %4566 = vmatprep.mubr.bf16.mxu0 0
      %4567 = vmatmul.mubr.bf16.gmra.mrb[0].mxu0 %v2016
      %v4568 = vpop.f32.mrb[0].mxu0
      %v4569 = vadd.f32 %v4468, %v4568
      %v4570 = vpop.f32.mrb[0].mxu0
      %v4571 = vpop.f32.mrb[0].mxu0
      %v4572 = vadd.f32 %v4468, %v4571
      %v4573 = vpop.f32.mrb[0].mxu0
      %4574 = vmatprep.mubr.bf16.mxu0 0
      %4575 = vmatmul.mubr.bf16.gmra.mrb[0].mxu0 %v2025
      %v4576 = vpop.f32.mrb[0].mxu0
      %v4577 = vadd.f32 %v4468, %v4576
      %v4578 = vpop.f32.mrb[0].mxu0
      %v4579 = vpop.f32.mrb[0].mxu0
      %v4580 = vadd.f32 %v4468, %v4579
      %v4581 = vpop.f32.mrb[0].mxu0
      %4582 = vmatprep.mubr.bf16.mxu0 0
      %4583 = vmatmul.mubr.bf16.gmra.mrb[0].mxu0 %v2034
      %v4584 = vpop.f32.mrb[0].mxu0
      %v4585 = vadd.f32 %v4468, %v4584
      %v4586 = vpop.f32.mrb[0].mxu0
      %v4587 = vpop.f32.mrb[0].mxu0
      %v4588 = vadd.f32 %v4468, %v4587
      %v4589 = vpop.f32.mrb[0].mxu0
      %4590 = vmatprep.mubr.bf16.mxu0 0
      %4591 = vmatmul.mubr.bf16.gmra.mrb[0].mxu0 %v2043
      %v4592 = vpop.f32.mrb[0].mxu0
      %v4593 = vadd.f32 %v4468, %v4592
      %v4594 = vpop.f32.mrb[0].mxu0
      %v4595 = vpop.f32.mrb[0].mxu0
      %v4596 = vadd.f32 %v4468, %v4595
      %v4597 = vpop.f32.mrb[0].mxu0
      %4598 = vmatprep.mubr.bf16.mxu0 0
      %4599 = vmatmul.mubr.bf16.gmra.mrb[0].mxu0 %v2052
      %v4600 = vpop.f32.mrb[0].mxu0
      %v4601 = vadd.f32 %v4468, %v4600
      %v4602 = vpop.f32.mrb[0].mxu0
      %v4603 = vpop.f32.mrb[0].mxu0
      %v4604 = vadd.f32 %v4468, %v4603
      %v4605 = vpop.f32.mrb[0].mxu0
      %4606 = vmatprep.mubr.bf16.mxu0 0
      %4607 = vmatmul.mubr.bf16.gmra.mrb[0].mxu0 %v2061
      %v4608 = vpop.f32.mrb[0].mxu0
      %v4609 = vadd.f32 %v4468, %v4608
      %v4610 = vpop.f32.mrb[0].mxu0
      %v4611 = vpop.f32.mrb[0].mxu0
      %v4612 = vadd.f32 %v4468, %v4611
      %v4613 = vpop.f32.mrb[0].mxu0
      %4614 = vmatprep.mubr.bf16.mxu0 0
      %4615 = vmatmul.mubr.bf16.gmra.mrb[0].mxu0 %v2070
      %v4616 = vpop.f32.mrb[0].mxu0
      %v4617 = vadd.f32 %v4468, %v4616
      %v4618 = vpop.f32.mrb[0].mxu0
      %v4619 = vpop.f32.mrb[0].mxu0
      %v4620 = vadd.f32 %v4468, %v4619
      %v4621 = vpop.f32.mrb[0].mxu0
      %4622 = vmatprep.mubr.bf16.mxu0 0
      %4623 = vmatmul.mubr.bf16.gmra.mrb[0].mxu0 %v2079
      %v4624 = vpop.f32.mrb[0].mxu0
      %v4625 = vadd.f32 %v4468, %v4624
      %v4626 = vpop.f32.mrb[0].mxu0
      %v4627 = vpop.f32.mrb[0].mxu0
      %v4628 = vadd.f32 %v4468, %v4627
      %v4629 = vpop.f32.mrb[0].mxu0
      %4630 = vmatprep.mubr.bf16.mxu0 0
      %4631 = vmatmul.mubr.bf16.gmra.mrb[0].mxu0 %v2088
      %v4632 = vpop.f32.mrb[0].mxu0
      %v4633 = vadd.f32 %v4468, %v4632
      %v4634 = vpop.f32.mrb[0].mxu0
      %v4635 = vpop.f32.mrb[0].mxu0
      %v4636 = vadd.f32 %v4468, %v4635
      %v4637 = vpop.f32.mrb[0].mxu0
      %4638 = vmatprep.mubr.bf16.mxu0 0
      %4639 = vmatmul.mubr.bf16.gmra.mrb[0].mxu0 %v2097
      %v4640 = vpop.f32.mrb[0].mxu0
      %v4641 = vadd.f32 %v4468, %v4640
      %v4642 = vpop.f32.mrb[0].mxu0
      %v4643 = vpop.f32.mrb[0].mxu0
      %v4644 = vadd.f32 %v4468, %v4643
      %v4645 = vpop.f32.mrb[0].mxu0
      %4646 = vmatprep.mubr.bf16.mxu0 0
      %4647 = vmatmul.mubr.bf16.gmra.mrb[0].mxu0 %v2106
      %v4648 = vpop.f32.mrb[0].mxu0
      %v4649 = vadd.f32 %v4468, %v4648
      %v4650 = vpop.f32.mrb[0].mxu0
      %v4651 = vpop.f32.mrb[0].mxu0
      %v4652 = vadd.f32 %v4468, %v4651
      %v4653 = vpop.f32.mrb[0].mxu0
      %4654 = vmatprep.mubr.bf16.mxu0 0
      %4655 = vmatmul.mubr.bf16.gmra.mrb[0].mxu0 %v2115
      %v4656 = vpop.f32.mrb[0].mxu0
      %v4657 = vadd.f32 %v4468, %v4656
      %v4658 = vpop.f32.mrb[0].mxu0
      %v4659 = vpop.f32.mrb[0].mxu0
      %v4660 = vadd.f32 %v4468, %v4659
      %v4661 = vpop.f32.mrb[0].mxu0
      %4662 = vmatprep.mubr.bf16.mxu0 0
      %4663 = vmatmul.mubr.bf16.gmra.mrb[0].mxu0 %v2124
      %v4664 = vpop.f32.mrb[0].mxu0
      %v4665 = vadd.f32 %v4468, %v4664
      %v4666 = vpop.f32.mrb[0].mxu0
      %v4667 = vpop.f32.mrb[0].mxu0
      %v4668 = vadd.f32 %v4468, %v4667
      %v4669 = vpop.f32.mrb[0].mxu0
      %4670 = vmatprep.mubr.bf16.mxu0 0
      %4671 = vmatmul.mubr.bf16.gmra.mrb[0].mxu0 %v2133
      %v4672 = vpop.f32.mrb[0].mxu0
      %v4673 = vadd.f32 %v4468, %v4672
      %v4674 = vpop.f32.mrb[0].mxu0
      %v4675 = vpop.f32.mrb[0].mxu0
      %v4676 = vadd.f32 %v4468, %v4675
      %v4677 = vpop.f32.mrb[0].mxu0
      %4678 = vmatprep.mubr.bf16.mxu0 0
      %4679 = vmatmul.mubr.bf16.gmra.mrb[0].mxu0 %v2142
      %v4680 = vpop.f32.mrb[0].mxu0
      %v4681 = vadd.f32 %v4468, %v4680
      %v4682 = vpop.f32.mrb[0].mxu0
      %v4683 = vpop.f32.mrb[0].mxu0
      %v4684 = vadd.f32 %v4468, %v4683
      %v4685 = vpop.f32.mrb[0].mxu0
      %4686 = vmatprep.mubr.bf16.mxu0 0
      %4687 = vmatmul.mubr.bf16.gmra.mrb[0].mxu0 %v2151
      %v4688 = vpop.f32.mrb[0].mxu0
      %v4689 = vadd.f32 %v4468, %v4688
      %v4690 = vpop.f32.mrb[0].mxu0
      %v4691 = vpop.f32.mrb[0].mxu0
      %v4692 = vadd.f32 %v4468, %v4691
      %v4693 = vpop.f32.mrb[0].mxu0
      %4694 = vdwg.mxu0
      %v4695 = vld [vmem:[%s5] sm:$0x1]
      %v4697 = vlaneseq
      %v4698 = vshrl.u32 %v4697, 7
      %v4699 = vsub.s32 0, %v4698
      %v4700 = vrot.slane %v4695, %v4699
      %v4702 = vadd.f32 %v4553, %v4700
      %v4703 = vadd.f32 %v4556, %v4700
      %v4704 = vadd.f32 %v4561, %v4700
      %v4705 = vadd.f32 %v4564, %v4700
      %v4706 = vadd.f32 %v4569, %v4700
      %v4707 = vadd.f32 %v4572, %v4700
      %v4708 = vadd.f32 %v4577, %v4700
      %v4709 = vadd.f32 %v4580, %v4700
      %v4710 = vadd.f32 %v4585, %v4700
      %v4711 = vadd.f32 %v4588, %v4700
      %v4712 = vadd.f32 %v4593, %v4700
      %v4713 = vadd.f32 %v4596, %v4700
      %v4714 = vadd.f32 %v4601, %v4700
      %v4715 = vadd.f32 %v4604, %v4700
      %v4716 = vadd.f32 %v4609, %v4700
      %v4717 = vadd.f32 %v4612, %v4700
      %v4718 = vadd.f32 %v4617, %v4700
      %v4719 = vadd.f32 %v4620, %v4700
      %v4720 = vadd.f32 %v4625, %v4700
      %v4721 = vadd.f32 %v4628, %v4700
      %v4722 = vadd.f32 %v4633, %v4700
      %v4723 = vadd.f32 %v4636, %v4700
      %v4724 = vadd.f32 %v4641, %v4700
      %v4725 = vadd.f32 %v4644, %v4700
      %v4726 = vadd.f32 %v4649, %v4700
      %v4727 = vadd.f32 %v4652, %v4700
      %v4728 = vadd.f32 %v4657, %v4700
      %v4729 = vadd.f32 %v4660, %v4700
      %v4730 = vadd.f32 %v4665, %v4700
      %v4731 = vadd.f32 %v4668, %v4700
      %v4732 = vadd.f32 %v4673, %v4700
      %v4733 = vadd.f32 %v4676, %v4700
      %v4734 = vadd.f32 %v4681, %v4700
      %v4735 = vadd.f32 %v4684, %v4700
      %v4736 = vadd.f32 %v4689, %v4700
      %v4737 = vadd.f32 %v4692, %v4700
      %v4738 = vld [vmem:[#allocation2] sm:$0xf]
      %v4739 = vld [vmem:[#allocation2 + $0x4] sm:$0xf]
      %v4740 = vld [vmem:[#allocation2 + $0x8] sm:$0xf]
      %v4741 = vld [vmem:[#allocation2 + $0xc] sm:$0xf]
      %v4742 = vld [vmem:[#allocation2 + $0x10] sm:$0xf]
      %v4743 = vld [vmem:[#allocation2 + $0x14] sm:$0xf]
      %v4744 = vld [vmem:[#allocation2 + $0x18] sm:$0xf]
      %v4745 = vld [vmem:[#allocation2 + $0x1c] sm:$0xf]
      %v4746 = vld [vmem:[#allocation2 + $0x20] sm:$0xf]
      %v4747 = vld [vmem:[#allocation2 + $0x24] sm:$0xf]
      %v4748 = vld [vmem:[#allocation2 + $0x28] sm:$0xf]
      %v4749 = vld [vmem:[#allocation2 + $0x2c] sm:$0xf]
      %v4750 = vld [vmem:[#allocation2 + $0x30] sm:$0xf]
      %v4751 = vld [vmem:[#allocation2 + $0x34] sm:$0xf]
      %v4752 = vld [vmem:[#allocation2 + $0x38] sm:$0xf]
      %v4753 = vld [vmem:[#allocation2 + $0x3c] sm:$0xf]
      %v4754 = vld [vmem:[#allocation2 + $0x40] sm:$0xf]
      %v4755 = vld [vmem:[#allocation2 + $0x44] sm:$0xf]
      %v4756 = vld [vmem:[#allocation2 + $0x48] sm:$0xf]
      %v4757 = vld [vmem:[#allocation2 + $0x4c] sm:$0xf]
      %v4758 = vld [vmem:[#allocation2 + $0x50] sm:$0xf]
      %v4759 = vld [vmem:[#allocation2 + $0x54] sm:$0xf]
      %v4760 = vld [vmem:[#allocation2 + $0x58] sm:$0xf]
      %v4761 = vld [vmem:[#allocation2 + $0x5c] sm:$0xf]
      %v4762 = vld [vmem:[#allocation2 + $0x60] sm:$0xf]
      %v4763 = vld [vmem:[#allocation2 + $0x64] sm:$0xf]
      %v4764 = vld [vmem:[#allocation2 + $0x68] sm:$0xf]
      %v4765 = vld [vmem:[#allocation2 + $0x6c] sm:$0xf]
      %v4766 = vld [vmem:[#allocation2 + $0x70] sm:$0xf]
      %v4767 = vld [vmem:[#allocation2 + $0x74] sm:$0xf]
      %v4768 = vld [vmem:[#allocation2 + $0x78] sm:$0xf]
      %v4769 = vld [vmem:[#allocation2 + $0x7c] sm:$0xf]
      %v4770 = vld [vmem:[#allocation2 + $0x80] sm:$0xf]
      %v4771 = vld [vmem:[#allocation2 + $0x84] sm:$0xf]
      %v4772 = vld [vmem:[#allocation2 + $0x88] sm:$0xf]
      %v4773 = vld [vmem:[#allocation2 + $0x8c] sm:$0xf]
      %v4774 = vld [vmem:[#allocation2 + $0x90] sm:$0x1]
      %v4775 = vld [vmem:[%s4] sm:$0xf]
      %v4776 = vld [vmem:[%s4 + $0x4] sm:$0xf]
      %v4777 = vld [vmem:[%s4 + $0x8] sm:$0xf]
      %v4778 = vld [vmem:[%s4 + $0xc] sm:$0xf]
      %v4779 = vld [vmem:[%s4 + $0x10] sm:$0xf]
      %v4780 = vld [vmem:[%s4 + $0x14] sm:$0xf]
      %v4781 = vld [vmem:[%s4 + $0x18] sm:$0xf]
      %v4782 = vld [vmem:[%s4 + $0x1c] sm:$0xf]
      %v4783 = vld [vmem:[%s4 + $0x20] sm:$0xf]
      %v4784 = vld [vmem:[%s4 + $0x24] sm:$0xf]
      %v4785 = vld [vmem:[%s4 + $0x28] sm:$0xf]
      %v4786 = vld [vmem:[%s4 + $0x2c] sm:$0xf]
      %v4787 = vld [vmem:[%s4 + $0x30] sm:$0xf]
      %v4788 = vld [vmem:[%s4 + $0x34] sm:$0xf]
      %v4789 = vld [vmem:[%s4 + $0x38] sm:$0xf]
      %v4790 = vld [vmem:[%s4 + $0x3c] sm:$0xf]
      %v4828 = vunpack.c.l.b16 %v4738
      %v4829 = vunpack.c.l.b16 %v4739
      %v4830 = vunpack.c.l.b16 %v4740
      %v4831 = vunpack.c.l.b16 %v4741
      %v4832 = vunpack.c.l.b16 %v4742
      %v4833 = vunpack.c.l.b16 %v4743
      %v4834 = vunpack.c.l.b16 %v4744
      %v4835 = vunpack.c.l.b16 %v4745
      %v4836 = vunpack.c.l.b16 %v4746
      %v4837 = vunpack.c.l.b16 %v4747
      %v4838 = vunpack.c.l.b16 %v4748
      %v4839 = vunpack.c.l.b16 %v4749
      %v4840 = vunpack.c.l.b16 %v4750
      %v4841 = vunpack.c.l.b16 %v4751
      %v4842 = vunpack.c.l.b16 %v4752
      %v4843 = vunpack.c.l.b16 %v4753
      %v4844 = vunpack.c.l.b16 %v4754
      %v4845 = vunpack.c.l.b16 %v4755
      %v4846 = vunpack.c.l.b16 %v4756
      %v4847 = vunpack.c.l.b16 %v4757
      %v4848 = vunpack.c.l.b16 %v4758
      %v4849 = vunpack.c.l.b16 %v4759
      %v4850 = vunpack.c.l.b16 %v4760
      %v4851 = vunpack.c.l.b16 %v4761
      %v4852 = vunpack.c.l.b16 %v4762
      %v4853 = vunpack.c.l.b16 %v4763
      %v4854 = vunpack.c.l.b16 %v4764
      %v4855 = vunpack.c.l.b16 %v4765
      %v4856 = vunpack.c.l.b16 %v4766
      %v4857 = vunpack.c.l.b16 %v4767
      %v4858 = vunpack.c.l.b16 %v4768
      %v4859 = vunpack.c.l.b16 %v4769
      %v4860 = vunpack.c.l.b16 %v4770
      %v4861 = vunpack.c.l.b16 %v4771
      %v4862 = vunpack.c.l.b16 %v4772
      %v4863 = vunpack.c.l.b16 %v4773
      %v4864 = vunpack.c.l.b16 %v4774
      %v4865 = vpack.c.b16 %v4829, %v4828
      %v4866 = vpack.c.b16 %v4831, %v4830
      %v4867 = vpack.c.b16 %v4833, %v4832
      %v4868 = vpack.c.b16 %v4835, %v4834
      %v4869 = vpack.c.b16 %v4837, %v4836
      %v4870 = vpack.c.b16 %v4839, %v4838
      %v4871 = vpack.c.b16 %v4841, %v4840
      %v4872 = vpack.c.b16 %v4843, %v4842
      %v4873 = vpack.c.b16 %v4845, %v4844
      %v4874 = vpack.c.b16 %v4847, %v4846
      %v4875 = vpack.c.b16 %v4849, %v4848
      %v4876 = vpack.c.b16 %v4851, %v4850
      %v4877 = vpack.c.b16 %v4853, %v4852
      %v4878 = vpack.c.b16 %v4855, %v4854
      %v4879 = vpack.c.b16 %v4857, %v4856
      %v4880 = vpack.c.b16 %v4859, %v4858
      %v4881 = vpack.c.b16 %v4861, %v4860
      %v4882 = vpack.c.b16 %v4863, %v4862
      %v4883 = vpack.c.b16 %v4864, %v4864
      %v4885 = vshrl.u32 %v4865, 16
      %v4887 = vshll.u32 %v4865, 16
      %v4889 = vrot.slane %v4887, 1
      %v4890 = vor.u32 %v4885, %v4889
      %v4892 = vshll.u32 %v4866, 16
      %v4894 = vrot.slane %v4892, 1
      %v4895 = vsel %vm850, %v4890, %v4894
      %v4896 = vshrl.u32 %v4866, 16
      %v4898 = vor.u32 %v4896, %v4894
      %v4900 = vshll.u32 %v4867, 16
      %v4902 = vrot.slane %v4900, 1
      %v4903 = vsel %vm850, %v4898, %v4902
      %v4904 = vshrl.u32 %v4867, 16
      %v4906 = vor.u32 %v4904, %v4902
      %v4908 = vshll.u32 %v4868, 16
      %v4910 = vrot.slane %v4908, 1
      %v4911 = vsel %vm850, %v4906, %v4910
      %v4912 = vshrl.u32 %v4868, 16
      %v4914 = vor.u32 %v4912, %v4910
      %v4916 = vshll.u32 %v4869, 16
      %v4918 = vrot.slane %v4916, 1
      %v4919 = vsel %vm850, %v4914, %v4918
      %v4920 = vshrl.u32 %v4869, 16
      %v4922 = vor.u32 %v4920, %v4918
      %v4924 = vshll.u32 %v4870, 16
      %v4926 = vrot.slane %v4924, 1
      %v4927 = vsel %vm850, %v4922, %v4926
      %v4928 = vshrl.u32 %v4870, 16
      %v4930 = vor.u32 %v4928, %v4926
      %v4932 = vshll.u32 %v4871, 16
      %v4934 = vrot.slane %v4932, 1
      %v4935 = vsel %vm850, %v4930, %v4934
      %v4936 = vshrl.u32 %v4871, 16
      %v4938 = vor.u32 %v4936, %v4934
      %v4940 = vshll.u32 %v4872, 16
      %v4942 = vrot.slane %v4940, 1
      %v4943 = vsel %vm850, %v4938, %v4942
      %v4944 = vshrl.u32 %v4872, 16
      %v4946 = vor.u32 %v4944, %v4942
      %v4948 = vshll.u32 %v4873, 16
      %v4950 = vrot.slane %v4948, 1
      %v4951 = vsel %vm850, %v4946, %v4950
      %v4952 = vshrl.u32 %v4873, 16
      %v4954 = vor.u32 %v4952, %v4950
      %v4956 = vshll.u32 %v4874, 16
      %v4958 = vrot.slane %v4956, 1
      %v4959 = vsel %vm850, %v4954, %v4958
      %v4960 = vshrl.u32 %v4874, 16
      %v4962 = vor.u32 %v4960, %v4958
      %v4964 = vshll.u32 %v4875, 16
      %v4966 = vrot.slane %v4964, 1
      %v4967 = vsel %vm850, %v4962, %v4966
      %v4968 = vshrl.u32 %v4875, 16
      %v4970 = vor.u32 %v4968, %v4966
      %v4972 = vshll.u32 %v4876, 16
      %v4974 = vrot.slane %v4972, 1
      %v4975 = vsel %vm850, %v4970, %v4974
      %v4976 = vshrl.u32 %v4876, 16
      %v4978 = vor.u32 %v4976, %v4974
      %v4980 = vshll.u32 %v4877, 16
      %v4982 = vrot.slane %v4980, 1
      %v4983 = vsel %vm850, %v4978, %v4982
      %v4984 = vshrl.u32 %v4877, 16
      %v4986 = vor.u32 %v4984, %v4982
      %v4988 = vshll.u32 %v4878, 16
      %v4990 = vrot.slane %v4988, 1
      %v4991 = vsel %vm850, %v4986, %v4990
      %v4992 = vshrl.u32 %v4878, 16
      %v4994 = vor.u32 %v4992, %v4990
      %v4996 = vshll.u32 %v4879, 16
      %v4998 = vrot.slane %v4996, 1
      %v4999 = vsel %vm850, %v4994, %v4998
      %v5000 = vshrl.u32 %v4879, 16
      %v5002 = vor.u32 %v5000, %v4998
      %v5004 = vshll.u32 %v4880, 16
      %v5006 = vrot.slane %v5004, 1
      %v5007 = vsel %vm850, %v5002, %v5006
      %v5008 = vshrl.u32 %v4880, 16
      %v5010 = vor.u32 %v5008, %v5006
      %v5012 = vshll.u32 %v4881, 16
      %v5014 = vrot.slane %v5012, 1
      %v5015 = vsel %vm850, %v5010, %v5014
      %v5016 = vshrl.u32 %v4881, 16
      %v5018 = vor.u32 %v5016, %v5014
      %v5020 = vshll.u32 %v4882, 16
      %v5022 = vrot.slane %v5020, 1
      %v5023 = vsel %vm850, %v5018, %v5022
      %v5024 = vshrl.u32 %v4882, 16
      %v5026 = vor.u32 %v5024, %v5022
      %v5028 = vshll.u32 %v4883, 16
      %v5030 = vrot.slane %v5028, 1
      %v5031 = vsel %vm850, %v5026, %v5030
      %v5066 = vunpack.c.l.b16 %v4775
      %v5067 = vunpack.c.l.b16 %v4776
      %v5068 = vunpack.c.l.b16 %v4777
      %v5069 = vunpack.c.l.b16 %v4778
      %v5070 = vunpack.c.l.b16 %v4779
      %v5071 = vunpack.c.l.b16 %v4780
      %v5072 = vunpack.c.l.b16 %v4781
      %v5073 = vunpack.c.l.b16 %v4782
      %v5074 = vunpack.c.l.b16 %v4783
      %v5075 = vunpack.c.l.b16 %v4784
      %v5076 = vunpack.c.l.b16 %v4785
      %v5077 = vunpack.c.l.b16 %v4786
      %v5078 = vunpack.c.l.b16 %v4787
      %v5079 = vunpack.c.l.b16 %v4788
      %v5080 = vunpack.c.l.b16 %v4789
      %v5081 = vunpack.c.l.b16 %v4790
      %v5082 = vpack.c.b16 %v5067, %v5066
      %v5083 = vpack.c.b16 %v5069, %v5068
      %v5084 = vpack.c.b16 %v5071, %v5070
      %v5085 = vpack.c.b16 %v5073, %v5072
      %v5086 = vpack.c.b16 %v5075, %v5074
      %v5087 = vpack.c.b16 %v5077, %v5076
      %v5088 = vpack.c.b16 %v5079, %v5078
      %v5089 = vpack.c.b16 %v5081, %v5080
      %5098 = vmatprep.subr.bf16.mxu0 0
      %5099 = vmatpush1.bf16.msra.mxu0 %v5082
      %5100 = vmatprep.subr.bf16.mxu0 0
      %5101 = vmatpush1.bf16.msra.mxu0 %v5083
      %5102 = vmatprep.subr.bf16.mxu0 0
      %5103 = vmatpush1.bf16.msra.mxu0 %v5084
      %5104 = vmatprep.subr.bf16.mxu0 0
      %5105 = vmatpush1.bf16.msra.mxu0 %v5085
      %5106 = vmatprep.subr.bf16.mxu0 0
      %5107 = vmatpush1.bf16.msra.mxu0 %v5086
      %5108 = vmatprep.subr.bf16.mxu0 0
      %5109 = vmatpush1.bf16.msra.mxu0 %v5087
      %5110 = vmatprep.subr.bf16.mxu0 0
      %5111 = vmatpush1.bf16.msra.mxu0 %v5088
      %5112 = vmatprep.subr.bf16.mxu0 0
      %5113 = vmatpush1.bf16.msra.mxu0 %v5089
      %5114 = vmatprep.subr.bf16.mxu0 0
      %5115 = vmatpush1.bf16.msra.mxu0 0
      %5116 = vmatprep.subr.bf16.mxu0 0
      %5117 = vmatpush1.bf16.msra.mxu0 0
      %5118 = vmatprep.subr.bf16.mxu0 0
      %5119 = vmatpush1.bf16.msra.mxu0 0
      %5120 = vmatprep.subr.bf16.mxu0 0
      %5121 = vmatpush1.bf16.msra.mxu0 0
      %5122 = vmatprep.subr.bf16.mxu0 0
      %5123 = vmatpush1.bf16.msra.mxu0 0
      %5124 = vmatprep.subr.bf16.mxu0 0
      %5125 = vmatpush1.bf16.msra.mxu0 0
      %5126 = vmatprep.subr.bf16.mxu0 0
      %5127 = vmatpush1.bf16.msra.mxu0 0
      %5128 = vmatprep.subr.bf16.mxu0 0
      %5129 = vmatpush1.bf16.msra.mxu0 0
      %5130 = vmatprep.mubr.bf16.mxu0 0
      %5131 = vmatmul.mubr.bf16.gmra.mrb[0].mxu0 %v4895
      %v5132 = vpop.f32.mrb[0].mxu0
      %v5133 = vadd.f32 0.0, %v5132
      %v5134 = vpop.f32.mrb[0].mxu0
      %v5135 = vpop.f32.mrb[0].mxu0
      %v5136 = vadd.f32 0.0, %v5135
      %v5137 = vpop.f32.mrb[0].mxu0
      %5138 = vmatprep.mubr.bf16.mxu0 0
      %5139 = vmatmul.mubr.bf16.gmra.mrb[0].mxu0 %v4903
      %v5140 = vpop.f32.mrb[0].mxu0
      %v5141 = vadd.f32 0.0, %v5140
      %v5142 = vpop.f32.mrb[0].mxu0
      %v5143 = vpop.f32.mrb[0].mxu0
      %v5144 = vadd.f32 0.0, %v5143
      %v5145 = vpop.f32.mrb[0].mxu0
      %5146 = vmatprep.mubr.bf16.mxu0 0
      %5147 = vmatmul.mubr.bf16.gmra.mrb[0].mxu0 %v4911
      %v5148 = vpop.f32.mrb[0].mxu0
      %v5149 = vadd.f32 0.0, %v5148
      %v5150 = vpop.f32.mrb[0].mxu0
      %v5151 = vpop.f32.mrb[0].mxu0
      %v5152 = vadd.f32 0.0, %v5151
      %v5153 = vpop.f32.mrb[0].mxu0
      %5154 = vmatprep.mubr.bf16.mxu0 0
      %5155 = vmatmul.mubr.bf16.gmra.mrb[0].mxu0 %v4919
      %v5156 = vpop.f32.mrb[0].mxu0
      %v5157 = vadd.f32 0.0, %v5156
      %v5158 = vpop.f32.mrb[0].mxu0
      %v5159 = vpop.f32.mrb[0].mxu0
      %v5160 = vadd.f32 0.0, %v5159
      %v5161 = vpop.f32.mrb[0].mxu0
      %5162 = vmatprep.mubr.bf16.mxu0 0
      %5163 = vmatmul.mubr.bf16.gmra.mrb[0].mxu0 %v4927
      %v5164 = vpop.f32.mrb[0].mxu0
      %v5165 = vadd.f32 0.0, %v5164
      %v5166 = vpop.f32.mrb[0].mxu0
      %v5167 = vpop.f32.mrb[0].mxu0
      %v5168 = vadd.f32 0.0, %v5167
      %v5169 = vpop.f32.mrb[0].mxu0
      %5170 = vmatprep.mubr.bf16.mxu0 0
      %5171 = vmatmul.mubr.bf16.gmra.mrb[0].mxu0 %v4935
      %v5172 = vpop.f32.mrb[0].mxu0
      %v5173 = vadd.f32 0.0, %v5172
      %v5174 = vpop.f32.mrb[0].mxu0
      %v5175 = vpop.f32.mrb[0].mxu0
      %v5176 = vadd.f32 0.0, %v5175
      %v5177 = vpop.f32.mrb[0].mxu0
      %5178 = vmatprep.mubr.bf16.mxu0 0
      %5179 = vmatmul.mubr.bf16.gmra.mrb[0].mxu0 %v4943
      %v5180 = vpop.f32.mrb[0].mxu0
      %v5181 = vadd.f32 0.0, %v5180
      %v5182 = vpop.f32.mrb[0].mxu0
      %v5183 = vpop.f32.mrb[0].mxu0
      %v5184 = vadd.f32 0.0, %v5183
      %v5185 = vpop.f32.mrb[0].mxu0
      %5186 = vmatprep.mubr.bf16.mxu0 0
      %5187 = vmatmul.mubr.bf16.gmra.mrb[0].mxu0 %v4951
      %v5188 = vpop.f32.mrb[0].mxu0
      %v5189 = vadd.f32 0.0, %v5188
      %v5190 = vpop.f32.mrb[0].mxu0
      %v5191 = vpop.f32.mrb[0].mxu0
      %v5192 = vadd.f32 0.0, %v5191
      %v5193 = vpop.f32.mrb[0].mxu0
      %5194 = vmatprep.mubr.bf16.mxu0 0
      %5195 = vmatmul.mubr.bf16.gmra.mrb[0].mxu0 %v4959
      %v5196 = vpop.f32.mrb[0].mxu0
      %v5197 = vadd.f32 0.0, %v5196
      %v5198 = vpop.f32.mrb[0].mxu0
      %v5199 = vpop.f32.mrb[0].mxu0
      %v5200 = vadd.f32 0.0, %v5199
      %v5201 = vpop.f32.mrb[0].mxu0
      %5202 = vmatprep.mubr.bf16.mxu0 0
      %5203 = vmatmul.mubr.bf16.gmra.mrb[0].mxu0 %v4967
      %v5204 = vpop.f32.mrb[0].mxu0
      %v5205 = vadd.f32 0.0, %v5204
      %v5206 = vpop.f32.mrb[0].mxu0
      %v5207 = vpop.f32.mrb[0].mxu0
      %v5208 = vadd.f32 0.0, %v5207
      %v5209 = vpop.f32.mrb[0].mxu0
      %5210 = vmatprep.mubr.bf16.mxu0 0
      %5211 = vmatmul.mubr.bf16.gmra.mrb[0].mxu0 %v4975
      %v5212 = vpop.f32.mrb[0].mxu0
      %v5213 = vadd.f32 0.0, %v5212
      %v5214 = vpop.f32.mrb[0].mxu0
      %v5215 = vpop.f32.mrb[0].mxu0
      %v5216 = vadd.f32 0.0, %v5215
      %v5217 = vpop.f32.mrb[0].mxu0
      %5218 = vmatprep.mubr.bf16.mxu0 0
      %5219 = vmatmul.mubr.bf16.gmra.mrb[0].mxu0 %v4983
      %v5220 = vpop.f32.mrb[0].mxu0
      %v5221 = vadd.f32 0.0, %v5220
      %v5222 = vpop.f32.mrb[0].mxu0
      %v5223 = vpop.f32.mrb[0].mxu0
      %v5224 = vadd.f32 0.0, %v5223
      %v5225 = vpop.f32.mrb[0].mxu0
      %5226 = vmatprep.mubr.bf16.mxu0 0
      %5227 = vmatmul.mubr.bf16.gmra.mrb[0].mxu0 %v4991
      %v5228 = vpop.f32.mrb[0].mxu0
      %v5229 = vadd.f32 0.0, %v5228
      %v5230 = vpop.f32.mrb[0].mxu0
      %v5231 = vpop.f32.mrb[0].mxu0
      %v5232 = vadd.f32 0.0, %v5231
      %v5233 = vpop.f32.mrb[0].mxu0
      %5234 = vmatprep.mubr.bf16.mxu0 0
      %5235 = vmatmul.mubr.bf16.gmra.mrb[0].mxu0 %v4999
      %v5236 = vpop.f32.mrb[0].mxu0
      %v5237 = vadd.f32 0.0, %v5236
      %v5238 = vpop.f32.mrb[0].mxu0
      %v5239 = vpop.f32.mrb[0].mxu0
      %v5240 = vadd.f32 0.0, %v5239
      %v5241 = vpop.f32.mrb[0].mxu0
      %5242 = vmatprep.mubr.bf16.mxu0 0
      %5243 = vmatmul.mubr.bf16.gmra.mrb[0].mxu0 %v5007
      %v5244 = vpop.f32.mrb[0].mxu0
      %v5245 = vadd.f32 0.0, %v5244
      %v5246 = vpop.f32.mrb[0].mxu0
      %v5247 = vpop.f32.mrb[0].mxu0
      %v5248 = vadd.f32 0.0, %v5247
      %v5249 = vpop.f32.mrb[0].mxu0
      %5250 = vmatprep.mubr.bf16.mxu0 0
      %5251 = vmatmul.mubr.bf16.gmra.mrb[0].mxu0 %v5015
      %v5252 = vpop.f32.mrb[0].mxu0
      %v5253 = vadd.f32 0.0, %v5252
      %v5254 = vpop.f32.mrb[0].mxu0
      %v5255 = vpop.f32.mrb[0].mxu0
      %v5256 = vadd.f32 0.0, %v5255
      %v5257 = vpop.f32.mrb[0].mxu0
      %5258 = vmatprep.mubr.bf16.mxu0 0
      %5259 = vmatmul.mubr.bf16.gmra.mrb[0].mxu0 %v5023
      %v5260 = vpop.f32.mrb[0].mxu0
      %v5261 = vadd.f32 0.0, %v5260
      %v5262 = vpop.f32.mrb[0].mxu0
      %v5263 = vpop.f32.mrb[0].mxu0
      %v5264 = vadd.f32 0.0, %v5263
      %v5265 = vpop.f32.mrb[0].mxu0
      %5266 = vmatprep.mubr.bf16.mxu0 0
      %5267 = vmatmul.mubr.bf16.gmra.mrb[0].mxu0 %v5031
      %v5268 = vpop.f32.mrb[0].mxu0
      %v5269 = vadd.f32 0.0, %v5268
      %v5270 = vpop.f32.mrb[0].mxu0
      %v5271 = vpop.f32.mrb[0].mxu0
      %v5272 = vadd.f32 0.0, %v5271
      %v5273 = vpop.f32.mrb[0].mxu0
      %5274 = vdwg.mxu0
      %v5275 = vadd.f32 %v4702, %v5133
      %v5276 = vadd.f32 %v4703, %v5136
      %v5277 = vadd.f32 %v4704, %v5141
      %v5278 = vadd.f32 %v4705, %v5144
      %v5279 = vadd.f32 %v4706, %v5149
      %v5280 = vadd.f32 %v4707, %v5152
      %v5281 = vadd.f32 %v4708, %v5157
      %v5282 = vadd.f32 %v4709, %v5160
      %v5283 = vadd.f32 %v4710, %v5165
      %v5284 = vadd.f32 %v4711, %v5168
      %v5285 = vadd.f32 %v4712, %v5173
      %v5286 = vadd.f32 %v4713, %v5176
      %v5287 = vadd.f32 %v4714, %v5181
      %v5288 = vadd.f32 %v4715, %v5184
      %v5289 = vadd.f32 %v4716, %v5189
      %v5290 = vadd.f32 %v4717, %v5192
      %v5291 = vadd.f32 %v4718, %v5197
      %v5292 = vadd.f32 %v4719, %v5200
      %v5293 = vadd.f32 %v4720, %v5205
      %v5294 = vadd.f32 %v4721, %v5208
      %v5295 = vadd.f32 %v4722, %v5213
      %v5296 = vadd.f32 %v4723, %v5216
      %v5297 = vadd.f32 %v4724, %v5221
      %v5298 = vadd.f32 %v4725, %v5224
      %v5299 = vadd.f32 %v4726, %v5229
      %v5300 = vadd.f32 %v4727, %v5232
      %v5301 = vadd.f32 %v4728, %v5237
      %v5302 = vadd.f32 %v4729, %v5240
      %v5303 = vadd.f32 %v4730, %v5245
      %v5304 = vadd.f32 %v4731, %v5248
      %v5305 = vadd.f32 %v4732, %v5253
      %v5306 = vadd.f32 %v4733, %v5256
      %v5307 = vadd.f32 %v4734, %v5261
      %v5308 = vadd.f32 %v4735, %v5264
      %v5309 = vadd.f32 %v4736, %v5269
      %v5310 = vadd.f32 %v4737, %v5272
      %v5311 = vld [vmem:[#allocation2] sm:$0xe]
      %s5312 = scalar_lea.vmem %s4, 64
      %v5313 = vld [vmem:[%s5312] sm:$0xf]
      %v5314 = vld [vmem:[%s5312 + $0x4] sm:$0xf]
      %v5315 = vld [vmem:[%s5312 + $0x8] sm:$0xf]
      %v5316 = vld [vmem:[%s5312 + $0xc] sm:$0xf]
      %v5317 = vld [vmem:[%s5312 + $0x10] sm:$0xf]
      %v5318 = vld [vmem:[%s5312 + $0x14] sm:$0xf]
      %v5319 = vld [vmem:[%s5312 + $0x18] sm:$0xf]
      %v5320 = vld [vmem:[%s5312 + $0x1c] sm:$0xf]
      %v5321 = vld [vmem:[%s5312 + $0x20] sm:$0xf]
      %v5322 = vld [vmem:[%s5312 + $0x24] sm:$0xf]
      %v5323 = vld [vmem:[%s5312 + $0x28] sm:$0xf]
      %v5324 = vld [vmem:[%s5312 + $0x2c] sm:$0xf]
      %v5325 = vld [vmem:[%s5312 + $0x30] sm:$0xf]
      %v5326 = vld [vmem:[%s5312 + $0x34] sm:$0xf]
      %v5327 = vld [vmem:[%s5312 + $0x38] sm:$0xf]
      %v5328 = vld [vmem:[%s5312 + $0x3c] sm:$0xf]
      %v5330 = vunpack.c.l.b16 %v5311
      %v5331 = vpack.c.b16 %v4829, %v5330
      %v5332 = vrot.slane %v5331, 1
      %v5333 = vrot.slane %v4866, 1
      %v5334 = vsel %vm1299, %v5332, %v5333
      %v5335 = vrot.slane %v4867, 1
      %v5336 = vsel %vm1299, %v5333, %v5335
      %v5337 = vrot.slane %v4868, 1
      %v5338 = vsel %vm1299, %v5335, %v5337
      %v5339 = vrot.slane %v4869, 1
      %v5340 = vsel %vm1299, %v5337, %v5339
      %v5341 = vrot.slane %v4870, 1
      %v5342 = vsel %vm1299, %v5339, %v5341
      %v5343 = vrot.slane %v4871, 1
      %v5344 = vsel %vm1299, %v5341, %v5343
      %v5345 = vrot.slane %v4872, 1
      %v5346 = vsel %vm1299, %v5343, %v5345
      %v5347 = vrot.slane %v4873, 1
      %v5348 = vsel %vm1299, %v5345, %v5347
      %v5349 = vrot.slane %v4874, 1
      %v5350 = vsel %vm1299, %v5347, %v5349
      %v5351 = vrot.slane %v4875, 1
      %v5352 = vsel %vm1299, %v5349, %v5351
      %v5353 = vrot.slane %v4876, 1
      %v5354 = vsel %vm1299, %v5351, %v5353
      %v5355 = vrot.slane %v4877, 1
      %v5356 = vsel %vm1299, %v5353, %v5355
      %v5357 = vrot.slane %v4878, 1
      %v5358 = vsel %vm1299, %v5355, %v5357
      %v5359 = vrot.slane %v4879, 1
      %v5360 = vsel %vm1299, %v5357, %v5359
      %v5361 = vrot.slane %v4880, 1
      %v5362 = vsel %vm1299, %v5359, %v5361
      %v5363 = vrot.slane %v4881, 1
      %v5364 = vsel %vm1299, %v5361, %v5363
      %v5365 = vrot.slane %v4882, 1
      %v5366 = vsel %vm1299, %v5363, %v5365
      %v5367 = vrot.slane %v4883, 1
      %v5368 = vsel %vm1299, %v5365, %v5367
      %v5403 = vunpack.c.l.b16 %v5313
      %v5404 = vunpack.c.l.b16 %v5314
      %v5405 = vunpack.c.l.b16 %v5315
      %v5406 = vunpack.c.l.b16 %v5316
      %v5407 = vunpack.c.l.b16 %v5317
      %v5408 = vunpack.c.l.b16 %v5318
      %v5409 = vunpack.c.l.b16 %v5319
      %v5410 = vunpack.c.l.b16 %v5320
      %v5411 = vunpack.c.l.b16 %v5321
      %v5412 = vunpack.c.l.b16 %v5322
      %v5413 = vunpack.c.l.b16 %v5323
      %v5414 = vunpack.c.l.b16 %v5324
      %v5415 = vunpack.c.l.b16 %v5325
      %v5416 = vunpack.c.l.b16 %v5326
      %v5417 = vunpack.c.l.b16 %v5327
      %v5418 = vunpack.c.l.b16 %v5328
      %v5419 = vpack.c.b16 %v5404, %v5403
      %v5420 = vpack.c.b16 %v5406, %v5405
      %v5421 = vpack.c.b16 %v5408, %v5407
      %v5422 = vpack.c.b16 %v5410, %v5409
      %v5423 = vpack.c.b16 %v5412, %v5411
      %v5424 = vpack.c.b16 %v5414, %v5413
      %v5425 = vpack.c.b16 %v5416, %v5415
      %v5426 = vpack.c.b16 %v5418, %v5417
      %5435 = vmatprep.subr.bf16.mxu0 0
      %5436 = vmatpush1.bf16.msra.mxu0 %v5419
      %5437 = vmatprep.subr.bf16.mxu0 0
      %5438 = vmatpush1.bf16.msra.mxu0 %v5420
      %5439 = vmatprep.subr.bf16.mxu0 0
      %5440 = vmatpush1.bf16.msra.mxu0 %v5421
      %5441 = vmatprep.subr.bf16.mxu0 0
      %5442 = vmatpush1.bf16.msra.mxu0 %v5422
      %5443 = vmatprep.subr.bf16.mxu0 0
      %5444 = vmatpush1.bf16.msra.mxu0 %v5423
      %5445 = vmatprep.subr.bf16.mxu0 0
      %5446 = vmatpush1.bf16.msra.mxu0 %v5424
      %5447 = vmatprep.subr.bf16.mxu0 0
      %5448 = vmatpush1.bf16.msra.mxu0 %v5425
      %5449 = vmatprep.subr.bf16.mxu0 0
      %5450 = vmatpush1.bf16.msra.mxu0 %v5426
      %5451 = vmatprep.subr.bf16.mxu0 0
      %5452 = vmatpush1.bf16.msra.mxu0 0
      %5453 = vmatprep.subr.bf16.mxu0 0
      %5454 = vmatpush1.bf16.msra.mxu0 0
      %5455 = vmatprep.subr.bf16.mxu0 0
      %5456 = vmatpush1.bf16.msra.mxu0 0
      %5457 = vmatprep.subr.bf16.mxu0 0
      %5458 = vmatpush1.bf16.msra.mxu0 0
      %5459 = vmatprep.subr.bf16.mxu0 0
      %5460 = vmatpush1.bf16.msra.mxu0 0
      %5461 = vmatprep.subr.bf16.mxu0 0
      %5462 = vmatpush1.bf16.msra.mxu0 0
      %5463 = vmatprep.subr.bf16.mxu0 0
      %5464 = vmatpush1.bf16.msra.mxu0 0
      %5465 = vmatprep.subr.bf16.mxu0 0
      %5466 = vmatpush1.bf16.msra.mxu0 0
      %5467 = vmatprep.mubr.bf16.mxu0 0
      %5468 = vmatmul.mubr.bf16.gmra.mrb[0].mxu0 %v5334
      %v5469 = vpop.f32.mrb[0].mxu0
      %v5470 = vadd.f32 0.0, %v5469
      %v5471 = vpop.f32.mrb[0].mxu0
      %v5472 = vpop.f32.mrb[0].mxu0
      %v5473 = vadd.f32 0.0, %v5472
      %v5474 = vpop.f32.mrb[0].mxu0
      %5475 = vmatprep.mubr.bf16.mxu0 0
      %5476 = vmatmul.mubr.bf16.gmra.mrb[0].mxu0 %v5336
      %v5477 = vpop.f32.mrb[0].mxu0
      %v5478 = vadd.f32 0.0, %v5477
      %v5479 = vpop.f32.mrb[0].mxu0
      %v5480 = vpop.f32.mrb[0].mxu0
      %v5481 = vadd.f32 0.0, %v5480
      %v5482 = vpop.f32.mrb[0].mxu0
      %5483 = vmatprep.mubr.bf16.mxu0 0
      %5484 = vmatmul.mubr.bf16.gmra.mrb[0].mxu0 %v5338
      %v5485 = vpop.f32.mrb[0].mxu0
      %v5486 = vadd.f32 0.0, %v5485
      %v5487 = vpop.f32.mrb[0].mxu0
      %v5488 = vpop.f32.mrb[0].mxu0
      %v5489 = vadd.f32 0.0, %v5488
      %v5490 = vpop.f32.mrb[0].mxu0
      %5491 = vmatprep.mubr.bf16.mxu0 0
      %5492 = vmatmul.mubr.bf16.gmra.mrb[0].mxu0 %v5340
      %v5493 = vpop.f32.mrb[0].mxu0
      %v5494 = vadd.f32 0.0, %v5493
      %v5495 = vpop.f32.mrb[0].mxu0
      %v5496 = vpop.f32.mrb[0].mxu0
      %v5497 = vadd.f32 0.0, %v5496
      %v5498 = vpop.f32.mrb[0].mxu0
      %5499 = vmatprep.mubr.bf16.mxu0 0
      %5500 = vmatmul.mubr.bf16.gmra.mrb[0].mxu0 %v5342
      %v5501 = vpop.f32.mrb[0].mxu0
      %v5502 = vadd.f32 0.0, %v5501
      %v5503 = vpop.f32.mrb[0].mxu0
      %v5504 = vpop.f32.mrb[0].mxu0
      %v5505 = vadd.f32 0.0, %v5504
      %v5506 = vpop.f32.mrb[0].mxu0
      %5507 = vmatprep.mubr.bf16.mxu0 0
      %5508 = vmatmul.mubr.bf16.gmra.mrb[0].mxu0 %v5344
      %v5509 = vpop.f32.mrb[0].mxu0
      %v5510 = vadd.f32 0.0, %v5509
      %v5511 = vpop.f32.mrb[0].mxu0
      %v5512 = vpop.f32.mrb[0].mxu0
      %v5513 = vadd.f32 0.0, %v5512
      %v5514 = vpop.f32.mrb[0].mxu0
      %5515 = vmatprep.mubr.bf16.mxu0 0
      %5516 = vmatmul.mubr.bf16.gmra.mrb[0].mxu0 %v5346
      %v5517 = vpop.f32.mrb[0].mxu0
      %v5518 = vadd.f32 0.0, %v5517
      %v5519 = vpop.f32.mrb[0].mxu0
      %v5520 = vpop.f32.mrb[0].mxu0
      %v5521 = vadd.f32 0.0, %v5520
      %v5522 = vpop.f32.mrb[0].mxu0
      %5523 = vmatprep.mubr.bf16.mxu0 0
      %5524 = vmatmul.mubr.bf16.gmra.mrb[0].mxu0 %v5348
      %v5525 = vpop.f32.mrb[0].mxu0
      %v5526 = vadd.f32 0.0, %v5525
      %v5527 = vpop.f32.mrb[0].mxu0
      %v5528 = vpop.f32.mrb[0].mxu0
      %v5529 = vadd.f32 0.0, %v5528
      %v5530 = vpop.f32.mrb[0].mxu0
      %5531 = vmatprep.mubr.bf16.mxu0 0
      %5532 = vmatmul.mubr.bf16.gmra.mrb[0].mxu0 %v5350
      %v5533 = vpop.f32.mrb[0].mxu0
      %v5534 = vadd.f32 0.0, %v5533
      %v5535 = vpop.f32.mrb[0].mxu0
      %v5536 = vpop.f32.mrb[0].mxu0
      %v5537 = vadd.f32 0.0, %v5536
      %v5538 = vpop.f32.mrb[0].mxu0
      %5539 = vmatprep.mubr.bf16.mxu0 0
      %5540 = vmatmul.mubr.bf16.gmra.mrb[0].mxu0 %v5352
      %v5541 = vpop.f32.mrb[0].mxu0
      %v5542 = vadd.f32 0.0, %v5541
      %v5543 = vpop.f32.mrb[0].mxu0
      %v5544 = vpop.f32.mrb[0].mxu0
      %v5545 = vadd.f32 0.0, %v5544
      %v5546 = vpop.f32.mrb[0].mxu0
      %5547 = vmatprep.mubr.bf16.mxu0 0
      %5548 = vmatmul.mubr.bf16.gmra.mrb[0].mxu0 %v5354
      %v5549 = vpop.f32.mrb[0].mxu0
      %v5550 = vadd.f32 0.0, %v5549
      %v5551 = vpop.f32.mrb[0].mxu0
      %v5552 = vpop.f32.mrb[0].mxu0
      %v5553 = vadd.f32 0.0, %v5552
      %v5554 = vpop.f32.mrb[0].mxu0
      %5555 = vmatprep.mubr.bf16.mxu0 0
      %5556 = vmatmul.mubr.bf16.gmra.mrb[0].mxu0 %v5356
      %v5557 = vpop.f32.mrb[0].mxu0
      %v5558 = vadd.f32 0.0, %v5557
      %v5559 = vpop.f32.mrb[0].mxu0
      %v5560 = vpop.f32.mrb[0].mxu0
      %v5561 = vadd.f32 0.0, %v5560
      %v5562 = vpop.f32.mrb[0].mxu0
      %5563 = vmatprep.mubr.bf16.mxu0 0
      %5564 = vmatmul.mubr.bf16.gmra.mrb[0].mxu0 %v5358
      %v5565 = vpop.f32.mrb[0].mxu0
      %v5566 = vadd.f32 0.0, %v5565
      %v5567 = vpop.f32.mrb[0].mxu0
      %v5568 = vpop.f32.mrb[0].mxu0
      %v5569 = vadd.f32 0.0, %v5568
      %v5570 = vpop.f32.mrb[0].mxu0
      %5571 = vmatprep.mubr.bf16.mxu0 0
      %5572 = vmatmul.mubr.bf16.gmra.mrb[0].mxu0 %v5360
      %v5573 = vpop.f32.mrb[0].mxu0
      %v5574 = vadd.f32 0.0, %v5573
      %v5575 = vpop.f32.mrb[0].mxu0
      %v5576 = vpop.f32.mrb[0].mxu0
      %v5577 = vadd.f32 0.0, %v5576
      %v5578 = vpop.f32.mrb[0].mxu0
      %5579 = vmatprep.mubr.bf16.mxu0 0
      %5580 = vmatmul.mubr.bf16.gmra.mrb[0].mxu0 %v5362
      %v5581 = vpop.f32.mrb[0].mxu0
      %v5582 = vadd.f32 0.0, %v5581
      %v5583 = vpop.f32.mrb[0].mxu0
      %v5584 = vpop.f32.mrb[0].mxu0
      %v5585 = vadd.f32 0.0, %v5584
      %v5586 = vpop.f32.mrb[0].mxu0
      %5587 = vmatprep.mubr.bf16.mxu0 0
      %5588 = vmatmul.mubr.bf16.gmra.mrb[0].mxu0 %v5364
      %v5589 = vpop.f32.mrb[0].mxu0
      %v5590 = vadd.f32 0.0, %v5589
      %v5591 = vpop.f32.mrb[0].mxu0
      %v5592 = vpop.f32.mrb[0].mxu0
      %v5593 = vadd.f32 0.0, %v5592
      %v5594 = vpop.f32.mrb[0].mxu0
      %5595 = vmatprep.mubr.bf16.mxu0 0
      %5596 = vmatmul.mubr.bf16.gmra.mrb[0].mxu0 %v5366
      %v5597 = vpop.f32.mrb[0].mxu0
      %v5598 = vadd.f32 0.0, %v5597
      %v5599 = vpop.f32.mrb[0].mxu0
      %v5600 = vpop.f32.mrb[0].mxu0
      %v5601 = vadd.f32 0.0, %v5600
      %v5602 = vpop.f32.mrb[0].mxu0
      %5603 = vmatprep.mubr.bf16.mxu0 0
      %5604 = vmatmul.mubr.bf16.gmra.mrb[0].mxu0 %v5368
      %v5605 = vpop.f32.mrb[0].mxu0
      %v5606 = vadd.f32 0.0, %v5605
      %v5607 = vpop.f32.mrb[0].mxu0
      %v5608 = vpop.f32.mrb[0].mxu0
      %v5609 = vadd.f32 0.0, %v5608
      %v5610 = vpop.f32.mrb[0].mxu0
      %5611 = vdwg.mxu0
      %v5612 = vadd.f32 %v5275, %v5470
      %v5613 = vadd.f32 %v5276, %v5473
      %v5614 = vadd.f32 %v5277, %v5478
      %v5615 = vadd.f32 %v5278, %v5481
      %v5616 = vadd.f32 %v5279, %v5486
      %v5617 = vadd.f32 %v5280, %v5489
      %v5618 = vadd.f32 %v5281, %v5494
      %v5619 = vadd.f32 %v5282, %v5497
      %v5620 = vadd.f32 %v5283, %v5502
      %v5621 = vadd.f32 %v5284, %v5505
      %v5622 = vadd.f32 %v5285, %v5510
      %v5623 = vadd.f32 %v5286, %v5513
      %v5624 = vadd.f32 %v5287, %v5518
      %v5625 = vadd.f32 %v5288, %v5521
      %v5626 = vadd.f32 %v5289, %v5526
      %v5627 = vadd.f32 %v5290, %v5529
      %v5628 = vadd.f32 %v5291, %v5534
      %v5629 = vadd.f32 %v5292, %v5537
      %v5630 = vadd.f32 %v5293, %v5542
      %v5631 = vadd.f32 %v5294, %v5545
      %v5632 = vadd.f32 %v5295, %v5550
      %v5633 = vadd.f32 %v5296, %v5553
      %v5634 = vadd.f32 %v5297, %v5558
      %v5635 = vadd.f32 %v5298, %v5561
      %v5636 = vadd.f32 %v5299, %v5566
      %v5637 = vadd.f32 %v5300, %v5569
      %v5638 = vadd.f32 %v5301, %v5574
      %v5639 = vadd.f32 %v5302, %v5577
      %v5640 = vadd.f32 %v5303, %v5582
      %v5641 = vadd.f32 %v5304, %v5585
      %v5642 = vadd.f32 %v5305, %v5590
      %v5643 = vadd.f32 %v5306, %v5593
      %v5644 = vadd.f32 %v5307, %v5598
      %v5645 = vadd.f32 %v5308, %v5601
      %v5646 = vadd.f32 %v5309, %v5606
      %v5647 = vadd.f32 %v5310, %v5609
      %v5648 = vld [vmem:[#allocation2 + $0x90] sm:$0x3]
      %s5649 = scalar_lea.vmem %s4, 128
      %v5650 = vld [vmem:[%s5649] sm:$0xf]
      %v5651 = vld [vmem:[%s5649 + $0x4] sm:$0xf]
      %v5652 = vld [vmem:[%s5649 + $0x8] sm:$0xf]
      %v5653 = vld [vmem:[%s5649 + $0xc] sm:$0xf]
      %v5654 = vld [vmem:[%s5649 + $0x10] sm:$0xf]
      %v5655 = vld [vmem:[%s5649 + $0x14] sm:$0xf]
      %v5656 = vld [vmem:[%s5649 + $0x18] sm:$0xf]
      %v5657 = vld [vmem:[%s5649 + $0x1c] sm:$0xf]
      %v5658 = vld [vmem:[%s5649 + $0x20] sm:$0xf]
      %v5659 = vld [vmem:[%s5649 + $0x24] sm:$0xf]
      %v5660 = vld [vmem:[%s5649 + $0x28] sm:$0xf]
      %v5661 = vld [vmem:[%s5649 + $0x2c] sm:$0xf]
      %v5662 = vld [vmem:[%s5649 + $0x30] sm:$0xf]
      %v5663 = vld [vmem:[%s5649 + $0x34] sm:$0xf]
      %v5664 = vld [vmem:[%s5649 + $0x38] sm:$0xf]
      %v5665 = vld [vmem:[%s5649 + $0x3c] sm:$0xf]
      %v5667 = vunpack.c.l.b16 %v5648
      %v5668 = vpack.c.b16 %v5667, %v5667
      %v5670 = vshrl.u32 %v5331, 16
      %v5672 = vrot.slane %v5670, 1
      %v5673 = vshll.u32 %v5331, 16
      %v5675 = vrot.slane %v5673, 2
      %v5676 = vor.u32 %v5672, %v5675
      %v5677 = vrot.slane %v4896, 1
      %v5678 = vrot.slane %v4892, 2
      %v5679 = vor.u32 %v5677, %v5678
      %v5680 = vsel %vm1981, %v5676, %v5679
      %v5681 = vrot.slane %v4904, 1
      %v5682 = vrot.slane %v4900, 2
      %v5683 = vor.u32 %v5681, %v5682
      %v5684 = vsel %vm1981, %v5679, %v5683
      %v5685 = vrot.slane %v4912, 1
      %v5686 = vrot.slane %v4908, 2
      %v5687 = vor.u32 %v5685, %v5686
      %v5688 = vsel %vm1981, %v5683, %v5687
      %v5689 = vrot.slane %v4920, 1
      %v5690 = vrot.slane %v4916, 2
      %v5691 = vor.u32 %v5689, %v5690
      %v5692 = vsel %vm1981, %v5687, %v5691
      %v5693 = vrot.slane %v4928, 1
      %v5694 = vrot.slane %v4924, 2
      %v5695 = vor.u32 %v5693, %v5694
      %v5696 = vsel %vm1981, %v5691, %v5695
      %v5697 = vrot.slane %v4936, 1
      %v5698 = vrot.slane %v4932, 2
      %v5699 = vor.u32 %v5697, %v5698
      %v5700 = vsel %vm1981, %v5695, %v5699
      %v5701 = vrot.slane %v4944, 1
      %v5702 = vrot.slane %v4940, 2
      %v5703 = vor.u32 %v5701, %v5702
      %v5704 = vsel %vm1981, %v5699, %v5703
      %v5705 = vrot.slane %v4952, 1
      %v5706 = vrot.slane %v4948, 2
      %v5707 = vor.u32 %v5705, %v5706
      %v5708 = vsel %vm1981, %v5703, %v5707
      %v5709 = vrot.slane %v4960, 1
      %v5710 = vrot.slane %v4956, 2
      %v5711 = vor.u32 %v5709, %v5710
      %v5712 = vsel %vm1981, %v5707, %v5711
      %v5713 = vrot.slane %v4968, 1
      %v5714 = vrot.slane %v4964, 2
      %v5715 = vor.u32 %v5713, %v5714
      %v5716 = vsel %vm1981, %v5711, %v5715
      %v5717 = vrot.slane %v4976, 1
      %v5718 = vrot.slane %v4972, 2
      %v5719 = vor.u32 %v5717, %v5718
      %v5720 = vsel %vm1981, %v5715, %v5719
      %v5721 = vrot.slane %v4984, 1
      %v5722 = vrot.slane %v4980, 2
      %v5723 = vor.u32 %v5721, %v5722
      %v5724 = vsel %vm1981, %v5719, %v5723
      %v5725 = vrot.slane %v4992, 1
      %v5726 = vrot.slane %v4988, 2
      %v5727 = vor.u32 %v5725, %v5726
      %v5728 = vsel %vm1981, %v5723, %v5727
      %v5729 = vrot.slane %v5000, 1
      %v5730 = vrot.slane %v4996, 2
      %v5731 = vor.u32 %v5729, %v5730
      %v5732 = vsel %vm1981, %v5727, %v5731
      %v5733 = vrot.slane %v5008, 1
      %v5734 = vrot.slane %v5004, 2
      %v5735 = vor.u32 %v5733, %v5734
      %v5736 = vsel %vm1981, %v5731, %v5735
      %v5737 = vrot.slane %v5016, 1
      %v5738 = vrot.slane %v5012, 2
      %v5739 = vor.u32 %v5737, %v5738
      %v5740 = vsel %vm1981, %v5735, %v5739
      %v5741 = vrot.slane %v5024, 1
      %v5742 = vrot.slane %v5020, 2
      %v5743 = vor.u32 %v5741, %v5742
      %v5744 = vsel %vm1981, %v5739, %v5743
      %v5746 = vshrl.u32 %v5668, 16
      %v5748 = vrot.slane %v5746, 1
      %v5749 = vshll.u32 %v5668, 16
      %v5751 = vrot.slane %v5749, 2
      %v5752 = vor.u32 %v5748, %v5751
      %v5753 = vsel %vm1981, %v5743, %v5752
      %v5788 = vunpack.c.l.b16 %v5650
      %v5789 = vunpack.c.l.b16 %v5651
      %v5790 = vunpack.c.l.b16 %v5652
      %v5791 = vunpack.c.l.b16 %v5653
      %v5792 = vunpack.c.l.b16 %v5654
      %v5793 = vunpack.c.l.b16 %v5655
      %v5794 = vunpack.c.l.b16 %v5656
      %v5795 = vunpack.c.l.b16 %v5657
      %v5796 = vunpack.c.l.b16 %v5658
      %v5797 = vunpack.c.l.b16 %v5659
      %v5798 = vunpack.c.l.b16 %v5660
      %v5799 = vunpack.c.l.b16 %v5661
      %v5800 = vunpack.c.l.b16 %v5662
      %v5801 = vunpack.c.l.b16 %v5663
      %v5802 = vunpack.c.l.b16 %v5664
      %v5803 = vunpack.c.l.b16 %v5665
      %v5804 = vpack.c.b16 %v5789, %v5788
      %v5805 = vpack.c.b16 %v5791, %v5790
      %v5806 = vpack.c.b16 %v5793, %v5792
      %v5807 = vpack.c.b16 %v5795, %v5794
      %v5808 = vpack.c.b16 %v5797, %v5796
      %v5809 = vpack.c.b16 %v5799, %v5798
      %v5810 = vpack.c.b16 %v5801, %v5800
      %v5811 = vpack.c.b16 %v5803, %v5802
      %5820 = vmatprep.subr.bf16.mxu0 0
      %5821 = vmatpush1.bf16.msra.mxu0 %v5804
      %5822 = vmatprep.subr.bf16.mxu0 0
      %5823 = vmatpush1.bf16.msra.mxu0 %v5805
      %5824 = vmatprep.subr.bf16.mxu0 0
      %5825 = vmatpush1.bf16.msra.mxu0 %v5806
      %5826 = vmatprep.subr.bf16.mxu0 0
      %5827 = vmatpush1.bf16.msra.mxu0 %v5807
      %5828 = vmatprep.subr.bf16.mxu0 0
      %5829 = vmatpush1.bf16.msra.mxu0 %v5808
      %5830 = vmatprep.subr.bf16.mxu0 0
      %5831 = vmatpush1.bf16.msra.mxu0 %v5809
      %5832 = vmatprep.subr.bf16.mxu0 0
      %5833 = vmatpush1.bf16.msra.mxu0 %v5810
      %5834 = vmatprep.subr.bf16.mxu0 0
      %5835 = vmatpush1.bf16.msra.mxu0 %v5811
      %5836 = vmatprep.subr.bf16.mxu0 0
      %5837 = vmatpush1.bf16.msra.mxu0 0
      %5838 = vmatprep.subr.bf16.mxu0 0
      %5839 = vmatpush1.bf16.msra.mxu0 0
      %5840 = vmatprep.subr.bf16.mxu0 0
      %5841 = vmatpush1.bf16.msra.mxu0 0
      %5842 = vmatprep.subr.bf16.mxu0 0
      %5843 = vmatpush1.bf16.msra.mxu0 0
      %5844 = vmatprep.subr.bf16.mxu0 0
      %5845 = vmatpush1.bf16.msra.mxu0 0
      %5846 = vmatprep.subr.bf16.mxu0 0
      %5847 = vmatpush1.bf16.msra.mxu0 0
      %5848 = vmatprep.subr.bf16.mxu0 0
      %5849 = vmatpush1.bf16.msra.mxu0 0
      %5850 = vmatprep.subr.bf16.mxu0 0
      %5851 = vmatpush1.bf16.msra.mxu0 0
      %5852 = vmatprep.mubr.bf16.mxu0 0
      %5853 = vmatmul.mubr.bf16.gmra.mrb[0].mxu0 %v5680
      %v5854 = vpop.f32.mrb[0].mxu0
      %v5855 = vadd.f32 0.0, %v5854
      %v5856 = vpop.f32.mrb[0].mxu0
      %v5857 = vpop.f32.mrb[0].mxu0
      %v5858 = vadd.f32 0.0, %v5857
      %v5859 = vpop.f32.mrb[0].mxu0
      %5860 = vmatprep.mubr.bf16.mxu0 0
      %5861 = vmatmul.mubr.bf16.gmra.mrb[0].mxu0 %v5684
      %v5862 = vpop.f32.mrb[0].mxu0
      %v5863 = vadd.f32 0.0, %v5862
      %v5864 = vpop.f32.mrb[0].mxu0
      %v5865 = vpop.f32.mrb[0].mxu0
      %v5866 = vadd.f32 0.0, %v5865
      %v5867 = vpop.f32.mrb[0].mxu0
      %5868 = vmatprep.mubr.bf16.mxu0 0
      %5869 = vmatmul.mubr.bf16.gmra.mrb[0].mxu0 %v5688
      %v5870 = vpop.f32.mrb[0].mxu0
      %v5871 = vadd.f32 0.0, %v5870
      %v5872 = vpop.f32.mrb[0].mxu0
      %v5873 = vpop.f32.mrb[0].mxu0
      %v5874 = vadd.f32 0.0, %v5873
      %v5875 = vpop.f32.mrb[0].mxu0
      %5876 = vmatprep.mubr.bf16.mxu0 0
      %5877 = vmatmul.mubr.bf16.gmra.mrb[0].mxu0 %v5692
      %v5878 = vpop.f32.mrb[0].mxu0
      %v5879 = vadd.f32 0.0, %v5878
      %v5880 = vpop.f32.mrb[0].mxu0
      %v5881 = vpop.f32.mrb[0].mxu0
      %v5882 = vadd.f32 0.0, %v5881
      %v5883 = vpop.f32.mrb[0].mxu0
      %5884 = vmatprep.mubr.bf16.mxu0 0
      %5885 = vmatmul.mubr.bf16.gmra.mrb[0].mxu0 %v5696
      %v5886 = vpop.f32.mrb[0].mxu0
      %v5887 = vadd.f32 0.0, %v5886
      %v5888 = vpop.f32.mrb[0].mxu0
      %v5889 = vpop.f32.mrb[0].mxu0
      %v5890 = vadd.f32 0.0, %v5889
      %v5891 = vpop.f32.mrb[0].mxu0
      %5892 = vmatprep.mubr.bf16.mxu0 0
      %5893 = vmatmul.mubr.bf16.gmra.mrb[0].mxu0 %v5700
      %v5894 = vpop.f32.mrb[0].mxu0
      %v5895 = vadd.f32 0.0, %v5894
      %v5896 = vpop.f32.mrb[0].mxu0
      %v5897 = vpop.f32.mrb[0].mxu0
      %v5898 = vadd.f32 0.0, %v5897
      %v5899 = vpop.f32.mrb[0].mxu0
      %5900 = vmatprep.mubr.bf16.mxu0 0
      %5901 = vmatmul.mubr.bf16.gmra.mrb[0].mxu0 %v5704
      %v5902 = vpop.f32.mrb[0].mxu0
      %v5903 = vadd.f32 0.0, %v5902
      %v5904 = vpop.f32.mrb[0].mxu0
      %v5905 = vpop.f32.mrb[0].mxu0
      %v5906 = vadd.f32 0.0, %v5905
      %v5907 = vpop.f32.mrb[0].mxu0
      %5908 = vmatprep.mubr.bf16.mxu0 0
      %5909 = vmatmul.mubr.bf16.gmra.mrb[0].mxu0 %v5708
      %v5910 = vpop.f32.mrb[0].mxu0
      %v5911 = vadd.f32 0.0, %v5910
      %v5912 = vpop.f32.mrb[0].mxu0
      %v5913 = vpop.f32.mrb[0].mxu0
      %v5914 = vadd.f32 0.0, %v5913
      %v5915 = vpop.f32.mrb[0].mxu0
      %5916 = vmatprep.mubr.bf16.mxu0 0
      %5917 = vmatmul.mubr.bf16.gmra.mrb[0].mxu0 %v5712
      %v5918 = vpop.f32.mrb[0].mxu0
      %v5919 = vadd.f32 0.0, %v5918
      %v5920 = vpop.f32.mrb[0].mxu0
      %v5921 = vpop.f32.mrb[0].mxu0
      %v5922 = vadd.f32 0.0, %v5921
      %v5923 = vpop.f32.mrb[0].mxu0
      %5924 = vmatprep.mubr.bf16.mxu0 0
      %5925 = vmatmul.mubr.bf16.gmra.mrb[0].mxu0 %v5716
      %v5926 = vpop.f32.mrb[0].mxu0
      %v5927 = vadd.f32 0.0, %v5926
      %v5928 = vpop.f32.mrb[0].mxu0
      %v5929 = vpop.f32.mrb[0].mxu0
      %v5930 = vadd.f32 0.0, %v5929
      %v5931 = vpop.f32.mrb[0].mxu0
      %5932 = vmatprep.mubr.bf16.mxu0 0
      %5933 = vmatmul.mubr.bf16.gmra.mrb[0].mxu0 %v5720
      %v5934 = vpop.f32.mrb[0].mxu0
      %v5935 = vadd.f32 0.0, %v5934
      %v5936 = vpop.f32.mrb[0].mxu0
      %v5937 = vpop.f32.mrb[0].mxu0
      %v5938 = vadd.f32 0.0, %v5937
      %v5939 = vpop.f32.mrb[0].mxu0
      %5940 = vmatprep.mubr.bf16.mxu0 0
      %5941 = vmatmul.mubr.bf16.gmra.mrb[0].mxu0 %v5724
      %v5942 = vpop.f32.mrb[0].mxu0
      %v5943 = vadd.f32 0.0, %v5942
      %v5944 = vpop.f32.mrb[0].mxu0
      %v5945 = vpop.f32.mrb[0].mxu0
      %v5946 = vadd.f32 0.0, %v5945
      %v5947 = vpop.f32.mrb[0].mxu0
      %5948 = vmatprep.mubr.bf16.mxu0 0
      %5949 = vmatmul.mubr.bf16.gmra.mrb[0].mxu0 %v5728
      %v5950 = vpop.f32.mrb[0].mxu0
      %v5951 = vadd.f32 0.0, %v5950
      %v5952 = vpop.f32.mrb[0].mxu0
      %v5953 = vpop.f32.mrb[0].mxu0
      %v5954 = vadd.f32 0.0, %v5953
      %v5955 = vpop.f32.mrb[0].mxu0
      %5956 = vmatprep.mubr.bf16.mxu0 0
      %5957 = vmatmul.mubr.bf16.gmra.mrb[0].mxu0 %v5732
      %v5958 = vpop.f32.mrb[0].mxu0
      %v5959 = vadd.f32 0.0, %v5958
      %v5960 = vpop.f32.mrb[0].mxu0
      %v5961 = vpop.f32.mrb[0].mxu0
      %v5962 = vadd.f32 0.0, %v5961
      %v5963 = vpop.f32.mrb[0].mxu0
      %5964 = vmatprep.mubr.bf16.mxu0 0
      %5965 = vmatmul.mubr.bf16.gmra.mrb[0].mxu0 %v5736
      %v5966 = vpop.f32.mrb[0].mxu0
      %v5967 = vadd.f32 0.0, %v5966
      %v5968 = vpop.f32.mrb[0].mxu0
      %v5969 = vpop.f32.mrb[0].mxu0
      %v5970 = vadd.f32 0.0, %v5969
      %v5971 = vpop.f32.mrb[0].mxu0
      %5972 = vmatprep.mubr.bf16.mxu0 0
      %5973 = vmatmul.mubr.bf16.gmra.mrb[0].mxu0 %v5740
      %v5974 = vpop.f32.mrb[0].mxu0
      %v5975 = vadd.f32 0.0, %v5974
      %v5976 = vpop.f32.mrb[0].mxu0
      %v5977 = vpop.f32.mrb[0].mxu0
      %v5978 = vadd.f32 0.0, %v5977
      %v5979 = vpop.f32.mrb[0].mxu0
      %5980 = vmatprep.mubr.bf16.mxu0 0
      %5981 = vmatmul.mubr.bf16.gmra.mrb[0].mxu0 %v5744
      %v5982 = vpop.f32.mrb[0].mxu0
      %v5983 = vadd.f32 0.0, %v5982
      %v5984 = vpop.f32.mrb[0].mxu0
      %v5985 = vpop.f32.mrb[0].mxu0
      %v5986 = vadd.f32 0.0, %v5985
      %v5987 = vpop.f32.mrb[0].mxu0
      %5988 = vmatprep.mubr.bf16.mxu0 0
      %5989 = vmatmul.mubr.bf16.gmra.mrb[0].mxu0 %v5753
      %v5990 = vpop.f32.mrb[0].mxu0
      %v5991 = vadd.f32 0.0, %v5990
      %v5992 = vpop.f32.mrb[0].mxu0
      %v5993 = vpop.f32.mrb[0].mxu0
      %v5994 = vadd.f32 0.0, %v5993
      %v5995 = vpop.f32.mrb[0].mxu0
      %5996 = vdwg.mxu0
      %v5997 = vadd.f32 %v5612, %v5855
      %v5998 = vadd.f32 %v5613, %v5858
      %v5999 = vadd.f32 %v5614, %v5863
      %v6000 = vadd.f32 %v5615, %v5866
      %v6001 = vadd.f32 %v5616, %v5871
      %v6002 = vadd.f32 %v5617, %v5874
      %v6003 = vadd.f32 %v5618, %v5879
      %v6004 = vadd.f32 %v5619, %v5882
      %v6005 = vadd.f32 %v5620, %v5887
      %v6006 = vadd.f32 %v5621, %v5890
      %v6007 = vadd.f32 %v5622, %v5895
      %v6008 = vadd.f32 %v5623, %v5898
      %v6009 = vadd.f32 %v5624, %v5903
      %v6010 = vadd.f32 %v5625, %v5906
      %v6011 = vadd.f32 %v5626, %v5911
      %v6012 = vadd.f32 %v5627, %v5914
      %v6013 = vadd.f32 %v5628, %v5919
      %v6014 = vadd.f32 %v5629, %v5922
      %v6015 = vadd.f32 %v5630, %v5927
      %v6016 = vadd.f32 %v5631, %v5930
      %v6017 = vadd.f32 %v5632, %v5935
      %v6018 = vadd.f32 %v5633, %v5938
      %v6019 = vadd.f32 %v5634, %v5943
      %v6020 = vadd.f32 %v5635, %v5946
      %v6021 = vadd.f32 %v5636, %v5951
      %v6022 = vadd.f32 %v5637, %v5954
      %v6023 = vadd.f32 %v5638, %v5959
      %v6024 = vadd.f32 %v5639, %v5962
      %v6025 = vadd.f32 %v5640, %v5967
      %v6026 = vadd.f32 %v5641, %v5970
      %v6027 = vadd.f32 %v5642, %v5975
      %v6028 = vadd.f32 %v5643, %v5978
      %v6029 = vadd.f32 %v5644, %v5983
      %v6030 = vadd.f32 %v5645, %v5986
      %v6031 = vadd.f32 %v5646, %v5991
      %v6032 = vadd.f32 %v5647, %v5994
      %v6033 = vld [vmem:[#allocation2 + $0x8] sm:$0xe]
      %v6034 = vld [vmem:[#allocation2 + $0xc] sm:$0xf]
      %v6035 = vld [vmem:[#allocation2 + $0x10] sm:$0xf]
      %v6036 = vld [vmem:[#allocation2 + $0x14] sm:$0xf]
      %v6037 = vld [vmem:[#allocation2 + $0x18] sm:$0xf]
      %v6038 = vld [vmem:[#allocation2 + $0x1c] sm:$0xf]
      %v6039 = vld [vmem:[#allocation2 + $0x20] sm:$0xf]
      %v6040 = vld [vmem:[#allocation2 + $0x24] sm:$0xf]
      %v6041 = vld [vmem:[#allocation2 + $0x28] sm:$0xf]
      %v6042 = vld [vmem:[#allocation2 + $0x2c] sm:$0xf]
      %v6043 = vld [vmem:[#allocation2 + $0x30] sm:$0xf]
      %v6044 = vld [vmem:[#allocation2 + $0x34] sm:$0xf]
      %v6045 = vld [vmem:[#allocation2 + $0x38] sm:$0xf]
      %v6046 = vld [vmem:[#allocation2 + $0x3c] sm:$0xf]
      %v6047 = vld [vmem:[#allocation2 + $0x40] sm:$0xf]
      %v6048 = vld [vmem:[#allocation2 + $0x44] sm:$0xf]
      %v6049 = vld [vmem:[#allocation2 + $0x48] sm:$0xf]
      %v6050 = vld [vmem:[#allocation2 + $0x4c] sm:$0xf]
      %v6051 = vld [vmem:[#allocation2 + $0x50] sm:$0xf]
      %v6052 = vld [vmem:[#allocation2 + $0x54] sm:$0xf]
      %v6053 = vld [vmem:[#allocation2 + $0x58] sm:$0xf]
      %v6054 = vld [vmem:[#allocation2 + $0x5c] sm:$0xf]
      %v6055 = vld [vmem:[#allocation2 + $0x60] sm:$0xf]
      %v6056 = vld [vmem:[#allocation2 + $0x64] sm:$0xf]
      %v6057 = vld [vmem:[#allocation2 + $0x68] sm:$0xf]
      %v6058 = vld [vmem:[#allocation2 + $0x6c] sm:$0xf]
      %v6059 = vld [vmem:[#allocation2 + $0x70] sm:$0xf]
      %v6060 = vld [vmem:[#allocation2 + $0x74] sm:$0xf]
      %v6061 = vld [vmem:[#allocation2 + $0x78] sm:$0xf]
      %v6062 = vld [vmem:[#allocation2 + $0x7c] sm:$0xf]
      %v6063 = vld [vmem:[#allocation2 + $0x80] sm:$0xf]
      %v6064 = vld [vmem:[#allocation2 + $0x84] sm:$0xf]
      %v6065 = vld [vmem:[#allocation2 + $0x88] sm:$0xf]
      %v6066 = vld [vmem:[#allocation2 + $0x8c] sm:$0xf]
      %v6067 = vld [vmem:[#allocation2 + $0x90] sm:$0xf]
      %v6068 = vld [vmem:[#allocation2 + $0x94] sm:$0xf]
      %v6069 = vld [vmem:[#allocation2 + $0x98] sm:$0x3]
      %s6070 = scalar_lea.vmem %s4, 192
      %v6071 = vld [vmem:[%s6070] sm:$0xf]
      %v6072 = vld [vmem:[%s6070 + $0x4] sm:$0xf]
      %v6073 = vld [vmem:[%s6070 + $0x8] sm:$0xf]
      %v6074 = vld [vmem:[%s6070 + $0xc] sm:$0xf]
      %v6075 = vld [vmem:[%s6070 + $0x10] sm:$0xf]
      %v6076 = vld [vmem:[%s6070 + $0x14] sm:$0xf]
      %v6077 = vld [vmem:[%s6070 + $0x18] sm:$0xf]
      %v6078 = vld [vmem:[%s6070 + $0x1c] sm:$0xf]
      %v6079 = vld [vmem:[%s6070 + $0x20] sm:$0xf]
      %v6080 = vld [vmem:[%s6070 + $0x24] sm:$0xf]
      %v6081 = vld [vmem:[%s6070 + $0x28] sm:$0xf]
      %v6082 = vld [vmem:[%s6070 + $0x2c] sm:$0xf]
      %v6083 = vld [vmem:[%s6070 + $0x30] sm:$0xf]
      %v6084 = vld [vmem:[%s6070 + $0x34] sm:$0xf]
      %v6085 = vld [vmem:[%s6070 + $0x38] sm:$0xf]
      %v6086 = vld [vmem:[%s6070 + $0x3c] sm:$0xf]
      %v6124 = vunpack.c.l.b16 %v6033
      %v6125 = vunpack.c.l.b16 %v6034
      %v6126 = vunpack.c.l.b16 %v6035
      %v6127 = vunpack.c.l.b16 %v6036
      %v6128 = vunpack.c.l.b16 %v6037
      %v6129 = vunpack.c.l.b16 %v6038
      %v6130 = vunpack.c.l.b16 %v6039
      %v6131 = vunpack.c.l.b16 %v6040
      %v6132 = vunpack.c.l.b16 %v6041
      %v6133 = vunpack.c.l.b16 %v6042
      %v6134 = vunpack.c.l.b16 %v6043
      %v6135 = vunpack.c.l.b16 %v6044
      %v6136 = vunpack.c.l.b16 %v6045
      %v6137 = vunpack.c.l.b16 %v6046
      %v6138 = vunpack.c.l.b16 %v6047
      %v6139 = vunpack.c.l.b16 %v6048
      %v6140 = vunpack.c.l.b16 %v6049
      %v6141 = vunpack.c.l.b16 %v6050
      %v6142 = vunpack.c.l.b16 %v6051
      %v6143 = vunpack.c.l.b16 %v6052
      %v6144 = vunpack.c.l.b16 %v6053
      %v6145 = vunpack.c.l.b16 %v6054
      %v6146 = vunpack.c.l.b16 %v6055
      %v6147 = vunpack.c.l.b16 %v6056
      %v6148 = vunpack.c.l.b16 %v6057
      %v6149 = vunpack.c.l.b16 %v6058
      %v6150 = vunpack.c.l.b16 %v6059
      %v6151 = vunpack.c.l.b16 %v6060
      %v6152 = vunpack.c.l.b16 %v6061
      %v6153 = vunpack.c.l.b16 %v6062
      %v6154 = vunpack.c.l.b16 %v6063
      %v6155 = vunpack.c.l.b16 %v6064
      %v6156 = vunpack.c.l.b16 %v6065
      %v6157 = vunpack.c.l.b16 %v6066
      %v6158 = vunpack.c.l.b16 %v6067
      %v6159 = vunpack.c.l.b16 %v6068
      %v6160 = vunpack.c.l.b16 %v6069
      %v6161 = vpack.c.b16 %v6125, %v6124
      %v6162 = vpack.c.b16 %v6127, %v6126
      %v6163 = vpack.c.b16 %v6129, %v6128
      %v6164 = vpack.c.b16 %v6131, %v6130
      %v6165 = vpack.c.b16 %v6133, %v6132
      %v6166 = vpack.c.b16 %v6135, %v6134
      %v6167 = vpack.c.b16 %v6137, %v6136
      %v6168 = vpack.c.b16 %v6139, %v6138
      %v6169 = vpack.c.b16 %v6141, %v6140
      %v6170 = vpack.c.b16 %v6143, %v6142
      %v6171 = vpack.c.b16 %v6145, %v6144
      %v6172 = vpack.c.b16 %v6147, %v6146
      %v6173 = vpack.c.b16 %v6149, %v6148
      %v6174 = vpack.c.b16 %v6151, %v6150
      %v6175 = vpack.c.b16 %v6153, %v6152
      %v6176 = vpack.c.b16 %v6155, %v6154
      %v6177 = vpack.c.b16 %v6157, %v6156
      %v6178 = vpack.c.b16 %v6159, %v6158
      %v6179 = vpack.c.b16 %v6160, %v6160
      %v6181 = vshrl.u32 %v6161, 16
      %v6183 = vrot.slane %v6181, 1
      %v6184 = vshll.u32 %v6161, 16
      %v6186 = vrot.slane %v6184, 2
      %v6187 = vor.u32 %v6183, %v6186
      %v6189 = vshrl.u32 %v6162, 16
      %v6191 = vrot.slane %v6189, 1
      %v6192 = vshll.u32 %v6162, 16
      %v6194 = vrot.slane %v6192, 2
      %v6195 = vor.u32 %v6191, %v6194
      %v6196 = vsel %vm1981, %v6187, %v6195
      %v6198 = vshrl.u32 %v6163, 16
      %v6200 = vrot.slane %v6198, 1
      %v6201 = vshll.u32 %v6163, 16
      %v6203 = vrot.slane %v6201, 2
      %v6204 = vor.u32 %v6200, %v6203
      %v6205 = vsel %vm1981, %v6195, %v6204
      %v6207 = vshrl.u32 %v6164, 16
      %v6209 = vrot.slane %v6207, 1
      %v6210 = vshll.u32 %v6164, 16
      %v6212 = vrot.slane %v6210, 2
      %v6213 = vor.u32 %v6209, %v6212
      %v6214 = vsel %vm1981, %v6204, %v6213
      %v6216 = vshrl.u32 %v6165, 16
      %v6218 = vrot.slane %v6216, 1
      %v6219 = vshll.u32 %v6165, 16
      %v6221 = vrot.slane %v6219, 2
      %v6222 = vor.u32 %v6218, %v6221
      %v6223 = vsel %vm1981, %v6213, %v6222
      %v6225 = vshrl.u32 %v6166, 16
      %v6227 = vrot.slane %v6225, 1
      %v6228 = vshll.u32 %v6166, 16
      %v6230 = vrot.slane %v6228, 2
      %v6231 = vor.u32 %v6227, %v6230
      %v6232 = vsel %vm1981, %v6222, %v6231
      %v6234 = vshrl.u32 %v6167, 16
      %v6236 = vrot.slane %v6234, 1
      %v6237 = vshll.u32 %v6167, 16
      %v6239 = vrot.slane %v6237, 2
      %v6240 = vor.u32 %v6236, %v6239
      %v6241 = vsel %vm1981, %v6231, %v6240
      %v6243 = vshrl.u32 %v6168, 16
      %v6245 = vrot.slane %v6243, 1
      %v6246 = vshll.u32 %v6168, 16
      %v6248 = vrot.slane %v6246, 2
      %v6249 = vor.u32 %v6245, %v6248
      %v6250 = vsel %vm1981, %v6240, %v6249
      %v6252 = vshrl.u32 %v6169, 16
      %v6254 = vrot.slane %v6252, 1
      %v6255 = vshll.u32 %v6169, 16
      %v6257 = vrot.slane %v6255, 2
      %v6258 = vor.u32 %v6254, %v6257
      %v6259 = vsel %vm1981, %v6249, %v6258
      %v6261 = vshrl.u32 %v6170, 16
      %v6263 = vrot.slane %v6261, 1
      %v6264 = vshll.u32 %v6170, 16
      %v6266 = vrot.slane %v6264, 2
      %v6267 = vor.u32 %v6263, %v6266
      %v6268 = vsel %vm1981, %v6258, %v6267
      %v6270 = vshrl.u32 %v6171, 16
      %v6272 = vrot.slane %v6270, 1
      %v6273 = vshll.u32 %v6171, 16
      %v6275 = vrot.slane %v6273, 2
      %v6276 = vor.u32 %v6272, %v6275
      %v6277 = vsel %vm1981, %v6267, %v6276
      %v6279 = vshrl.u32 %v6172, 16
      %v6281 = vrot.slane %v6279, 1
      %v6282 = vshll.u32 %v6172, 16
      %v6284 = vrot.slane %v6282, 2
      %v6285 = vor.u32 %v6281, %v6284
      %v6286 = vsel %vm1981, %v6276, %v6285
      %v6288 = vshrl.u32 %v6173, 16
      %v6290 = vrot.slane %v6288, 1
      %v6291 = vshll.u32 %v6173, 16
      %v6293 = vrot.slane %v6291, 2
      %v6294 = vor.u32 %v6290, %v6293
      %v6295 = vsel %vm1981, %v6285, %v6294
      %v6297 = vshrl.u32 %v6174, 16
      %v6299 = vrot.slane %v6297, 1
      %v6300 = vshll.u32 %v6174, 16
      %v6302 = vrot.slane %v6300, 2
      %v6303 = vor.u32 %v6299, %v6302
      %v6304 = vsel %vm1981, %v6294, %v6303
      %v6306 = vshrl.u32 %v6175, 16
      %v6308 = vrot.slane %v6306, 1
      %v6309 = vshll.u32 %v6175, 16
      %v6311 = vrot.slane %v6309, 2
      %v6312 = vor.u32 %v6308, %v6311
      %v6313 = vsel %vm1981, %v6303, %v6312
      %v6315 = vshrl.u32 %v6176, 16
      %v6317 = vrot.slane %v6315, 1
      %v6318 = vshll.u32 %v6176, 16
      %v6320 = vrot.slane %v6318, 2
      %v6321 = vor.u32 %v6317, %v6320
      %v6322 = vsel %vm1981, %v6312, %v6321
      %v6324 = vshrl.u32 %v6177, 16
      %v6326 = vrot.slane %v6324, 1
      %v6327 = vshll.u32 %v6177, 16
      %v6329 = vrot.slane %v6327, 2
      %v6330 = vor.u32 %v6326, %v6329
      %v6331 = vsel %vm1981, %v6321, %v6330
      %v6333 = vshrl.u32 %v6178, 16
      %v6335 = vrot.slane %v6333, 1
      %v6336 = vshll.u32 %v6178, 16
      %v6338 = vrot.slane %v6336, 2
      %v6339 = vor.u32 %v6335, %v6338
      %v6340 = vsel %vm1981, %v6330, %v6339
      %v6342 = vshrl.u32 %v6179, 16
      %v6344 = vrot.slane %v6342, 1
      %v6345 = vshll.u32 %v6179, 16
      %v6347 = vrot.slane %v6345, 2
      %v6348 = vor.u32 %v6344, %v6347
      %v6349 = vsel %vm1981, %v6339, %v6348
      %v6384 = vunpack.c.l.b16 %v6071
      %v6385 = vunpack.c.l.b16 %v6072
      %v6386 = vunpack.c.l.b16 %v6073
      %v6387 = vunpack.c.l.b16 %v6074
      %v6388 = vunpack.c.l.b16 %v6075
      %v6389 = vunpack.c.l.b16 %v6076
      %v6390 = vunpack.c.l.b16 %v6077
      %v6391 = vunpack.c.l.b16 %v6078
      %v6392 = vunpack.c.l.b16 %v6079
      %v6393 = vunpack.c.l.b16 %v6080
      %v6394 = vunpack.c.l.b16 %v6081
      %v6395 = vunpack.c.l.b16 %v6082
      %v6396 = vunpack.c.l.b16 %v6083
      %v6397 = vunpack.c.l.b16 %v6084
      %v6398 = vunpack.c.l.b16 %v6085
      %v6399 = vunpack.c.l.b16 %v6086
      %v6400 = vpack.c.b16 %v6385, %v6384
      %v6401 = vpack.c.b16 %v6387, %v6386
      %v6402 = vpack.c.b16 %v6389, %v6388
      %v6403 = vpack.c.b16 %v6391, %v6390
      %v6404 = vpack.c.b16 %v6393, %v6392
      %v6405 = vpack.c.b16 %v6395, %v6394
      %v6406 = vpack.c.b16 %v6397, %v6396
      %v6407 = vpack.c.b16 %v6399, %v6398
      %6416 = vmatprep.subr.bf16.mxu0 0
      %6417 = vmatpush1.bf16.msra.mxu0 %v6400
      %6418 = vmatprep.subr.bf16.mxu0 0
      %6419 = vmatpush1.bf16.msra.mxu0 %v6401
      %6420 = vmatprep.subr.bf16.mxu0 0
      %6421 = vmatpush1.bf16.msra.mxu0 %v6402
      %6422 = vmatprep.subr.bf16.mxu0 0
      %6423 = vmatpush1.bf16.msra.mxu0 %v6403
      %6424 = vmatprep.subr.bf16.mxu0 0
      %6425 = vmatpush1.bf16.msra.mxu0 %v6404
      %6426 = vmatprep.subr.bf16.mxu0 0
      %6427 = vmatpush1.bf16.msra.mxu0 %v6405
      %6428 = vmatprep.subr.bf16.mxu0 0
      %6429 = vmatpush1.bf16.msra.mxu0 %v6406
      %6430 = vmatprep.subr.bf16.mxu0 0
      %6431 = vmatpush1.bf16.msra.mxu0 %v6407
      %6432 = vmatprep.subr.bf16.mxu0 0
      %6433 = vmatpush1.bf16.msra.mxu0 0
      %6434 = vmatprep.subr.bf16.mxu0 0
      %6435 = vmatpush1.bf16.msra.mxu0 0
      %6436 = vmatprep.subr.bf16.mxu0 0
      %6437 = vmatpush1.bf16.msra.mxu0 0
      %6438 = vmatprep.subr.bf16.mxu0 0
      %6439 = vmatpush1.bf16.msra.mxu0 0
      %6440 = vmatprep.subr.bf16.mxu0 0
      %6441 = vmatpush1.bf16.msra.mxu0 0
      %6442 = vmatprep.subr.bf16.mxu0 0
      %6443 = vmatpush1.bf16.msra.mxu0 0
      %6444 = vmatprep.subr.bf16.mxu0 0
      %6445 = vmatpush1.bf16.msra.mxu0 0
      %6446 = vmatprep.subr.bf16.mxu0 0
      %6447 = vmatpush1.bf16.msra.mxu0 0
      %6448 = vmatprep.mubr.bf16.mxu0 0
      %6449 = vmatmul.mubr.bf16.gmra.mrb[0].mxu0 %v6196
      %v6450 = vpop.f32.mrb[0].mxu0
      %v6451 = vadd.f32 0.0, %v6450
      %v6452 = vpop.f32.mrb[0].mxu0
      %v6453 = vpop.f32.mrb[0].mxu0
      %v6454 = vadd.f32 0.0, %v6453
      %v6455 = vpop.f32.mrb[0].mxu0
      %6456 = vmatprep.mubr.bf16.mxu0 0
      %6457 = vmatmul.mubr.bf16.gmra.mrb[0].mxu0 %v6205
      %v6458 = vpop.f32.mrb[0].mxu0
      %v6459 = vadd.f32 0.0, %v6458
      %v6460 = vpop.f32.mrb[0].mxu0
      %v6461 = vpop.f32.mrb[0].mxu0
      %v6462 = vadd.f32 0.0, %v6461
      %v6463 = vpop.f32.mrb[0].mxu0
      %6464 = vmatprep.mubr.bf16.mxu0 0
      %6465 = vmatmul.mubr.bf16.gmra.mrb[0].mxu0 %v6214
      %v6466 = vpop.f32.mrb[0].mxu0
      %v6467 = vadd.f32 0.0, %v6466
      %v6468 = vpop.f32.mrb[0].mxu0
      %v6469 = vpop.f32.mrb[0].mxu0
      %v6470 = vadd.f32 0.0, %v6469
      %v6471 = vpop.f32.mrb[0].mxu0
      %6472 = vmatprep.mubr.bf16.mxu0 0
      %6473 = vmatmul.mubr.bf16.gmra.mrb[0].mxu0 %v6223
      %v6474 = vpop.f32.mrb[0].mxu0
      %v6475 = vadd.f32 0.0, %v6474
      %v6476 = vpop.f32.mrb[0].mxu0
      %v6477 = vpop.f32.mrb[0].mxu0
      %v6478 = vadd.f32 0.0, %v6477
      %v6479 = vpop.f32.mrb[0].mxu0
      %6480 = vmatprep.mubr.bf16.mxu0 0
      %6481 = vmatmul.mubr.bf16.gmra.mrb[0].mxu0 %v6232
      %v6482 = vpop.f32.mrb[0].mxu0
      %v6483 = vadd.f32 0.0, %v6482
      %v6484 = vpop.f32.mrb[0].mxu0
      %v6485 = vpop.f32.mrb[0].mxu0
      %v6486 = vadd.f32 0.0, %v6485
      %v6487 = vpop.f32.mrb[0].mxu0
      %6488 = vmatprep.mubr.bf16.mxu0 0
      %6489 = vmatmul.mubr.bf16.gmra.mrb[0].mxu0 %v6241
      %v6490 = vpop.f32.mrb[0].mxu0
      %v6491 = vadd.f32 0.0, %v6490
      %v6492 = vpop.f32.mrb[0].mxu0
      %v6493 = vpop.f32.mrb[0].mxu0
      %v6494 = vadd.f32 0.0, %v6493
      %v6495 = vpop.f32.mrb[0].mxu0
      %6496 = vmatprep.mubr.bf16.mxu0 0
      %6497 = vmatmul.mubr.bf16.gmra.mrb[0].mxu0 %v6250
      %v6498 = vpop.f32.mrb[0].mxu0
      %v6499 = vadd.f32 0.0, %v6498
      %v6500 = vpop.f32.mrb[0].mxu0
      %v6501 = vpop.f32.mrb[0].mxu0
      %v6502 = vadd.f32 0.0, %v6501
      %v6503 = vpop.f32.mrb[0].mxu0
      %6504 = vmatprep.mubr.bf16.mxu0 0
      %6505 = vmatmul.mubr.bf16.gmra.mrb[0].mxu0 %v6259
      %v6506 = vpop.f32.mrb[0].mxu0
      %v6507 = vadd.f32 0.0, %v6506
      %v6508 = vpop.f32.mrb[0].mxu0
      %v6509 = vpop.f32.mrb[0].mxu0
      %v6510 = vadd.f32 0.0, %v6509
      %v6511 = vpop.f32.mrb[0].mxu0
      %6512 = vmatprep.mubr.bf16.mxu0 0
      %6513 = vmatmul.mubr.bf16.gmra.mrb[0].mxu0 %v6268
      %v6514 = vpop.f32.mrb[0].mxu0
      %v6515 = vadd.f32 0.0, %v6514
      %v6516 = vpop.f32.mrb[0].mxu0
      %v6517 = vpop.f32.mrb[0].mxu0
      %v6518 = vadd.f32 0.0, %v6517
      %v6519 = vpop.f32.mrb[0].mxu0
      %6520 = vmatprep.mubr.bf16.mxu0 0
      %6521 = vmatmul.mubr.bf16.gmra.mrb[0].mxu0 %v6277
      %v6522 = vpop.f32.mrb[0].mxu0
      %v6523 = vadd.f32 0.0, %v6522
      %v6524 = vpop.f32.mrb[0].mxu0
      %v6525 = vpop.f32.mrb[0].mxu0
      %v6526 = vadd.f32 0.0, %v6525
      %v6527 = vpop.f32.mrb[0].mxu0
      %6528 = vmatprep.mubr.bf16.mxu0 0
      %6529 = vmatmul.mubr.bf16.gmra.mrb[0].mxu0 %v6286
      %v6530 = vpop.f32.mrb[0].mxu0
      %v6531 = vadd.f32 0.0, %v6530
      %v6532 = vpop.f32.mrb[0].mxu0
      %v6533 = vpop.f32.mrb[0].mxu0
      %v6534 = vadd.f32 0.0, %v6533
      %v6535 = vpop.f32.mrb[0].mxu0
      %6536 = vmatprep.mubr.bf16.mxu0 0
      %6537 = vmatmul.mubr.bf16.gmra.mrb[0].mxu0 %v6295
      %v6538 = vpop.f32.mrb[0].mxu0
      %v6539 = vadd.f32 0.0, %v6538
      %v6540 = vpop.f32.mrb[0].mxu0
      %v6541 = vpop.f32.mrb[0].mxu0
      %v6542 = vadd.f32 0.0, %v6541
      %v6543 = vpop.f32.mrb[0].mxu0
      %6544 = vmatprep.mubr.bf16.mxu0 0
      %6545 = vmatmul.mubr.bf16.gmra.mrb[0].mxu0 %v6304
      %v6546 = vpop.f32.mrb[0].mxu0
      %v6547 = vadd.f32 0.0, %v6546
      %v6548 = vpop.f32.mrb[0].mxu0
      %v6549 = vpop.f32.mrb[0].mxu0
      %v6550 = vadd.f32 0.0, %v6549
      %v6551 = vpop.f32.mrb[0].mxu0
      %6552 = vmatprep.mubr.bf16.mxu0 0
      %6553 = vmatmul.mubr.bf16.gmra.mrb[0].mxu0 %v6313
      %v6554 = vpop.f32.mrb[0].mxu0
      %v6555 = vadd.f32 0.0, %v6554
      %v6556 = vpop.f32.mrb[0].mxu0
      %v6557 = vpop.f32.mrb[0].mxu0
      %v6558 = vadd.f32 0.0, %v6557
      %v6559 = vpop.f32.mrb[0].mxu0
      %6560 = vmatprep.mubr.bf16.mxu0 0
      %6561 = vmatmul.mubr.bf16.gmra.mrb[0].mxu0 %v6322
      %v6562 = vpop.f32.mrb[0].mxu0
      %v6563 = vadd.f32 0.0, %v6562
      %v6564 = vpop.f32.mrb[0].mxu0
      %v6565 = vpop.f32.mrb[0].mxu0
      %v6566 = vadd.f32 0.0, %v6565
      %v6567 = vpop.f32.mrb[0].mxu0
      %6568 = vmatprep.mubr.bf16.mxu0 0
      %6569 = vmatmul.mubr.bf16.gmra.mrb[0].mxu0 %v6331
      %v6570 = vpop.f32.mrb[0].mxu0
      %v6571 = vadd.f32 0.0, %v6570
      %v6572 = vpop.f32.mrb[0].mxu0
      %v6573 = vpop.f32.mrb[0].mxu0
      %v6574 = vadd.f32 0.0, %v6573
      %v6575 = vpop.f32.mrb[0].mxu0
      %6576 = vmatprep.mubr.bf16.mxu0 0
      %6577 = vmatmul.mubr.bf16.gmra.mrb[0].mxu0 %v6340
      %v6578 = vpop.f32.mrb[0].mxu0
      %v6579 = vadd.f32 0.0, %v6578
      %v6580 = vpop.f32.mrb[0].mxu0
      %v6581 = vpop.f32.mrb[0].mxu0
      %v6582 = vadd.f32 0.0, %v6581
      %v6583 = vpop.f32.mrb[0].mxu0
      %6584 = vmatprep.mubr.bf16.mxu0 0
      %6585 = vmatmul.mubr.bf16.gmra.mrb[0].mxu0 %v6349
      %v6586 = vpop.f32.mrb[0].mxu0
      %v6587 = vadd.f32 0.0, %v6586
      %v6588 = vpop.f32.mrb[0].mxu0
      %v6589 = vpop.f32.mrb[0].mxu0
      %v6590 = vadd.f32 0.0, %v6589
      %v6591 = vpop.f32.mrb[0].mxu0
      %6592 = vdwg.mxu0
      %v6593 = vadd.f32 %v5997, %v6451
      %v6594 = vadd.f32 %v5998, %v6454
      %v6595 = vadd.f32 %v5999, %v6459
      %v6596 = vadd.f32 %v6000, %v6462
      %v6597 = vadd.f32 %v6001, %v6467
      %v6598 = vadd.f32 %v6002, %v6470
      %v6599 = vadd.f32 %v6003, %v6475
      %v6600 = vadd.f32 %v6004, %v6478
      %v6601 = vadd.f32 %v6005, %v6483
      %v6602 = vadd.f32 %v6006, %v6486
      %v6603 = vadd.f32 %v6007, %v6491
      %v6604 = vadd.f32 %v6008, %v6494
      %v6605 = vadd.f32 %v6009, %v6499
      %v6606 = vadd.f32 %v6010, %v6502
      %v6607 = vadd.f32 %v6011, %v6507
      %v6608 = vadd.f32 %v6012, %v6510
      %v6609 = vadd.f32 %v6013, %v6515
      %v6610 = vadd.f32 %v6014, %v6518
      %v6611 = vadd.f32 %v6015, %v6523
      %v6612 = vadd.f32 %v6016, %v6526
      %v6613 = vadd.f32 %v6017, %v6531
      %v6614 = vadd.f32 %v6018, %v6534
      %v6615 = vadd.f32 %v6019, %v6539
      %v6616 = vadd.f32 %v6020, %v6542
      %v6617 = vadd.f32 %v6021, %v6547
      %v6618 = vadd.f32 %v6022, %v6550
      %v6619 = vadd.f32 %v6023, %v6555
      %v6620 = vadd.f32 %v6024, %v6558
      %v6621 = vadd.f32 %v6025, %v6563
      %v6622 = vadd.f32 %v6026, %v6566
      %v6623 = vadd.f32 %v6027, %v6571
      %v6624 = vadd.f32 %v6028, %v6574
      %v6625 = vadd.f32 %v6029, %v6579
      %v6626 = vadd.f32 %v6030, %v6582
      %v6627 = vadd.f32 %v6031, %v6587
      %v6628 = vadd.f32 %v6032, %v6590
      %v6629 = vld [vmem:[#allocation2 + $0x8] sm:$0xc]
      %s6630 = scalar_lea.vmem %s4, 256
      %v6631 = vld [vmem:[%s6630] sm:$0xf]
      %v6632 = vld [vmem:[%s6630 + $0x4] sm:$0xf]
      %v6633 = vld [vmem:[%s6630 + $0x8] sm:$0xf]
      %v6634 = vld [vmem:[%s6630 + $0xc] sm:$0xf]
      %v6635 = vld [vmem:[%s6630 + $0x10] sm:$0xf]
      %v6636 = vld [vmem:[%s6630 + $0x14] sm:$0xf]
      %v6637 = vld [vmem:[%s6630 + $0x18] sm:$0xf]
      %v6638 = vld [vmem:[%s6630 + $0x1c] sm:$0xf]
      %v6639 = vld [vmem:[%s6630 + $0x20] sm:$0xf]
      %v6640 = vld [vmem:[%s6630 + $0x24] sm:$0xf]
      %v6641 = vld [vmem:[%s6630 + $0x28] sm:$0xf]
      %v6642 = vld [vmem:[%s6630 + $0x2c] sm:$0xf]
      %v6643 = vld [vmem:[%s6630 + $0x30] sm:$0xf]
      %v6644 = vld [vmem:[%s6630 + $0x34] sm:$0xf]
      %v6645 = vld [vmem:[%s6630 + $0x38] sm:$0xf]
      %v6646 = vld [vmem:[%s6630 + $0x3c] sm:$0xf]
      %v6648 = vunpack.c.l.b16 %v6629
      %v6649 = vpack.c.b16 %v6125, %v6648
      %v6650 = vrot.slane %v6649, 2
      %v6651 = vrot.slane %v6162, 2
      %v6652 = vsel %vm2452, %v6650, %v6651
      %v6653 = vrot.slane %v6163, 2
      %v6654 = vsel %vm2452, %v6651, %v6653
      %v6655 = vrot.slane %v6164, 2
      %v6656 = vsel %vm2452, %v6653, %v6655
      %v6657 = vrot.slane %v6165, 2
      %v6658 = vsel %vm2452, %v6655, %v6657
      %v6659 = vrot.slane %v6166, 2
      %v6660 = vsel %vm2452, %v6657, %v6659
      %v6661 = vrot.slane %v6167, 2
      %v6662 = vsel %vm2452, %v6659, %v6661
      %v6663 = vrot.slane %v6168, 2
      %v6664 = vsel %vm2452, %v6661, %v6663
      %v6665 = vrot.slane %v6169, 2
      %v6666 = vsel %vm2452, %v6663, %v6665
      %v6667 = vrot.slane %v6170, 2
      %v6668 = vsel %vm2452, %v6665, %v6667
      %v6669 = vrot.slane %v6171, 2
      %v6670 = vsel %vm2452, %v6667, %v6669
      %v6671 = vrot.slane %v6172, 2
      %v6672 = vsel %vm2452, %v6669, %v6671
      %v6673 = vrot.slane %v6173, 2
      %v6674 = vsel %vm2452, %v6671, %v6673
      %v6675 = vrot.slane %v6174, 2
      %v6676 = vsel %vm2452, %v6673, %v6675
      %v6677 = vrot.slane %v6175, 2
      %v6678 = vsel %vm2452, %v6675, %v6677
      %v6679 = vrot.slane %v6176, 2
      %v6680 = vsel %vm2452, %v6677, %v6679
      %v6681 = vrot.slane %v6177, 2
      %v6682 = vsel %vm2452, %v6679, %v6681
      %v6683 = vrot.slane %v6178, 2
      %v6684 = vsel %vm2452, %v6681, %v6683
      %v6685 = vrot.slane %v6179, 2
      %v6686 = vsel %vm2452, %v6683, %v6685
      %v6721 = vunpack.c.l.b16 %v6631
      %v6722 = vunpack.c.l.b16 %v6632
      %v6723 = vunpack.c.l.b16 %v6633
      %v6724 = vunpack.c.l.b16 %v6634
      %v6725 = vunpack.c.l.b16 %v6635
      %v6726 = vunpack.c.l.b16 %v6636
      %v6727 = vunpack.c.l.b16 %v6637
      %v6728 = vunpack.c.l.b16 %v6638
      %v6729 = vunpack.c.l.b16 %v6639
      %v6730 = vunpack.c.l.b16 %v6640
      %v6731 = vunpack.c.l.b16 %v6641
      %v6732 = vunpack.c.l.b16 %v6642
      %v6733 = vunpack.c.l.b16 %v6643
      %v6734 = vunpack.c.l.b16 %v6644
      %v6735 = vunpack.c.l.b16 %v6645
      %v6736 = vunpack.c.l.b16 %v6646
      %v6737 = vpack.c.b16 %v6722, %v6721
      %v6738 = vpack.c.b16 %v6724, %v6723
      %v6739 = vpack.c.b16 %v6726, %v6725
      %v6740 = vpack.c.b16 %v6728, %v6727
      %v6741 = vpack.c.b16 %v6730, %v6729
      %v6742 = vpack.c.b16 %v6732, %v6731
      %v6743 = vpack.c.b16 %v6734, %v6733
      %v6744 = vpack.c.b16 %v6736, %v6735
      %6753 = vmatprep.subr.bf16.mxu0 0
      %6754 = vmatpush1.bf16.msra.mxu0 %v6737
      %6755 = vmatprep.subr.bf16.mxu0 0
      %6756 = vmatpush1.bf16.msra.mxu0 %v6738
      %6757 = vmatprep.subr.bf16.mxu0 0
      %6758 = vmatpush1.bf16.msra.mxu0 %v6739
      %6759 = vmatprep.subr.bf16.mxu0 0
      %6760 = vmatpush1.bf16.msra.mxu0 %v6740
      %6761 = vmatprep.subr.bf16.mxu0 0
      %6762 = vmatpush1.bf16.msra.mxu0 %v6741
      %6763 = vmatprep.subr.bf16.mxu0 0
      %6764 = vmatpush1.bf16.msra.mxu0 %v6742
      %6765 = vmatprep.subr.bf16.mxu0 0
      %6766 = vmatpush1.bf16.msra.mxu0 %v6743
      %6767 = vmatprep.subr.bf16.mxu0 0
      %6768 = vmatpush1.bf16.msra.mxu0 %v6744
      %6769 = vmatprep.subr.bf16.mxu0 0
      %6770 = vmatpush1.bf16.msra.mxu0 0
      %6771 = vmatprep.subr.bf16.mxu0 0
      %6772 = vmatpush1.bf16.msra.mxu0 0
      %6773 = vmatprep.subr.bf16.mxu0 0
      %6774 = vmatpush1.bf16.msra.mxu0 0
      %6775 = vmatprep.subr.bf16.mxu0 0
      %6776 = vmatpush1.bf16.msra.mxu0 0
      %6777 = vmatprep.subr.bf16.mxu0 0
      %6778 = vmatpush1.bf16.msra.mxu0 0
      %6779 = vmatprep.subr.bf16.mxu0 0
      %6780 = vmatpush1.bf16.msra.mxu0 0
      %6781 = vmatprep.subr.bf16.mxu0 0
      %6782 = vmatpush1.bf16.msra.mxu0 0
      %6783 = vmatprep.subr.bf16.mxu0 0
      %6784 = vmatpush1.bf16.msra.mxu0 0
      %6785 = vmatprep.mubr.bf16.mxu0 0
      %6786 = vmatmul.mubr.bf16.gmra.mrb[0].mxu0 %v6652
      %v6787 = vpop.f32.mrb[0].mxu0
      %v6788 = vadd.f32 0.0, %v6787
      %v6789 = vpop.f32.mrb[0].mxu0
      %v6790 = vpop.f32.mrb[0].mxu0
      %v6791 = vadd.f32 0.0, %v6790
      %v6792 = vpop.f32.mrb[0].mxu0
      %6793 = vmatprep.mubr.bf16.mxu0 0
      %6794 = vmatmul.mubr.bf16.gmra.mrb[0].mxu0 %v6654
      %v6795 = vpop.f32.mrb[0].mxu0
      %v6796 = vadd.f32 0.0, %v6795
      %v6797 = vpop.f32.mrb[0].mxu0
      %v6798 = vpop.f32.mrb[0].mxu0
      %v6799 = vadd.f32 0.0, %v6798
      %v6800 = vpop.f32.mrb[0].mxu0
      %6801 = vmatprep.mubr.bf16.mxu0 0
      %6802 = vmatmul.mubr.bf16.gmra.mrb[0].mxu0 %v6656
      %v6803 = vpop.f32.mrb[0].mxu0
      %v6804 = vadd.f32 0.0, %v6803
      %v6805 = vpop.f32.mrb[0].mxu0
      %v6806 = vpop.f32.mrb[0].mxu0
      %v6807 = vadd.f32 0.0, %v6806
      %v6808 = vpop.f32.mrb[0].mxu0
      %6809 = vmatprep.mubr.bf16.mxu0 0
      %6810 = vmatmul.mubr.bf16.gmra.mrb[0].mxu0 %v6658
      %v6811 = vpop.f32.mrb[0].mxu0
      %v6812 = vadd.f32 0.0, %v6811
      %v6813 = vpop.f32.mrb[0].mxu0
      %v6814 = vpop.f32.mrb[0].mxu0
      %v6815 = vadd.f32 0.0, %v6814
      %v6816 = vpop.f32.mrb[0].mxu0
      %6817 = vmatprep.mubr.bf16.mxu0 0
      %6818 = vmatmul.mubr.bf16.gmra.mrb[0].mxu0 %v6660
      %v6819 = vpop.f32.mrb[0].mxu0
      %v6820 = vadd.f32 0.0, %v6819
      %v6821 = vpop.f32.mrb[0].mxu0
      %v6822 = vpop.f32.mrb[0].mxu0
      %v6823 = vadd.f32 0.0, %v6822
      %v6824 = vpop.f32.mrb[0].mxu0
      %6825 = vmatprep.mubr.bf16.mxu0 0
      %6826 = vmatmul.mubr.bf16.gmra.mrb[0].mxu0 %v6662
      %v6827 = vpop.f32.mrb[0].mxu0
      %v6828 = vadd.f32 0.0, %v6827
      %v6829 = vpop.f32.mrb[0].mxu0
      %v6830 = vpop.f32.mrb[0].mxu0
      %v6831 = vadd.f32 0.0, %v6830
      %v6832 = vpop.f32.mrb[0].mxu0
      %6833 = vmatprep.mubr.bf16.mxu0 0
      %6834 = vmatmul.mubr.bf16.gmra.mrb[0].mxu0 %v6664
      %v6835 = vpop.f32.mrb[0].mxu0
      %v6836 = vadd.f32 0.0, %v6835
      %v6837 = vpop.f32.mrb[0].mxu0
      %v6838 = vpop.f32.mrb[0].mxu0
      %v6839 = vadd.f32 0.0, %v6838
      %v6840 = vpop.f32.mrb[0].mxu0
      %6841 = vmatprep.mubr.bf16.mxu0 0
      %6842 = vmatmul.mubr.bf16.gmra.mrb[0].mxu0 %v6666
      %v6843 = vpop.f32.mrb[0].mxu0
      %v6844 = vadd.f32 0.0, %v6843
      %v6845 = vpop.f32.mrb[0].mxu0
      %v6846 = vpop.f32.mrb[0].mxu0
      %v6847 = vadd.f32 0.0, %v6846
      %v6848 = vpop.f32.mrb[0].mxu0
      %6849 = vmatprep.mubr.bf16.mxu0 0
      %6850 = vmatmul.mubr.bf16.gmra.mrb[0].mxu0 %v6668
      %v6851 = vpop.f32.mrb[0].mxu0
      %v6852 = vadd.f32 0.0, %v6851
      %v6853 = vpop.f32.mrb[0].mxu0
      %v6854 = vpop.f32.mrb[0].mxu0
      %v6855 = vadd.f32 0.0, %v6854
      %v6856 = vpop.f32.mrb[0].mxu0
      %6857 = vmatprep.mubr.bf16.mxu0 0
      %6858 = vmatmul.mubr.bf16.gmra.mrb[0].mxu0 %v6670
      %v6859 = vpop.f32.mrb[0].mxu0
      %v6860 = vadd.f32 0.0, %v6859
      %v6861 = vpop.f32.mrb[0].mxu0
      %v6862 = vpop.f32.mrb[0].mxu0
      %v6863 = vadd.f32 0.0, %v6862
      %v6864 = vpop.f32.mrb[0].mxu0
      %6865 = vmatprep.mubr.bf16.mxu0 0
      %6866 = vmatmul.mubr.bf16.gmra.mrb[0].mxu0 %v6672
      %v6867 = vpop.f32.mrb[0].mxu0
      %v6868 = vadd.f32 0.0, %v6867
      %v6869 = vpop.f32.mrb[0].mxu0
      %v6870 = vpop.f32.mrb[0].mxu0
      %v6871 = vadd.f32 0.0, %v6870
      %v6872 = vpop.f32.mrb[0].mxu0
      %6873 = vmatprep.mubr.bf16.mxu0 0
      %6874 = vmatmul.mubr.bf16.gmra.mrb[0].mxu0 %v6674
      %v6875 = vpop.f32.mrb[0].mxu0
      %v6876 = vadd.f32 0.0, %v6875
      %v6877 = vpop.f32.mrb[0].mxu0
      %v6878 = vpop.f32.mrb[0].mxu0
      %v6879 = vadd.f32 0.0, %v6878
      %v6880 = vpop.f32.mrb[0].mxu0
      %6881 = vmatprep.mubr.bf16.mxu0 0
      %6882 = vmatmul.mubr.bf16.gmra.mrb[0].mxu0 %v6676
      %v6883 = vpop.f32.mrb[0].mxu0
      %v6884 = vadd.f32 0.0, %v6883
      %v6885 = vpop.f32.mrb[0].mxu0
      %v6886 = vpop.f32.mrb[0].mxu0
      %v6887 = vadd.f32 0.0, %v6886
      %v6888 = vpop.f32.mrb[0].mxu0
      %6889 = vmatprep.mubr.bf16.mxu0 0
      %6890 = vmatmul.mubr.bf16.gmra.mrb[0].mxu0 %v6678
      %v6891 = vpop.f32.mrb[0].mxu0
      %v6892 = vadd.f32 0.0, %v6891
      %v6893 = vpop.f32.mrb[0].mxu0
      %v6894 = vpop.f32.mrb[0].mxu0
      %v6895 = vadd.f32 0.0, %v6894
      %v6896 = vpop.f32.mrb[0].mxu0
      %6897 = vmatprep.mubr.bf16.mxu0 0
      %6898 = vmatmul.mubr.bf16.gmra.mrb[0].mxu0 %v6680
      %v6899 = vpop.f32.mrb[0].mxu0
      %v6900 = vadd.f32 0.0, %v6899
      %v6901 = vpop.f32.mrb[0].mxu0
      %v6902 = vpop.f32.mrb[0].mxu0
      %v6903 = vadd.f32 0.0, %v6902
      %v6904 = vpop.f32.mrb[0].mxu0
      %6905 = vmatprep.mubr.bf16.mxu0 0
      %6906 = vmatmul.mubr.bf16.gmra.mrb[0].mxu0 %v6682
      %v6907 = vpop.f32.mrb[0].mxu0
      %v6908 = vadd.f32 0.0, %v6907
      %v6909 = vpop.f32.mrb[0].mxu0
      %v6910 = vpop.f32.mrb[0].mxu0
      %v6911 = vadd.f32 0.0, %v6910
      %v6912 = vpop.f32.mrb[0].mxu0
      %6913 = vmatprep.mubr.bf16.mxu0 0
      %6914 = vmatmul.mubr.bf16.gmra.mrb[0].mxu0 %v6684
      %v6915 = vpop.f32.mrb[0].mxu0
      %v6916 = vadd.f32 0.0, %v6915
      %v6917 = vpop.f32.mrb[0].mxu0
      %v6918 = vpop.f32.mrb[0].mxu0
      %v6919 = vadd.f32 0.0, %v6918
      %v6920 = vpop.f32.mrb[0].mxu0
      %6921 = vmatprep.mubr.bf16.mxu0 0
      %6922 = vmatmul.mubr.bf16.gmra.mrb[0].mxu0 %v6686
      %v6923 = vpop.f32.mrb[0].mxu0
      %v6924 = vadd.f32 0.0, %v6923
      %v6925 = vpop.f32.mrb[0].mxu0
      %v6926 = vpop.f32.mrb[0].mxu0
      %v6927 = vadd.f32 0.0, %v6926
      %v6928 = vpop.f32.mrb[0].mxu0
      %6929 = vdwg.mxu0
      %v6930 = vadd.f32 %v6593, %v6788
      %v6931 = vadd.f32 %v6594, %v6791
      %v6932 = vadd.f32 %v6595, %v6796
      %v6933 = vadd.f32 %v6596, %v6799
      %v6934 = vadd.f32 %v6597, %v6804
      %v6935 = vadd.f32 %v6598, %v6807
      %v6936 = vadd.f32 %v6599, %v6812
      %v6937 = vadd.f32 %v6600, %v6815
      %v6938 = vadd.f32 %v6601, %v6820
      %v6939 = vadd.f32 %v6602, %v6823
      %v6940 = vadd.f32 %v6603, %v6828
      %v6941 = vadd.f32 %v6604, %v6831
      %v6942 = vadd.f32 %v6605, %v6836
      %v6943 = vadd.f32 %v6606, %v6839
      %v6944 = vadd.f32 %v6607, %v6844
      %v6945 = vadd.f32 %v6608, %v6847
      %v6946 = vadd.f32 %v6609, %v6852
      %v6947 = vadd.f32 %v6610, %v6855
      %v6948 = vadd.f32 %v6611, %v6860
      %v6949 = vadd.f32 %v6612, %v6863
      %v6950 = vadd.f32 %v6613, %v6868
      %v6951 = vadd.f32 %v6614, %v6871
      %v6952 = vadd.f32 %v6615, %v6876
      %v6953 = vadd.f32 %v6616, %v6879
      %v6954 = vadd.f32 %v6617, %v6884
      %v6955 = vadd.f32 %v6618, %v6887
      %v6956 = vadd.f32 %v6619, %v6892
      %v6957 = vadd.f32 %v6620, %v6895
      %v6958 = vadd.f32 %v6621, %v6900
      %v6959 = vadd.f32 %v6622, %v6903
      %v6960 = vadd.f32 %v6623, %v6908
      %v6961 = vadd.f32 %v6624, %v6911
      %v6962 = vadd.f32 %v6625, %v6916
      %v6963 = vadd.f32 %v6626, %v6919
      %v6964 = vadd.f32 %v6627, %v6924
      %v6965 = vadd.f32 %v6628, %v6927
      %v6966 = vld [vmem:[#allocation2 + $0x98] sm:$0x7]
      %s6967 = scalar_lea.vmem %s4, 320
      %v6968 = vld [vmem:[%s6967] sm:$0xf]
      %v6969 = vld [vmem:[%s6967 + $0x4] sm:$0xf]
      %v6970 = vld [vmem:[%s6967 + $0x8] sm:$0xf]
      %v6971 = vld [vmem:[%s6967 + $0xc] sm:$0xf]
      %v6972 = vld [vmem:[%s6967 + $0x10] sm:$0xf]
      %v6973 = vld [vmem:[%s6967 + $0x14] sm:$0xf]
      %v6974 = vld [vmem:[%s6967 + $0x18] sm:$0xf]
      %v6975 = vld [vmem:[%s6967 + $0x1c] sm:$0xf]
      %v6976 = vld [vmem:[%s6967 + $0x20] sm:$0xf]
      %v6977 = vld [vmem:[%s6967 + $0x24] sm:$0xf]
      %v6978 = vld [vmem:[%s6967 + $0x28] sm:$0xf]
      %v6979 = vld [vmem:[%s6967 + $0x2c] sm:$0xf]
      %v6980 = vld [vmem:[%s6967 + $0x30] sm:$0xf]
      %v6981 = vld [vmem:[%s6967 + $0x34] sm:$0xf]
      %v6982 = vld [vmem:[%s6967 + $0x38] sm:$0xf]
      %v6983 = vld [vmem:[%s6967 + $0x3c] sm:$0xf]
      %v6985 = vunpack.c.l.b16 %v6966
      %v6986 = vpack.c.b16 %v6985, %v6985
      %v6988 = vshrl.u32 %v6649, 16
      %v6990 = vrot.slane %v6988, 2
      %v6991 = vshll.u32 %v6649, 16
      %v6993 = vrot.slane %v6991, 3
      %v6994 = vor.u32 %v6990, %v6993
      %v6995 = vrot.slane %v6189, 2
      %v6996 = vrot.slane %v6192, 3
      %v6997 = vor.u32 %v6995, %v6996
      %v6998 = vsel %vm3253, %v6994, %v6997
      %v6999 = vrot.slane %v6198, 2
      %v7000 = vrot.slane %v6201, 3
      %v7001 = vor.u32 %v6999, %v7000
      %v7002 = vsel %vm3253, %v6997, %v7001
      %v7003 = vrot.slane %v6207, 2
      %v7004 = vrot.slane %v6210, 3
      %v7005 = vor.u32 %v7003, %v7004
      %v7006 = vsel %vm3253, %v7001, %v7005
      %v7007 = vrot.slane %v6216, 2
      %v7008 = vrot.slane %v6219, 3
      %v7009 = vor.u32 %v7007, %v7008
      %v7010 = vsel %vm3253, %v7005, %v7009
      %v7011 = vrot.slane %v6225, 2
      %v7012 = vrot.slane %v6228, 3
      %v7013 = vor.u32 %v7011, %v7012
      %v7014 = vsel %vm3253, %v7009, %v7013
      %v7015 = vrot.slane %v6234, 2
      %v7016 = vrot.slane %v6237, 3
      %v7017 = vor.u32 %v7015, %v7016
      %v7018 = vsel %vm3253, %v7013, %v7017
      %v7019 = vrot.slane %v6243, 2
      %v7020 = vrot.slane %v6246, 3
      %v7021 = vor.u32 %v7019, %v7020
      %v7022 = vsel %vm3253, %v7017, %v7021
      %v7023 = vrot.slane %v6252, 2
      %v7024 = vrot.slane %v6255, 3
      %v7025 = vor.u32 %v7023, %v7024
      %v7026 = vsel %vm3253, %v7021, %v7025
      %v7027 = vrot.slane %v6261, 2
      %v7028 = vrot.slane %v6264, 3
      %v7029 = vor.u32 %v7027, %v7028
      %v7030 = vsel %vm3253, %v7025, %v7029
      %v7031 = vrot.slane %v6270, 2
      %v7032 = vrot.slane %v6273, 3
      %v7033 = vor.u32 %v7031, %v7032
      %v7034 = vsel %vm3253, %v7029, %v7033
      %v7035 = vrot.slane %v6279, 2
      %v7036 = vrot.slane %v6282, 3
      %v7037 = vor.u32 %v7035, %v7036
      %v7038 = vsel %vm3253, %v7033, %v7037
      %v7039 = vrot.slane %v6288, 2
      %v7040 = vrot.slane %v6291, 3
      %v7041 = vor.u32 %v7039, %v7040
      %v7042 = vsel %vm3253, %v7037, %v7041
      %v7043 = vrot.slane %v6297, 2
      %v7044 = vrot.slane %v6300, 3
      %v7045 = vor.u32 %v7043, %v7044
      %v7046 = vsel %vm3253, %v7041, %v7045
      %v7047 = vrot.slane %v6306, 2
      %v7048 = vrot.slane %v6309, 3
      %v7049 = vor.u32 %v7047, %v7048
      %v7050 = vsel %vm3253, %v7045, %v7049
      %v7051 = vrot.slane %v6315, 2
      %v7052 = vrot.slane %v6318, 3
      %v7053 = vor.u32 %v7051, %v7052
      %v7054 = vsel %vm3253, %v7049, %v7053
      %v7055 = vrot.slane %v6324, 2
      %v7056 = vrot.slane %v6327, 3
      %v7057 = vor.u32 %v7055, %v7056
      %v7058 = vsel %vm3253, %v7053, %v7057
      %v7059 = vrot.slane %v6333, 2
      %v7060 = vrot.slane %v6336, 3
      %v7061 = vor.u32 %v7059, %v7060
      %v7062 = vsel %vm3253, %v7057, %v7061
      %v7064 = vshrl.u32 %v6986, 16
      %v7066 = vrot.slane %v7064, 2
      %v7067 = vshll.u32 %v6986, 16
      %v7069 = vrot.slane %v7067, 3
      %v7070 = vor.u32 %v7066, %v7069
      %v7071 = vsel %vm3253, %v7061, %v7070
      %v7106 = vunpack.c.l.b16 %v6968
      %v7107 = vunpack.c.l.b16 %v6969
      %v7108 = vunpack.c.l.b16 %v6970
      %v7109 = vunpack.c.l.b16 %v6971
      %v7110 = vunpack.c.l.b16 %v6972
      %v7111 = vunpack.c.l.b16 %v6973
      %v7112 = vunpack.c.l.b16 %v6974
      %v7113 = vunpack.c.l.b16 %v6975
      %v7114 = vunpack.c.l.b16 %v6976
      %v7115 = vunpack.c.l.b16 %v6977
      %v7116 = vunpack.c.l.b16 %v6978
      %v7117 = vunpack.c.l.b16 %v6979
      %v7118 = vunpack.c.l.b16 %v6980
      %v7119 = vunpack.c.l.b16 %v6981
      %v7120 = vunpack.c.l.b16 %v6982
      %v7121 = vunpack.c.l.b16 %v6983
      %v7122 = vpack.c.b16 %v7107, %v7106
      %v7123 = vpack.c.b16 %v7109, %v7108
      %v7124 = vpack.c.b16 %v7111, %v7110
      %v7125 = vpack.c.b16 %v7113, %v7112
      %v7126 = vpack.c.b16 %v7115, %v7114
      %v7127 = vpack.c.b16 %v7117, %v7116
      %v7128 = vpack.c.b16 %v7119, %v7118
      %v7129 = vpack.c.b16 %v7121, %v7120
      %7138 = vmatprep.subr.bf16.mxu0 0
      %7139 = vmatpush1.bf16.msra.mxu0 %v7122
      %7140 = vmatprep.subr.bf16.mxu0 0
      %7141 = vmatpush1.bf16.msra.mxu0 %v7123
      %7142 = vmatprep.subr.bf16.mxu0 0
      %7143 = vmatpush1.bf16.msra.mxu0 %v7124
      %7144 = vmatprep.subr.bf16.mxu0 0
      %7145 = vmatpush1.bf16.msra.mxu0 %v7125
      %7146 = vmatprep.subr.bf16.mxu0 0
      %7147 = vmatpush1.bf16.msra.mxu0 %v7126
      %7148 = vmatprep.subr.bf16.mxu0 0
      %7149 = vmatpush1.bf16.msra.mxu0 %v7127
      %7150 = vmatprep.subr.bf16.mxu0 0
      %7151 = vmatpush1.bf16.msra.mxu0 %v7128
      %7152 = vmatprep.subr.bf16.mxu0 0
      %7153 = vmatpush1.bf16.msra.mxu0 %v7129
      %7154 = vmatprep.subr.bf16.mxu0 0
      %7155 = vmatpush1.bf16.msra.mxu0 0
      %7156 = vmatprep.subr.bf16.mxu0 0
      %7157 = vmatpush1.bf16.msra.mxu0 0
      %7158 = vmatprep.subr.bf16.mxu0 0
      %7159 = vmatpush1.bf16.msra.mxu0 0
      %7160 = vmatprep.subr.bf16.mxu0 0
      %7161 = vmatpush1.bf16.msra.mxu0 0
      %7162 = vmatprep.subr.bf16.mxu0 0
      %7163 = vmatpush1.bf16.msra.mxu0 0
      %7164 = vmatprep.subr.bf16.mxu0 0
      %7165 = vmatpush1.bf16.msra.mxu0 0
      %7166 = vmatprep.subr.bf16.mxu0 0
      %7167 = vmatpush1.bf16.msra.mxu0 0
      %7168 = vmatprep.subr.bf16.mxu0 0
      %7169 = vmatpush1.bf16.msra.mxu0 0
      %7170 = vmatprep.mubr.bf16.mxu0 0
      %7171 = vmatmul.mubr.bf16.gmra.mrb[0].mxu0 %v6998
      %v7172 = vpop.f32.mrb[0].mxu0
      %v7173 = vadd.f32 0.0, %v7172
      %v7174 = vpop.f32.mrb[0].mxu0
      %v7175 = vpop.f32.mrb[0].mxu0
      %v7176 = vadd.f32 0.0, %v7175
      %v7177 = vpop.f32.mrb[0].mxu0
      %7178 = vmatprep.mubr.bf16.mxu0 0
      %7179 = vmatmul.mubr.bf16.gmra.mrb[0].mxu0 %v7002
      %v7180 = vpop.f32.mrb[0].mxu0
      %v7181 = vadd.f32 0.0, %v7180
      %v7182 = vpop.f32.mrb[0].mxu0
      %v7183 = vpop.f32.mrb[0].mxu0
      %v7184 = vadd.f32 0.0, %v7183
      %v7185 = vpop.f32.mrb[0].mxu0
      %7186 = vmatprep.mubr.bf16.mxu0 0
      %7187 = vmatmul.mubr.bf16.gmra.mrb[0].mxu0 %v7006
      %v7188 = vpop.f32.mrb[0].mxu0
      %v7189 = vadd.f32 0.0, %v7188
      %v7190 = vpop.f32.mrb[0].mxu0
      %v7191 = vpop.f32.mrb[0].mxu0
      %v7192 = vadd.f32 0.0, %v7191
      %v7193 = vpop.f32.mrb[0].mxu0
      %7194 = vmatprep.mubr.bf16.mxu0 0
      %7195 = vmatmul.mubr.bf16.gmra.mrb[0].mxu0 %v7010
      %v7196 = vpop.f32.mrb[0].mxu0
      %v7197 = vadd.f32 0.0, %v7196
      %v7198 = vpop.f32.mrb[0].mxu0
      %v7199 = vpop.f32.mrb[0].mxu0
      %v7200 = vadd.f32 0.0, %v7199
      %v7201 = vpop.f32.mrb[0].mxu0
      %7202 = vmatprep.mubr.bf16.mxu0 0
      %7203 = vmatmul.mubr.bf16.gmra.mrb[0].mxu0 %v7014
      %v7204 = vpop.f32.mrb[0].mxu0
      %v7205 = vadd.f32 0.0, %v7204
      %v7206 = vpop.f32.mrb[0].mxu0
      %v7207 = vpop.f32.mrb[0].mxu0
      %v7208 = vadd.f32 0.0, %v7207
      %v7209 = vpop.f32.mrb[0].mxu0
      %7210 = vmatprep.mubr.bf16.mxu0 0
      %7211 = vmatmul.mubr.bf16.gmra.mrb[0].mxu0 %v7018
      %v7212 = vpop.f32.mrb[0].mxu0
      %v7213 = vadd.f32 0.0, %v7212
      %v7214 = vpop.f32.mrb[0].mxu0
      %v7215 = vpop.f32.mrb[0].mxu0
      %v7216 = vadd.f32 0.0, %v7215
      %v7217 = vpop.f32.mrb[0].mxu0
      %7218 = vmatprep.mubr.bf16.mxu0 0
      %7219 = vmatmul.mubr.bf16.gmra.mrb[0].mxu0 %v7022
      %v7220 = vpop.f32.mrb[0].mxu0
      %v7221 = vadd.f32 0.0, %v7220
      %v7222 = vpop.f32.mrb[0].mxu0
      %v7223 = vpop.f32.mrb[0].mxu0
      %v7224 = vadd.f32 0.0, %v7223
      %v7225 = vpop.f32.mrb[0].mxu0
      %7226 = vmatprep.mubr.bf16.mxu0 0
      %7227 = vmatmul.mubr.bf16.gmra.mrb[0].mxu0 %v7026
      %v7228 = vpop.f32.mrb[0].mxu0
      %v7229 = vadd.f32 0.0, %v7228
      %v7230 = vpop.f32.mrb[0].mxu0
      %v7231 = vpop.f32.mrb[0].mxu0
      %v7232 = vadd.f32 0.0, %v7231
      %v7233 = vpop.f32.mrb[0].mxu0
      %7234 = vmatprep.mubr.bf16.mxu0 0
      %7235 = vmatmul.mubr.bf16.gmra.mrb[0].mxu0 %v7030
      %v7236 = vpop.f32.mrb[0].mxu0
      %v7237 = vadd.f32 0.0, %v7236
      %v7238 = vpop.f32.mrb[0].mxu0
      %v7239 = vpop.f32.mrb[0].mxu0
      %v7240 = vadd.f32 0.0, %v7239
      %v7241 = vpop.f32.mrb[0].mxu0
      %7242 = vmatprep.mubr.bf16.mxu0 0
      %7243 = vmatmul.mubr.bf16.gmra.mrb[0].mxu0 %v7034
      %v7244 = vpop.f32.mrb[0].mxu0
      %v7245 = vadd.f32 0.0, %v7244
      %v7246 = vpop.f32.mrb[0].mxu0
      %v7247 = vpop.f32.mrb[0].mxu0
      %v7248 = vadd.f32 0.0, %v7247
      %v7249 = vpop.f32.mrb[0].mxu0
      %7250 = vmatprep.mubr.bf16.mxu0 0
      %7251 = vmatmul.mubr.bf16.gmra.mrb[0].mxu0 %v7038
      %v7252 = vpop.f32.mrb[0].mxu0
      %v7253 = vadd.f32 0.0, %v7252
      %v7254 = vpop.f32.mrb[0].mxu0
      %v7255 = vpop.f32.mrb[0].mxu0
      %v7256 = vadd.f32 0.0, %v7255
      %v7257 = vpop.f32.mrb[0].mxu0
      %7258 = vmatprep.mubr.bf16.mxu0 0
      %7259 = vmatmul.mubr.bf16.gmra.mrb[0].mxu0 %v7042
      %v7260 = vpop.f32.mrb[0].mxu0
      %v7261 = vadd.f32 0.0, %v7260
      %v7262 = vpop.f32.mrb[0].mxu0
      %v7263 = vpop.f32.mrb[0].mxu0
      %v7264 = vadd.f32 0.0, %v7263
      %v7265 = vpop.f32.mrb[0].mxu0
      %7266 = vmatprep.mubr.bf16.mxu0 0
      %7267 = vmatmul.mubr.bf16.gmra.mrb[0].mxu0 %v7046
      %v7268 = vpop.f32.mrb[0].mxu0
      %v7269 = vadd.f32 0.0, %v7268
      %v7270 = vpop.f32.mrb[0].mxu0
      %v7271 = vpop.f32.mrb[0].mxu0
      %v7272 = vadd.f32 0.0, %v7271
      %v7273 = vpop.f32.mrb[0].mxu0
      %7274 = vmatprep.mubr.bf16.mxu0 0
      %7275 = vmatmul.mubr.bf16.gmra.mrb[0].mxu0 %v7050
      %v7276 = vpop.f32.mrb[0].mxu0
      %v7277 = vadd.f32 0.0, %v7276
      %v7278 = vpop.f32.mrb[0].mxu0
      %v7279 = vpop.f32.mrb[0].mxu0
      %v7280 = vadd.f32 0.0, %v7279
      %v7281 = vpop.f32.mrb[0].mxu0
      %7282 = vmatprep.mubr.bf16.mxu0 0
      %7283 = vmatmul.mubr.bf16.gmra.mrb[0].mxu0 %v7054
      %v7284 = vpop.f32.mrb[0].mxu0
      %v7285 = vadd.f32 0.0, %v7284
      %v7286 = vpop.f32.mrb[0].mxu0
      %v7287 = vpop.f32.mrb[0].mxu0
      %v7288 = vadd.f32 0.0, %v7287
      %v7289 = vpop.f32.mrb[0].mxu0
      %7290 = vmatprep.mubr.bf16.mxu0 0
      %7291 = vmatmul.mubr.bf16.gmra.mrb[0].mxu0 %v7058
      %v7292 = vpop.f32.mrb[0].mxu0
      %v7293 = vadd.f32 0.0, %v7292
      %v7294 = vpop.f32.mrb[0].mxu0
      %v7295 = vpop.f32.mrb[0].mxu0
      %v7296 = vadd.f32 0.0, %v7295
      %v7297 = vpop.f32.mrb[0].mxu0
      %7298 = vmatprep.mubr.bf16.mxu0 0
      %7299 = vmatmul.mubr.bf16.gmra.mrb[0].mxu0 %v7062
      %v7300 = vpop.f32.mrb[0].mxu0
      %v7301 = vadd.f32 0.0, %v7300
      %v7302 = vpop.f32.mrb[0].mxu0
      %v7303 = vpop.f32.mrb[0].mxu0
      %v7304 = vadd.f32 0.0, %v7303
      %v7305 = vpop.f32.mrb[0].mxu0
      %7306 = vmatprep.mubr.bf16.mxu0 0
      %7307 = vmatmul.mubr.bf16.gmra.mrb[0].mxu0 %v7071
      %v7308 = vpop.f32.mrb[0].mxu0
      %v7309 = vadd.f32 0.0, %v7308
      %v7310 = vpop.f32.mrb[0].mxu0
      %v7311 = vpop.f32.mrb[0].mxu0
      %v7312 = vadd.f32 0.0, %v7311
      %v7313 = vpop.f32.mrb[0].mxu0
      %7314 = vdwg.mxu0
      %v7315 = vadd.f32 %v6930, %v7173
      %v7316 = vadd.f32 %v6931, %v7176
      %v7317 = vadd.f32 %v6932, %v7181
      %v7318 = vadd.f32 %v6933, %v7184
      %v7319 = vadd.f32 %v6934, %v7189
      %v7320 = vadd.f32 %v6935, %v7192
      %v7321 = vadd.f32 %v6936, %v7197
      %v7322 = vadd.f32 %v6937, %v7200
      %v7323 = vadd.f32 %v6938, %v7205
      %v7324 = vadd.f32 %v6939, %v7208
      %v7325 = vadd.f32 %v6940, %v7213
      %v7326 = vadd.f32 %v6941, %v7216
      %v7327 = vadd.f32 %v6942, %v7221
      %v7328 = vadd.f32 %v6943, %v7224
      %v7329 = vadd.f32 %v6944, %v7229
      %v7330 = vadd.f32 %v6945, %v7232
      %v7331 = vadd.f32 %v6946, %v7237
      %v7332 = vadd.f32 %v6947, %v7240
      %v7333 = vadd.f32 %v6948, %v7245
      %v7334 = vadd.f32 %v6949, %v7248
      %v7335 = vadd.f32 %v6950, %v7253
      %v7336 = vadd.f32 %v6951, %v7256
      %v7337 = vadd.f32 %v6952, %v7261
      %v7338 = vadd.f32 %v6953, %v7264
      %v7339 = vadd.f32 %v6954, %v7269
      %v7340 = vadd.f32 %v6955, %v7272
      %v7341 = vadd.f32 %v6956, %v7277
      %v7342 = vadd.f32 %v6957, %v7280
      %v7343 = vadd.f32 %v6958, %v7285
      %v7344 = vadd.f32 %v6959, %v7288
      %v7345 = vadd.f32 %v6960, %v7293
      %v7346 = vadd.f32 %v6961, %v7296
      %v7347 = vadd.f32 %v6962, %v7301
      %v7348 = vadd.f32 %v6963, %v7304
      %v7349 = vadd.f32 %v6964, %v7309
      %v7350 = vadd.f32 %v6965, %v7312
      %v7351 = vld [vmem:[#allocation2 + $0x10] sm:$0xc]
      %v7352 = vld [vmem:[#allocation2 + $0x14] sm:$0xf]
      %v7353 = vld [vmem:[#allocation2 + $0x18] sm:$0xf]
      %v7354 = vld [vmem:[#allocation2 + $0x1c] sm:$0xf]
      %v7355 = vld [vmem:[#allocation2 + $0x20] sm:$0xf]
      %v7356 = vld [vmem:[#allocation2 + $0x24] sm:$0xf]
      %v7357 = vld [vmem:[#allocation2 + $0x28] sm:$0xf]
      %v7358 = vld [vmem:[#allocation2 + $0x2c] sm:$0xf]
      %v7359 = vld [vmem:[#allocation2 + $0x30] sm:$0xf]
      %v7360 = vld [vmem:[#allocation2 + $0x34] sm:$0xf]
      %v7361 = vld [vmem:[#allocation2 + $0x38] sm:$0xf]
      %v7362 = vld [vmem:[#allocation2 + $0x3c] sm:$0xf]
      %v7363 = vld [vmem:[#allocation2 + $0x40] sm:$0xf]
      %v7364 = vld [vmem:[#allocation2 + $0x44] sm:$0xf]
      %v7365 = vld [vmem:[#allocation2 + $0x48] sm:$0xf]
      %v7366 = vld [vmem:[#allocation2 + $0x4c] sm:$0xf]
      %v7367 = vld [vmem:[#allocation2 + $0x50] sm:$0xf]
      %v7368 = vld [vmem:[#allocation2 + $0x54] sm:$0xf]
      %v7369 = vld [vmem:[#allocation2 + $0x58] sm:$0xf]
      %v7370 = vld [vmem:[#allocation2 + $0x5c] sm:$0xf]
      %v7371 = vld [vmem:[#allocation2 + $0x60] sm:$0xf]
      %v7372 = vld [vmem:[#allocation2 + $0x64] sm:$0xf]
      %v7373 = vld [vmem:[#allocation2 + $0x68] sm:$0xf]
      %v7374 = vld [vmem:[#allocation2 + $0x6c] sm:$0xf]
      %v7375 = vld [vmem:[#allocation2 + $0x70] sm:$0xf]
      %v7376 = vld [vmem:[#allocation2 + $0x74] sm:$0xf]
      %v7377 = vld [vmem:[#allocation2 + $0x78] sm:$0xf]
      %v7378 = vld [vmem:[#allocation2 + $0x7c] sm:$0xf]
      %v7379 = vld [vmem:[#allocation2 + $0x80] sm:$0xf]
      %v7380 = vld [vmem:[#allocation2 + $0x84] sm:$0xf]
      %v7381 = vld [vmem:[#allocation2 + $0x88] sm:$0xf]
      %v7382 = vld [vmem:[#allocation2 + $0x8c] sm:$0xf]
      %v7383 = vld [vmem:[#allocation2 + $0x90] sm:$0xf]
      %v7384 = vld [vmem:[#allocation2 + $0x94] sm:$0xf]
      %v7385 = vld [vmem:[#allocation2 + $0x98] sm:$0xf]
      %v7386 = vld [vmem:[#allocation2 + $0x9c] sm:$0xf]
      %v7387 = vld [vmem:[#allocation2 + $0xa0] sm:$0x7]
      %s7388 = scalar_lea.vmem %s4, 384
      %v7389 = vld [vmem:[%s7388] sm:$0xf]
      %v7390 = vld [vmem:[%s7388 + $0x4] sm:$0xf]
      %v7391 = vld [vmem:[%s7388 + $0x8] sm:$0xf]
      %v7392 = vld [vmem:[%s7388 + $0xc] sm:$0xf]
      %v7393 = vld [vmem:[%s7388 + $0x10] sm:$0xf]
      %v7394 = vld [vmem:[%s7388 + $0x14] sm:$0xf]
      %v7395 = vld [vmem:[%s7388 + $0x18] sm:$0xf]
      %v7396 = vld [vmem:[%s7388 + $0x1c] sm:$0xf]
      %v7397 = vld [vmem:[%s7388 + $0x20] sm:$0xf]
      %v7398 = vld [vmem:[%s7388 + $0x24] sm:$0xf]
      %v7399 = vld [vmem:[%s7388 + $0x28] sm:$0xf]
      %v7400 = vld [vmem:[%s7388 + $0x2c] sm:$0xf]
      %v7401 = vld [vmem:[%s7388 + $0x30] sm:$0xf]
      %v7402 = vld [vmem:[%s7388 + $0x34] sm:$0xf]
      %v7403 = vld [vmem:[%s7388 + $0x38] sm:$0xf]
      %v7404 = vld [vmem:[%s7388 + $0x3c] sm:$0xf]
      %v7442 = vunpack.c.l.b16 %v7351
      %v7443 = vunpack.c.l.b16 %v7352
      %v7444 = vunpack.c.l.b16 %v7353
      %v7445 = vunpack.c.l.b16 %v7354
      %v7446 = vunpack.c.l.b16 %v7355
      %v7447 = vunpack.c.l.b16 %v7356
      %v7448 = vunpack.c.l.b16 %v7357
      %v7449 = vunpack.c.l.b16 %v7358
      %v7450 = vunpack.c.l.b16 %v7359
      %v7451 = vunpack.c.l.b16 %v7360
      %v7452 = vunpack.c.l.b16 %v7361
      %v7453 = vunpack.c.l.b16 %v7362
      %v7454 = vunpack.c.l.b16 %v7363
      %v7455 = vunpack.c.l.b16 %v7364
      %v7456 = vunpack.c.l.b16 %v7365
      %v7457 = vunpack.c.l.b16 %v7366
      %v7458 = vunpack.c.l.b16 %v7367
      %v7459 = vunpack.c.l.b16 %v7368
      %v7460 = vunpack.c.l.b16 %v7369
      %v7461 = vunpack.c.l.b16 %v7370
      %v7462 = vunpack.c.l.b16 %v7371
      %v7463 = vunpack.c.l.b16 %v7372
      %v7464 = vunpack.c.l.b16 %v7373
      %v7465 = vunpack.c.l.b16 %v7374
      %v7466 = vunpack.c.l.b16 %v7375
      %v7467 = vunpack.c.l.b16 %v7376
      %v7468 = vunpack.c.l.b16 %v7377
      %v7469 = vunpack.c.l.b16 %v7378
      %v7470 = vunpack.c.l.b16 %v7379
      %v7471 = vunpack.c.l.b16 %v7380
      %v7472 = vunpack.c.l.b16 %v7381
      %v7473 = vunpack.c.l.b16 %v7382
      %v7474 = vunpack.c.l.b16 %v7383
      %v7475 = vunpack.c.l.b16 %v7384
      %v7476 = vunpack.c.l.b16 %v7385
      %v7477 = vunpack.c.l.b16 %v7386
      %v7478 = vunpack.c.l.b16 %v7387
      %v7479 = vpack.c.b16 %v7443, %v7442
      %v7480 = vpack.c.b16 %v7445, %v7444
      %v7481 = vpack.c.b16 %v7447, %v7446
      %v7482 = vpack.c.b16 %v7449, %v7448
      %v7483 = vpack.c.b16 %v7451, %v7450
      %v7484 = vpack.c.b16 %v7453, %v7452
      %v7485 = vpack.c.b16 %v7455, %v7454
      %v7486 = vpack.c.b16 %v7457, %v7456
      %v7487 = vpack.c.b16 %v7459, %v7458
      %v7488 = vpack.c.b16 %v7461, %v7460
      %v7489 = vpack.c.b16 %v7463, %v7462
      %v7490 = vpack.c.b16 %v7465, %v7464
      %v7491 = vpack.c.b16 %v7467, %v7466
      %v7492 = vpack.c.b16 %v7469, %v7468
      %v7493 = vpack.c.b16 %v7471, %v7470
      %v7494 = vpack.c.b16 %v7473, %v7472
      %v7495 = vpack.c.b16 %v7475, %v7474
      %v7496 = vpack.c.b16 %v7477, %v7476
      %v7497 = vpack.c.b16 %v7478, %v7478
      %v7499 = vshrl.u32 %v7479, 16
      %v7501 = vrot.slane %v7499, 2
      %v7502 = vshll.u32 %v7479, 16
      %v7504 = vrot.slane %v7502, 3
      %v7505 = vor.u32 %v7501, %v7504
      %v7507 = vshrl.u32 %v7480, 16
      %v7509 = vrot.slane %v7507, 2
      %v7510 = vshll.u32 %v7480, 16
      %v7512 = vrot.slane %v7510, 3
      %v7513 = vor.u32 %v7509, %v7512
      %v7514 = vsel %vm3253, %v7505, %v7513
      %v7516 = vshrl.u32 %v7481, 16
      %v7518 = vrot.slane %v7516, 2
      %v7519 = vshll.u32 %v7481, 16
      %v7521 = vrot.slane %v7519, 3
      %v7522 = vor.u32 %v7518, %v7521
      %v7523 = vsel %vm3253, %v7513, %v7522
      %v7525 = vshrl.u32 %v7482, 16
      %v7527 = vrot.slane %v7525, 2
      %v7528 = vshll.u32 %v7482, 16
      %v7530 = vrot.slane %v7528, 3
      %v7531 = vor.u32 %v7527, %v7530
      %v7532 = vsel %vm3253, %v7522, %v7531
      %v7534 = vshrl.u32 %v7483, 16
      %v7536 = vrot.slane %v7534, 2
      %v7537 = vshll.u32 %v7483, 16
      %v7539 = vrot.slane %v7537, 3
      %v7540 = vor.u32 %v7536, %v7539
      %v7541 = vsel %vm3253, %v7531, %v7540
      %v7543 = vshrl.u32 %v7484, 16
      %v7545 = vrot.slane %v7543, 2
      %v7546 = vshll.u32 %v7484, 16
      %v7548 = vrot.slane %v7546, 3
      %v7549 = vor.u32 %v7545, %v7548
      %v7550 = vsel %vm3253, %v7540, %v7549
      %v7552 = vshrl.u32 %v7485, 16
      %v7554 = vrot.slane %v7552, 2
      %v7555 = vshll.u32 %v7485, 16
      %v7557 = vrot.slane %v7555, 3
      %v7558 = vor.u32 %v7554, %v7557
      %v7559 = vsel %vm3253, %v7549, %v7558
      %v7561 = vshrl.u32 %v7486, 16
      %v7563 = vrot.slane %v7561, 2
      %v7564 = vshll.u32 %v7486, 16
      %v7566 = vrot.slane %v7564, 3
      %v7567 = vor.u32 %v7563, %v7566
      %v7568 = vsel %vm3253, %v7558, %v7567
      %v7570 = vshrl.u32 %v7487, 16
      %v7572 = vrot.slane %v7570, 2
      %v7573 = vshll.u32 %v7487, 16
      %v7575 = vrot.slane %v7573, 3
      %v7576 = vor.u32 %v7572, %v7575
      %v7577 = vsel %vm3253, %v7567, %v7576
      %v7579 = vshrl.u32 %v7488, 16
      %v7581 = vrot.slane %v7579, 2
      %v7582 = vshll.u32 %v7488, 16
      %v7584 = vrot.slane %v7582, 3
      %v7585 = vor.u32 %v7581, %v7584
      %v7586 = vsel %vm3253, %v7576, %v7585
      %v7588 = vshrl.u32 %v7489, 16
      %v7590 = vrot.slane %v7588, 2
      %v7591 = vshll.u32 %v7489, 16
      %v7593 = vrot.slane %v7591, 3
      %v7594 = vor.u32 %v7590, %v7593
      %v7595 = vsel %vm3253, %v7585, %v7594
      %v7597 = vshrl.u32 %v7490, 16
      %v7599 = vrot.slane %v7597, 2
      %v7600 = vshll.u32 %v7490, 16
      %v7602 = vrot.slane %v7600, 3
      %v7603 = vor.u32 %v7599, %v7602
      %v7604 = vsel %vm3253, %v7594, %v7603
      %v7606 = vshrl.u32 %v7491, 16
      %v7608 = vrot.slane %v7606, 2
      %v7609 = vshll.u32 %v7491, 16
      %v7611 = vrot.slane %v7609, 3
      %v7612 = vor.u32 %v7608, %v7611
      %v7613 = vsel %vm3253, %v7603, %v7612
      %v7615 = vshrl.u32 %v7492, 16
      %v7617 = vrot.slane %v7615, 2
      %v7618 = vshll.u32 %v7492, 16
      %v7620 = vrot.slane %v7618, 3
      %v7621 = vor.u32 %v7617, %v7620
      %v7622 = vsel %vm3253, %v7612, %v7621
      %v7624 = vshrl.u32 %v7493, 16
      %v7626 = vrot.slane %v7624, 2
      %v7627 = vshll.u32 %v7493, 16
      %v7629 = vrot.slane %v7627, 3
      %v7630 = vor.u32 %v7626, %v7629
      %v7631 = vsel %vm3253, %v7621, %v7630
      %v7633 = vshrl.u32 %v7494, 16
      %v7635 = vrot.slane %v7633, 2
      %v7636 = vshll.u32 %v7494, 16
      %v7638 = vrot.slane %v7636, 3
      %v7639 = vor.u32 %v7635, %v7638
      %v7640 = vsel %vm3253, %v7630, %v7639
      %v7642 = vshrl.u32 %v7495, 16
      %v7644 = vrot.slane %v7642, 2
      %v7645 = vshll.u32 %v7495, 16
      %v7647 = vrot.slane %v7645, 3
      %v7648 = vor.u32 %v7644, %v7647
      %v7649 = vsel %vm3253, %v7639, %v7648
      %v7651 = vshrl.u32 %v7496, 16
      %v7653 = vrot.slane %v7651, 2
      %v7654 = vshll.u32 %v7496, 16
      %v7656 = vrot.slane %v7654, 3
      %v7657 = vor.u32 %v7653, %v7656
      %v7658 = vsel %vm3253, %v7648, %v7657
      %v7660 = vshrl.u32 %v7497, 16
      %v7662 = vrot.slane %v7660, 2
      %v7663 = vshll.u32 %v7497, 16
      %v7665 = vrot.slane %v7663, 3
      %v7666 = vor.u32 %v7662, %v7665
      %v7667 = vsel %vm3253, %v7657, %v7666
      %v7702 = vunpack.c.l.b16 %v7389
      %v7703 = vunpack.c.l.b16 %v7390
      %v7704 = vunpack.c.l.b16 %v7391
      %v7705 = vunpack.c.l.b16 %v7392
      %v7706 = vunpack.c.l.b16 %v7393
      %v7707 = vunpack.c.l.b16 %v7394
      %v7708 = vunpack.c.l.b16 %v7395
      %v7709 = vunpack.c.l.b16 %v7396
      %v7710 = vunpack.c.l.b16 %v7397
      %v7711 = vunpack.c.l.b16 %v7398
      %v7712 = vunpack.c.l.b16 %v7399
      %v7713 = vunpack.c.l.b16 %v7400
      %v7714 = vunpack.c.l.b16 %v7401
      %v7715 = vunpack.c.l.b16 %v7402
      %v7716 = vunpack.c.l.b16 %v7403
      %v7717 = vunpack.c.l.b16 %v7404
      %v7718 = vpack.c.b16 %v7703, %v7702
      %v7719 = vpack.c.b16 %v7705, %v7704
      %v7720 = vpack.c.b16 %v7707, %v7706
      %v7721 = vpack.c.b16 %v7709, %v7708
      %v7722 = vpack.c.b16 %v7711, %v7710
      %v7723 = vpack.c.b16 %v7713, %v7712
      %v7724 = vpack.c.b16 %v7715, %v7714
      %v7725 = vpack.c.b16 %v7717, %v7716
      %7734 = vmatprep.subr.bf16.mxu0 0
      %7735 = vmatpush1.bf16.msra.mxu0 %v7718
      %7736 = vmatprep.subr.bf16.mxu0 0
      %7737 = vmatpush1.bf16.msra.mxu0 %v7719
      %7738 = vmatprep.subr.bf16.mxu0 0
      %7739 = vmatpush1.bf16.msra.mxu0 %v7720
      %7740 = vmatprep.subr.bf16.mxu0 0
      %7741 = vmatpush1.bf16.msra.mxu0 %v7721
      %7742 = vmatprep.subr.bf16.mxu0 0
      %7743 = vmatpush1.bf16.msra.mxu0 %v7722
      %7744 = vmatprep.subr.bf16.mxu0 0
      %7745 = vmatpush1.bf16.msra.mxu0 %v7723
      %7746 = vmatprep.subr.bf16.mxu0 0
      %7747 = vmatpush1.bf16.msra.mxu0 %v7724
      %7748 = vmatprep.subr.bf16.mxu0 0
      %7749 = vmatpush1.bf16.msra.mxu0 %v7725
      %7750 = vmatprep.subr.bf16.mxu0 0
      %7751 = vmatpush1.bf16.msra.mxu0 0
      %7752 = vmatprep.subr.bf16.mxu0 0
      %7753 = vmatpush1.bf16.msra.mxu0 0
      %7754 = vmatprep.subr.bf16.mxu0 0
      %7755 = vmatpush1.bf16.msra.mxu0 0
      %7756 = vmatprep.subr.bf16.mxu0 0
      %7757 = vmatpush1.bf16.msra.mxu0 0
      %7758 = vmatprep.subr.bf16.mxu0 0
      %7759 = vmatpush1.bf16.msra.mxu0 0
      %7760 = vmatprep.subr.bf16.mxu0 0
      %7761 = vmatpush1.bf16.msra.mxu0 0
      %7762 = vmatprep.subr.bf16.mxu0 0
      %7763 = vmatpush1.bf16.msra.mxu0 0
      %7764 = vmatprep.subr.bf16.mxu0 0
      %7765 = vmatpush1.bf16.msra.mxu0 0
      %7766 = vmatprep.mubr.bf16.mxu0 0
      %7767 = vmatmul.mubr.bf16.gmra.mrb[0].mxu0 %v7514
      %v7768 = vpop.f32.mrb[0].mxu0
      %v7769 = vadd.f32 0.0, %v7768
      %v7770 = vpop.f32.mrb[0].mxu0
      %v7771 = vpop.f32.mrb[0].mxu0
      %v7772 = vadd.f32 0.0, %v7771
      %v7773 = vpop.f32.mrb[0].mxu0
      %7774 = vmatprep.mubr.bf16.mxu0 0
      %7775 = vmatmul.mubr.bf16.gmra.mrb[0].mxu0 %v7523
      %v7776 = vpop.f32.mrb[0].mxu0
      %v7777 = vadd.f32 0.0, %v7776
      %v7778 = vpop.f32.mrb[0].mxu0
      %v7779 = vpop.f32.mrb[0].mxu0
      %v7780 = vadd.f32 0.0, %v7779
      %v7781 = vpop.f32.mrb[0].mxu0
      %7782 = vmatprep.mubr.bf16.mxu0 0
      %7783 = vmatmul.mubr.bf16.gmra.mrb[0].mxu0 %v7532
      %v7784 = vpop.f32.mrb[0].mxu0
      %v7785 = vadd.f32 0.0, %v7784
      %v7786 = vpop.f32.mrb[0].mxu0
      %v7787 = vpop.f32.mrb[0].mxu0
      %v7788 = vadd.f32 0.0, %v7787
      %v7789 = vpop.f32.mrb[0].mxu0
      %7790 = vmatprep.mubr.bf16.mxu0 0
      %7791 = vmatmul.mubr.bf16.gmra.mrb[0].mxu0 %v7541
      %v7792 = vpop.f32.mrb[0].mxu0
      %v7793 = vadd.f32 0.0, %v7792
      %v7794 = vpop.f32.mrb[0].mxu0
      %v7795 = vpop.f32.mrb[0].mxu0
      %v7796 = vadd.f32 0.0, %v7795
      %v7797 = vpop.f32.mrb[0].mxu0
      %7798 = vmatprep.mubr.bf16.mxu0 0
      %7799 = vmatmul.mubr.bf16.gmra.mrb[0].mxu0 %v7550
      %v7800 = vpop.f32.mrb[0].mxu0
      %v7801 = vadd.f32 0.0, %v7800
      %v7802 = vpop.f32.mrb[0].mxu0
      %v7803 = vpop.f32.mrb[0].mxu0
      %v7804 = vadd.f32 0.0, %v7803
      %v7805 = vpop.f32.mrb[0].mxu0
      %7806 = vmatprep.mubr.bf16.mxu0 0
      %7807 = vmatmul.mubr.bf16.gmra.mrb[0].mxu0 %v7559
      %v7808 = vpop.f32.mrb[0].mxu0
      %v7809 = vadd.f32 0.0, %v7808
      %v7810 = vpop.f32.mrb[0].mxu0
      %v7811 = vpop.f32.mrb[0].mxu0
      %v7812 = vadd.f32 0.0, %v7811
      %v7813 = vpop.f32.mrb[0].mxu0
      %7814 = vmatprep.mubr.bf16.mxu0 0
      %7815 = vmatmul.mubr.bf16.gmra.mrb[0].mxu0 %v7568
      %v7816 = vpop.f32.mrb[0].mxu0
      %v7817 = vadd.f32 0.0, %v7816
      %v7818 = vpop.f32.mrb[0].mxu0
      %v7819 = vpop.f32.mrb[0].mxu0
      %v7820 = vadd.f32 0.0, %v7819
      %v7821 = vpop.f32.mrb[0].mxu0
      %7822 = vmatprep.mubr.bf16.mxu0 0
      %7823 = vmatmul.mubr.bf16.gmra.mrb[0].mxu0 %v7577
      %v7824 = vpop.f32.mrb[0].mxu0
      %v7825 = vadd.f32 0.0, %v7824
      %v7826 = vpop.f32.mrb[0].mxu0
      %v7827 = vpop.f32.mrb[0].mxu0
      %v7828 = vadd.f32 0.0, %v7827
      %v7829 = vpop.f32.mrb[0].mxu0
      %7830 = vmatprep.mubr.bf16.mxu0 0
      %7831 = vmatmul.mubr.bf16.gmra.mrb[0].mxu0 %v7586
      %v7832 = vpop.f32.mrb[0].mxu0
      %v7833 = vadd.f32 0.0, %v7832
      %v7834 = vpop.f32.mrb[0].mxu0
      %v7835 = vpop.f32.mrb[0].mxu0
      %v7836 = vadd.f32 0.0, %v7835
      %v7837 = vpop.f32.mrb[0].mxu0
      %7838 = vmatprep.mubr.bf16.mxu0 0
      %7839 = vmatmul.mubr.bf16.gmra.mrb[0].mxu0 %v7595
      %v7840 = vpop.f32.mrb[0].mxu0
      %v7841 = vadd.f32 0.0, %v7840
      %v7842 = vpop.f32.mrb[0].mxu0
      %v7843 = vpop.f32.mrb[0].mxu0
      %v7844 = vadd.f32 0.0, %v7843
      %v7845 = vpop.f32.mrb[0].mxu0
      %7846 = vmatprep.mubr.bf16.mxu0 0
      %7847 = vmatmul.mubr.bf16.gmra.mrb[0].mxu0 %v7604
      %v7848 = vpop.f32.mrb[0].mxu0
      %v7849 = vadd.f32 0.0, %v7848
      %v7850 = vpop.f32.mrb[0].mxu0
      %v7851 = vpop.f32.mrb[0].mxu0
      %v7852 = vadd.f32 0.0, %v7851
      %v7853 = vpop.f32.mrb[0].mxu0
      %7854 = vmatprep.mubr.bf16.mxu0 0
      %7855 = vmatmul.mubr.bf16.gmra.mrb[0].mxu0 %v7613
      %v7856 = vpop.f32.mrb[0].mxu0
      %v7857 = vadd.f32 0.0, %v7856
      %v7858 = vpop.f32.mrb[0].mxu0
      %v7859 = vpop.f32.mrb[0].mxu0
      %v7860 = vadd.f32 0.0, %v7859
      %v7861 = vpop.f32.mrb[0].mxu0
      %7862 = vmatprep.mubr.bf16.mxu0 0
      %7863 = vmatmul.mubr.bf16.gmra.mrb[0].mxu0 %v7622
      %v7864 = vpop.f32.mrb[0].mxu0
      %v7865 = vadd.f32 0.0, %v7864
      %v7866 = vpop.f32.mrb[0].mxu0
      %v7867 = vpop.f32.mrb[0].mxu0
      %v7868 = vadd.f32 0.0, %v7867
      %v7869 = vpop.f32.mrb[0].mxu0
      %7870 = vmatprep.mubr.bf16.mxu0 0
      %7871 = vmatmul.mubr.bf16.gmra.mrb[0].mxu0 %v7631
      %v7872 = vpop.f32.mrb[0].mxu0
      %v7873 = vadd.f32 0.0, %v7872
      %v7874 = vpop.f32.mrb[0].mxu0
      %v7875 = vpop.f32.mrb[0].mxu0
      %v7876 = vadd.f32 0.0, %v7875
      %v7877 = vpop.f32.mrb[0].mxu0
      %7878 = vmatprep.mubr.bf16.mxu0 0
      %7879 = vmatmul.mubr.bf16.gmra.mrb[0].mxu0 %v7640
      %v7880 = vpop.f32.mrb[0].mxu0
      %v7881 = vadd.f32 0.0, %v7880
      %v7882 = vpop.f32.mrb[0].mxu0
      %v7883 = vpop.f32.mrb[0].mxu0
      %v7884 = vadd.f32 0.0, %v7883
      %v7885 = vpop.f32.mrb[0].mxu0
      %7886 = vmatprep.mubr.bf16.mxu0 0
      %7887 = vmatmul.mubr.bf16.gmra.mrb[0].mxu0 %v7649
      %v7888 = vpop.f32.mrb[0].mxu0
      %v7889 = vadd.f32 0.0, %v7888
      %v7890 = vpop.f32.mrb[0].mxu0
      %v7891 = vpop.f32.mrb[0].mxu0
      %v7892 = vadd.f32 0.0, %v7891
      %v7893 = vpop.f32.mrb[0].mxu0
      %7894 = vmatprep.mubr.bf16.mxu0 0
      %7895 = vmatmul.mubr.bf16.gmra.mrb[0].mxu0 %v7658
      %v7896 = vpop.f32.mrb[0].mxu0
      %v7897 = vadd.f32 0.0, %v7896
      %v7898 = vpop.f32.mrb[0].mxu0
      %v7899 = vpop.f32.mrb[0].mxu0
      %v7900 = vadd.f32 0.0, %v7899
      %v7901 = vpop.f32.mrb[0].mxu0
      %7902 = vmatprep.mubr.bf16.mxu0 0
      %7903 = vmatmul.mubr.bf16.gmra.mrb[0].mxu0 %v7667
      %v7904 = vpop.f32.mrb[0].mxu0
      %v7905 = vadd.f32 0.0, %v7904
      %v7906 = vpop.f32.mrb[0].mxu0
      %v7907 = vpop.f32.mrb[0].mxu0
      %v7908 = vadd.f32 0.0, %v7907
      %v7909 = vpop.f32.mrb[0].mxu0
      %7910 = vdwg.mxu0
      %v7911 = vadd.f32 %v7315, %v7769
      %v7912 = vadd.f32 %v7316, %v7772
      %v7913 = vadd.f32 %v7317, %v7777
      %v7914 = vadd.f32 %v7318, %v7780
      %v7915 = vadd.f32 %v7319, %v7785
      %v7916 = vadd.f32 %v7320, %v7788
      %v7917 = vadd.f32 %v7321, %v7793
      %v7918 = vadd.f32 %v7322, %v7796
      %v7919 = vadd.f32 %v7323, %v7801
      %v7920 = vadd.f32 %v7324, %v7804
      %v7921 = vadd.f32 %v7325, %v7809
      %v7922 = vadd.f32 %v7326, %v7812
      %v7923 = vadd.f32 %v7327, %v7817
      %v7924 = vadd.f32 %v7328, %v7820
      %v7925 = vadd.f32 %v7329, %v7825
      %v7926 = vadd.f32 %v7330, %v7828
      %v7927 = vadd.f32 %v7331, %v7833
      %v7928 = vadd.f32 %v7332, %v7836
      %v7929 = vadd.f32 %v7333, %v7841
      %v7930 = vadd.f32 %v7334, %v7844
      %v7931 = vadd.f32 %v7335, %v7849
      %v7932 = vadd.f32 %v7336, %v7852
      %v7933 = vadd.f32 %v7337, %v7857
      %v7934 = vadd.f32 %v7338, %v7860
      %v7935 = vadd.f32 %v7339, %v7865
      %v7936 = vadd.f32 %v7340, %v7868
      %v7937 = vadd.f32 %v7341, %v7873
      %v7938 = vadd.f32 %v7342, %v7876
      %v7939 = vadd.f32 %v7343, %v7881
      %v7940 = vadd.f32 %v7344, %v7884
      %v7941 = vadd.f32 %v7345, %v7889
      %v7942 = vadd.f32 %v7346, %v7892
      %v7943 = vadd.f32 %v7347, %v7897
      %v7944 = vadd.f32 %v7348, %v7900
      %v7945 = vadd.f32 %v7349, %v7905
      %v7946 = vadd.f32 %v7350, %v7908
      %v7947 = vld [vmem:[#allocation2 + $0x10] sm:$0x8]
      %s7948 = scalar_lea.vmem %s4, 448
      %v7949 = vld [vmem:[%s7948] sm:$0xf]
      %v7950 = vld [vmem:[%s7948 + $0x4] sm:$0xf]
      %v7951 = vld [vmem:[%s7948 + $0x8] sm:$0xf]
      %v7952 = vld [vmem:[%s7948 + $0xc] sm:$0xf]
      %v7953 = vld [vmem:[%s7948 + $0x10] sm:$0xf]
      %v7954 = vld [vmem:[%s7948 + $0x14] sm:$0xf]
      %v7955 = vld [vmem:[%s7948 + $0x18] sm:$0xf]
      %v7956 = vld [vmem:[%s7948 + $0x1c] sm:$0xf]
      %v7957 = vld [vmem:[%s7948 + $0x20] sm:$0xf]
      %v7958 = vld [vmem:[%s7948 + $0x24] sm:$0xf]
      %v7959 = vld [vmem:[%s7948 + $0x28] sm:$0xf]
      %v7960 = vld [vmem:[%s7948 + $0x2c] sm:$0xf]
      %v7961 = vld [vmem:[%s7948 + $0x30] sm:$0xf]
      %v7962 = vld [vmem:[%s7948 + $0x34] sm:$0xf]
      %v7963 = vld [vmem:[%s7948 + $0x38] sm:$0xf]
      %v7964 = vld [vmem:[%s7948 + $0x3c] sm:$0xf]
      %v7966 = vunpack.c.l.b16 %v7947
      %v7967 = vpack.c.b16 %v7443, %v7966
      %v7968 = vrot.slane %v7967, 3
      %v7969 = vrot.slane %v7480, 3
      %v7970 = vsel %vm3724, %v7968, %v7969
      %v7971 = vrot.slane %v7481, 3
      %v7972 = vsel %vm3724, %v7969, %v7971
      %v7973 = vrot.slane %v7482, 3
      %v7974 = vsel %vm3724, %v7971, %v7973
      %v7975 = vrot.slane %v7483, 3
      %v7976 = vsel %vm3724, %v7973, %v7975
      %v7977 = vrot.slane %v7484, 3
      %v7978 = vsel %vm3724, %v7975, %v7977
      %v7979 = vrot.slane %v7485, 3
      %v7980 = vsel %vm3724, %v7977, %v7979
      %v7981 = vrot.slane %v7486, 3
      %v7982 = vsel %vm3724, %v7979, %v7981
      %v7983 = vrot.slane %v7487, 3
      %v7984 = vsel %vm3724, %v7981, %v7983
      %v7985 = vrot.slane %v7488, 3
      %v7986 = vsel %vm3724, %v7983, %v7985
      %v7987 = vrot.slane %v7489, 3
      %v7988 = vsel %vm3724, %v7985, %v7987
      %v7989 = vrot.slane %v7490, 3
      %v7990 = vsel %vm3724, %v7987, %v7989
      %v7991 = vrot.slane %v7491, 3
      %v7992 = vsel %vm3724, %v7989, %v7991
      %v7993 = vrot.slane %v7492, 3
      %v7994 = vsel %vm3724, %v7991, %v7993
      %v7995 = vrot.slane %v7493, 3
      %v7996 = vsel %vm3724, %v7993, %v7995
      %v7997 = vrot.slane %v7494, 3
      %v7998 = vsel %vm3724, %v7995, %v7997
      %v7999 = vrot.slane %v7495, 3
      %v8000 = vsel %vm3724, %v7997, %v7999
      %v8001 = vrot.slane %v7496, 3
      %v8002 = vsel %vm3724, %v7999, %v8001
      %v8003 = vrot.slane %v7497, 3
      %v8004 = vsel %vm3724, %v8001, %v8003
      %v8039 = vunpack.c.l.b16 %v7949
      %v8040 = vunpack.c.l.b16 %v7950
      %v8041 = vunpack.c.l.b16 %v7951
      %v8042 = vunpack.c.l.b16 %v7952
      %v8043 = vunpack.c.l.b16 %v7953
      %v8044 = vunpack.c.l.b16 %v7954
      %v8045 = vunpack.c.l.b16 %v7955
      %v8046 = vunpack.c.l.b16 %v7956
      %v8047 = vunpack.c.l.b16 %v7957
      %v8048 = vunpack.c.l.b16 %v7958
      %v8049 = vunpack.c.l.b16 %v7959
      %v8050 = vunpack.c.l.b16 %v7960
      %v8051 = vunpack.c.l.b16 %v7961
      %v8052 = vunpack.c.l.b16 %v7962
      %v8053 = vunpack.c.l.b16 %v7963
      %v8054 = vunpack.c.l.b16 %v7964
      %v8055 = vpack.c.b16 %v8040, %v8039
      %v8056 = vpack.c.b16 %v8042, %v8041
      %v8057 = vpack.c.b16 %v8044, %v8043
      %v8058 = vpack.c.b16 %v8046, %v8045
      %v8059 = vpack.c.b16 %v8048, %v8047
      %v8060 = vpack.c.b16 %v8050, %v8049
      %v8061 = vpack.c.b16 %v8052, %v8051
      %v8062 = vpack.c.b16 %v8054, %v8053
      %8071 = vmatprep.subr.bf16.mxu0 0
      %8072 = vmatpush1.bf16.msra.mxu0 %v8055
      %8073 = vmatprep.subr.bf16.mxu0 0
      %8074 = vmatpush1.bf16.msra.mxu0 %v8056
      %8075 = vmatprep.subr.bf16.mxu0 0
      %8076 = vmatpush1.bf16.msra.mxu0 %v8057
      %8077 = vmatprep.subr.bf16.mxu0 0
      %8078 = vmatpush1.bf16.msra.mxu0 %v8058
      %8079 = vmatprep.subr.bf16.mxu0 0
      %8080 = vmatpush1.bf16.msra.mxu0 %v8059
      %8081 = vmatprep.subr.bf16.mxu0 0
      %8082 = vmatpush1.bf16.msra.mxu0 %v8060
      %8083 = vmatprep.subr.bf16.mxu0 0
      %8084 = vmatpush1.bf16.msra.mxu0 %v8061
      %8085 = vmatprep.subr.bf16.mxu0 0
      %8086 = vmatpush1.bf16.msra.mxu0 %v8062
      %8087 = vmatprep.subr.bf16.mxu0 0
      %8088 = vmatpush1.bf16.msra.mxu0 0
      %8089 = vmatprep.subr.bf16.mxu0 0
      %8090 = vmatpush1.bf16.msra.mxu0 0
      %8091 = vmatprep.subr.bf16.mxu0 0
      %8092 = vmatpush1.bf16.msra.mxu0 0
      %8093 = vmatprep.subr.bf16.mxu0 0
      %8094 = vmatpush1.bf16.msra.mxu0 0
      %8095 = vmatprep.subr.bf16.mxu0 0
      %8096 = vmatpush1.bf16.msra.mxu0 0
      %8097 = vmatprep.subr.bf16.mxu0 0
      %8098 = vmatpush1.bf16.msra.mxu0 0
      %8099 = vmatprep.subr.bf16.mxu0 0
      %8100 = vmatpush1.bf16.msra.mxu0 0
      %8101 = vmatprep.subr.bf16.mxu0 0
      %8102 = vmatpush1.bf16.msra.mxu0 0
      %8103 = vmatprep.mubr.bf16.mxu0 0
      %8104 = vmatmul.mubr.bf16.gmra.mrb[0].mxu0 %v7970
      %v8105 = vpop.f32.mrb[0].mxu0
      %v8106 = vadd.f32 0.0, %v8105
      %v8107 = vpop.f32.mrb[0].mxu0
      %v8108 = vpop.f32.mrb[0].mxu0
      %v8109 = vadd.f32 0.0, %v8108
      %v8110 = vpop.f32.mrb[0].mxu0
      %8111 = vmatprep.mubr.bf16.mxu0 0
      %8112 = vmatmul.mubr.bf16.gmra.mrb[0].mxu0 %v7972
      %v8113 = vpop.f32.mrb[0].mxu0
      %v8114 = vadd.f32 0.0, %v8113
      %v8115 = vpop.f32.mrb[0].mxu0
      %v8116 = vpop.f32.mrb[0].mxu0
      %v8117 = vadd.f32 0.0, %v8116
      %v8118 = vpop.f32.mrb[0].mxu0
      %8119 = vmatprep.mubr.bf16.mxu0 0
      %8120 = vmatmul.mubr.bf16.gmra.mrb[0].mxu0 %v7974
      %v8121 = vpop.f32.mrb[0].mxu0
      %v8122 = vadd.f32 0.0, %v8121
      %v8123 = vpop.f32.mrb[0].mxu0
      %v8124 = vpop.f32.mrb[0].mxu0
      %v8125 = vadd.f32 0.0, %v8124
      %v8126 = vpop.f32.mrb[0].mxu0
      %8127 = vmatprep.mubr.bf16.mxu0 0
      %8128 = vmatmul.mubr.bf16.gmra.mrb[0].mxu0 %v7976
      %v8129 = vpop.f32.mrb[0].mxu0
      %v8130 = vadd.f32 0.0, %v8129
      %v8131 = vpop.f32.mrb[0].mxu0
      %v8132 = vpop.f32.mrb[0].mxu0
      %v8133 = vadd.f32 0.0, %v8132
      %v8134 = vpop.f32.mrb[0].mxu0
      %8135 = vmatprep.mubr.bf16.mxu0 0
      %8136 = vmatmul.mubr.bf16.gmra.mrb[0].mxu0 %v7978
      %v8137 = vpop.f32.mrb[0].mxu0
      %v8138 = vadd.f32 0.0, %v8137
      %v8139 = vpop.f32.mrb[0].mxu0
      %v8140 = vpop.f32.mrb[0].mxu0
      %v8141 = vadd.f32 0.0, %v8140
      %v8142 = vpop.f32.mrb[0].mxu0
      %8143 = vmatprep.mubr.bf16.mxu0 0
      %8144 = vmatmul.mubr.bf16.gmra.mrb[0].mxu0 %v7980
      %v8145 = vpop.f32.mrb[0].mxu0
      %v8146 = vadd.f32 0.0, %v8145
      %v8147 = vpop.f32.mrb[0].mxu0
      %v8148 = vpop.f32.mrb[0].mxu0
      %v8149 = vadd.f32 0.0, %v8148
      %v8150 = vpop.f32.mrb[0].mxu0
      %8151 = vmatprep.mubr.bf16.mxu0 0
      %8152 = vmatmul.mubr.bf16.gmra.mrb[0].mxu0 %v7982
      %v8153 = vpop.f32.mrb[0].mxu0
      %v8154 = vadd.f32 0.0, %v8153
      %v8155 = vpop.f32.mrb[0].mxu0
      %v8156 = vpop.f32.mrb[0].mxu0
      %v8157 = vadd.f32 0.0, %v8156
      %v8158 = vpop.f32.mrb[0].mxu0
      %8159 = vmatprep.mubr.bf16.mxu0 0
      %8160 = vmatmul.mubr.bf16.gmra.mrb[0].mxu0 %v7984
      %v8161 = vpop.f32.mrb[0].mxu0
      %v8162 = vadd.f32 0.0, %v8161
      %v8163 = vpop.f32.mrb[0].mxu0
      %v8164 = vpop.f32.mrb[0].mxu0
      %v8165 = vadd.f32 0.0, %v8164
      %v8166 = vpop.f32.mrb[0].mxu0
      %8167 = vmatprep.mubr.bf16.mxu0 0
      %8168 = vmatmul.mubr.bf16.gmra.mrb[0].mxu0 %v7986
      %v8169 = vpop.f32.mrb[0].mxu0
      %v8170 = vadd.f32 0.0, %v8169
      %v8171 = vpop.f32.mrb[0].mxu0
      %v8172 = vpop.f32.mrb[0].mxu0
      %v8173 = vadd.f32 0.0, %v8172
      %v8174 = vpop.f32.mrb[0].mxu0
      %8175 = vmatprep.mubr.bf16.mxu0 0
      %8176 = vmatmul.mubr.bf16.gmra.mrb[0].mxu0 %v7988
      %v8177 = vpop.f32.mrb[0].mxu0
      %v8178 = vadd.f32 0.0, %v8177
      %v8179 = vpop.f32.mrb[0].mxu0
      %v8180 = vpop.f32.mrb[0].mxu0
      %v8181 = vadd.f32 0.0, %v8180
      %v8182 = vpop.f32.mrb[0].mxu0
      %8183 = vmatprep.mubr.bf16.mxu0 0
      %8184 = vmatmul.mubr.bf16.gmra.mrb[0].mxu0 %v7990
      %v8185 = vpop.f32.mrb[0].mxu0
      %v8186 = vadd.f32 0.0, %v8185
      %v8187 = vpop.f32.mrb[0].mxu0
      %v8188 = vpop.f32.mrb[0].mxu0
      %v8189 = vadd.f32 0.0, %v8188
      %v8190 = vpop.f32.mrb[0].mxu0
      %8191 = vmatprep.mubr.bf16.mxu0 0
      %8192 = vmatmul.mubr.bf16.gmra.mrb[0].mxu0 %v7992
      %v8193 = vpop.f32.mrb[0].mxu0
      %v8194 = vadd.f32 0.0, %v8193
      %v8195 = vpop.f32.mrb[0].mxu0
      %v8196 = vpop.f32.mrb[0].mxu0
      %v8197 = vadd.f32 0.0, %v8196
      %v8198 = vpop.f32.mrb[0].mxu0
      %8199 = vmatprep.mubr.bf16.mxu0 0
      %8200 = vmatmul.mubr.bf16.gmra.mrb[0].mxu0 %v7994
      %v8201 = vpop.f32.mrb[0].mxu0
      %v8202 = vadd.f32 0.0, %v8201
      %v8203 = vpop.f32.mrb[0].mxu0
      %v8204 = vpop.f32.mrb[0].mxu0
      %v8205 = vadd.f32 0.0, %v8204
      %v8206 = vpop.f32.mrb[0].mxu0
      %8207 = vmatprep.mubr.bf16.mxu0 0
      %8208 = vmatmul.mubr.bf16.gmra.mrb[0].mxu0 %v7996
      %v8209 = vpop.f32.mrb[0].mxu0
      %v8210 = vadd.f32 0.0, %v8209
      %v8211 = vpop.f32.mrb[0].mxu0
      %v8212 = vpop.f32.mrb[0].mxu0
      %v8213 = vadd.f32 0.0, %v8212
      %v8214 = vpop.f32.mrb[0].mxu0
      %8215 = vmatprep.mubr.bf16.mxu0 0
      %8216 = vmatmul.mubr.bf16.gmra.mrb[0].mxu0 %v7998
      %v8217 = vpop.f32.mrb[0].mxu0
      %v8218 = vadd.f32 0.0, %v8217
      %v8219 = vpop.f32.mrb[0].mxu0
      %v8220 = vpop.f32.mrb[0].mxu0
      %v8221 = vadd.f32 0.0, %v8220
      %v8222 = vpop.f32.mrb[0].mxu0
      %8223 = vmatprep.mubr.bf16.mxu0 0
      %8224 = vmatmul.mubr.bf16.gmra.mrb[0].mxu0 %v8000
      %v8225 = vpop.f32.mrb[0].mxu0
      %v8226 = vadd.f32 0.0, %v8225
      %v8227 = vpop.f32.mrb[0].mxu0
      %v8228 = vpop.f32.mrb[0].mxu0
      %v8229 = vadd.f32 0.0, %v8228
      %v8230 = vpop.f32.mrb[0].mxu0
      %8231 = vmatprep.mubr.bf16.mxu0 0
      %8232 = vmatmul.mubr.bf16.gmra.mrb[0].mxu0 %v8002
      %v8233 = vpop.f32.mrb[0].mxu0
      %v8234 = vadd.f32 0.0, %v8233
      %v8235 = vpop.f32.mrb[0].mxu0
      %v8236 = vpop.f32.mrb[0].mxu0
      %v8237 = vadd.f32 0.0, %v8236
      %v8238 = vpop.f32.mrb[0].mxu0
      %8239 = vmatprep.mubr.bf16.mxu0 0
      %8240 = vmatmul.mubr.bf16.gmra.mrb[0].mxu0 %v8004
      %v8241 = vpop.f32.mrb[0].mxu0
      %v8242 = vadd.f32 0.0, %v8241
      %v8243 = vpop.f32.mrb[0].mxu0
      %v8244 = vpop.f32.mrb[0].mxu0
      %v8245 = vadd.f32 0.0, %v8244
      %v8246 = vpop.f32.mrb[0].mxu0
      %8247 = vdwg.mxu0
      %v8248 = vadd.f32 %v7911, %v8106
      %v8249 = vadd.f32 %v7912, %v8109
      %v8250 = vadd.f32 %v7913, %v8114
      %v8251 = vadd.f32 %v7914, %v8117
      %v8252 = vadd.f32 %v7915, %v8122
      %v8253 = vadd.f32 %v7916, %v8125
      %v8254 = vadd.f32 %v7917, %v8130
      %v8255 = vadd.f32 %v7918, %v8133
      %v8256 = vadd.f32 %v7919, %v8138
      %v8257 = vadd.f32 %v7920, %v8141
      %v8258 = vadd.f32 %v7921, %v8146
      %v8259 = vadd.f32 %v7922, %v8149
      %v8260 = vadd.f32 %v7923, %v8154
      %v8261 = vadd.f32 %v7924, %v8157
      %v8262 = vadd.f32 %v7925, %v8162
      %v8263 = vadd.f32 %v7926, %v8165
      %v8264 = vadd.f32 %v7927, %v8170
      %v8265 = vadd.f32 %v7928, %v8173
      %v8266 = vadd.f32 %v7929, %v8178
      %v8267 = vadd.f32 %v7930, %v8181
      %v8268 = vadd.f32 %v7931, %v8186
      %v8269 = vadd.f32 %v7932, %v8189
      %v8270 = vadd.f32 %v7933, %v8194
      %v8271 = vadd.f32 %v7934, %v8197
      %v8272 = vadd.f32 %v7935, %v8202
      %v8273 = vadd.f32 %v7936, %v8205
      %v8274 = vadd.f32 %v7937, %v8210
      %v8275 = vadd.f32 %v7938, %v8213
      %v8276 = vadd.f32 %v7939, %v8218
      %v8277 = vadd.f32 %v7940, %v8221
      %v8278 = vadd.f32 %v7941, %v8226
      %v8279 = vadd.f32 %v7942, %v8229
      %v8280 = vadd.f32 %v7943, %v8234
      %v8281 = vadd.f32 %v7944, %v8237
      %v8282 = vadd.f32 %v7945, %v8242
      %v8283 = vadd.f32 %v7946, %v8245
      %v8284 = vld [vmem:[#allocation2 + $0xa0] sm:$0xf]
      %s8285 = scalar_lea.vmem %s4, 512
      %v8286 = vld [vmem:[%s8285] sm:$0xf]
      %v8287 = vld [vmem:[%s8285 + $0x4] sm:$0xf]
      %v8288 = vld [vmem:[%s8285 + $0x8] sm:$0xf]
      %v8289 = vld [vmem:[%s8285 + $0xc] sm:$0xf]
      %v8290 = vld [vmem:[%s8285 + $0x10] sm:$0xf]
      %v8291 = vld [vmem:[%s8285 + $0x14] sm:$0xf]
      %v8292 = vld [vmem:[%s8285 + $0x18] sm:$0xf]
      %v8293 = vld [vmem:[%s8285 + $0x1c] sm:$0xf]
      %v8294 = vld [vmem:[%s8285 + $0x20] sm:$0xf]
      %v8295 = vld [vmem:[%s8285 + $0x24] sm:$0xf]
      %v8296 = vld [vmem:[%s8285 + $0x28] sm:$0xf]
      %v8297 = vld [vmem:[%s8285 + $0x2c] sm:$0xf]
      %v8298 = vld [vmem:[%s8285 + $0x30] sm:$0xf]
      %v8299 = vld [vmem:[%s8285 + $0x34] sm:$0xf]
      %v8300 = vld [vmem:[%s8285 + $0x38] sm:$0xf]
      %v8301 = vld [vmem:[%s8285 + $0x3c] sm:$0xf]
      %v8303 = vunpack.c.l.b16 %v8284
      %v8304 = vpack.c.b16 %v8303, %v8303
      %vm8305 = vsmask.f32 4352
      %v8307 = vshrl.u32 %v7967, 16
      %v8309 = vrot.slane %v8307, 3
      %v8310 = vshll.u32 %v7967, 16
      %v8312 = vrot.slane %v8310, 4
      %v8313 = vor.u32 %v8309, %v8312
      %v8314 = vrot.slane %v7507, 3
      %v8315 = vrot.slane %v7510, 4
      %v8316 = vor.u32 %v8314, %v8315
      %v8317 = vsel %vm8305, %v8313, %v8316
      %v8318 = vrot.slane %v7516, 3
      %v8319 = vrot.slane %v7519, 4
      %v8320 = vor.u32 %v8318, %v8319
      %v8321 = vsel %vm8305, %v8316, %v8320
      %v8322 = vrot.slane %v7525, 3
      %v8323 = vrot.slane %v7528, 4
      %v8324 = vor.u32 %v8322, %v8323
      %v8325 = vsel %vm8305, %v8320, %v8324
      %v8326 = vrot.slane %v7534, 3
      %v8327 = vrot.slane %v7537, 4
      %v8328 = vor.u32 %v8326, %v8327
      %v8329 = vsel %vm8305, %v8324, %v8328
      %v8330 = vrot.slane %v7543, 3
      %v8331 = vrot.slane %v7546, 4
      %v8332 = vor.u32 %v8330, %v8331
      %v8333 = vsel %vm8305, %v8328, %v8332
      %v8334 = vrot.slane %v7552, 3
      %v8335 = vrot.slane %v7555, 4
      %v8336 = vor.u32 %v8334, %v8335
      %v8337 = vsel %vm8305, %v8332, %v8336
      %v8338 = vrot.slane %v7561, 3
      %v8339 = vrot.slane %v7564, 4
      %v8340 = vor.u32 %v8338, %v8339
      %v8341 = vsel %vm8305, %v8336, %v8340
      %v8342 = vrot.slane %v7570, 3
      %v8343 = vrot.slane %v7573, 4
      %v8344 = vor.u32 %v8342, %v8343
      %v8345 = vsel %vm8305, %v8340, %v8344
      %v8346 = vrot.slane %v7579, 3
      %v8347 = vrot.slane %v7582, 4
      %v8348 = vor.u32 %v8346, %v8347
      %v8349 = vsel %vm8305, %v8344, %v8348
      %v8350 = vrot.slane %v7588, 3
      %v8351 = vrot.slane %v7591, 4
      %v8352 = vor.u32 %v8350, %v8351
      %v8353 = vsel %vm8305, %v8348, %v8352
      %v8354 = vrot.slane %v7597, 3
      %v8355 = vrot.slane %v7600, 4
      %v8356 = vor.u32 %v8354, %v8355
      %v8357 = vsel %vm8305, %v8352, %v8356
      %v8358 = vrot.slane %v7606, 3
      %v8359 = vrot.slane %v7609, 4
      %v8360 = vor.u32 %v8358, %v8359
      %v8361 = vsel %vm8305, %v8356, %v8360
      %v8362 = vrot.slane %v7615, 3
      %v8363 = vrot.slane %v7618, 4
      %v8364 = vor.u32 %v8362, %v8363
      %v8365 = vsel %vm8305, %v8360, %v8364
      %v8366 = vrot.slane %v7624, 3
      %v8367 = vrot.slane %v7627, 4
      %v8368 = vor.u32 %v8366, %v8367
      %v8369 = vsel %vm8305, %v8364, %v8368
      %v8370 = vrot.slane %v7633, 3
      %v8371 = vrot.slane %v7636, 4
      %v8372 = vor.u32 %v8370, %v8371
      %v8373 = vsel %vm8305, %v8368, %v8372
      %v8374 = vrot.slane %v7642, 3
      %v8375 = vrot.slane %v7645, 4
      %v8376 = vor.u32 %v8374, %v8375
      %v8377 = vsel %vm8305, %v8372, %v8376
      %v8378 = vrot.slane %v7651, 3
      %v8379 = vrot.slane %v7654, 4
      %v8380 = vor.u32 %v8378, %v8379
      %v8381 = vsel %vm8305, %v8376, %v8380
      %v8383 = vshrl.u32 %v8304, 16
      %v8385 = vrot.slane %v8383, 3
      %v8386 = vshll.u32 %v8304, 16
      %v8388 = vrot.slane %v8386, 4
      %v8389 = vor.u32 %v8385, %v8388
      %v8390 = vsel %vm8305, %v8380, %v8389
      %v8425 = vunpack.c.l.b16 %v8286
      %v8426 = vunpack.c.l.b16 %v8287
      %v8427 = vunpack.c.l.b16 %v8288
      %v8428 = vunpack.c.l.b16 %v8289
      %v8429 = vunpack.c.l.b16 %v8290
      %v8430 = vunpack.c.l.b16 %v8291
      %v8431 = vunpack.c.l.b16 %v8292
      %v8432 = vunpack.c.l.b16 %v8293
      %v8433 = vunpack.c.l.b16 %v8294
      %v8434 = vunpack.c.l.b16 %v8295
      %v8435 = vunpack.c.l.b16 %v8296
      %v8436 = vunpack.c.l.b16 %v8297
      %v8437 = vunpack.c.l.b16 %v8298
      %v8438 = vunpack.c.l.b16 %v8299
      %v8439 = vunpack.c.l.b16 %v8300
      %v8440 = vunpack.c.l.b16 %v8301
      %v8441 = vpack.c.b16 %v8426, %v8425
      %v8442 = vpack.c.b16 %v8428, %v8427
      %v8443 = vpack.c.b16 %v8430, %v8429
      %v8444 = vpack.c.b16 %v8432, %v8431
      %v8445 = vpack.c.b16 %v8434, %v8433
      %v8446 = vpack.c.b16 %v8436, %v8435
      %v8447 = vpack.c.b16 %v8438, %v8437
      %v8448 = vpack.c.b16 %v8440, %v8439
      %8457 = vmatprep.subr.bf16.mxu0 0
      %8458 = vmatpush1.bf16.msra.mxu0 %v8441
      %8459 = vmatprep.subr.bf16.mxu0 0
      %8460 = vmatpush1.bf16.msra.mxu0 %v8442
      %8461 = vmatprep.subr.bf16.mxu0 0
      %8462 = vmatpush1.bf16.msra.mxu0 %v8443
      %8463 = vmatprep.subr.bf16.mxu0 0
      %8464 = vmatpush1.bf16.msra.mxu0 %v8444
      %8465 = vmatprep.subr.bf16.mxu0 0
      %8466 = vmatpush1.bf16.msra.mxu0 %v8445
      %8467 = vmatprep.subr.bf16.mxu0 0
      %8468 = vmatpush1.bf16.msra.mxu0 %v8446
      %8469 = vmatprep.subr.bf16.mxu0 0
      %8470 = vmatpush1.bf16.msra.mxu0 %v8447
      %8471 = vmatprep.subr.bf16.mxu0 0
      %8472 = vmatpush1.bf16.msra.mxu0 %v8448
      %8473 = vmatprep.subr.bf16.mxu0 0
      %8474 = vmatpush1.bf16.msra.mxu0 0
      %8475 = vmatprep.subr.bf16.mxu0 0
      %8476 = vmatpush1.bf16.msra.mxu0 0
      %8477 = vmatprep.subr.bf16.mxu0 0
      %8478 = vmatpush1.bf16.msra.mxu0 0
      %8479 = vmatprep.subr.bf16.mxu0 0
      %8480 = vmatpush1.bf16.msra.mxu0 0
      %8481 = vmatprep.subr.bf16.mxu0 0
      %8482 = vmatpush1.bf16.msra.mxu0 0
      %8483 = vmatprep.subr.bf16.mxu0 0
      %8484 = vmatpush1.bf16.msra.mxu0 0
      %8485 = vmatprep.subr.bf16.mxu0 0
      %8486 = vmatpush1.bf16.msra.mxu0 0
      %8487 = vmatprep.subr.bf16.mxu0 0
      %8488 = vmatpush1.bf16.msra.mxu0 0
      %8489 = vmatprep.mubr.bf16.mxu0 0
      %8490 = vmatmul.mubr.bf16.gmra.mrb[0].mxu0 %v8317
      %v8491 = vpop.f32.mrb[0].mxu0
      %v8492 = vadd.f32 0.0, %v8491
      %v8493 = vpop.f32.mrb[0].mxu0
      %v8494 = vpop.f32.mrb[0].mxu0
      %v8495 = vadd.f32 0.0, %v8494
      %v8496 = vpop.f32.mrb[0].mxu0
      %8497 = vmatprep.mubr.bf16.mxu0 0
      %8498 = vmatmul.mubr.bf16.gmra.mrb[0].mxu0 %v8321
      %v8499 = vpop.f32.mrb[0].mxu0
      %v8500 = vadd.f32 0.0, %v8499
      %v8501 = vpop.f32.mrb[0].mxu0
      %v8502 = vpop.f32.mrb[0].mxu0
      %v8503 = vadd.f32 0.0, %v8502
      %v8504 = vpop.f32.mrb[0].mxu0
      %8505 = vmatprep.mubr.bf16.mxu0 0
      %8506 = vmatmul.mubr.bf16.gmra.mrb[0].mxu0 %v8325
      %v8507 = vpop.f32.mrb[0].mxu0
      %v8508 = vadd.f32 0.0, %v8507
      %v8509 = vpop.f32.mrb[0].mxu0
      %v8510 = vpop.f32.mrb[0].mxu0
      %v8511 = vadd.f32 0.0, %v8510
      %v8512 = vpop.f32.mrb[0].mxu0
      %8513 = vmatprep.mubr.bf16.mxu0 0
      %8514 = vmatmul.mubr.bf16.gmra.mrb[0].mxu0 %v8329
      %v8515 = vpop.f32.mrb[0].mxu0
      %v8516 = vadd.f32 0.0, %v8515
      %v8517 = vpop.f32.mrb[0].mxu0
      %v8518 = vpop.f32.mrb[0].mxu0
      %v8519 = vadd.f32 0.0, %v8518
      %v8520 = vpop.f32.mrb[0].mxu0
      %8521 = vmatprep.mubr.bf16.mxu0 0
      %8522 = vmatmul.mubr.bf16.gmra.mrb[0].mxu0 %v8333
      %v8523 = vpop.f32.mrb[0].mxu0
      %v8524 = vadd.f32 0.0, %v8523
      %v8525 = vpop.f32.mrb[0].mxu0
      %v8526 = vpop.f32.mrb[0].mxu0
      %v8527 = vadd.f32 0.0, %v8526
      %v8528 = vpop.f32.mrb[0].mxu0
      %8529 = vmatprep.mubr.bf16.mxu0 0
      %8530 = vmatmul.mubr.bf16.gmra.mrb[0].mxu0 %v8337
      %v8531 = vpop.f32.mrb[0].mxu0
      %v8532 = vadd.f32 0.0, %v8531
      %v8533 = vpop.f32.mrb[0].mxu0
      %v8534 = vpop.f32.mrb[0].mxu0
      %v8535 = vadd.f32 0.0, %v8534
      %v8536 = vpop.f32.mrb[0].mxu0
      %8537 = vmatprep.mubr.bf16.mxu0 0
      %8538 = vmatmul.mubr.bf16.gmra.mrb[0].mxu0 %v8341
      %v8539 = vpop.f32.mrb[0].mxu0
      %v8540 = vadd.f32 0.0, %v8539
      %v8541 = vpop.f32.mrb[0].mxu0
      %v8542 = vpop.f32.mrb[0].mxu0
      %v8543 = vadd.f32 0.0, %v8542
      %v8544 = vpop.f32.mrb[0].mxu0
      %8545 = vmatprep.mubr.bf16.mxu0 0
      %8546 = vmatmul.mubr.bf16.gmra.mrb[0].mxu0 %v8345
      %v8547 = vpop.f32.mrb[0].mxu0
      %v8548 = vadd.f32 0.0, %v8547
      %v8549 = vpop.f32.mrb[0].mxu0
      %v8550 = vpop.f32.mrb[0].mxu0
      %v8551 = vadd.f32 0.0, %v8550
      %v8552 = vpop.f32.mrb[0].mxu0
      %8553 = vmatprep.mubr.bf16.mxu0 0
      %8554 = vmatmul.mubr.bf16.gmra.mrb[0].mxu0 %v8349
      %v8555 = vpop.f32.mrb[0].mxu0
      %v8556 = vadd.f32 0.0, %v8555
      %v8557 = vpop.f32.mrb[0].mxu0
      %v8558 = vpop.f32.mrb[0].mxu0
      %v8559 = vadd.f32 0.0, %v8558
      %v8560 = vpop.f32.mrb[0].mxu0
      %8561 = vmatprep.mubr.bf16.mxu0 0
      %8562 = vmatmul.mubr.bf16.gmra.mrb[0].mxu0 %v8353
      %v8563 = vpop.f32.mrb[0].mxu0
      %v8564 = vadd.f32 0.0, %v8563
      %v8565 = vpop.f32.mrb[0].mxu0
      %v8566 = vpop.f32.mrb[0].mxu0
      %v8567 = vadd.f32 0.0, %v8566
      %v8568 = vpop.f32.mrb[0].mxu0
      %8569 = vmatprep.mubr.bf16.mxu0 0
      %8570 = vmatmul.mubr.bf16.gmra.mrb[0].mxu0 %v8357
      %v8571 = vpop.f32.mrb[0].mxu0
      %v8572 = vadd.f32 0.0, %v8571
      %v8573 = vpop.f32.mrb[0].mxu0
      %v8574 = vpop.f32.mrb[0].mxu0
      %v8575 = vadd.f32 0.0, %v8574
      %v8576 = vpop.f32.mrb[0].mxu0
      %8577 = vmatprep.mubr.bf16.mxu0 0
      %8578 = vmatmul.mubr.bf16.gmra.mrb[0].mxu0 %v8361
      %v8579 = vpop.f32.mrb[0].mxu0
      %v8580 = vadd.f32 0.0, %v8579
      %v8581 = vpop.f32.mrb[0].mxu0
      %v8582 = vpop.f32.mrb[0].mxu0
      %v8583 = vadd.f32 0.0, %v8582
      %v8584 = vpop.f32.mrb[0].mxu0
      %8585 = vmatprep.mubr.bf16.mxu0 0
      %8586 = vmatmul.mubr.bf16.gmra.mrb[0].mxu0 %v8365
      %v8587 = vpop.f32.mrb[0].mxu0
      %v8588 = vadd.f32 0.0, %v8587
      %v8589 = vpop.f32.mrb[0].mxu0
      %v8590 = vpop.f32.mrb[0].mxu0
      %v8591 = vadd.f32 0.0, %v8590
      %v8592 = vpop.f32.mrb[0].mxu0
      %8593 = vmatprep.mubr.bf16.mxu0 0
      %8594 = vmatmul.mubr.bf16.gmra.mrb[0].mxu0 %v8369
      %v8595 = vpop.f32.mrb[0].mxu0
      %v8596 = vadd.f32 0.0, %v8595
      %v8597 = vpop.f32.mrb[0].mxu0
      %v8598 = vpop.f32.mrb[0].mxu0
      %v8599 = vadd.f32 0.0, %v8598
      %v8600 = vpop.f32.mrb[0].mxu0
      %8601 = vmatprep.mubr.bf16.mxu0 0
      %8602 = vmatmul.mubr.bf16.gmra.mrb[0].mxu0 %v8373
      %v8603 = vpop.f32.mrb[0].mxu0
      %v8604 = vadd.f32 0.0, %v8603
      %v8605 = vpop.f32.mrb[0].mxu0
      %v8606 = vpop.f32.mrb[0].mxu0
      %v8607 = vadd.f32 0.0, %v8606
      %v8608 = vpop.f32.mrb[0].mxu0
      %8609 = vmatprep.mubr.bf16.mxu0 0
      %8610 = vmatmul.mubr.bf16.gmra.mrb[0].mxu0 %v8377
      %v8611 = vpop.f32.mrb[0].mxu0
      %v8612 = vadd.f32 0.0, %v8611
      %v8613 = vpop.f32.mrb[0].mxu0
      %v8614 = vpop.f32.mrb[0].mxu0
      %v8615 = vadd.f32 0.0, %v8614
      %v8616 = vpop.f32.mrb[0].mxu0
      %8617 = vmatprep.mubr.bf16.mxu0 0
      %8618 = vmatmul.mubr.bf16.gmra.mrb[0].mxu0 %v8381
      %v8619 = vpop.f32.mrb[0].mxu0
      %v8620 = vadd.f32 0.0, %v8619
      %v8621 = vpop.f32.mrb[0].mxu0
      %v8622 = vpop.f32.mrb[0].mxu0
      %v8623 = vadd.f32 0.0, %v8622
      %v8624 = vpop.f32.mrb[0].mxu0
      %8625 = vmatprep.mubr.bf16.mxu0 0
      %8626 = vmatmul.mubr.bf16.gmra.mrb[0].mxu0 %v8390
      %v8627 = vpop.f32.mrb[0].mxu0
      %v8628 = vadd.f32 0.0, %v8627
      %v8629 = vpop.f32.mrb[0].mxu0
      %v8630 = vpop.f32.mrb[0].mxu0
      %v8631 = vadd.f32 0.0, %v8630
      %v8632 = vpop.f32.mrb[0].mxu0
      %8633 = vdwg.mxu0
      %v8634 = vadd.f32 %v8248, %v8492
      %v8635 = vadd.f32 %v8249, %v8495
      %v8636 = vadd.f32 %v8250, %v8500
      %v8637 = vadd.f32 %v8251, %v8503
      %v8638 = vadd.f32 %v8252, %v8508
      %v8639 = vadd.f32 %v8253, %v8511
      %v8640 = vadd.f32 %v8254, %v8516
      %v8641 = vadd.f32 %v8255, %v8519
      %v8642 = vadd.f32 %v8256, %v8524
      %v8643 = vadd.f32 %v8257, %v8527
      %v8644 = vadd.f32 %v8258, %v8532
      %v8645 = vadd.f32 %v8259, %v8535
      %v8646 = vadd.f32 %v8260, %v8540
      %v8647 = vadd.f32 %v8261, %v8543
      %v8648 = vadd.f32 %v8262, %v8548
      %v8649 = vadd.f32 %v8263, %v8551
      %v8650 = vadd.f32 %v8264, %v8556
      %v8651 = vadd.f32 %v8265, %v8559
      %v8652 = vadd.f32 %v8266, %v8564
      %v8653 = vadd.f32 %v8267, %v8567
      %v8654 = vadd.f32 %v8268, %v8572
      %v8655 = vadd.f32 %v8269, %v8575
      %v8656 = vadd.f32 %v8270, %v8580
      %v8657 = vadd.f32 %v8271, %v8583
      %v8658 = vadd.f32 %v8272, %v8588
      %v8659 = vadd.f32 %v8273, %v8591
      %v8660 = vadd.f32 %v8274, %v8596
      %v8661 = vadd.f32 %v8275, %v8599
      %v8662 = vadd.f32 %v8276, %v8604
      %v8663 = vadd.f32 %v8277, %v8607
      %v8664 = vadd.f32 %v8278, %v8612
      %v8665 = vadd.f32 %v8279, %v8615
      %v8666 = vadd.f32 %v8280, %v8620
      %v8667 = vadd.f32 %v8281, %v8623
      %v8668 = vadd.f32 %v8282, %v8628
      %v8669 = vadd.f32 %v8283, %v8631
      %v8670 = vmax.f32 %v8634, 0.0
      %v8671 = vmax.f32 %v8635, 0.0
      %v8672 = vmax.f32 %v8636, 0.0
      %v8673 = vmax.f32 %v8637, 0.0
      %v8674 = vmax.f32 %v8638, 0.0
      %v8675 = vmax.f32 %v8639, 0.0
      %v8676 = vmax.f32 %v8640, 0.0
      %v8677 = vmax.f32 %v8641, 0.0
      %v8678 = vmax.f32 %v8642, 0.0
      %v8679 = vmax.f32 %v8643, 0.0
      %v8680 = vmax.f32 %v8644, 0.0
      %v8681 = vmax.f32 %v8645, 0.0
      %v8682 = vmax.f32 %v8646, 0.0
      %v8683 = vmax.f32 %v8647, 0.0
      %v8684 = vmax.f32 %v8648, 0.0
      %v8685 = vmax.f32 %v8649, 0.0
      %v8686 = vmax.f32 %v8650, 0.0
      %v8687 = vmax.f32 %v8651, 0.0
      %v8688 = vmax.f32 %v8652, 0.0
      %v8689 = vmax.f32 %v8653, 0.0
      %v8690 = vmax.f32 %v8654, 0.0
      %v8691 = vmax.f32 %v8655, 0.0
      %v8692 = vmax.f32 %v8656, 0.0
      %v8693 = vmax.f32 %v8657, 0.0
      %v8694 = vmax.f32 %v8658, 0.0
      %v8695 = vmax.f32 %v8659, 0.0
      %v8696 = vmax.f32 %v8660, 0.0
      %v8697 = vmax.f32 %v8661, 0.0
      %v8698 = vmax.f32 %v8662, 0.0
      %v8699 = vmax.f32 %v8663, 0.0
      %v8700 = vmax.f32 %v8664, 0.0
      %v8701 = vmax.f32 %v8665, 0.0
      %v8702 = vmax.f32 %v8666, 0.0
      %v8703 = vmax.f32 %v8667, 0.0
      %v8704 = vmax.f32 %v8668, 0.0
      %v8705 = vmax.f32 %v8669, 0.0
      %v8706 = vpack.c.bf16 %v8671, %v8670
      %v8707 = vpack.c.bf16 %v8673, %v8672
      %v8708 = vpack.c.bf16 %v8675, %v8674
      %v8709 = vpack.c.bf16 %v8677, %v8676
      %v8710 = vpack.c.bf16 %v8679, %v8678
      %v8711 = vpack.c.bf16 %v8681, %v8680
      %v8712 = vpack.c.bf16 %v8683, %v8682
      %v8713 = vpack.c.bf16 %v8685, %v8684
      %v8714 = vpack.c.bf16 %v8687, %v8686
      %v8715 = vpack.c.bf16 %v8689, %v8688
      %v8716 = vpack.c.bf16 %v8691, %v8690
      %v8717 = vpack.c.bf16 %v8693, %v8692
      %v8718 = vpack.c.bf16 %v8695, %v8694
      %v8719 = vpack.c.bf16 %v8697, %v8696
      %v8720 = vpack.c.bf16 %v8699, %v8698
      %v8721 = vpack.c.bf16 %v8701, %v8700
      %v8722 = vpack.c.bf16 %v8703, %v8702
      %v8723 = vpack.c.bf16 %v8705, %v8704
      %v8742 = vunpack.c.l.b16 %v8706
      %v8743 = vunpack.c.h.b16 %v8706
      %v8744 = vunpack.c.l.b16 %v8707
      %v8745 = vunpack.c.h.b16 %v8707
      %v8746 = vunpack.c.l.b16 %v8708
      %v8747 = vunpack.c.h.b16 %v8708
      %v8748 = vunpack.c.l.b16 %v8709
      %v8749 = vunpack.c.h.b16 %v8709
      %v8750 = vunpack.c.l.b16 %v8710
      %v8751 = vunpack.c.h.b16 %v8710
      %v8752 = vunpack.c.l.b16 %v8711
      %v8753 = vunpack.c.h.b16 %v8711
      %v8754 = vunpack.c.l.b16 %v8712
      %v8755 = vunpack.c.h.b16 %v8712
      %v8756 = vunpack.c.l.b16 %v8713
      %v8757 = vunpack.c.h.b16 %v8713
      %v8758 = vunpack.c.l.b16 %v8714
      %v8759 = vunpack.c.h.b16 %v8714
      %v8760 = vunpack.c.l.b16 %v8715
      %v8761 = vunpack.c.h.b16 %v8715
      %v8762 = vunpack.c.l.b16 %v8716
      %v8763 = vunpack.c.h.b16 %v8716
      %v8764 = vunpack.c.l.b16 %v8717
      %v8765 = vunpack.c.h.b16 %v8717
      %v8766 = vunpack.c.l.b16 %v8718
      %v8767 = vunpack.c.h.b16 %v8718
      %v8768 = vunpack.c.l.b16 %v8719
      %v8769 = vunpack.c.h.b16 %v8719
      %v8770 = vunpack.c.l.b16 %v8720
      %v8771 = vunpack.c.h.b16 %v8720
      %v8772 = vunpack.c.l.b16 %v8721
      %v8773 = vunpack.c.h.b16 %v8721
      %v8774 = vunpack.c.l.b16 %v8722
      %v8775 = vunpack.c.h.b16 %v8722
      %v8776 = vunpack.c.l.b16 %v8723
      %v8777 = vunpack.c.h.b16 %v8723
      %v8778 = vpack.c.b16 %v8742, %v8742
      %v8779 = vpack.c.b16 %v8743, %v8743
      %v8780 = vpack.c.b16 %v8744, %v8744
      %v8781 = vpack.c.b16 %v8745, %v8745
      %v8782 = vpack.c.b16 %v8746, %v8746
      %v8783 = vpack.c.b16 %v8747, %v8747
      %v8784 = vpack.c.b16 %v8748, %v8748
      %v8785 = vpack.c.b16 %v8749, %v8749
      %v8786 = vpack.c.b16 %v8750, %v8750
      %v8787 = vpack.c.b16 %v8751, %v8751
      %v8788 = vpack.c.b16 %v8752, %v8752
      %v8789 = vpack.c.b16 %v8753, %v8753
      %v8790 = vpack.c.b16 %v8754, %v8754
      %v8791 = vpack.c.b16 %v8755, %v8755
      %v8792 = vpack.c.b16 %v8756, %v8756
      %v8793 = vpack.c.b16 %v8757, %v8757
      %v8794 = vpack.c.b16 %v8758, %v8758
      %v8795 = vpack.c.b16 %v8759, %v8759
      %v8796 = vpack.c.b16 %v8760, %v8760
      %v8797 = vpack.c.b16 %v8761, %v8761
      %v8798 = vpack.c.b16 %v8762, %v8762
      %v8799 = vpack.c.b16 %v8763, %v8763
      %v8800 = vpack.c.b16 %v8764, %v8764
      %v8801 = vpack.c.b16 %v8765, %v8765
      %v8802 = vpack.c.b16 %v8766, %v8766
      %v8803 = vpack.c.b16 %v8767, %v8767
      %v8804 = vpack.c.b16 %v8768, %v8768
      %v8805 = vpack.c.b16 %v8769, %v8769
      %v8806 = vpack.c.b16 %v8770, %v8770
      %v8807 = vpack.c.b16 %v8771, %v8771
      %v8808 = vpack.c.b16 %v8772, %v8772
      %v8809 = vpack.c.b16 %v8773, %v8773
      %v8810 = vpack.c.b16 %v8774, %v8774
      %v8811 = vpack.c.b16 %v8775, %v8775
      %v8812 = vpack.c.b16 %v8776, %v8776
      %v8813 = vpack.c.b16 %v8777, %v8777
      %8850 = vst [vmem:[%s305] sm:$0xf] %v8778
      %8851 = vst [vmem:[%s305 + $0x4] sm:$0xf] %v8779
      %8852 = vst [vmem:[%s305 + $0x8] sm:$0xf] %v8780
      %8853 = vst [vmem:[%s305 + $0xc] sm:$0xf] %v8781
      %8854 = vst [vmem:[%s305 + $0x10] sm:$0xf] %v8782
      %8855 = vst [vmem:[%s305 + $0x14] sm:$0xf] %v8783
      %8856 = vst [vmem:[%s305 + $0x18] sm:$0xf] %v8784
      %8857 = vst [vmem:[%s305 + $0x1c] sm:$0xf] %v8785
      %8858 = vst [vmem:[%s305 + $0x20] sm:$0xf] %v8786
      %8859 = vst [vmem:[%s305 + $0x24] sm:$0xf] %v8787
      %8860 = vst [vmem:[%s305 + $0x28] sm:$0xf] %v8788
      %8861 = vst [vmem:[%s305 + $0x2c] sm:$0xf] %v8789
      %8862 = vst [vmem:[%s305 + $0x30] sm:$0xf] %v8790
      %8863 = vst [vmem:[%s305 + $0x34] sm:$0xf] %v8791
      %8864 = vst [vmem:[%s305 + $0x38] sm:$0xf] %v8792
      %8865 = vst [vmem:[%s305 + $0x3c] sm:$0xf] %v8793
      %8866 = vst [vmem:[%s305 + $0x40] sm:$0xf] %v8794
      %8867 = vst [vmem:[%s305 + $0x44] sm:$0xf] %v8795
      %8868 = vst [vmem:[%s305 + $0x48] sm:$0xf] %v8796
      %8869 = vst [vmem:[%s305 + $0x4c] sm:$0xf] %v8797
      %8870 = vst [vmem:[%s305 + $0x50] sm:$0xf] %v8798
      %8871 = vst [vmem:[%s305 + $0x54] sm:$0xf] %v8799
      %8872 = vst [vmem:[%s305 + $0x58] sm:$0xf] %v8800
      %8873 = vst [vmem:[%s305 + $0x5c] sm:$0xf] %v8801
      %8874 = vst [vmem:[%s305 + $0x60] sm:$0xf] %v8802
      %8875 = vst [vmem:[%s305 + $0x64] sm:$0xf] %v8803
      %8876 = vst [vmem:[%s305 + $0x68] sm:$0xf] %v8804
      %8877 = vst [vmem:[%s305 + $0x6c] sm:$0xf] %v8805
      %8878 = vst [vmem:[%s305 + $0x70] sm:$0xf] %v8806
      %8879 = vst [vmem:[%s305 + $0x74] sm:$0xf] %v8807
      %8880 = vst [vmem:[%s305 + $0x78] sm:$0xf] %v8808
      %8881 = vst [vmem:[%s305 + $0x7c] sm:$0xf] %v8809
      %8882 = vst [vmem:[%s305 + $0x80] sm:$0xf] %v8810
      %8883 = vst [vmem:[%s305 + $0x84] sm:$0xf] %v8811
      %8884 = vst [vmem:[%s305 + $0x88] sm:$0xf] %v8812
      %8885 = vst [vmem:[%s305 + $0x8c] sm:$0xf] %v8813
      %p8886 = scmp.lt.s32.totalorder %s19, 1
      %s8887 = scalar_select %p8886, %s19, 1
      %s8888 = smul.addr %s8887, 36
      %s8889 = smul.addr %s8888, 4
      %s8890 = scalar_lea.vmem %s8, %s8889
      // Predicated region
      $region53: #{basic_block_forward.1} parent=51 // pred_check
        %p8891 = pneg %p210
      $region54: #{basic_block_forward.1} parent=51 // pred_check_branch
        %8893 = sbr.rel (%p8891) target = $region56
      $region55: #{basic_block_forward.1} parent=51 // pred_region
        _
      $region56: #{basic_block_forward.1} parent=51 // pred_fallthru
        _
    $region52: #{basic_block_forward.1} parent=5 // pred_fallthru
      _
    %p8894 = scmp.le.s32.totalorder 2, %s14
    // Predicated region
    $region57: #{basic_block_forward.1} parent=5 // pred_check
      %p8895 = pneg %p8894
    $region58: #{basic_block_forward.1} parent=5 // pred_check_branch
      %8897 = sbr.rel (%p8895) target = $region60
    $region59: #{basic_block_forward.1} parent=5 // pred_region
      %s8898 = ssub.s32 %s14, 2
      // Predicated region
      $region61: #{basic_block_forward.1} parent=59 // pred_check
        %p8899 = pneg %p216
      $region62: #{basic_block_forward.1} parent=59 // pred_check_branch
        %8901 = sbr.rel (%p8899) target = $region64
      $region63: #{basic_block_forward.1} parent=59 // pred_region
        %p8902 = scmp.lt.s32.totalorder %s20, 1
        %s8903 = scalar_select %p8902, %s20, 1
        %s8904 = smul.addr %s8903, 36
        %s8905 = smul.addr %s8904, 4
        %s8906 = scalar_lea.vmem %s8, %s8905
      $region64: #{basic_block_forward.1} parent=59 // pred_fallthru
        _
    $region60: #{basic_block_forward.1} parent=5 // pred_fallthru
      _
  $region6: #{basic_block_forward.1} parent=0 // loop_footer
    %s18 = sadd.s32 1, %s14
  $region7: #{basic_block_forward.1} parent=0 // loop_footer_branch
    %13 = sbr.rel target = $region3
  $region8: #{basic_block_forward.1} parent=0 // loop_exit
    _

</llo_original>
